<compile_context>
chip_gen: v5e
topology: v5e:2x2
jax: 0.10.0
libtpu: 0.0.40
codegen_flags: <defaults>
</compile_context>

<pallas_src>
import functools

import jax
import jax.numpy as jnp
import numpy as np
from jax import lax
from jax.experimental import pallas as pl
from jax.experimental.pallas import tpu as pltpu

EPS = 1e-5


# ------------------------------ in-kernel helpers ---------------------------
def _bn_train(x, gamma, beta):
    """BatchNorm2d (training mode) on (B, C, P); gamma/beta are (C, 1).

    One fused pass: sum and sum-of-squares, biased var = E[x^2] - mean^2.
    """
    cnt = float(x.shape[0] * x.shape[2])
    s = jnp.sum(jnp.sum(x, axis=2, keepdims=True), axis=0, keepdims=True)
    sq = jnp.sum(jnp.sum(x * x, axis=2, keepdims=True), axis=0, keepdims=True)
    mean = s * (1.0 / cnt)
    var = jnp.maximum(sq * (1.0 / cnt) - mean * mean, 0.0)
    return (x - mean) * lax.rsqrt(var + EPS) * gamma + beta


def _hardswish(x):
    return x * jnp.clip(x + 3.0, 0.0, 6.0) * (1.0 / 6.0)


def _shift_lanes(x2, off):
    """y[:, p] = x2[:, p + off], zero where p + off falls outside [0, HW)."""
    if off == 0:
        return x2
    n = x2.shape[-1]
    fill = jnp.zeros((x2.shape[0], abs(off)), x2.dtype)
    if off > 0:
        return jnp.concatenate([x2[:, off:], fill], axis=-1)
    return jnp.concatenate([fill, x2[:, :n + off]], axis=-1)


def _dw_conv_same(x, w_taps, masks, ksize, W):
    """Depthwise ksize x ksize conv, stride 1, 'same' zero padding.

    x      : (B, C, HW)  channels on sublanes, flattened spatial on lanes
    w_taps : (ksize*ksize, C, 1)   per-channel tap weights
    masks  : (ksize*ksize, 1, HW)  precomputed 0/1 boundary masks
    All spatial shifts are in-register lane shifts (no padded VMEM scratch,
    no masked misaligned interior stores).
    """
    B, C, HW = x.shape
    x2 = x.reshape(B * C, HW)
    r = ksize // 2
    acc = jnp.zeros((B, C, HW), jnp.float32)
    for ky in range(ksize):
        for kx in range(ksize):
            t = ky * ksize + kx
            off = (ky - r) * W + (kx - r)
            shifted = _shift_lanes(x2, off).reshape(B, C, HW)
            acc = acc + shifted * (masks[t] * w_taps[t])
    return acc


# ---------------------------------- kernel ----------------------------------
def _mscsa_kernel(x_ref,
                  g0_ref, b0_ref,
                  w_s0_ref, g_s0_ref, b_s0_ref,
                  mask3_ref, wd1_ref, gd1_ref, bd1_ref, sel1_ref,
                  mask5_ref, wd2_ref, gd2_ref, bd2_ref, sel2_ref,
                  w_s1_ref, g_s1_ref, b_s1_ref,
                  w_s2_ref, g_s2_ref, b_s2_ref,
                  wvc_ref, bvc_ref,
                  gan_ref, ban_ref,
                  wp_ref, bp_ref,
                  o_ref,
                  *, W, nh, hd, hdv, E, EV, scale):
    # TODO(synk): for realistic nnUNet feature maps, tile H*W with a grid and a
    # two-pass BN (accumulate per-channel sum/sumsq across grid steps, then
    # normalize/project per tile) so the intermediates fit v7x's 64 MiB VMEM
    # and the DMA pipeline double-buffers; at these demo sizes one fused block
    # (global batch stats + global softmax) is optimal.
    B, DIM, HW = x_ref.shape
    HW1 = sel1_ref.shape[1]
    HW2 = sel2_ref.shape[1]

    x = x_ref[...].astype(jnp.float32)

    # ---- input BatchNorm ----------------------------------------------------
    xn = _bn_train(x, g0_ref[...], b0_ref[...])

    # ---- scale 0: stacked [q | k1 | v1] 1x1 conv + shared-stat BN -----------
    w0 = w_s0_ref[...]
    y0 = jnp.stack(
        [jnp.dot(w0, xn[b], preferred_element_type=jnp.float32) for b in range(B)],
        axis=0)                                            # (B, 2E+EV, HW)
    y0 = _bn_train(y0, g_s0_ref[...], b_s0_ref[...])
    q_bn = y0[:, :E, :]
    k1 = y0[:, E:2 * E, :]
    v1 = y0[:, 2 * E:, :]

    # ---- downsample 1: depthwise 3x3, stride 2, pad 1 (no bias) + BN --------
    mask3 = mask3_ref[...]
    full3 = _dw_conv_same(xn, wd1_ref[...], mask3, 3, W)   # stride-1 same conv
    xd1 = jnp.dot(full3.reshape(B * DIM, HW), sel1_ref[...],
                  preferred_element_type=jnp.float32).reshape(B, DIM, HW1)
    xd1 = _bn_train(xd1, gd1_ref[...], bd1_ref[...])

    # ---- downsample 2: depthwise 5x5, stride 3, pad 2 (no bias) + BN --------
    full5 = _dw_conv_same(xn, wd2_ref[...], mask5_ref[...], 5, W)
    xd2 = jnp.dot(full5.reshape(B * DIM, HW), sel2_ref[...],
                  preferred_element_type=jnp.float32).reshape(B, DIM, HW2)
    xd2 = _bn_train(xd2, gd2_ref[...], bd2_ref[...])

    # ---- scales 1/2: stacked [k | v] 1x1 conv + shared-stat BN --------------
    w1 = w_s1_ref[...]
    y1 = jnp.stack(
        [jnp.dot(w1, xd1[b], preferred_element_type=jnp.float32) for b in range(B)],
        axis=0)
    y1 = _bn_train(y1, g_s1_ref[...], b_s1_ref[...])
    k2, v2 = y1[:, :E, :], y1[:, E:, :]

    w2 = w_s2_ref[...]
    y2 = jnp.stack(
        [jnp.dot(w2, xd2[b], preferred_element_type=jnp.float32) for b in range(B)],
        axis=0)
    y2 = _bn_train(y2, g_s2_ref[...], b_s2_ref[...])
    k3, v3 = y2[:, :E, :], y2[:, E:, :]

    # ---- v_conv: Hardswish -> depthwise 3x3 stride 1 pad 1 (with bias) ------
    vconv = _dw_conv_same(_hardswish(v1), wvc_ref[...], mask3, 3, W) + bvc_ref[...]

    # ---- multi-scale attention ----------------------------------------------
    def heads(t, d):                        # (B, nh*d, P) -> (B*nh, d, P)
        return t.reshape(B * nh, d, t.shape[2])

    qh = heads(q_bn, hd)                                            # (B*nh, hd, HW)
    kh = jnp.concatenate(
        [heads(k1, hd), heads(k2, hd), heads(k3, hd)], axis=2)      # (B*nh, hd, L)
    vh = jnp.concatenate(
        [heads(v1, hdv), heads(v2, hdv), heads(v3, hdv)], axis=2)   # (B*nh, hdv, L)

    q_t = jnp.stack([qh[n].T for n in range(B * nh)], axis=0)       # (B*nh, HW, hd)
    logits = jnp.einsum('nqd,ndl->nql', q_t, kh,
                        preferred_element_type=jnp.float32) * scale
    m = jnp.max(logits, axis=-1, keepdims=True)
    probs = jnp.exp(logits - m)
    denom = jnp.sum(probs, axis=-1, keepdims=True)
    attn = probs * pl.reciprocal(denom, approx=True)
    outh = jnp.einsum('nel,nql->neq', vh, attn,
                      preferred_element_type=jnp.float32)           # (B*nh, hdv, HW)
    att = outh.reshape(B, EV, HW)

    # ---- residual depthwise branch, attn_norm BN, Hardswish, 1x1 proj -------
    z = att + vconv
    z = _hardswish(_bn_train(z, gan_ref[...], ban_ref[...]))
    wp = wp_ref[...]
    bp = bp_ref[...]
    for b in range(B):
        o_ref[b] = (jnp.dot(wp, z[b], preferred_element_type=jnp.float32)
                    + bp).astype(o_ref.dtype)


# ------------------------------- host wrapper --------------------------------
def _make_sel(H, W, Ho, Wo, stride):
    """Constant 0/1 selection matrix: strided subsample of a same-pad conv."""
    sel = np.zeros((H * W, Ho * Wo), np.float32)
    for oh in range(Ho):
        for ow in range(Wo):
            sel[(oh * stride) * W + (ow * stride), oh * Wo + ow] = 1.0
    return jnp.asarray(sel)


def _make_masks(H, W, ksize):
    """Constant boundary masks (ksize*ksize, 1, H*W) for the shifted taps."""
    r = ksize // 2
    out = np.zeros((ksize * ksize, 1, H * W), np.float32)
    for ky in range(ksize):
        for kx in range(ksize):
            dy, dx = ky - r, kx - r
            m = np.zeros((H, W), np.float32)
            m[max(0, -dy):min(H, H - dy), max(0, -dx):min(W, W - dx)] = 1.0
            out[ky * ksize + kx, 0] = m.reshape(-1)
    return jnp.asarray(out)


def _taps(w, k):
    # torch depthwise weight (C, k, k) -> (k*k, C, 1) per-tap columns
    c = w.shape[0]
    return jnp.transpose(w.reshape(c, k * k)).reshape(k * k, c, 1)


def _col(v):
    return v.reshape(-1, 1)


def mscsa_forward(x_nchw, p, cfg):
    B, DIM, H, W = x_nchw.shape
    nh = cfg['head_loc']
    hd = cfg['head_dim_loc']
    hdv = int(cfg['head_attn_ratio'] * hd)
    E, EV = nh * hd, nh * hdv
    HW = H * W
    H1, W1 = (H - 1) // 2 + 1, (W - 1) // 2 + 1      # 3x3 s2 p1
    H2, W2 = (H - 1) // 3 + 1, (W - 1) // 3 + 1      # 5x5 s3 p2

    # stack the per-scale 1x1-conv weights / BN params (q|k|v share one matmul)
    w_s0 = jnp.concatenate([p['wq'], p['wk'][0], p['wv'][0]], axis=0)
    g_s0 = _col(jnp.concatenate([p['gq'], p['gk'][0], p['gv'][0]]))
    b_s0 = _col(jnp.concatenate([p['bq'], p['bk'][0], p['bv'][0]]))
    w_s1 = jnp.concatenate([p['wk'][1], p['wv'][1]], axis=0)
    g_s1 = _col(jnp.concatenate([p['gk'][1], p['gv'][1]]))
    b_s1 = _col(jnp.concatenate([p['bk'][1], p['bv'][1]]))
    w_s2 = jnp.concatenate([p['wk'][2], p['wv'][2]], axis=0)
    g_s2 = _col(jnp.concatenate([p['gk'][2], p['gv'][2]]))
    b_s2 = _col(jnp.concatenate([p['bk'][2], p['bv'][2]]))

    args = (
        x_nchw.reshape(B, DIM, HW),                       # free reshape, no transpose
        _col(p['g0']), _col(p['b0']),
        w_s0, g_s0, b_s0,
        _make_masks(H, W, 3), _taps(p['wd1'], 3), _col(p['gd1']), _col(p['bd1']),
        _make_sel(H, W, H1, W1, 2),
        _make_masks(H, W, 5), _taps(p['wd2'], 5), _col(p['gd2']), _col(p['bd2']),
        _make_sel(H, W, H2, W2, 3),
        w_s1, g_s1, b_s1,
        w_s2, g_s2, b_s2,
        _taps(p['wvc'], 3), _col(p['bvc']),
        _col(p['gan']), _col(p['ban']),
        p['wp'], _col(p['bp']),
    )

    kernel = functools.partial(
        _mscsa_kernel, W=W, nh=nh, hd=hd, hdv=hdv, E=E, EV=EV,
        scale=float(hd) ** -0.5)
    vmem = pl.BlockSpec(memory_space=pltpu.MemorySpace.VMEM)
    out_flat = pl.pallas_call(
        kernel,
        out_shape=jax.ShapeDtypeStruct((B, DIM, HW), x_nchw.dtype),
        in_specs=[vmem] * len(args),
        out_specs=vmem,
        compiler_params=pltpu.CompilerParams(vmem_limit_bytes=32 * 1024 * 1024),
    )(*args)
    return out_flat.reshape(B, DIM, H, W)


# ------------------------ deterministic parameter init -----------------------
def init_params(key, cfg):
    dim = sum(cfg['channels'])
    nh, hd = cfg['head_loc'], cfg['head_dim_loc']
    E = nh * hd
    hdv = int(cfg['head_attn_ratio'] * hd)
    EV = nh * hdv
    keys = iter(jax.random.split(key, 64))

    def w(shape, s=0.2):
        return s * jax.random.normal(next(keys), shape, jnp.float32)

    def gamma(n):
        return 1.0 + 0.1 * jax.random.normal(next(keys), (n,), jnp.float32)

    def beta(n):
        return 0.1 * jax.random.normal(next(keys), (n,), jnp.float32)

    return {
        'g0': gamma(dim), 'b0': beta(dim),
        'wq': w((E, dim)), 'gq': gamma(E), 'bq': beta(E),
        'wk': [w((E, dim)) for _ in range(3)],
        'gk': [gamma(E) for _ in range(3)],
        'bk': [beta(E) for _ in range(3)],
        'wv': [w((EV, dim)) for _ in range(3)],
        'gv': [gamma(EV) for _ in range(3)],
        'bv': [beta(EV) for _ in range(3)],
        'wd1': w((dim, 3, 3)), 'gd1': gamma(dim), 'bd1': beta(dim),
        'wd2': w((dim, 5, 5)), 'gd2': gamma(dim), 'bd2': beta(dim),
        'wvc': w((EV, 3, 3)), 'bvc': beta(EV),
        'gan': gamma(EV), 'ban': beta(EV),
        'wp': w((dim, EV)), 'bp': beta(dim),
    }


# ------------------------------ pure-JAX reference ----------------------------
def _ref_bn(x, g, b):
    mean = jnp.mean(x, axis=(0, 2, 3), keepdims=True)
    var = jnp.mean((x - mean) ** 2, axis=(0, 2, 3), keepdims=True)
    return ((x - mean) / jnp.sqrt(var + EPS) * g[None, :, None, None]
            + b[None, :, None, None])


def _ref_conv1x1(x, w):
    return lax.conv_general_dilated(x, w[:, :, None, None], (1, 1), 'VALID',
                                    precision=lax.Precision.HIGHEST)


def _ref_dwconv(x, w, stride, pad):
    c = x.shape[1]
    return lax.conv_general_dilated(
        x, w[:, None, :, :], (stride, stride), ((pad, pad), (pad, pad)),
        feature_group_count=c, precision=lax.Precision.HIGHEST)


def _ref_hardswish(x):
    return x * jnp.clip(x + 3.0, 0.0, 6.0) / 6.0


def ref_forward(x, p, cfg):
    B, DIM, H, W = x.shape
    nh, hd = cfg['head_loc'], cfg['head_dim_loc']
    hdv = int(cfg['head_attn_ratio'] * hd)
    EV = nh * hdv
    scale = float(hd) ** -0.5

    xn = _ref_bn(x, p['g0'], p['b0'])
    q = _ref_bn(_ref_conv1x1(xn, p['wq']), p['gq'], p['bq'])
    xd1 = _ref_bn(_ref_dwconv(xn, p['wd1'], 2, 1), p['gd1'], p['bd1'])
    xd2 = _ref_bn(_ref_dwconv(xn, p['wd2'], 3, 2), p['gd2'], p['bd2'])
    xs = [xn, xd1, xd2]
    vs = [_ref_bn(_ref_conv1x1(xi, p['wv'][i]), p['gv'][i], p['bv'][i])
          for i, xi in enumerate(xs)]
    ks = [_ref_bn(_ref_conv1x1(xi, p['wk'][i]), p['gk'][i], p['bk'][i])
          for i, xi in enumerate(xs)]
    vconv = (_ref_dwconv(_ref_hardswish(vs[0]), p['wvc'], 1, 1)
             + p['bvc'][None, :, None, None])

    qh = q.reshape(B, nh, hd, -1)
    kh = jnp.concatenate([ki.reshape(B, nh, hd, -1) for ki in ks], axis=-1)
    vh = jnp.concatenate([vi.reshape(B, nh, hdv, -1) for vi in vs], axis=-1)
    qh = jnp.transpose(qh, (0, 1, 3, 2))
    vh = jnp.transpose(vh, (0, 1, 3, 2))
    attn = jnp.einsum('bnqd,bndl->bnql', qh, kh,
                      precision=lax.Precision.HIGHEST) * scale
    attn = jax.nn.softmax(attn, axis=-1)
    out = jnp.einsum('bnql,bnld->bnqd', attn, vh,
                     precision=lax.Precision.HIGHEST)
    out = jnp.transpose(out, (0, 1, 3, 2)).reshape(B, EV, H, W)
    out = out + vconv
    out = _ref_hardswish(_ref_bn(out, p['gan'], p['ban']))
    out = _ref_conv1x1(out, p['wp']) + p['bp'][None, :, None, None]
    return out


if __name__ == "__main__":
    cfg = dict(channels=[8, 8], head_loc=2, head_dim_loc=8, head_attn_ratio=2.0)
    B, H, W = 2, 12, 12
    dim = sum(cfg['channels'])

    key = jax.random.PRNGKey(0)
    kx, kp = jax.random.split(key)
    x = jax.random.normal(kx, (B, dim, H, W), jnp.float32)
    params = init_params(kp, cfg)

    out = jax.block_until_ready(mscsa_forward(x, params, cfg))
    assert out.shape == (B, dim, H, W)

    ref = jax.block_until_ready(ref_forward(x, params, cfg))
    np.testing.assert_allclose(np.asarray(out), np.asarray(ref),
                               rtol=2e-2, atol=2e-2)

    print("KERNEL_OK")
</pallas_src>

<mosaic_0001>
module attributes {stable_mosaic.version = 11 : i64} {
  func.func @_mscsa_kernel(%arg0: memref<2x16x144xf32, #tpu.memory_space<vmem>>, %arg1: memref<16x1xf32, #tpu.memory_space<vmem>>, %arg2: memref<16x1xf32, #tpu.memory_space<vmem>>, %arg3: memref<64x16xf32, #tpu.memory_space<vmem>>, %arg4: memref<64x1xf32, #tpu.memory_space<vmem>>, %arg5: memref<64x1xf32, #tpu.memory_space<vmem>>, %arg6: memref<9x1x144xf32, #tpu.memory_space<vmem>>, %arg7: memref<9x16x1xf32, #tpu.memory_space<vmem>>, %arg8: memref<16x1xf32, #tpu.memory_space<vmem>>, %arg9: memref<16x1xf32, #tpu.memory_space<vmem>>, %arg10: memref<144x36xf32, #tpu.memory_space<vmem>>, %arg11: memref<25x1x144xf32, #tpu.memory_space<vmem>>, %arg12: memref<25x16x1xf32, #tpu.memory_space<vmem>>, %arg13: memref<16x1xf32, #tpu.memory_space<vmem>>, %arg14: memref<16x1xf32, #tpu.memory_space<vmem>>, %arg15: memref<144x16xf32, #tpu.memory_space<vmem>>, %arg16: memref<48x16xf32, #tpu.memory_space<vmem>>, %arg17: memref<48x1xf32, #tpu.memory_space<vmem>>, %arg18: memref<48x1xf32, #tpu.memory_space<vmem>>, %arg19: memref<48x16xf32, #tpu.memory_space<vmem>>, %arg20: memref<48x1xf32, #tpu.memory_space<vmem>>, %arg21: memref<48x1xf32, #tpu.memory_space<vmem>>, %arg22: memref<9x32x1xf32, #tpu.memory_space<vmem>>, %arg23: memref<32x1xf32, #tpu.memory_space<vmem>>, %arg24: memref<32x1xf32, #tpu.memory_space<vmem>>, %arg25: memref<32x1xf32, #tpu.memory_space<vmem>>, %arg26: memref<16x32xf32, #tpu.memory_space<vmem>>, %arg27: memref<16x1xf32, #tpu.memory_space<vmem>>, %arg28: memref<2x16x144xf32, #tpu.memory_space<vmem>>) attributes {dimension_semantics = [], scalar_prefetch = 0 : i64, scratch_operands = 0 : i64, tpu.core_type = #tpu.core_type<tc>} {
    %c0 = arith.constant 0 : index
    %c0_0 = arith.constant 0 : index
    %c0_1 = arith.constant 0 : index
    %0 = vector.load %arg0[%c0, %c0_0, %c0_1] : memref<2x16x144xf32, #tpu.memory_space<vmem>>, vector<2x16x144xf32>
    %c0_2 = arith.constant 0 : index
    %c0_3 = arith.constant 0 : index
    %1 = vector.load %arg1[%c0_2, %c0_3] : memref<16x1xf32, #tpu.memory_space<vmem>>, vector<16x1xf32>
    %c0_4 = arith.constant 0 : index
    %c0_5 = arith.constant 0 : index
    %2 = vector.load %arg2[%c0_4, %c0_5] : memref<16x1xf32, #tpu.memory_space<vmem>>, vector<16x1xf32>
    %cst = arith.constant dense<0.000000e+00> : vector<2x16xf32>
    %3 = vector.multi_reduction <add>, %0, %cst [2] : vector<2x16x144xf32> to vector<2x16xf32>
    %4 = vector.shape_cast %3 : vector<2x16xf32> to vector<2x16x1xf32>
    %cst_6 = arith.constant dense<0.000000e+00> : vector<16x1xf32>
    %5 = vector.multi_reduction <add>, %4, %cst_6 [0] : vector<2x16x1xf32> to vector<16x1xf32>
    %6 = vector.shape_cast %5 : vector<16x1xf32> to vector<1x16x1xf32>
    %7 = arith.mulf %0, %0 : vector<2x16x144xf32>
    %cst_7 = arith.constant dense<0.000000e+00> : vector<2x16xf32>
    %8 = vector.multi_reduction <add>, %7, %cst_7 [2] : vector<2x16x144xf32> to vector<2x16xf32>
    %9 = vector.shape_cast %8 : vector<2x16xf32> to vector<2x16x1xf32>
    %cst_8 = arith.constant dense<0.000000e+00> : vector<16x1xf32>
    %10 = vector.multi_reduction <add>, %9, %cst_8 [0] : vector<2x16x1xf32> to vector<16x1xf32>
    %11 = vector.shape_cast %10 : vector<16x1xf32> to vector<1x16x1xf32>
    %cst_9 = arith.constant 0.00347222225 : f32
    %12 = vector.broadcast %cst_9 : f32 to vector<1x16x1xf32>
    %13 = arith.mulf %6, %12 : vector<1x16x1xf32>
    %cst_10 = arith.constant 0.00347222225 : f32
    %14 = vector.broadcast %cst_10 : f32 to vector<1x16x1xf32>
    %15 = arith.mulf %11, %14 : vector<1x16x1xf32>
    %16 = arith.mulf %13, %13 : vector<1x16x1xf32>
    %17 = arith.subf %15, %16 : vector<1x16x1xf32>
    %cst_11 = arith.constant 0.000000e+00 : f32
    %18 = vector.broadcast %cst_11 : f32 to vector<1x16x1xf32>
    %19 = arith.maximumf %17, %18 : vector<1x16x1xf32>
    %20 = vector.broadcast %13 : vector<1x16x1xf32> to vector<2x16x144xf32>
    %21 = arith.subf %0, %20 : vector<2x16x144xf32>
    %cst_12 = arith.constant 9.99999974E-6 : f32
    %22 = vector.broadcast %cst_12 : f32 to vector<1x16x1xf32>
    %23 = arith.addf %19, %22 : vector<1x16x1xf32>
    %24 = math.rsqrt %23 : vector<1x16x1xf32>
    %25 = vector.broadcast %24 : vector<1x16x1xf32> to vector<2x16x144xf32>
    %26 = arith.mulf %21, %25 : vector<2x16x144xf32>
    %27 = vector.shape_cast %1 : vector<16x1xf32> to vector<1x16x1xf32>
    %28 = vector.broadcast %27 : vector<1x16x1xf32> to vector<2x16x144xf32>
    %29 = arith.mulf %26, %28 : vector<2x16x144xf32>
    %30 = vector.shape_cast %2 : vector<16x1xf32> to vector<1x16x1xf32>
    %31 = vector.broadcast %30 : vector<1x16x1xf32> to vector<2x16x144xf32>
    %32 = arith.addf %29, %31 : vector<2x16x144xf32>
    %c0_13 = arith.constant 0 : index
    %c0_14 = arith.constant 0 : index
    %33 = vector.load %arg3[%c0_13, %c0_14] : memref<64x16xf32, #tpu.memory_space<vmem>>, vector<64x16xf32>
    %34 = vector.extract_strided_slice %32 {offsets = [0, 0, 0], sizes = [1, 16, 144], strides = [1, 1, 1]} : vector<2x16x144xf32> to vector<1x16x144xf32>
    %35 = vector.shape_cast %34 : vector<1x16x144xf32> to vector<16x144xf32>
    %cst_15 = arith.constant dense<0.000000e+00> : vector<64x144xf32>
    %36 = tpu.matmul %33, %35, %cst_15 {dimension_numbers = #tpu.dot_dimension_numbers<[1], [0], [0], [1], [0, 0, 1, 1], [], []>} : vector<64x16xf32>, vector<16x144xf32>, vector<64x144xf32> -> vector<64x144xf32>
    %37 = vector.extract_strided_slice %32 {offsets = [1, 0, 0], sizes = [1, 16, 144], strides = [1, 1, 1]} : vector<2x16x144xf32> to vector<1x16x144xf32>
    %38 = vector.shape_cast %37 : vector<1x16x144xf32> to vector<16x144xf32>
    %cst_16 = arith.constant dense<0.000000e+00> : vector<64x144xf32>
    %39 = tpu.matmul %33, %38, %cst_16 {dimension_numbers = #tpu.dot_dimension_numbers<[1], [0], [0], [1], [0, 0, 1, 1], [], []>} : vector<64x16xf32>, vector<16x144xf32>, vector<64x144xf32> -> vector<64x144xf32>
    %40 = vector.shape_cast %36 : vector<64x144xf32> to vector<1x64x144xf32>
    %41 = vector.shape_cast %39 : vector<64x144xf32> to vector<1x64x144xf32>
    %42 = tpu.concatenate %40, %41 in 0 : vector<1x64x144xf32>, vector<1x64x144xf32> -> vector<2x64x144xf32>
    %c0_17 = arith.constant 0 : index
    %c0_18 = arith.constant 0 : index
    %43 = vector.load %arg4[%c0_17, %c0_18] : memref<64x1xf32, #tpu.memory_space<vmem>>, vector<64x1xf32>
    %c0_19 = arith.constant 0 : index
    %c0_20 = arith.constant 0 : index
    %44 = vector.load %arg5[%c0_19, %c0_20] : memref<64x1xf32, #tpu.memory_space<vmem>>, vector<64x1xf32>
    %cst_21 = arith.constant dense<0.000000e+00> : vector<2x64xf32>
    %45 = vector.multi_reduction <add>, %42, %cst_21 [2] : vector<2x64x144xf32> to vector<2x64xf32>
    %46 = vector.shape_cast %45 : vector<2x64xf32> to vector<2x64x1xf32>
    %cst_22 = arith.constant dense<0.000000e+00> : vector<64x1xf32>
    %47 = vector.multi_reduction <add>, %46, %cst_22 [0] : vector<2x64x1xf32> to vector<64x1xf32>
    %48 = vector.shape_cast %47 : vector<64x1xf32> to vector<1x64x1xf32>
    %49 = arith.mulf %42, %42 : vector<2x64x144xf32>
    %cst_23 = arith.constant dense<0.000000e+00> : vector<2x64xf32>
    %50 = vector.multi_reduction <add>, %49, %cst_23 [2] : vector<2x64x144xf32> to vector<2x64xf32>
    %51 = vector.shape_cast %50 : vector<2x64xf32> to vector<2x64x1xf32>
    %cst_24 = arith.constant dense<0.000000e+00> : vector<64x1xf32>
    %52 = vector.multi_reduction <add>, %51, %cst_24 [0] : vector<2x64x1xf32> to vector<64x1xf32>
    %53 = vector.shape_cast %52 : vector<64x1xf32> to vector<1x64x1xf32>
    %cst_25 = arith.constant 0.00347222225 : f32
    %54 = vector.broadcast %cst_25 : f32 to vector<1x64x1xf32>
    %55 = arith.mulf %48, %54 : vector<1x64x1xf32>
    %cst_26 = arith.constant 0.00347222225 : f32
    %56 = vector.broadcast %cst_26 : f32 to vector<1x64x1xf32>
    %57 = arith.mulf %53, %56 : vector<1x64x1xf32>
    %58 = arith.mulf %55, %55 : vector<1x64x1xf32>
    %59 = arith.subf %57, %58 : vector<1x64x1xf32>
    %cst_27 = arith.constant 0.000000e+00 : f32
    %60 = vector.broadcast %cst_27 : f32 to vector<1x64x1xf32>
    %61 = arith.maximumf %59, %60 : vector<1x64x1xf32>
    %62 = vector.broadcast %55 : vector<1x64x1xf32> to vector<2x64x144xf32>
    %63 = arith.subf %42, %62 : vector<2x64x144xf32>
    %cst_28 = arith.constant 9.99999974E-6 : f32
    %64 = vector.broadcast %cst_28 : f32 to vector<1x64x1xf32>
    %65 = arith.addf %61, %64 : vector<1x64x1xf32>
    %66 = math.rsqrt %65 : vector<1x64x1xf32>
    %67 = vector.broadcast %66 : vector<1x64x1xf32> to vector<2x64x144xf32>
    %68 = arith.mulf %63, %67 : vector<2x64x144xf32>
    %69 = vector.shape_cast %43 : vector<64x1xf32> to vector<1x64x1xf32>
    %70 = vector.broadcast %69 : vector<1x64x1xf32> to vector<2x64x144xf32>
    %71 = arith.mulf %68, %70 : vector<2x64x144xf32>
    %72 = vector.shape_cast %44 : vector<64x1xf32> to vector<1x64x1xf32>
    %73 = vector.broadcast %72 : vector<1x64x1xf32> to vector<2x64x144xf32>
    %74 = arith.addf %71, %73 : vector<2x64x144xf32>
    %75 = vector.extract_strided_slice %74 {offsets = [0, 0, 0], sizes = [2, 16, 144], strides = [1, 1, 1]} : vector<2x64x144xf32> to vector<2x16x144xf32>
    %76 = vector.extract_strided_slice %74 {offsets = [0, 16, 0], sizes = [2, 16, 144], strides = [1, 1, 1]} : vector<2x64x144xf32> to vector<2x16x144xf32>
    %77 = vector.extract_strided_slice %74 {offsets = [0, 32, 0], sizes = [2, 32, 144], strides = [1, 1, 1]} : vector<2x64x144xf32> to vector<2x32x144xf32>
    %c0_29 = arith.constant 0 : index
    %c0_30 = arith.constant 0 : index
    %c0_31 = arith.constant 0 : index
    %78 = vector.load %arg6[%c0_29, %c0_30, %c0_31] : memref<9x1x144xf32, #tpu.memory_space<vmem>>, vector<9x1x144xf32>
    %c0_32 = arith.constant 0 : index
    %c0_33 = arith.constant 0 : index
    %c0_34 = arith.constant 0 : index
    %79 = vector.load %arg7[%c0_32, %c0_33, %c0_34] : memref<9x16x1xf32, #tpu.memory_space<vmem>>, vector<9x16x1xf32>
    %80 = vector.shape_cast %32 : vector<2x16x144xf32> to vector<32x144xf32>
    %cst_35 = arith.constant 0.000000e+00 : f32
    %81 = vector.broadcast %cst_35 : f32 to vector<2x16x144xf32>
    %cst_36 = arith.constant 0.000000e+00 : f32
    %82 = vector.broadcast %cst_36 : f32 to vector<32x13xf32>
    %83 = vector.extract_strided_slice %80 {offsets = [0, 0], sizes = [32, 131], strides = [1, 1]} : vector<32x144xf32> to vector<32x131xf32>
    %84 = tpu.concatenate %82, %83 in 1 : vector<32x13xf32>, vector<32x131xf32> -> vector<32x144xf32>
    %85 = vector.shape_cast %84 : vector<32x144xf32> to vector<2x16x144xf32>
    %86 = vector.extract_strided_slice %78 {offsets = [0, 0, 0], sizes = [1, 1, 144], strides = [1, 1, 1]} : vector<9x1x144xf32> to vector<1x1x144xf32>
    %87 = vector.shape_cast %86 : vector<1x1x144xf32> to vector<1x144xf32>
    %88 = vector.extract_strided_slice %79 {offsets = [0, 0, 0], sizes = [1, 16, 1], strides = [1, 1, 1]} : vector<9x16x1xf32> to vector<1x16x1xf32>
    %89 = vector.shape_cast %88 : vector<1x16x1xf32> to vector<16x1xf32>
    %90 = vector.broadcast %87 : vector<1x144xf32> to vector<16x144xf32>
    %91 = vector.broadcast %89 : vector<16x1xf32> to vector<16x144xf32>
    %92 = arith.mulf %90, %91 : vector<16x144xf32>
    %93 = vector.shape_cast %92 : vector<16x144xf32> to vector<1x16x144xf32>
    %94 = vector.broadcast %93 : vector<1x16x144xf32> to vector<2x16x144xf32>
    %95 = arith.mulf %85, %94 : vector<2x16x144xf32>
    %96 = arith.addf %81, %95 : vector<2x16x144xf32>
    %cst_37 = arith.constant 0.000000e+00 : f32
    %97 = vector.broadcast %cst_37 : f32 to vector<32x12xf32>
    %98 = vector.extract_strided_slice %80 {offsets = [0, 0], sizes = [32, 132], strides = [1, 1]} : vector<32x144xf32> to vector<32x132xf32>
    %99 = tpu.concatenate %97, %98 in 1 : vector<32x12xf32>, vector<32x132xf32> -> vector<32x144xf32>
    %100 = vector.shape_cast %99 : vector<32x144xf32> to vector<2x16x144xf32>
    %101 = vector.extract_strided_slice %78 {offsets = [1, 0, 0], sizes = [1, 1, 144], strides = [1, 1, 1]} : vector<9x1x144xf32> to vector<1x1x144xf32>
    %102 = vector.shape_cast %101 : vector<1x1x144xf32> to vector<1x144xf32>
    %103 = vector.extract_strided_slice %79 {offsets = [1, 0, 0], sizes = [1, 16, 1], strides = [1, 1, 1]} : vector<9x16x1xf32> to vector<1x16x1xf32>
    %104 = vector.shape_cast %103 : vector<1x16x1xf32> to vector<16x1xf32>
    %105 = vector.broadcast %102 : vector<1x144xf32> to vector<16x144xf32>
    %106 = vector.broadcast %104 : vector<16x1xf32> to vector<16x144xf32>
    %107 = arith.mulf %105, %106 : vector<16x144xf32>
    %108 = vector.shape_cast %107 : vector<16x144xf32> to vector<1x16x144xf32>
    %109 = vector.broadcast %108 : vector<1x16x144xf32> to vector<2x16x144xf32>
    %110 = arith.mulf %100, %109 : vector<2x16x144xf32>
    %111 = arith.addf %96, %110 : vector<2x16x144xf32>
    %cst_38 = arith.constant 0.000000e+00 : f32
    %112 = vector.broadcast %cst_38 : f32 to vector<32x11xf32>
    %113 = vector.extract_strided_slice %80 {offsets = [0, 0], sizes = [32, 133], strides = [1, 1]} : vector<32x144xf32> to vector<32x133xf32>
    %114 = tpu.concatenate %112, %113 in 1 : vector<32x11xf32>, vector<32x133xf32> -> vector<32x144xf32>
    %115 = vector.shape_cast %114 : vector<32x144xf32> to vector<2x16x144xf32>
    %116 = vector.extract_strided_slice %78 {offsets = [2, 0, 0], sizes = [1, 1, 144], strides = [1, 1, 1]} : vector<9x1x144xf32> to vector<1x1x144xf32>
    %117 = vector.shape_cast %116 : vector<1x1x144xf32> to vector<1x144xf32>
    %118 = vector.extract_strided_slice %79 {offsets = [2, 0, 0], sizes = [1, 16, 1], strides = [1, 1, 1]} : vector<9x16x1xf32> to vector<1x16x1xf32>
    %119 = vector.shape_cast %118 : vector<1x16x1xf32> to vector<16x1xf32>
    %120 = vector.broadcast %117 : vector<1x144xf32> to vector<16x144xf32>
    %121 = vector.broadcast %119 : vector<16x1xf32> to vector<16x144xf32>
    %122 = arith.mulf %120, %121 : vector<16x144xf32>
    %123 = vector.shape_cast %122 : vector<16x144xf32> to vector<1x16x144xf32>
    %124 = vector.broadcast %123 : vector<1x16x144xf32> to vector<2x16x144xf32>
    %125 = arith.mulf %115, %124 : vector<2x16x144xf32>
    %126 = arith.addf %111, %125 : vector<2x16x144xf32>
    %cst_39 = arith.constant 0.000000e+00 : f32
    %127 = vector.broadcast %cst_39 : f32 to vector<32x1xf32>
    %128 = vector.extract_strided_slice %80 {offsets = [0, 0], sizes = [32, 143], strides = [1, 1]} : vector<32x144xf32> to vector<32x143xf32>
    %129 = tpu.concatenate %127, %128 in 1 : vector<32x1xf32>, vector<32x143xf32> -> vector<32x144xf32>
    %130 = vector.shape_cast %129 : vector<32x144xf32> to vector<2x16x144xf32>
    %131 = vector.extract_strided_slice %78 {offsets = [3, 0, 0], sizes = [1, 1, 144], strides = [1, 1, 1]} : vector<9x1x144xf32> to vector<1x1x144xf32>
    %132 = vector.shape_cast %131 : vector<1x1x144xf32> to vector<1x144xf32>
    %133 = vector.extract_strided_slice %79 {offsets = [3, 0, 0], sizes = [1, 16, 1], strides = [1, 1, 1]} : vector<9x16x1xf32> to vector<1x16x1xf32>
    %134 = vector.shape_cast %133 : vector<1x16x1xf32> to vector<16x1xf32>
    %135 = vector.broadcast %132 : vector<1x144xf32> to vector<16x144xf32>
    %136 = vector.broadcast %134 : vector<16x1xf32> to vector<16x144xf32>
    %137 = arith.mulf %135, %136 : vector<16x144xf32>
    %138 = vector.shape_cast %137 : vector<16x144xf32> to vector<1x16x144xf32>
    %139 = vector.broadcast %138 : vector<1x16x144xf32> to vector<2x16x144xf32>
    %140 = arith.mulf %130, %139 : vector<2x16x144xf32>
    %141 = arith.addf %126, %140 : vector<2x16x144xf32>
    %142 = vector.shape_cast %80 : vector<32x144xf32> to vector<2x16x144xf32>
    %143 = vector.extract_strided_slice %78 {offsets = [4, 0, 0], sizes = [1, 1, 144], strides = [1, 1, 1]} : vector<9x1x144xf32> to vector<1x1x144xf32>
    %144 = vector.shape_cast %143 : vector<1x1x144xf32> to vector<1x144xf32>
    %145 = vector.extract_strided_slice %79 {offsets = [4, 0, 0], sizes = [1, 16, 1], strides = [1, 1, 1]} : vector<9x16x1xf32> to vector<1x16x1xf32>
    %146 = vector.shape_cast %145 : vector<1x16x1xf32> to vector<16x1xf32>
    %147 = vector.broadcast %144 : vector<1x144xf32> to vector<16x144xf32>
    %148 = vector.broadcast %146 : vector<16x1xf32> to vector<16x144xf32>
    %149 = arith.mulf %147, %148 : vector<16x144xf32>
    %150 = vector.shape_cast %149 : vector<16x144xf32> to vector<1x16x144xf32>
    %151 = vector.broadcast %150 : vector<1x16x144xf32> to vector<2x16x144xf32>
    %152 = arith.mulf %142, %151 : vector<2x16x144xf32>
    %153 = arith.addf %141, %152 : vector<2x16x144xf32>
    %cst_40 = arith.constant 0.000000e+00 : f32
    %154 = vector.broadcast %cst_40 : f32 to vector<32x1xf32>
    %155 = vector.extract_strided_slice %80 {offsets = [0, 1], sizes = [32, 143], strides = [1, 1]} : vector<32x144xf32> to vector<32x143xf32>
    %156 = tpu.concatenate %155, %154 in 1 : vector<32x143xf32>, vector<32x1xf32> -> vector<32x144xf32>
    %157 = vector.shape_cast %156 : vector<32x144xf32> to vector<2x16x144xf32>
    %158 = vector.extract_strided_slice %78 {offsets = [5, 0, 0], sizes = [1, 1, 144], strides = [1, 1, 1]} : vector<9x1x144xf32> to vector<1x1x144xf32>
    %159 = vector.shape_cast %158 : vector<1x1x144xf32> to vector<1x144xf32>
    %160 = vector.extract_strided_slice %79 {offsets = [5, 0, 0], sizes = [1, 16, 1], strides = [1, 1, 1]} : vector<9x16x1xf32> to vector<1x16x1xf32>
    %161 = vector.shape_cast %160 : vector<1x16x1xf32> to vector<16x1xf32>
    %162 = vector.broadcast %159 : vector<1x144xf32> to vector<16x144xf32>
    %163 = vector.broadcast %161 : vector<16x1xf32> to vector<16x144xf32>
    %164 = arith.mulf %162, %163 : vector<16x144xf32>
    %165 = vector.shape_cast %164 : vector<16x144xf32> to vector<1x16x144xf32>
    %166 = vector.broadcast %165 : vector<1x16x144xf32> to vector<2x16x144xf32>
    %167 = arith.mulf %157, %166 : vector<2x16x144xf32>
    %168 = arith.addf %153, %167 : vector<2x16x144xf32>
    %cst_41 = arith.constant 0.000000e+00 : f32
    %169 = vector.broadcast %cst_41 : f32 to vector<32x11xf32>
    %170 = vector.extract_strided_slice %80 {offsets = [0, 11], sizes = [32, 133], strides = [1, 1]} : vector<32x144xf32> to vector<32x133xf32>
    %171 = tpu.concatenate %170, %169 in 1 : vector<32x133xf32>, vector<32x11xf32> -> vector<32x144xf32>
    %172 = vector.shape_cast %171 : vector<32x144xf32> to vector<2x16x144xf32>
    %173 = vector.extract_strided_slice %78 {offsets = [6, 0, 0], sizes = [1, 1, 144], strides = [1, 1, 1]} : vector<9x1x144xf32> to vector<1x1x144xf32>
    %174 = vector.shape_cast %173 : vector<1x1x144xf32> to vector<1x144xf32>
    %175 = vector.extract_strided_slice %79 {offsets = [6, 0, 0], sizes = [1, 16, 1], strides = [1, 1, 1]} : vector<9x16x1xf32> to vector<1x16x1xf32>
    %176 = vector.shape_cast %175 : vector<1x16x1xf32> to vector<16x1xf32>
    %177 = vector.broadcast %174 : vector<1x144xf32> to vector<16x144xf32>
    %178 = vector.broadcast %176 : vector<16x1xf32> to vector<16x144xf32>
    %179 = arith.mulf %177, %178 : vector<16x144xf32>
    %180 = vector.shape_cast %179 : vector<16x144xf32> to vector<1x16x144xf32>
    %181 = vector.broadcast %180 : vector<1x16x144xf32> to vector<2x16x144xf32>
    %182 = arith.mulf %172, %181 : vector<2x16x144xf32>
    %183 = arith.addf %168, %182 : vector<2x16x144xf32>
    %cst_42 = arith.constant 0.000000e+00 : f32
    %184 = vector.broadcast %cst_42 : f32 to vector<32x12xf32>
    %185 = vector.extract_strided_slice %80 {offsets = [0, 12], sizes = [32, 132], strides = [1, 1]} : vector<32x144xf32> to vector<32x132xf32>
    %186 = tpu.concatenate %185, %184 in 1 : vector<32x132xf32>, vector<32x12xf32> -> vector<32x144xf32>
    %187 = vector.shape_cast %186 : vector<32x144xf32> to vector<2x16x144xf32>
    %188 = vector.extract_strided_slice %78 {offsets = [7, 0, 0], sizes = [1, 1, 144], strides = [1, 1, 1]} : vector<9x1x144xf32> to vector<1x1x144xf32>
    %189 = vector.shape_cast %188 : vector<1x1x144xf32> to vector<1x144xf32>
    %190 = vector.extract_strided_slice %79 {offsets = [7, 0, 0], sizes = [1, 16, 1], strides = [1, 1, 1]} : vector<9x16x1xf32> to vector<1x16x1xf32>
    %191 = vector.shape_cast %190 : vector<1x16x1xf32> to vector<16x1xf32>
    %192 = vector.broadcast %189 : vector<1x144xf32> to vector<16x144xf32>
    %193 = vector.broadcast %191 : vector<16x1xf32> to vector<16x144xf32>
    %194 = arith.mulf %192, %193 : vector<16x144xf32>
    %195 = vector.shape_cast %194 : vector<16x144xf32> to vector<1x16x144xf32>
    %196 = vector.broadcast %195 : vector<1x16x144xf32> to vector<2x16x144xf32>
    %197 = arith.mulf %187, %196 : vector<2x16x144xf32>
    %198 = arith.addf %183, %197 : vector<2x16x144xf32>
    %cst_43 = arith.constant 0.000000e+00 : f32
    %199 = vector.broadcast %cst_43 : f32 to vector<32x13xf32>
    %200 = vector.extract_strided_slice %80 {offsets = [0, 13], sizes = [32, 131], strides = [1, 1]} : vector<32x144xf32> to vector<32x131xf32>
    %201 = tpu.concatenate %200, %199 in 1 : vector<32x131xf32>, vector<32x13xf32> -> vector<32x144xf32>
    %202 = vector.shape_cast %201 : vector<32x144xf32> to vector<2x16x144xf32>
    %203 = vector.extract_strided_slice %78 {offsets = [8, 0, 0], sizes = [1, 1, 144], strides = [1, 1, 1]} : vector<9x1x144xf32> to vector<1x1x144xf32>
    %204 = vector.shape_cast %203 : vector<1x1x144xf32> to vector<1x144xf32>
    %205 = vector.extract_strided_slice %79 {offsets = [8, 0, 0], sizes = [1, 16, 1], strides = [1, 1, 1]} : vector<9x16x1xf32> to vector<1x16x1xf32>
    %206 = vector.shape_cast %205 : vector<1x16x1xf32> to vector<16x1xf32>
    %207 = vector.broadcast %204 : vector<1x144xf32> to vector<16x144xf32>
    %208 = vector.broadcast %206 : vector<16x1xf32> to vector<16x144xf32>
    %209 = arith.mulf %207, %208 : vector<16x144xf32>
    %210 = vector.shape_cast %209 : vector<16x144xf32> to vector<1x16x144xf32>
    %211 = vector.broadcast %210 : vector<1x16x144xf32> to vector<2x16x144xf32>
    %212 = arith.mulf %202, %211 : vector<2x16x144xf32>
    %213 = arith.addf %198, %212 : vector<2x16x144xf32>
    %214 = vector.shape_cast %213 : vector<2x16x144xf32> to vector<32x144xf32>
    %c0_44 = arith.constant 0 : index
    %c0_45 = arith.constant 0 : index
    %215 = vector.load %arg10[%c0_44, %c0_45] : memref<144x36xf32, #tpu.memory_space<vmem>>, vector<144x36xf32>
    %cst_46 = arith.constant dense<0.000000e+00> : vector<32x36xf32>
    %216 = tpu.matmul %214, %215, %cst_46 {dimension_numbers = #tpu.dot_dimension_numbers<[1], [0], [0], [1], [0, 0, 1, 1], [], []>} : vector<32x144xf32>, vector<144x36xf32>, vector<32x36xf32> -> vector<32x36xf32>
    %217 = vector.shape_cast %216 : vector<32x36xf32> to vector<2x16x36xf32>
    %c0_47 = arith.constant 0 : index
    %c0_48 = arith.constant 0 : index
    %218 = vector.load %arg8[%c0_47, %c0_48] : memref<16x1xf32, #tpu.memory_space<vmem>>, vector<16x1xf32>
    %c0_49 = arith.constant 0 : index
    %c0_50 = arith.constant 0 : index
    %219 = vector.load %arg9[%c0_49, %c0_50] : memref<16x1xf32, #tpu.memory_space<vmem>>, vector<16x1xf32>
    %cst_51 = arith.constant dense<0.000000e+00> : vector<2x16xf32>
    %220 = vector.multi_reduction <add>, %217, %cst_51 [2] : vector<2x16x36xf32> to vector<2x16xf32>
    %221 = vector.shape_cast %220 : vector<2x16xf32> to vector<2x16x1xf32>
    %cst_52 = arith.constant dense<0.000000e+00> : vector<16x1xf32>
    %222 = vector.multi_reduction <add>, %221, %cst_52 [0] : vector<2x16x1xf32> to vector<16x1xf32>
    %223 = vector.shape_cast %222 : vector<16x1xf32> to vector<1x16x1xf32>
    %224 = arith.mulf %217, %217 : vector<2x16x36xf32>
    %cst_53 = arith.constant dense<0.000000e+00> : vector<2x16xf32>
    %225 = vector.multi_reduction <add>, %224, %cst_53 [2] : vector<2x16x36xf32> to vector<2x16xf32>
    %226 = vector.shape_cast %225 : vector<2x16xf32> to vector<2x16x1xf32>
    %cst_54 = arith.constant dense<0.000000e+00> : vector<16x1xf32>
    %227 = vector.multi_reduction <add>, %226, %cst_54 [0] : vector<2x16x1xf32> to vector<16x1xf32>
    %228 = vector.shape_cast %227 : vector<16x1xf32> to vector<1x16x1xf32>
    %cst_55 = arith.constant 0.013888889 : f32
    %229 = vector.broadcast %cst_55 : f32 to vector<1x16x1xf32>
    %230 = arith.mulf %223, %229 : vector<1x16x1xf32>
    %cst_56 = arith.constant 0.013888889 : f32
    %231 = vector.broadcast %cst_56 : f32 to vector<1x16x1xf32>
    %232 = arith.mulf %228, %231 : vector<1x16x1xf32>
    %233 = arith.mulf %230, %230 : vector<1x16x1xf32>
    %234 = arith.subf %232, %233 : vector<1x16x1xf32>
    %cst_57 = arith.constant 0.000000e+00 : f32
    %235 = vector.broadcast %cst_57 : f32 to vector<1x16x1xf32>
    %236 = arith.maximumf %234, %235 : vector<1x16x1xf32>
    %237 = vector.broadcast %230 : vector<1x16x1xf32> to vector<2x16x36xf32>
    %238 = arith.subf %217, %237 : vector<2x16x36xf32>
    %cst_58 = arith.constant 9.99999974E-6 : f32
    %239 = vector.broadcast %cst_58 : f32 to vector<1x16x1xf32>
    %240 = arith.addf %236, %239 : vector<1x16x1xf32>
    %241 = math.rsqrt %240 : vector<1x16x1xf32>
    %242 = vector.broadcast %241 : vector<1x16x1xf32> to vector<2x16x36xf32>
    %243 = arith.mulf %238, %242 : vector<2x16x36xf32>
    %244 = vector.shape_cast %218 : vector<16x1xf32> to vector<1x16x1xf32>
    %245 = vector.broadcast %244 : vector<1x16x1xf32> to vector<2x16x36xf32>
    %246 = arith.mulf %243, %245 : vector<2x16x36xf32>
    %247 = vector.shape_cast %219 : vector<16x1xf32> to vector<1x16x1xf32>
    %248 = vector.broadcast %247 : vector<1x16x1xf32> to vector<2x16x36xf32>
    %249 = arith.addf %246, %248 : vector<2x16x36xf32>
    %c0_59 = arith.constant 0 : index
    %c0_60 = arith.constant 0 : index
    %c0_61 = arith.constant 0 : index
    %250 = vector.load %arg12[%c0_59, %c0_60, %c0_61] : memref<25x16x1xf32, #tpu.memory_space<vmem>>, vector<25x16x1xf32>
    %c0_62 = arith.constant 0 : index
    %c0_63 = arith.constant 0 : index
    %c0_64 = arith.constant 0 : index
    %251 = vector.load %arg11[%c0_62, %c0_63, %c0_64] : memref<25x1x144xf32, #tpu.memory_space<vmem>>, vector<25x1x144xf32>
    %252 = vector.shape_cast %32 : vector<2x16x144xf32> to vector<32x144xf32>
    %cst_65 = arith.constant 0.000000e+00 : f32
    %253 = vector.broadcast %cst_65 : f32 to vector<2x16x144xf32>
    %cst_66 = arith.constant 0.000000e+00 : f32
    %254 = vector.broadcast %cst_66 : f32 to vector<32x26xf32>
    %255 = vector.extract_strided_slice %252 {offsets = [0, 0], sizes = [32, 118], strides = [1, 1]} : vector<32x144xf32> to vector<32x118xf32>
    %256 = tpu.concatenate %254, %255 in 1 : vector<32x26xf32>, vector<32x118xf32> -> vector<32x144xf32>
    %257 = vector.shape_cast %256 : vector<32x144xf32> to vector<2x16x144xf32>
    %258 = vector.extract_strided_slice %251 {offsets = [0, 0, 0], sizes = [1, 1, 144], strides = [1, 1, 1]} : vector<25x1x144xf32> to vector<1x1x144xf32>
    %259 = vector.shape_cast %258 : vector<1x1x144xf32> to vector<1x144xf32>
    %260 = vector.extract_strided_slice %250 {offsets = [0, 0, 0], sizes = [1, 16, 1], strides = [1, 1, 1]} : vector<25x16x1xf32> to vector<1x16x1xf32>
    %261 = vector.shape_cast %260 : vector<1x16x1xf32> to vector<16x1xf32>
    %262 = vector.broadcast %259 : vector<1x144xf32> to vector<16x144xf32>
    %263 = vector.broadcast %261 : vector<16x1xf32> to vector<16x144xf32>
    %264 = arith.mulf %262, %263 : vector<16x144xf32>
    %265 = vector.shape_cast %264 : vector<16x144xf32> to vector<1x16x144xf32>
    %266 = vector.broadcast %265 : vector<1x16x144xf32> to vector<2x16x144xf32>
    %267 = arith.mulf %257, %266 : vector<2x16x144xf32>
    %268 = arith.addf %253, %267 : vector<2x16x144xf32>
    %cst_67 = arith.constant 0.000000e+00 : f32
    %269 = vector.broadcast %cst_67 : f32 to vector<32x25xf32>
    %270 = vector.extract_strided_slice %252 {offsets = [0, 0], sizes = [32, 119], strides = [1, 1]} : vector<32x144xf32> to vector<32x119xf32>
    %271 = tpu.concatenate %269, %270 in 1 : vector<32x25xf32>, vector<32x119xf32> -> vector<32x144xf32>
    %272 = vector.shape_cast %271 : vector<32x144xf32> to vector<2x16x144xf32>
    %273 = vector.extract_strided_slice %251 {offsets = [1, 0, 0], sizes = [1, 1, 144], strides = [1, 1, 1]} : vector<25x1x144xf32> to vector<1x1x144xf32>
    %274 = vector.shape_cast %273 : vector<1x1x144xf32> to vector<1x144xf32>
    %275 = vector.extract_strided_slice %250 {offsets = [1, 0, 0], sizes = [1, 16, 1], strides = [1, 1, 1]} : vector<25x16x1xf32> to vector<1x16x1xf32>
    %276 = vector.shape_cast %275 : vector<1x16x1xf32> to vector<16x1xf32>
    %277 = vector.broadcast %274 : vector<1x144xf32> to vector<16x144xf32>
    %278 = vector.broadcast %276 : vector<16x1xf32> to vector<16x144xf32>
    %279 = arith.mulf %277, %278 : vector<16x144xf32>
    %280 = vector.shape_cast %279 : vector<16x144xf32> to vector<1x16x144xf32>
    %281 = vector.broadcast %280 : vector<1x16x144xf32> to vector<2x16x144xf32>
    %282 = arith.mulf %272, %281 : vector<2x16x144xf32>
    %283 = arith.addf %268, %282 : vector<2x16x144xf32>
    %cst_68 = arith.constant 0.000000e+00 : f32
    %284 = vector.broadcast %cst_68 : f32 to vector<32x24xf32>
    %285 = vector.extract_strided_slice %252 {offsets = [0, 0], sizes = [32, 120], strides = [1, 1]} : vector<32x144xf32> to vector<32x120xf32>
    %286 = tpu.concatenate %284, %285 in 1 : vector<32x24xf32>, vector<32x120xf32> -> vector<32x144xf32>
    %287 = vector.shape_cast %286 : vector<32x144xf32> to vector<2x16x144xf32>
    %288 = vector.extract_strided_slice %251 {offsets = [2, 0, 0], sizes = [1, 1, 144], strides = [1, 1, 1]} : vector<25x1x144xf32> to vector<1x1x144xf32>
    %289 = vector.shape_cast %288 : vector<1x1x144xf32> to vector<1x144xf32>
    %290 = vector.extract_strided_slice %250 {offsets = [2, 0, 0], sizes = [1, 16, 1], strides = [1, 1, 1]} : vector<25x16x1xf32> to vector<1x16x1xf32>
    %291 = vector.shape_cast %290 : vector<1x16x1xf32> to vector<16x1xf32>
    %292 = vector.broadcast %289 : vector<1x144xf32> to vector<16x144xf32>
    %293 = vector.broadcast %291 : vector<16x1xf32> to vector<16x144xf32>
    %294 = arith.mulf %292, %293 : vector<16x144xf32>
    %295 = vector.shape_cast %294 : vector<16x144xf32> to vector<1x16x144xf32>
    %296 = vector.broadcast %295 : vector<1x16x144xf32> to vector<2x16x144xf32>
    %297 = arith.mulf %287, %296 : vector<2x16x144xf32>
    %298 = arith.addf %283, %297 : vector<2x16x144xf32>
    %cst_69 = arith.constant 0.000000e+00 : f32
    %299 = vector.broadcast %cst_69 : f32 to vector<32x23xf32>
    %300 = vector.extract_strided_slice %252 {offsets = [0, 0], sizes = [32, 121], strides = [1, 1]} : vector<32x144xf32> to vector<32x121xf32>
    %301 = tpu.concatenate %299, %300 in 1 : vector<32x23xf32>, vector<32x121xf32> -> vector<32x144xf32>
    %302 = vector.shape_cast %301 : vector<32x144xf32> to vector<2x16x144xf32>
    %303 = vector.extract_strided_slice %251 {offsets = [3, 0, 0], sizes = [1, 1, 144], strides = [1, 1, 1]} : vector<25x1x144xf32> to vector<1x1x144xf32>
    %304 = vector.shape_cast %303 : vector<1x1x144xf32> to vector<1x144xf32>
    %305 = vector.extract_strided_slice %250 {offsets = [3, 0, 0], sizes = [1, 16, 1], strides = [1, 1, 1]} : vector<25x16x1xf32> to vector<1x16x1xf32>
    %306 = vector.shape_cast %305 : vector<1x16x1xf32> to vector<16x1xf32>
    %307 = vector.broadcast %304 : vector<1x144xf32> to vector<16x144xf32>
    %308 = vector.broadcast %306 : vector<16x1xf32> to vector<16x144xf32>
    %309 = arith.mulf %307, %308 : vector<16x144xf32>
    %310 = vector.shape_cast %309 : vector<16x144xf32> to vector<1x16x144xf32>
    %311 = vector.broadcast %310 : vector<1x16x144xf32> to vector<2x16x144xf32>
    %312 = arith.mulf %302, %311 : vector<2x16x144xf32>
    %313 = arith.addf %298, %312 : vector<2x16x144xf32>
    %cst_70 = arith.constant 0.000000e+00 : f32
    %314 = vector.broadcast %cst_70 : f32 to vector<32x22xf32>
    %315 = vector.extract_strided_slice %252 {offsets = [0, 0], sizes = [32, 122], strides = [1, 1]} : vector<32x144xf32> to vector<32x122xf32>
    %316 = tpu.concatenate %314, %315 in 1 : vector<32x22xf32>, vector<32x122xf32> -> vector<32x144xf32>
    %317 = vector.shape_cast %316 : vector<32x144xf32> to vector<2x16x144xf32>
    %318 = vector.extract_strided_slice %251 {offsets = [4, 0, 0], sizes = [1, 1, 144], strides = [1, 1, 1]} : vector<25x1x144xf32> to vector<1x1x144xf32>
    %319 = vector.shape_cast %318 : vector<1x1x144xf32> to vector<1x144xf32>
    %320 = vector.extract_strided_slice %250 {offsets = [4, 0, 0], sizes = [1, 16, 1], strides = [1, 1, 1]} : vector<25x16x1xf32> to vector<1x16x1xf32>
    %321 = vector.shape_cast %320 : vector<1x16x1xf32> to vector<16x1xf32>
    %322 = vector.broadcast %319 : vector<1x144xf32> to vector<16x144xf32>
    %323 = vector.broadcast %321 : vector<16x1xf32> to vector<16x144xf32>
    %324 = arith.mulf %322, %323 : vector<16x144xf32>
    %325 = vector.shape_cast %324 : vector<16x144xf32> to vector<1x16x144xf32>
    %326 = vector.broadcast %325 : vector<1x16x144xf32> to vector<2x16x144xf32>
    %327 = arith.mulf %317, %326 : vector<2x16x144xf32>
    %328 = arith.addf %313, %327 : vector<2x16x144xf32>
    %cst_71 = arith.constant 0.000000e+00 : f32
    %329 = vector.broadcast %cst_71 : f32 to vector<32x14xf32>
    %330 = vector.extract_strided_slice %252 {offsets = [0, 0], sizes = [32, 130], strides = [1, 1]} : vector<32x144xf32> to vector<32x130xf32>
    %331 = tpu.concatenate %329, %330 in 1 : vector<32x14xf32>, vector<32x130xf32> -> vector<32x144xf32>
    %332 = vector.shape_cast %331 : vector<32x144xf32> to vector<2x16x144xf32>
    %333 = vector.extract_strided_slice %251 {offsets = [5, 0, 0], sizes = [1, 1, 144], strides = [1, 1, 1]} : vector<25x1x144xf32> to vector<1x1x144xf32>
    %334 = vector.shape_cast %333 : vector<1x1x144xf32> to vector<1x144xf32>
    %335 = vector.extract_strided_slice %250 {offsets = [5, 0, 0], sizes = [1, 16, 1], strides = [1, 1, 1]} : vector<25x16x1xf32> to vector<1x16x1xf32>
    %336 = vector.shape_cast %335 : vector<1x16x1xf32> to vector<16x1xf32>
    %337 = vector.broadcast %334 : vector<1x144xf32> to vector<16x144xf32>
    %338 = vector.broadcast %336 : vector<16x1xf32> to vector<16x144xf32>
    %339 = arith.mulf %337, %338 : vector<16x144xf32>
    %340 = vector.shape_cast %339 : vector<16x144xf32> to vector<1x16x144xf32>
    %341 = vector.broadcast %340 : vector<1x16x144xf32> to vector<2x16x144xf32>
    %342 = arith.mulf %332, %341 : vector<2x16x144xf32>
    %343 = arith.addf %328, %342 : vector<2x16x144xf32>
    %cst_72 = arith.constant 0.000000e+00 : f32
    %344 = vector.broadcast %cst_72 : f32 to vector<32x13xf32>
    %345 = vector.extract_strided_slice %252 {offsets = [0, 0], sizes = [32, 131], strides = [1, 1]} : vector<32x144xf32> to vector<32x131xf32>
    %346 = tpu.concatenate %344, %345 in 1 : vector<32x13xf32>, vector<32x131xf32> -> vector<32x144xf32>
    %347 = vector.shape_cast %346 : vector<32x144xf32> to vector<2x16x144xf32>
    %348 = vector.extract_strided_slice %251 {offsets = [6, 0, 0], sizes = [1, 1, 144], strides = [1, 1, 1]} : vector<25x1x144xf32> to vector<1x1x144xf32>
    %349 = vector.shape_cast %348 : vector<1x1x144xf32> to vector<1x144xf32>
    %350 = vector.extract_strided_slice %250 {offsets = [6, 0, 0], sizes = [1, 16, 1], strides = [1, 1, 1]} : vector<25x16x1xf32> to vector<1x16x1xf32>
    %351 = vector.shape_cast %350 : vector<1x16x1xf32> to vector<16x1xf32>
    %352 = vector.broadcast %349 : vector<1x144xf32> to vector<16x144xf32>
    %353 = vector.broadcast %351 : vector<16x1xf32> to vector<16x144xf32>
    %354 = arith.mulf %352, %353 : vector<16x144xf32>
    %355 = vector.shape_cast %354 : vector<16x144xf32> to vector<1x16x144xf32>
    %356 = vector.broadcast %355 : vector<1x16x144xf32> to vector<2x16x144xf32>
    %357 = arith.mulf %347, %356 : vector<2x16x144xf32>
    %358 = arith.addf %343, %357 : vector<2x16x144xf32>
    %cst_73 = arith.constant 0.000000e+00 : f32
    %359 = vector.broadcast %cst_73 : f32 to vector<32x12xf32>
    %360 = vector.extract_strided_slice %252 {offsets = [0, 0], sizes = [32, 132], strides = [1, 1]} : vector<32x144xf32> to vector<32x132xf32>
    %361 = tpu.concatenate %359, %360 in 1 : vector<32x12xf32>, vector<32x132xf32> -> vector<32x144xf32>
    %362 = vector.shape_cast %361 : vector<32x144xf32> to vector<2x16x144xf32>
    %363 = vector.extract_strided_slice %251 {offsets = [7, 0, 0], sizes = [1, 1, 144], strides = [1, 1, 1]} : vector<25x1x144xf32> to vector<1x1x144xf32>
    %364 = vector.shape_cast %363 : vector<1x1x144xf32> to vector<1x144xf32>
    %365 = vector.extract_strided_slice %250 {offsets = [7, 0, 0], sizes = [1, 16, 1], strides = [1, 1, 1]} : vector<25x16x1xf32> to vector<1x16x1xf32>
    %366 = vector.shape_cast %365 : vector<1x16x1xf32> to vector<16x1xf32>
    %367 = vector.broadcast %364 : vector<1x144xf32> to vector<16x144xf32>
    %368 = vector.broadcast %366 : vector<16x1xf32> to vector<16x144xf32>
    %369 = arith.mulf %367, %368 : vector<16x144xf32>
    %370 = vector.shape_cast %369 : vector<16x144xf32> to vector<1x16x144xf32>
    %371 = vector.broadcast %370 : vector<1x16x144xf32> to vector<2x16x144xf32>
    %372 = arith.mulf %362, %371 : vector<2x16x144xf32>
    %373 = arith.addf %358, %372 : vector<2x16x144xf32>
    %cst_74 = arith.constant 0.000000e+00 : f32
    %374 = vector.broadcast %cst_74 : f32 to vector<32x11xf32>
    %375 = vector.extract_strided_slice %252 {offsets = [0, 0], sizes = [32, 133], strides = [1, 1]} : vector<32x144xf32> to vector<32x133xf32>
    %376 = tpu.concatenate %374, %375 in 1 : vector<32x11xf32>, vector<32x133xf32> -> vector<32x144xf32>
    %377 = vector.shape_cast %376 : vector<32x144xf32> to vector<2x16x144xf32>
    %378 = vector.extract_strided_slice %251 {offsets = [8, 0, 0], sizes = [1, 1, 144], strides = [1, 1, 1]} : vector<25x1x144xf32> to vector<1x1x144xf32>
    %379 = vector.shape_cast %378 : vector<1x1x144xf32> to vector<1x144xf32>
    %380 = vector.extract_strided_slice %250 {offsets = [8, 0, 0], sizes = [1, 16, 1], strides = [1, 1, 1]} : vector<25x16x1xf32> to vector<1x16x1xf32>
    %381 = vector.shape_cast %380 : vector<1x16x1xf32> to vector<16x1xf32>
    %382 = vector.broadcast %379 : vector<1x144xf32> to vector<16x144xf32>
    %383 = vector.broadcast %381 : vector<16x1xf32> to vector<16x144xf32>
    %384 = arith.mulf %382, %383 : vector<16x144xf32>
    %385 = vector.shape_cast %384 : vector<16x144xf32> to vector<1x16x144xf32>
    %386 = vector.broadcast %385 : vector<1x16x144xf32> to vector<2x16x144xf32>
    %387 = arith.mulf %377, %386 : vector<2x16x144xf32>
    %388 = arith.addf %373, %387 : vector<2x16x144xf32>
    %cst_75 = arith.constant 0.000000e+00 : f32
    %389 = vector.broadcast %cst_75 : f32 to vector<32x10xf32>
    %390 = vector.extract_strided_slice %252 {offsets = [0, 0], sizes = [32, 134], strides = [1, 1]} : vector<32x144xf32> to vector<32x134xf32>
    %391 = tpu.concatenate %389, %390 in 1 : vector<32x10xf32>, vector<32x134xf32> -> vector<32x144xf32>
    %392 = vector.shape_cast %391 : vector<32x144xf32> to vector<2x16x144xf32>
    %393 = vector.extract_strided_slice %251 {offsets = [9, 0, 0], sizes = [1, 1, 144], strides = [1, 1, 1]} : vector<25x1x144xf32> to vector<1x1x144xf32>
    %394 = vector.shape_cast %393 : vector<1x1x144xf32> to vector<1x144xf32>
    %395 = vector.extract_strided_slice %250 {offsets = [9, 0, 0], sizes = [1, 16, 1], strides = [1, 1, 1]} : vector<25x16x1xf32> to vector<1x16x1xf32>
    %396 = vector.shape_cast %395 : vector<1x16x1xf32> to vector<16x1xf32>
    %397 = vector.broadcast %394 : vector<1x144xf32> to vector<16x144xf32>
    %398 = vector.broadcast %396 : vector<16x1xf32> to vector<16x144xf32>
    %399 = arith.mulf %397, %398 : vector<16x144xf32>
    %400 = vector.shape_cast %399 : vector<16x144xf32> to vector<1x16x144xf32>
    %401 = vector.broadcast %400 : vector<1x16x144xf32> to vector<2x16x144xf32>
    %402 = arith.mulf %392, %401 : vector<2x16x144xf32>
    %403 = arith.addf %388, %402 : vector<2x16x144xf32>
    %cst_76 = arith.constant 0.000000e+00 : f32
    %404 = vector.broadcast %cst_76 : f32 to vector<32x2xf32>
    %405 = vector.extract_strided_slice %252 {offsets = [0, 0], sizes = [32, 142], strides = [1, 1]} : vector<32x144xf32> to vector<32x142xf32>
    %406 = tpu.concatenate %404, %405 in 1 : vector<32x2xf32>, vector<32x142xf32> -> vector<32x144xf32>
    %407 = vector.shape_cast %406 : vector<32x144xf32> to vector<2x16x144xf32>
    %408 = vector.extract_strided_slice %251 {offsets = [10, 0, 0], sizes = [1, 1, 144], strides = [1, 1, 1]} : vector<25x1x144xf32> to vector<1x1x144xf32>
    %409 = vector.shape_cast %408 : vector<1x1x144xf32> to vector<1x144xf32>
    %410 = vector.extract_strided_slice %250 {offsets = [10, 0, 0], sizes = [1, 16, 1], strides = [1, 1, 1]} : vector<25x16x1xf32> to vector<1x16x1xf32>
    %411 = vector.shape_cast %410 : vector<1x16x1xf32> to vector<16x1xf32>
    %412 = vector.broadcast %409 : vector<1x144xf32> to vector<16x144xf32>
    %413 = vector.broadcast %411 : vector<16x1xf32> to vector<16x144xf32>
    %414 = arith.mulf %412, %413 : vector<16x144xf32>
    %415 = vector.shape_cast %414 : vector<16x144xf32> to vector<1x16x144xf32>
    %416 = vector.broadcast %415 : vector<1x16x144xf32> to vector<2x16x144xf32>
    %417 = arith.mulf %407, %416 : vector<2x16x144xf32>
    %418 = arith.addf %403, %417 : vector<2x16x144xf32>
    %cst_77 = arith.constant 0.000000e+00 : f32
    %419 = vector.broadcast %cst_77 : f32 to vector<32x1xf32>
    %420 = vector.extract_strided_slice %252 {offsets = [0, 0], sizes = [32, 143], strides = [1, 1]} : vector<32x144xf32> to vector<32x143xf32>
    %421 = tpu.concatenate %419, %420 in 1 : vector<32x1xf32>, vector<32x143xf32> -> vector<32x144xf32>
    %422 = vector.shape_cast %421 : vector<32x144xf32> to vector<2x16x144xf32>
    %423 = vector.extract_strided_slice %251 {offsets = [11, 0, 0], sizes = [1, 1, 144], strides = [1, 1, 1]} : vector<25x1x144xf32> to vector<1x1x144xf32>
    %424 = vector.shape_cast %423 : vector<1x1x144xf32> to vector<1x144xf32>
    %425 = vector.extract_strided_slice %250 {offsets = [11, 0, 0], sizes = [1, 16, 1], strides = [1, 1, 1]} : vector<25x16x1xf32> to vector<1x16x1xf32>
    %426 = vector.shape_cast %425 : vector<1x16x1xf32> to vector<16x1xf32>
    %427 = vector.broadcast %424 : vector<1x144xf32> to vector<16x144xf32>
    %428 = vector.broadcast %426 : vector<16x1xf32> to vector<16x144xf32>
    %429 = arith.mulf %427, %428 : vector<16x144xf32>
    %430 = vector.shape_cast %429 : vector<16x144xf32> to vector<1x16x144xf32>
    %431 = vector.broadcast %430 : vector<1x16x144xf32> to vector<2x16x144xf32>
    %432 = arith.mulf %422, %431 : vector<2x16x144xf32>
    %433 = arith.addf %418, %432 : vector<2x16x144xf32>
    %434 = vector.shape_cast %252 : vector<32x144xf32> to vector<2x16x144xf32>
    %435 = vector.extract_strided_slice %251 {offsets = [12, 0, 0], sizes = [1, 1, 144], strides = [1, 1, 1]} : vector<25x1x144xf32> to vector<1x1x144xf32>
    %436 = vector.shape_cast %435 : vector<1x1x144xf32> to vector<1x144xf32>
    %437 = vector.extract_strided_slice %250 {offsets = [12, 0, 0], sizes = [1, 16, 1], strides = [1, 1, 1]} : vector<25x16x1xf32> to vector<1x16x1xf32>
    %438 = vector.shape_cast %437 : vector<1x16x1xf32> to vector<16x1xf32>
    %439 = vector.broadcast %436 : vector<1x144xf32> to vector<16x144xf32>
    %440 = vector.broadcast %438 : vector<16x1xf32> to vector<16x144xf32>
    %441 = arith.mulf %439, %440 : vector<16x144xf32>
    %442 = vector.shape_cast %441 : vector<16x144xf32> to vector<1x16x144xf32>
    %443 = vector.broadcast %442 : vector<1x16x144xf32> to vector<2x16x144xf32>
    %444 = arith.mulf %434, %443 : vector<2x16x144xf32>
    %445 = arith.addf %433, %444 : vector<2x16x144xf32>
    %cst_78 = arith.constant 0.000000e+00 : f32
    %446 = vector.broadcast %cst_78 : f32 to vector<32x1xf32>
    %447 = vector.extract_strided_slice %252 {offsets = [0, 1], sizes = [32, 143], strides = [1, 1]} : vector<32x144xf32> to vector<32x143xf32>
    %448 = tpu.concatenate %447, %446 in 1 : vector<32x143xf32>, vector<32x1xf32> -> vector<32x144xf32>
    %449 = vector.shape_cast %448 : vector<32x144xf32> to vector<2x16x144xf32>
    %450 = vector.extract_strided_slice %251 {offsets = [13, 0, 0], sizes = [1, 1, 144], strides = [1, 1, 1]} : vector<25x1x144xf32> to vector<1x1x144xf32>
    %451 = vector.shape_cast %450 : vector<1x1x144xf32> to vector<1x144xf32>
    %452 = vector.extract_strided_slice %250 {offsets = [13, 0, 0], sizes = [1, 16, 1], strides = [1, 1, 1]} : vector<25x16x1xf32> to vector<1x16x1xf32>
    %453 = vector.shape_cast %452 : vector<1x16x1xf32> to vector<16x1xf32>
    %454 = vector.broadcast %451 : vector<1x144xf32> to vector<16x144xf32>
    %455 = vector.broadcast %453 : vector<16x1xf32> to vector<16x144xf32>
    %456 = arith.mulf %454, %455 : vector<16x144xf32>
    %457 = vector.shape_cast %456 : vector<16x144xf32> to vector<1x16x144xf32>
    %458 = vector.broadcast %457 : vector<1x16x144xf32> to vector<2x16x144xf32>
    %459 = arith.mulf %449, %458 : vector<2x16x144xf32>
    %460 = arith.addf %445, %459 : vector<2x16x144xf32>
    %cst_79 = arith.constant 0.000000e+00 : f32
    %461 = vector.broadcast %cst_79 : f32 to vector<32x2xf32>
    %462 = vector.extract_strided_slice %252 {offsets = [0, 2], sizes = [32, 142], strides = [1, 1]} : vector<32x144xf32> to vector<32x142xf32>
    %463 = tpu.concatenate %462, %461 in 1 : vector<32x142xf32>, vector<32x2xf32> -> vector<32x144xf32>
    %464 = vector.shape_cast %463 : vector<32x144xf32> to vector<2x16x144xf32>
    %465 = vector.extract_strided_slice %251 {offsets = [14, 0, 0], sizes = [1, 1, 144], strides = [1, 1, 1]} : vector<25x1x144xf32> to vector<1x1x144xf32>
    %466 = vector.shape_cast %465 : vector<1x1x144xf32> to vector<1x144xf32>
    %467 = vector.extract_strided_slice %250 {offsets = [14, 0, 0], sizes = [1, 16, 1], strides = [1, 1, 1]} : vector<25x16x1xf32> to vector<1x16x1xf32>
    %468 = vector.shape_cast %467 : vector<1x16x1xf32> to vector<16x1xf32>
    %469 = vector.broadcast %466 : vector<1x144xf32> to vector<16x144xf32>
    %470 = vector.broadcast %468 : vector<16x1xf32> to vector<16x144xf32>
    %471 = arith.mulf %469, %470 : vector<16x144xf32>
    %472 = vector.shape_cast %471 : vector<16x144xf32> to vector<1x16x144xf32>
    %473 = vector.broadcast %472 : vector<1x16x144xf32> to vector<2x16x144xf32>
    %474 = arith.mulf %464, %473 : vector<2x16x144xf32>
    %475 = arith.addf %460, %474 : vector<2x16x144xf32>
    %cst_80 = arith.constant 0.000000e+00 : f32
    %476 = vector.broadcast %cst_80 : f32 to vector<32x10xf32>
    %477 = vector.extract_strided_slice %252 {offsets = [0, 10], sizes = [32, 134], strides = [1, 1]} : vector<32x144xf32> to vector<32x134xf32>
    %478 = tpu.concatenate %477, %476 in 1 : vector<32x134xf32>, vector<32x10xf32> -> vector<32x144xf32>
    %479 = vector.shape_cast %478 : vector<32x144xf32> to vector<2x16x144xf32>
    %480 = vector.extract_strided_slice %251 {offsets = [15, 0, 0], sizes = [1, 1, 144], strides = [1, 1, 1]} : vector<25x1x144xf32> to vector<1x1x144xf32>
    %481 = vector.shape_cast %480 : vector<1x1x144xf32> to vector<1x144xf32>
    %482 = vector.extract_strided_slice %250 {offsets = [15, 0, 0], sizes = [1, 16, 1], strides = [1, 1, 1]} : vector<25x16x1xf32> to vector<1x16x1xf32>
    %483 = vector.shape_cast %482 : vector<1x16x1xf32> to vector<16x1xf32>
    %484 = vector.broadcast %481 : vector<1x144xf32> to vector<16x144xf32>
    %485 = vector.broadcast %483 : vector<16x1xf32> to vector<16x144xf32>
    %486 = arith.mulf %484, %485 : vector<16x144xf32>
    %487 = vector.shape_cast %486 : vector<16x144xf32> to vector<1x16x144xf32>
    %488 = vector.broadcast %487 : vector<1x16x144xf32> to vector<2x16x144xf32>
    %489 = arith.mulf %479, %488 : vector<2x16x144xf32>
    %490 = arith.addf %475, %489 : vector<2x16x144xf32>
    %cst_81 = arith.constant 0.000000e+00 : f32
    %491 = vector.broadcast %cst_81 : f32 to vector<32x11xf32>
    %492 = vector.extract_strided_slice %252 {offsets = [0, 11], sizes = [32, 133], strides = [1, 1]} : vector<32x144xf32> to vector<32x133xf32>
    %493 = tpu.concatenate %492, %491 in 1 : vector<32x133xf32>, vector<32x11xf32> -> vector<32x144xf32>
    %494 = vector.shape_cast %493 : vector<32x144xf32> to vector<2x16x144xf32>
    %495 = vector.extract_strided_slice %251 {offsets = [16, 0, 0], sizes = [1, 1, 144], strides = [1, 1, 1]} : vector<25x1x144xf32> to vector<1x1x144xf32>
    %496 = vector.shape_cast %495 : vector<1x1x144xf32> to vector<1x144xf32>
    %497 = vector.extract_strided_slice %250 {offsets = [16, 0, 0], sizes = [1, 16, 1], strides = [1, 1, 1]} : vector<25x16x1xf32> to vector<1x16x1xf32>
    %498 = vector.shape_cast %497 : vector<1x16x1xf32> to vector<16x1xf32>
    %499 = vector.broadcast %496 : vector<1x144xf32> to vector<16x144xf32>
    %500 = vector.broadcast %498 : vector<16x1xf32> to vector<16x144xf32>
    %501 = arith.mulf %499, %500 : vector<16x144xf32>
    %502 = vector.shape_cast %501 : vector<16x144xf32> to vector<1x16x144xf32>
    %503 = vector.broadcast %502 : vector<1x16x144xf32> to vector<2x16x144xf32>
    %504 = arith.mulf %494, %503 : vector<2x16x144xf32>
    %505 = arith.addf %490, %504 : vector<2x16x144xf32>
    %cst_82 = arith.constant 0.000000e+00 : f32
    %506 = vector.broadcast %cst_82 : f32 to vector<32x12xf32>
    %507 = vector.extract_strided_slice %252 {offsets = [0, 12], sizes = [32, 132], strides = [1, 1]} : vector<32x144xf32> to vector<32x132xf32>
    %508 = tpu.concatenate %507, %506 in 1 : vector<32x132xf32>, vector<32x12xf32> -> vector<32x144xf32>
    %509 = vector.shape_cast %508 : vector<32x144xf32> to vector<2x16x144xf32>
    %510 = vector.extract_strided_slice %251 {offsets = [17, 0, 0], sizes = [1, 1, 144], strides = [1, 1, 1]} : vector<25x1x144xf32> to vector<1x1x144xf32>
    %511 = vector.shape_cast %510 : vector<1x1x144xf32> to vector<1x144xf32>
    %512 = vector.extract_strided_slice %250 {offsets = [17, 0, 0], sizes = [1, 16, 1], strides = [1, 1, 1]} : vector<25x16x1xf32> to vector<1x16x1xf32>
    %513 = vector.shape_cast %512 : vector<1x16x1xf32> to vector<16x1xf32>
    %514 = vector.broadcast %511 : vector<1x144xf32> to vector<16x144xf32>
    %515 = vector.broadcast %513 : vector<16x1xf32> to vector<16x144xf32>
    %516 = arith.mulf %514, %515 : vector<16x144xf32>
    %517 = vector.shape_cast %516 : vector<16x144xf32> to vector<1x16x144xf32>
    %518 = vector.broadcast %517 : vector<1x16x144xf32> to vector<2x16x144xf32>
    %519 = arith.mulf %509, %518 : vector<2x16x144xf32>
    %520 = arith.addf %505, %519 : vector<2x16x144xf32>
    %cst_83 = arith.constant 0.000000e+00 : f32
    %521 = vector.broadcast %cst_83 : f32 to vector<32x13xf32>
    %522 = vector.extract_strided_slice %252 {offsets = [0, 13], sizes = [32, 131], strides = [1, 1]} : vector<32x144xf32> to vector<32x131xf32>
    %523 = tpu.concatenate %522, %521 in 1 : vector<32x131xf32>, vector<32x13xf32> -> vector<32x144xf32>
    %524 = vector.shape_cast %523 : vector<32x144xf32> to vector<2x16x144xf32>
    %525 = vector.extract_strided_slice %251 {offsets = [18, 0, 0], sizes = [1, 1, 144], strides = [1, 1, 1]} : vector<25x1x144xf32> to vector<1x1x144xf32>
    %526 = vector.shape_cast %525 : vector<1x1x144xf32> to vector<1x144xf32>
    %527 = vector.extract_strided_slice %250 {offsets = [18, 0, 0], sizes = [1, 16, 1], strides = [1, 1, 1]} : vector<25x16x1xf32> to vector<1x16x1xf32>
    %528 = vector.shape_cast %527 : vector<1x16x1xf32> to vector<16x1xf32>
    %529 = vector.broadcast %526 : vector<1x144xf32> to vector<16x144xf32>
    %530 = vector.broadcast %528 : vector<16x1xf32> to vector<16x144xf32>
    %531 = arith.mulf %529, %530 : vector<16x144xf32>
    %532 = vector.shape_cast %531 : vector<16x144xf32> to vector<1x16x144xf32>
    %533 = vector.broadcast %532 : vector<1x16x144xf32> to vector<2x16x144xf32>
    %534 = arith.mulf %524, %533 : vector<2x16x144xf32>
    %535 = arith.addf %520, %534 : vector<2x16x144xf32>
    %cst_84 = arith.constant 0.000000e+00 : f32
    %536 = vector.broadcast %cst_84 : f32 to vector<32x14xf32>
    %537 = vector.extract_strided_slice %252 {offsets = [0, 14], sizes = [32, 130], strides = [1, 1]} : vector<32x144xf32> to vector<32x130xf32>
    %538 = tpu.concatenate %537, %536 in 1 : vector<32x130xf32>, vector<32x14xf32> -> vector<32x144xf32>
    %539 = vector.shape_cast %538 : vector<32x144xf32> to vector<2x16x144xf32>
    %540 = vector.extract_strided_slice %251 {offsets = [19, 0, 0], sizes = [1, 1, 144], strides = [1, 1, 1]} : vector<25x1x144xf32> to vector<1x1x144xf32>
    %541 = vector.shape_cast %540 : vector<1x1x144xf32> to vector<1x144xf32>
    %542 = vector.extract_strided_slice %250 {offsets = [19, 0, 0], sizes = [1, 16, 1], strides = [1, 1, 1]} : vector<25x16x1xf32> to vector<1x16x1xf32>
    %543 = vector.shape_cast %542 : vector<1x16x1xf32> to vector<16x1xf32>
    %544 = vector.broadcast %541 : vector<1x144xf32> to vector<16x144xf32>
    %545 = vector.broadcast %543 : vector<16x1xf32> to vector<16x144xf32>
    %546 = arith.mulf %544, %545 : vector<16x144xf32>
    %547 = vector.shape_cast %546 : vector<16x144xf32> to vector<1x16x144xf32>
    %548 = vector.broadcast %547 : vector<1x16x144xf32> to vector<2x16x144xf32>
    %549 = arith.mulf %539, %548 : vector<2x16x144xf32>
    %550 = arith.addf %535, %549 : vector<2x16x144xf32>
    %cst_85 = arith.constant 0.000000e+00 : f32
    %551 = vector.broadcast %cst_85 : f32 to vector<32x22xf32>
    %552 = vector.extract_strided_slice %252 {offsets = [0, 22], sizes = [32, 122], strides = [1, 1]} : vector<32x144xf32> to vector<32x122xf32>
    %553 = tpu.concatenate %552, %551 in 1 : vector<32x122xf32>, vector<32x22xf32> -> vector<32x144xf32>
    %554 = vector.shape_cast %553 : vector<32x144xf32> to vector<2x16x144xf32>
    %555 = vector.extract_strided_slice %251 {offsets = [20, 0, 0], sizes = [1, 1, 144], strides = [1, 1, 1]} : vector<25x1x144xf32> to vector<1x1x144xf32>
    %556 = vector.shape_cast %555 : vector<1x1x144xf32> to vector<1x144xf32>
    %557 = vector.extract_strided_slice %250 {offsets = [20, 0, 0], sizes = [1, 16, 1], strides = [1, 1, 1]} : vector<25x16x1xf32> to vector<1x16x1xf32>
    %558 = vector.shape_cast %557 : vector<1x16x1xf32> to vector<16x1xf32>
    %559 = vector.broadcast %556 : vector<1x144xf32> to vector<16x144xf32>
    %560 = vector.broadcast %558 : vector<16x1xf32> to vector<16x144xf32>
    %561 = arith.mulf %559, %560 : vector<16x144xf32>
    %562 = vector.shape_cast %561 : vector<16x144xf32> to vector<1x16x144xf32>
    %563 = vector.broadcast %562 : vector<1x16x144xf32> to vector<2x16x144xf32>
    %564 = arith.mulf %554, %563 : vector<2x16x144xf32>
    %565 = arith.addf %550, %564 : vector<2x16x144xf32>
    %cst_86 = arith.constant 0.000000e+00 : f32
    %566 = vector.broadcast %cst_86 : f32 to vector<32x23xf32>
    %567 = vector.extract_strided_slice %252 {offsets = [0, 23], sizes = [32, 121], strides = [1, 1]} : vector<32x144xf32> to vector<32x121xf32>
    %568 = tpu.concatenate %567, %566 in 1 : vector<32x121xf32>, vector<32x23xf32> -> vector<32x144xf32>
    %569 = vector.shape_cast %568 : vector<32x144xf32> to vector<2x16x144xf32>
    %570 = vector.extract_strided_slice %251 {offsets = [21, 0, 0], sizes = [1, 1, 144], strides = [1, 1, 1]} : vector<25x1x144xf32> to vector<1x1x144xf32>
    %571 = vector.shape_cast %570 : vector<1x1x144xf32> to vector<1x144xf32>
    %572 = vector.extract_strided_slice %250 {offsets = [21, 0, 0], sizes = [1, 16, 1], strides = [1, 1, 1]} : vector<25x16x1xf32> to vector<1x16x1xf32>
    %573 = vector.shape_cast %572 : vector<1x16x1xf32> to vector<16x1xf32>
    %574 = vector.broadcast %571 : vector<1x144xf32> to vector<16x144xf32>
    %575 = vector.broadcast %573 : vector<16x1xf32> to vector<16x144xf32>
    %576 = arith.mulf %574, %575 : vector<16x144xf32>
    %577 = vector.shape_cast %576 : vector<16x144xf32> to vector<1x16x144xf32>
    %578 = vector.broadcast %577 : vector<1x16x144xf32> to vector<2x16x144xf32>
    %579 = arith.mulf %569, %578 : vector<2x16x144xf32>
    %580 = arith.addf %565, %579 : vector<2x16x144xf32>
    %cst_87 = arith.constant 0.000000e+00 : f32
    %581 = vector.broadcast %cst_87 : f32 to vector<32x24xf32>
    %582 = vector.extract_strided_slice %252 {offsets = [0, 24], sizes = [32, 120], strides = [1, 1]} : vector<32x144xf32> to vector<32x120xf32>
    %583 = tpu.concatenate %582, %581 in 1 : vector<32x120xf32>, vector<32x24xf32> -> vector<32x144xf32>
    %584 = vector.shape_cast %583 : vector<32x144xf32> to vector<2x16x144xf32>
    %585 = vector.extract_strided_slice %251 {offsets = [22, 0, 0], sizes = [1, 1, 144], strides = [1, 1, 1]} : vector<25x1x144xf32> to vector<1x1x144xf32>
    %586 = vector.shape_cast %585 : vector<1x1x144xf32> to vector<1x144xf32>
    %587 = vector.extract_strided_slice %250 {offsets = [22, 0, 0], sizes = [1, 16, 1], strides = [1, 1, 1]} : vector<25x16x1xf32> to vector<1x16x1xf32>
    %588 = vector.shape_cast %587 : vector<1x16x1xf32> to vector<16x1xf32>
    %589 = vector.broadcast %586 : vector<1x144xf32> to vector<16x144xf32>
    %590 = vector.broadcast %588 : vector<16x1xf32> to vector<16x144xf32>
    %591 = arith.mulf %589, %590 : vector<16x144xf32>
    %592 = vector.shape_cast %591 : vector<16x144xf32> to vector<1x16x144xf32>
    %593 = vector.broadcast %592 : vector<1x16x144xf32> to vector<2x16x144xf32>
    %594 = arith.mulf %584, %593 : vector<2x16x144xf32>
    %595 = arith.addf %580, %594 : vector<2x16x144xf32>
    %cst_88 = arith.constant 0.000000e+00 : f32
    %596 = vector.broadcast %cst_88 : f32 to vector<32x25xf32>
    %597 = vector.extract_strided_slice %252 {offsets = [0, 25], sizes = [32, 119], strides = [1, 1]} : vector<32x144xf32> to vector<32x119xf32>
    %598 = tpu.concatenate %597, %596 in 1 : vector<32x119xf32>, vector<32x25xf32> -> vector<32x144xf32>
    %599 = vector.shape_cast %598 : vector<32x144xf32> to vector<2x16x144xf32>
    %600 = vector.extract_strided_slice %251 {offsets = [23, 0, 0], sizes = [1, 1, 144], strides = [1, 1, 1]} : vector<25x1x144xf32> to vector<1x1x144xf32>
    %601 = vector.shape_cast %600 : vector<1x1x144xf32> to vector<1x144xf32>
    %602 = vector.extract_strided_slice %250 {offsets = [23, 0, 0], sizes = [1, 16, 1], strides = [1, 1, 1]} : vector<25x16x1xf32> to vector<1x16x1xf32>
    %603 = vector.shape_cast %602 : vector<1x16x1xf32> to vector<16x1xf32>
    %604 = vector.broadcast %601 : vector<1x144xf32> to vector<16x144xf32>
    %605 = vector.broadcast %603 : vector<16x1xf32> to vector<16x144xf32>
    %606 = arith.mulf %604, %605 : vector<16x144xf32>
    %607 = vector.shape_cast %606 : vector<16x144xf32> to vector<1x16x144xf32>
    %608 = vector.broadcast %607 : vector<1x16x144xf32> to vector<2x16x144xf32>
    %609 = arith.mulf %599, %608 : vector<2x16x144xf32>
    %610 = arith.addf %595, %609 : vector<2x16x144xf32>
    %cst_89 = arith.constant 0.000000e+00 : f32
    %611 = vector.broadcast %cst_89 : f32 to vector<32x26xf32>
    %612 = vector.extract_strided_slice %252 {offsets = [0, 26], sizes = [32, 118], strides = [1, 1]} : vector<32x144xf32> to vector<32x118xf32>
    %613 = tpu.concatenate %612, %611 in 1 : vector<32x118xf32>, vector<32x26xf32> -> vector<32x144xf32>
    %614 = vector.shape_cast %613 : vector<32x144xf32> to vector<2x16x144xf32>
    %615 = vector.extract_strided_slice %251 {offsets = [24, 0, 0], sizes = [1, 1, 144], strides = [1, 1, 1]} : vector<25x1x144xf32> to vector<1x1x144xf32>
    %616 = vector.shape_cast %615 : vector<1x1x144xf32> to vector<1x144xf32>
    %617 = vector.extract_strided_slice %250 {offsets = [24, 0, 0], sizes = [1, 16, 1], strides = [1, 1, 1]} : vector<25x16x1xf32> to vector<1x16x1xf32>
    %618 = vector.shape_cast %617 : vector<1x16x1xf32> to vector<16x1xf32>
    %619 = vector.broadcast %616 : vector<1x144xf32> to vector<16x144xf32>
    %620 = vector.broadcast %618 : vector<16x1xf32> to vector<16x144xf32>
    %621 = arith.mulf %619, %620 : vector<16x144xf32>
    %622 = vector.shape_cast %621 : vector<16x144xf32> to vector<1x16x144xf32>
    %623 = vector.broadcast %622 : vector<1x16x144xf32> to vector<2x16x144xf32>
    %624 = arith.mulf %614, %623 : vector<2x16x144xf32>
    %625 = arith.addf %610, %624 : vector<2x16x144xf32>
    %626 = vector.shape_cast %625 : vector<2x16x144xf32> to vector<32x144xf32>
    %c0_90 = arith.constant 0 : index
    %c0_91 = arith.constant 0 : index
    %627 = vector.load %arg15[%c0_90, %c0_91] : memref<144x16xf32, #tpu.memory_space<vmem>>, vector<144x16xf32>
    %cst_92 = arith.constant dense<0.000000e+00> : vector<32x16xf32>
    %628 = tpu.matmul %626, %627, %cst_92 {dimension_numbers = #tpu.dot_dimension_numbers<[1], [0], [0], [1], [0, 0, 1, 1], [], []>} : vector<32x144xf32>, vector<144x16xf32>, vector<32x16xf32> -> vector<32x16xf32>
    %629 = vector.shape_cast %628 : vector<32x16xf32> to vector<2x16x16xf32>
    %c0_93 = arith.constant 0 : index
    %c0_94 = arith.constant 0 : index
    %630 = vector.load %arg13[%c0_93, %c0_94] : memref<16x1xf32, #tpu.memory_space<vmem>>, vector<16x1xf32>
    %c0_95 = arith.constant 0 : index
    %c0_96 = arith.constant 0 : index
    %631 = vector.load %arg14[%c0_95, %c0_96] : memref<16x1xf32, #tpu.memory_space<vmem>>, vector<16x1xf32>
    %cst_97 = arith.constant dense<0.000000e+00> : vector<2x16xf32>
    %632 = vector.multi_reduction <add>, %629, %cst_97 [2] : vector<2x16x16xf32> to vector<2x16xf32>
    %633 = vector.shape_cast %632 : vector<2x16xf32> to vector<2x16x1xf32>
    %cst_98 = arith.constant dense<0.000000e+00> : vector<16x1xf32>
    %634 = vector.multi_reduction <add>, %633, %cst_98 [0] : vector<2x16x1xf32> to vector<16x1xf32>
    %635 = vector.shape_cast %634 : vector<16x1xf32> to vector<1x16x1xf32>
    %636 = arith.mulf %629, %629 : vector<2x16x16xf32>
    %cst_99 = arith.constant dense<0.000000e+00> : vector<2x16xf32>
    %637 = vector.multi_reduction <add>, %636, %cst_99 [2] : vector<2x16x16xf32> to vector<2x16xf32>
    %638 = vector.shape_cast %637 : vector<2x16xf32> to vector<2x16x1xf32>
    %cst_100 = arith.constant dense<0.000000e+00> : vector<16x1xf32>
    %639 = vector.multi_reduction <add>, %638, %cst_100 [0] : vector<2x16x1xf32> to vector<16x1xf32>
    %640 = vector.shape_cast %639 : vector<16x1xf32> to vector<1x16x1xf32>
    %cst_101 = arith.constant 3.125000e-02 : f32
    %641 = vector.broadcast %cst_101 : f32 to vector<1x16x1xf32>
    %642 = arith.mulf %635, %641 : vector<1x16x1xf32>
    %cst_102 = arith.constant 3.125000e-02 : f32
    %643 = vector.broadcast %cst_102 : f32 to vector<1x16x1xf32>
    %644 = arith.mulf %640, %643 : vector<1x16x1xf32>
    %645 = arith.mulf %642, %642 : vector<1x16x1xf32>
    %646 = arith.subf %644, %645 : vector<1x16x1xf32>
    %cst_103 = arith.constant 0.000000e+00 : f32
    %647 = vector.broadcast %cst_103 : f32 to vector<1x16x1xf32>
    %648 = arith.maximumf %646, %647 : vector<1x16x1xf32>
    %649 = vector.broadcast %642 : vector<1x16x1xf32> to vector<2x16x16xf32>
    %650 = arith.subf %629, %649 : vector<2x16x16xf32>
    %cst_104 = arith.constant 9.99999974E-6 : f32
    %651 = vector.broadcast %cst_104 : f32 to vector<1x16x1xf32>
    %652 = arith.addf %648, %651 : vector<1x16x1xf32>
    %653 = math.rsqrt %652 : vector<1x16x1xf32>
    %654 = vector.broadcast %653 : vector<1x16x1xf32> to vector<2x16x16xf32>
    %655 = arith.mulf %650, %654 : vector<2x16x16xf32>
    %656 = vector.shape_cast %630 : vector<16x1xf32> to vector<1x16x1xf32>
    %657 = vector.broadcast %656 : vector<1x16x1xf32> to vector<2x16x16xf32>
    %658 = arith.mulf %655, %657 : vector<2x16x16xf32>
    %659 = vector.shape_cast %631 : vector<16x1xf32> to vector<1x16x1xf32>
    %660 = vector.broadcast %659 : vector<1x16x1xf32> to vector<2x16x16xf32>
    %661 = arith.addf %658, %660 : vector<2x16x16xf32>
    %c0_105 = arith.constant 0 : index
    %c0_106 = arith.constant 0 : index
    %662 = vector.load %arg16[%c0_105, %c0_106] : memref<48x16xf32, #tpu.memory_space<vmem>>, vector<48x16xf32>
    %663 = vector.extract_strided_slice %249 {offsets = [0, 0, 0], sizes = [1, 16, 36], strides = [1, 1, 1]} : vector<2x16x36xf32> to vector<1x16x36xf32>
    %664 = vector.shape_cast %663 : vector<1x16x36xf32> to vector<16x36xf32>
    %cst_107 = arith.constant dense<0.000000e+00> : vector<48x36xf32>
    %665 = tpu.matmul %662, %664, %cst_107 {dimension_numbers = #tpu.dot_dimension_numbers<[1], [0], [0], [1], [0, 0, 1, 1], [], []>} : vector<48x16xf32>, vector<16x36xf32>, vector<48x36xf32> -> vector<48x36xf32>
    %666 = vector.extract_strided_slice %249 {offsets = [1, 0, 0], sizes = [1, 16, 36], strides = [1, 1, 1]} : vector<2x16x36xf32> to vector<1x16x36xf32>
    %667 = vector.shape_cast %666 : vector<1x16x36xf32> to vector<16x36xf32>
    %cst_108 = arith.constant dense<0.000000e+00> : vector<48x36xf32>
    %668 = tpu.matmul %662, %667, %cst_108 {dimension_numbers = #tpu.dot_dimension_numbers<[1], [0], [0], [1], [0, 0, 1, 1], [], []>} : vector<48x16xf32>, vector<16x36xf32>, vector<48x36xf32> -> vector<48x36xf32>
    %669 = vector.shape_cast %665 : vector<48x36xf32> to vector<1x48x36xf32>
    %670 = vector.shape_cast %668 : vector<48x36xf32> to vector<1x48x36xf32>
    %671 = tpu.concatenate %669, %670 in 0 : vector<1x48x36xf32>, vector<1x48x36xf32> -> vector<2x48x36xf32>
    %c0_109 = arith.constant 0 : index
    %c0_110 = arith.constant 0 : index
    %672 = vector.load %arg17[%c0_109, %c0_110] : memref<48x1xf32, #tpu.memory_space<vmem>>, vector<48x1xf32>
    %c0_111 = arith.constant 0 : index
    %c0_112 = arith.constant 0 : index
    %673 = vector.load %arg18[%c0_111, %c0_112] : memref<48x1xf32, #tpu.memory_space<vmem>>, vector<48x1xf32>
    %cst_113 = arith.constant dense<0.000000e+00> : vector<2x48xf32>
    %674 = vector.multi_reduction <add>, %671, %cst_113 [2] : vector<2x48x36xf32> to vector<2x48xf32>
    %675 = vector.shape_cast %674 : vector<2x48xf32> to vector<2x48x1xf32>
    %cst_114 = arith.constant dense<0.000000e+00> : vector<48x1xf32>
    %676 = vector.multi_reduction <add>, %675, %cst_114 [0] : vector<2x48x1xf32> to vector<48x1xf32>
    %677 = vector.shape_cast %676 : vector<48x1xf32> to vector<1x48x1xf32>
    %678 = arith.mulf %671, %671 : vector<2x48x36xf32>
    %cst_115 = arith.constant dense<0.000000e+00> : vector<2x48xf32>
    %679 = vector.multi_reduction <add>, %678, %cst_115 [2] : vector<2x48x36xf32> to vector<2x48xf32>
    %680 = vector.shape_cast %679 : vector<2x48xf32> to vector<2x48x1xf32>
    %cst_116 = arith.constant dense<0.000000e+00> : vector<48x1xf32>
    %681 = vector.multi_reduction <add>, %680, %cst_116 [0] : vector<2x48x1xf32> to vector<48x1xf32>
    %682 = vector.shape_cast %681 : vector<48x1xf32> to vector<1x48x1xf32>
    %cst_117 = arith.constant 0.013888889 : f32
    %683 = vector.broadcast %cst_117 : f32 to vector<1x48x1xf32>
    %684 = arith.mulf %677, %683 : vector<1x48x1xf32>
    %cst_118 = arith.constant 0.013888889 : f32
    %685 = vector.broadcast %cst_118 : f32 to vector<1x48x1xf32>
    %686 = arith.mulf %682, %685 : vector<1x48x1xf32>
    %687 = arith.mulf %684, %684 : vector<1x48x1xf32>
    %688 = arith.subf %686, %687 : vector<1x48x1xf32>
    %cst_119 = arith.constant 0.000000e+00 : f32
    %689 = vector.broadcast %cst_119 : f32 to vector<1x48x1xf32>
    %690 = arith.maximumf %688, %689 : vector<1x48x1xf32>
    %691 = vector.broadcast %684 : vector<1x48x1xf32> to vector<2x48x36xf32>
    %692 = arith.subf %671, %691 : vector<2x48x36xf32>
    %cst_120 = arith.constant 9.99999974E-6 : f32
    %693 = vector.broadcast %cst_120 : f32 to vector<1x48x1xf32>
    %694 = arith.addf %690, %693 : vector<1x48x1xf32>
    %695 = math.rsqrt %694 : vector<1x48x1xf32>
    %696 = vector.broadcast %695 : vector<1x48x1xf32> to vector<2x48x36xf32>
    %697 = arith.mulf %692, %696 : vector<2x48x36xf32>
    %698 = vector.shape_cast %672 : vector<48x1xf32> to vector<1x48x1xf32>
    %699 = vector.broadcast %698 : vector<1x48x1xf32> to vector<2x48x36xf32>
    %700 = arith.mulf %697, %699 : vector<2x48x36xf32>
    %701 = vector.shape_cast %673 : vector<48x1xf32> to vector<1x48x1xf32>
    %702 = vector.broadcast %701 : vector<1x48x1xf32> to vector<2x48x36xf32>
    %703 = arith.addf %700, %702 : vector<2x48x36xf32>
    %704 = vector.extract_strided_slice %703 {offsets = [0, 0, 0], sizes = [2, 16, 36], strides = [1, 1, 1]} : vector<2x48x36xf32> to vector<2x16x36xf32>
    %705 = vector.extract_strided_slice %703 {offsets = [0, 16, 0], sizes = [2, 32, 36], strides = [1, 1, 1]} : vector<2x48x36xf32> to vector<2x32x36xf32>
    %c0_121 = arith.constant 0 : index
    %c0_122 = arith.constant 0 : index
    %706 = vector.load %arg19[%c0_121, %c0_122] : memref<48x16xf32, #tpu.memory_space<vmem>>, vector<48x16xf32>
    %707 = vector.extract_strided_slice %661 {offsets = [0, 0, 0], sizes = [1, 16, 16], strides = [1, 1, 1]} : vector<2x16x16xf32> to vector<1x16x16xf32>
    %708 = vector.shape_cast %707 : vector<1x16x16xf32> to vector<16x16xf32>
    %cst_123 = arith.constant dense<0.000000e+00> : vector<48x16xf32>
    %709 = tpu.matmul %706, %708, %cst_123 {dimension_numbers = #tpu.dot_dimension_numbers<[1], [0], [0], [1], [0, 0, 1, 1], [], []>} : vector<48x16xf32>, vector<16x16xf32>, vector<48x16xf32> -> vector<48x16xf32>
    %710 = vector.extract_strided_slice %661 {offsets = [1, 0, 0], sizes = [1, 16, 16], strides = [1, 1, 1]} : vector<2x16x16xf32> to vector<1x16x16xf32>
    %711 = vector.shape_cast %710 : vector<1x16x16xf32> to vector<16x16xf32>
    %cst_124 = arith.constant dense<0.000000e+00> : vector<48x16xf32>
    %712 = tpu.matmul %706, %711, %cst_124 {dimension_numbers = #tpu.dot_dimension_numbers<[1], [0], [0], [1], [0, 0, 1, 1], [], []>} : vector<48x16xf32>, vector<16x16xf32>, vector<48x16xf32> -> vector<48x16xf32>
    %713 = vector.shape_cast %709 : vector<48x16xf32> to vector<1x48x16xf32>
    %714 = vector.shape_cast %712 : vector<48x16xf32> to vector<1x48x16xf32>
    %715 = tpu.concatenate %713, %714 in 0 : vector<1x48x16xf32>, vector<1x48x16xf32> -> vector<2x48x16xf32>
    %c0_125 = arith.constant 0 : index
    %c0_126 = arith.constant 0 : index
    %716 = vector.load %arg20[%c0_125, %c0_126] : memref<48x1xf32, #tpu.memory_space<vmem>>, vector<48x1xf32>
    %c0_127 = arith.constant 0 : index
    %c0_128 = arith.constant 0 : index
    %717 = vector.load %arg21[%c0_127, %c0_128] : memref<48x1xf32, #tpu.memory_space<vmem>>, vector<48x1xf32>
    %cst_129 = arith.constant dense<0.000000e+00> : vector<2x48xf32>
    %718 = vector.multi_reduction <add>, %715, %cst_129 [2] : vector<2x48x16xf32> to vector<2x48xf32>
    %719 = vector.shape_cast %718 : vector<2x48xf32> to vector<2x48x1xf32>
    %cst_130 = arith.constant dense<0.000000e+00> : vector<48x1xf32>
    %720 = vector.multi_reduction <add>, %719, %cst_130 [0] : vector<2x48x1xf32> to vector<48x1xf32>
    %721 = vector.shape_cast %720 : vector<48x1xf32> to vector<1x48x1xf32>
    %722 = arith.mulf %715, %715 : vector<2x48x16xf32>
    %cst_131 = arith.constant dense<0.000000e+00> : vector<2x48xf32>
    %723 = vector.multi_reduction <add>, %722, %cst_131 [2] : vector<2x48x16xf32> to vector<2x48xf32>
    %724 = vector.shape_cast %723 : vector<2x48xf32> to vector<2x48x1xf32>
    %cst_132 = arith.constant dense<0.000000e+00> : vector<48x1xf32>
    %725 = vector.multi_reduction <add>, %724, %cst_132 [0] : vector<2x48x1xf32> to vector<48x1xf32>
    %726 = vector.shape_cast %725 : vector<48x1xf32> to vector<1x48x1xf32>
    %cst_133 = arith.constant 3.125000e-02 : f32
    %727 = vector.broadcast %cst_133 : f32 to vector<1x48x1xf32>
    %728 = arith.mulf %721, %727 : vector<1x48x1xf32>
    %cst_134 = arith.constant 3.125000e-02 : f32
    %729 = vector.broadcast %cst_134 : f32 to vector<1x48x1xf32>
    %730 = arith.mulf %726, %729 : vector<1x48x1xf32>
    %731 = arith.mulf %728, %728 : vector<1x48x1xf32>
    %732 = arith.subf %730, %731 : vector<1x48x1xf32>
    %cst_135 = arith.constant 0.000000e+00 : f32
    %733 = vector.broadcast %cst_135 : f32 to vector<1x48x1xf32>
    %734 = arith.maximumf %732, %733 : vector<1x48x1xf32>
    %735 = vector.broadcast %728 : vector<1x48x1xf32> to vector<2x48x16xf32>
    %736 = arith.subf %715, %735 : vector<2x48x16xf32>
    %cst_136 = arith.constant 9.99999974E-6 : f32
    %737 = vector.broadcast %cst_136 : f32 to vector<1x48x1xf32>
    %738 = arith.addf %734, %737 : vector<1x48x1xf32>
    %739 = math.rsqrt %738 : vector<1x48x1xf32>
    %740 = vector.broadcast %739 : vector<1x48x1xf32> to vector<2x48x16xf32>
    %741 = arith.mulf %736, %740 : vector<2x48x16xf32>
    %742 = vector.shape_cast %716 : vector<48x1xf32> to vector<1x48x1xf32>
    %743 = vector.broadcast %742 : vector<1x48x1xf32> to vector<2x48x16xf32>
    %744 = arith.mulf %741, %743 : vector<2x48x16xf32>
    %745 = vector.shape_cast %717 : vector<48x1xf32> to vector<1x48x1xf32>
    %746 = vector.broadcast %745 : vector<1x48x1xf32> to vector<2x48x16xf32>
    %747 = arith.addf %744, %746 : vector<2x48x16xf32>
    %748 = vector.extract_strided_slice %747 {offsets = [0, 0, 0], sizes = [2, 16, 16], strides = [1, 1, 1]} : vector<2x48x16xf32> to vector<2x16x16xf32>
    %749 = vector.extract_strided_slice %747 {offsets = [0, 16, 0], sizes = [2, 32, 16], strides = [1, 1, 1]} : vector<2x48x16xf32> to vector<2x32x16xf32>
    %cst_137 = arith.constant 3.000000e+00 : f32
    %750 = vector.broadcast %cst_137 : f32 to vector<2x32x144xf32>
    %751 = arith.addf %77, %750 : vector<2x32x144xf32>
    %cst_138 = arith.constant 0.000000e+00 : f32
    %cst_139 = arith.constant 6.000000e+00 : f32
    %752 = vector.broadcast %cst_138 : f32 to vector<2x32x144xf32>
    %753 = arith.maximumf %752, %751 : vector<2x32x144xf32>
    %754 = vector.broadcast %cst_139 : f32 to vector<2x32x144xf32>
    %755 = arith.minimumf %754, %753 : vector<2x32x144xf32>
    %756 = arith.mulf %77, %755 : vector<2x32x144xf32>
    %cst_140 = arith.constant 0.166666672 : f32
    %757 = vector.broadcast %cst_140 : f32 to vector<2x32x144xf32>
    %758 = arith.mulf %756, %757 : vector<2x32x144xf32>
    %c0_141 = arith.constant 0 : index
    %c0_142 = arith.constant 0 : index
    %c0_143 = arith.constant 0 : index
    %759 = vector.load %arg22[%c0_141, %c0_142, %c0_143] : memref<9x32x1xf32, #tpu.memory_space<vmem>>, vector<9x32x1xf32>
    %760 = vector.shape_cast %758 : vector<2x32x144xf32> to vector<64x144xf32>
    %cst_144 = arith.constant 0.000000e+00 : f32
    %761 = vector.broadcast %cst_144 : f32 to vector<2x32x144xf32>
    %cst_145 = arith.constant 0.000000e+00 : f32
    %762 = vector.broadcast %cst_145 : f32 to vector<64x13xf32>
    %763 = vector.extract_strided_slice %760 {offsets = [0, 0], sizes = [64, 131], strides = [1, 1]} : vector<64x144xf32> to vector<64x131xf32>
    %764 = tpu.concatenate %762, %763 in 1 : vector<64x13xf32>, vector<64x131xf32> -> vector<64x144xf32>
    %765 = vector.shape_cast %764 : vector<64x144xf32> to vector<2x32x144xf32>
    %766 = vector.extract_strided_slice %78 {offsets = [0, 0, 0], sizes = [1, 1, 144], strides = [1, 1, 1]} : vector<9x1x144xf32> to vector<1x1x144xf32>
    %767 = vector.shape_cast %766 : vector<1x1x144xf32> to vector<1x144xf32>
    %768 = vector.extract_strided_slice %759 {offsets = [0, 0, 0], sizes = [1, 32, 1], strides = [1, 1, 1]} : vector<9x32x1xf32> to vector<1x32x1xf32>
    %769 = vector.shape_cast %768 : vector<1x32x1xf32> to vector<32x1xf32>
    %770 = vector.broadcast %767 : vector<1x144xf32> to vector<32x144xf32>
    %771 = vector.broadcast %769 : vector<32x1xf32> to vector<32x144xf32>
    %772 = arith.mulf %770, %771 : vector<32x144xf32>
    %773 = vector.shape_cast %772 : vector<32x144xf32> to vector<1x32x144xf32>
    %774 = vector.broadcast %773 : vector<1x32x144xf32> to vector<2x32x144xf32>
    %775 = arith.mulf %765, %774 : vector<2x32x144xf32>
    %776 = arith.addf %761, %775 : vector<2x32x144xf32>
    %cst_146 = arith.constant 0.000000e+00 : f32
    %777 = vector.broadcast %cst_146 : f32 to vector<64x12xf32>
    %778 = vector.extract_strided_slice %760 {offsets = [0, 0], sizes = [64, 132], strides = [1, 1]} : vector<64x144xf32> to vector<64x132xf32>
    %779 = tpu.concatenate %777, %778 in 1 : vector<64x12xf32>, vector<64x132xf32> -> vector<64x144xf32>
    %780 = vector.shape_cast %779 : vector<64x144xf32> to vector<2x32x144xf32>
    %781 = vector.extract_strided_slice %78 {offsets = [1, 0, 0], sizes = [1, 1, 144], strides = [1, 1, 1]} : vector<9x1x144xf32> to vector<1x1x144xf32>
    %782 = vector.shape_cast %781 : vector<1x1x144xf32> to vector<1x144xf32>
    %783 = vector.extract_strided_slice %759 {offsets = [1, 0, 0], sizes = [1, 32, 1], strides = [1, 1, 1]} : vector<9x32x1xf32> to vector<1x32x1xf32>
    %784 = vector.shape_cast %783 : vector<1x32x1xf32> to vector<32x1xf32>
    %785 = vector.broadcast %782 : vector<1x144xf32> to vector<32x144xf32>
    %786 = vector.broadcast %784 : vector<32x1xf32> to vector<32x144xf32>
    %787 = arith.mulf %785, %786 : vector<32x144xf32>
    %788 = vector.shape_cast %787 : vector<32x144xf32> to vector<1x32x144xf32>
    %789 = vector.broadcast %788 : vector<1x32x144xf32> to vector<2x32x144xf32>
    %790 = arith.mulf %780, %789 : vector<2x32x144xf32>
    %791 = arith.addf %776, %790 : vector<2x32x144xf32>
    %cst_147 = arith.constant 0.000000e+00 : f32
    %792 = vector.broadcast %cst_147 : f32 to vector<64x11xf32>
    %793 = vector.extract_strided_slice %760 {offsets = [0, 0], sizes = [64, 133], strides = [1, 1]} : vector<64x144xf32> to vector<64x133xf32>
    %794 = tpu.concatenate %792, %793 in 1 : vector<64x11xf32>, vector<64x133xf32> -> vector<64x144xf32>
    %795 = vector.shape_cast %794 : vector<64x144xf32> to vector<2x32x144xf32>
    %796 = vector.extract_strided_slice %78 {offsets = [2, 0, 0], sizes = [1, 1, 144], strides = [1, 1, 1]} : vector<9x1x144xf32> to vector<1x1x144xf32>
    %797 = vector.shape_cast %796 : vector<1x1x144xf32> to vector<1x144xf32>
    %798 = vector.extract_strided_slice %759 {offsets = [2, 0, 0], sizes = [1, 32, 1], strides = [1, 1, 1]} : vector<9x32x1xf32> to vector<1x32x1xf32>
    %799 = vector.shape_cast %798 : vector<1x32x1xf32> to vector<32x1xf32>
    %800 = vector.broadcast %797 : vector<1x144xf32> to vector<32x144xf32>
    %801 = vector.broadcast %799 : vector<32x1xf32> to vector<32x144xf32>
    %802 = arith.mulf %800, %801 : vector<32x144xf32>
    %803 = vector.shape_cast %802 : vector<32x144xf32> to vector<1x32x144xf32>
    %804 = vector.broadcast %803 : vector<1x32x144xf32> to vector<2x32x144xf32>
    %805 = arith.mulf %795, %804 : vector<2x32x144xf32>
    %806 = arith.addf %791, %805 : vector<2x32x144xf32>
    %cst_148 = arith.constant 0.000000e+00 : f32
    %807 = vector.broadcast %cst_148 : f32 to vector<64x1xf32>
    %808 = vector.extract_strided_slice %760 {offsets = [0, 0], sizes = [64, 143], strides = [1, 1]} : vector<64x144xf32> to vector<64x143xf32>
    %809 = tpu.concatenate %807, %808 in 1 : vector<64x1xf32>, vector<64x143xf32> -> vector<64x144xf32>
    %810 = vector.shape_cast %809 : vector<64x144xf32> to vector<2x32x144xf32>
    %811 = vector.extract_strided_slice %78 {offsets = [3, 0, 0], sizes = [1, 1, 144], strides = [1, 1, 1]} : vector<9x1x144xf32> to vector<1x1x144xf32>
    %812 = vector.shape_cast %811 : vector<1x1x144xf32> to vector<1x144xf32>
    %813 = vector.extract_strided_slice %759 {offsets = [3, 0, 0], sizes = [1, 32, 1], strides = [1, 1, 1]} : vector<9x32x1xf32> to vector<1x32x1xf32>
    %814 = vector.shape_cast %813 : vector<1x32x1xf32> to vector<32x1xf32>
    %815 = vector.broadcast %812 : vector<1x144xf32> to vector<32x144xf32>
    %816 = vector.broadcast %814 : vector<32x1xf32> to vector<32x144xf32>
    %817 = arith.mulf %815, %816 : vector<32x144xf32>
    %818 = vector.shape_cast %817 : vector<32x144xf32> to vector<1x32x144xf32>
    %819 = vector.broadcast %818 : vector<1x32x144xf32> to vector<2x32x144xf32>
    %820 = arith.mulf %810, %819 : vector<2x32x144xf32>
    %821 = arith.addf %806, %820 : vector<2x32x144xf32>
    %822 = vector.shape_cast %760 : vector<64x144xf32> to vector<2x32x144xf32>
    %823 = vector.extract_strided_slice %78 {offsets = [4, 0, 0], sizes = [1, 1, 144], strides = [1, 1, 1]} : vector<9x1x144xf32> to vector<1x1x144xf32>
    %824 = vector.shape_cast %823 : vector<1x1x144xf32> to vector<1x144xf32>
    %825 = vector.extract_strided_slice %759 {offsets = [4, 0, 0], sizes = [1, 32, 1], strides = [1, 1, 1]} : vector<9x32x1xf32> to vector<1x32x1xf32>
    %826 = vector.shape_cast %825 : vector<1x32x1xf32> to vector<32x1xf32>
    %827 = vector.broadcast %824 : vector<1x144xf32> to vector<32x144xf32>
    %828 = vector.broadcast %826 : vector<32x1xf32> to vector<32x144xf32>
    %829 = arith.mulf %827, %828 : vector<32x144xf32>
    %830 = vector.shape_cast %829 : vector<32x144xf32> to vector<1x32x144xf32>
    %831 = vector.broadcast %830 : vector<1x32x144xf32> to vector<2x32x144xf32>
    %832 = arith.mulf %822, %831 : vector<2x32x144xf32>
    %833 = arith.addf %821, %832 : vector<2x32x144xf32>
    %cst_149 = arith.constant 0.000000e+00 : f32
    %834 = vector.broadcast %cst_149 : f32 to vector<64x1xf32>
    %835 = vector.extract_strided_slice %760 {offsets = [0, 1], sizes = [64, 143], strides = [1, 1]} : vector<64x144xf32> to vector<64x143xf32>
    %836 = tpu.concatenate %835, %834 in 1 : vector<64x143xf32>, vector<64x1xf32> -> vector<64x144xf32>
    %837 = vector.shape_cast %836 : vector<64x144xf32> to vector<2x32x144xf32>
    %838 = vector.extract_strided_slice %78 {offsets = [5, 0, 0], sizes = [1, 1, 144], strides = [1, 1, 1]} : vector<9x1x144xf32> to vector<1x1x144xf32>
    %839 = vector.shape_cast %838 : vector<1x1x144xf32> to vector<1x144xf32>
    %840 = vector.extract_strided_slice %759 {offsets = [5, 0, 0], sizes = [1, 32, 1], strides = [1, 1, 1]} : vector<9x32x1xf32> to vector<1x32x1xf32>
    %841 = vector.shape_cast %840 : vector<1x32x1xf32> to vector<32x1xf32>
    %842 = vector.broadcast %839 : vector<1x144xf32> to vector<32x144xf32>
    %843 = vector.broadcast %841 : vector<32x1xf32> to vector<32x144xf32>
    %844 = arith.mulf %842, %843 : vector<32x144xf32>
    %845 = vector.shape_cast %844 : vector<32x144xf32> to vector<1x32x144xf32>
    %846 = vector.broadcast %845 : vector<1x32x144xf32> to vector<2x32x144xf32>
    %847 = arith.mulf %837, %846 : vector<2x32x144xf32>
    %848 = arith.addf %833, %847 : vector<2x32x144xf32>
    %cst_150 = arith.constant 0.000000e+00 : f32
    %849 = vector.broadcast %cst_150 : f32 to vector<64x11xf32>
    %850 = vector.extract_strided_slice %760 {offsets = [0, 11], sizes = [64, 133], strides = [1, 1]} : vector<64x144xf32> to vector<64x133xf32>
    %851 = tpu.concatenate %850, %849 in 1 : vector<64x133xf32>, vector<64x11xf32> -> vector<64x144xf32>
    %852 = vector.shape_cast %851 : vector<64x144xf32> to vector<2x32x144xf32>
    %853 = vector.extract_strided_slice %78 {offsets = [6, 0, 0], sizes = [1, 1, 144], strides = [1, 1, 1]} : vector<9x1x144xf32> to vector<1x1x144xf32>
    %854 = vector.shape_cast %853 : vector<1x1x144xf32> to vector<1x144xf32>
    %855 = vector.extract_strided_slice %759 {offsets = [6, 0, 0], sizes = [1, 32, 1], strides = [1, 1, 1]} : vector<9x32x1xf32> to vector<1x32x1xf32>
    %856 = vector.shape_cast %855 : vector<1x32x1xf32> to vector<32x1xf32>
    %857 = vector.broadcast %854 : vector<1x144xf32> to vector<32x144xf32>
    %858 = vector.broadcast %856 : vector<32x1xf32> to vector<32x144xf32>
    %859 = arith.mulf %857, %858 : vector<32x144xf32>
    %860 = vector.shape_cast %859 : vector<32x144xf32> to vector<1x32x144xf32>
    %861 = vector.broadcast %860 : vector<1x32x144xf32> to vector<2x32x144xf32>
    %862 = arith.mulf %852, %861 : vector<2x32x144xf32>
    %863 = arith.addf %848, %862 : vector<2x32x144xf32>
    %cst_151 = arith.constant 0.000000e+00 : f32
    %864 = vector.broadcast %cst_151 : f32 to vector<64x12xf32>
    %865 = vector.extract_strided_slice %760 {offsets = [0, 12], sizes = [64, 132], strides = [1, 1]} : vector<64x144xf32> to vector<64x132xf32>
    %866 = tpu.concatenate %865, %864 in 1 : vector<64x132xf32>, vector<64x12xf32> -> vector<64x144xf32>
    %867 = vector.shape_cast %866 : vector<64x144xf32> to vector<2x32x144xf32>
    %868 = vector.extract_strided_slice %78 {offsets = [7, 0, 0], sizes = [1, 1, 144], strides = [1, 1, 1]} : vector<9x1x144xf32> to vector<1x1x144xf32>
    %869 = vector.shape_cast %868 : vector<1x1x144xf32> to vector<1x144xf32>
    %870 = vector.extract_strided_slice %759 {offsets = [7, 0, 0], sizes = [1, 32, 1], strides = [1, 1, 1]} : vector<9x32x1xf32> to vector<1x32x1xf32>
    %871 = vector.shape_cast %870 : vector<1x32x1xf32> to vector<32x1xf32>
    %872 = vector.broadcast %869 : vector<1x144xf32> to vector<32x144xf32>
    %873 = vector.broadcast %871 : vector<32x1xf32> to vector<32x144xf32>
    %874 = arith.mulf %872, %873 : vector<32x144xf32>
    %875 = vector.shape_cast %874 : vector<32x144xf32> to vector<1x32x144xf32>
    %876 = vector.broadcast %875 : vector<1x32x144xf32> to vector<2x32x144xf32>
    %877 = arith.mulf %867, %876 : vector<2x32x144xf32>
    %878 = arith.addf %863, %877 : vector<2x32x144xf32>
    %cst_152 = arith.constant 0.000000e+00 : f32
    %879 = vector.broadcast %cst_152 : f32 to vector<64x13xf32>
    %880 = vector.extract_strided_slice %760 {offsets = [0, 13], sizes = [64, 131], strides = [1, 1]} : vector<64x144xf32> to vector<64x131xf32>
    %881 = tpu.concatenate %880, %879 in 1 : vector<64x131xf32>, vector<64x13xf32> -> vector<64x144xf32>
    %882 = vector.shape_cast %881 : vector<64x144xf32> to vector<2x32x144xf32>
    %883 = vector.extract_strided_slice %78 {offsets = [8, 0, 0], sizes = [1, 1, 144], strides = [1, 1, 1]} : vector<9x1x144xf32> to vector<1x1x144xf32>
    %884 = vector.shape_cast %883 : vector<1x1x144xf32> to vector<1x144xf32>
    %885 = vector.extract_strided_slice %759 {offsets = [8, 0, 0], sizes = [1, 32, 1], strides = [1, 1, 1]} : vector<9x32x1xf32> to vector<1x32x1xf32>
    %886 = vector.shape_cast %885 : vector<1x32x1xf32> to vector<32x1xf32>
    %887 = vector.broadcast %884 : vector<1x144xf32> to vector<32x144xf32>
    %888 = vector.broadcast %886 : vector<32x1xf32> to vector<32x144xf32>
    %889 = arith.mulf %887, %888 : vector<32x144xf32>
    %890 = vector.shape_cast %889 : vector<32x144xf32> to vector<1x32x144xf32>
    %891 = vector.broadcast %890 : vector<1x32x144xf32> to vector<2x32x144xf32>
    %892 = arith.mulf %882, %891 : vector<2x32x144xf32>
    %893 = arith.addf %878, %892 : vector<2x32x144xf32>
    %c0_153 = arith.constant 0 : index
    %c0_154 = arith.constant 0 : index
    %894 = vector.load %arg23[%c0_153, %c0_154] : memref<32x1xf32, #tpu.memory_space<vmem>>, vector<32x1xf32>
    %895 = vector.shape_cast %894 : vector<32x1xf32> to vector<1x32x1xf32>
    %896 = vector.broadcast %895 : vector<1x32x1xf32> to vector<2x32x144xf32>
    %897 = arith.addf %893, %896 : vector<2x32x144xf32>
    %898 = vector.shape_cast %75 : vector<2x16x144xf32> to vector<4x8x144xf32>
    %899 = vector.shape_cast %76 : vector<2x16x144xf32> to vector<4x8x144xf32>
    %900 = vector.shape_cast %704 : vector<2x16x36xf32> to vector<4x8x36xf32>
    %901 = vector.shape_cast %748 : vector<2x16x16xf32> to vector<4x8x16xf32>
    %902 = tpu.concatenate %899, %900, %901 in 2 : vector<4x8x144xf32>, vector<4x8x36xf32>, vector<4x8x16xf32> -> vector<4x8x196xf32>
    %903 = vector.shape_cast %77 : vector<2x32x144xf32> to vector<4x16x144xf32>
    %904 = vector.shape_cast %705 : vector<2x32x36xf32> to vector<4x16x36xf32>
    %905 = vector.shape_cast %749 : vector<2x32x16xf32> to vector<4x16x16xf32>
    %906 = tpu.concatenate %903, %904, %905 in 2 : vector<4x16x144xf32>, vector<4x16x36xf32>, vector<4x16x16xf32> -> vector<4x16x196xf32>
    %907 = vector.extract_strided_slice %898 {offsets = [0, 0, 0], sizes = [1, 8, 144], strides = [1, 1, 1]} : vector<4x8x144xf32> to vector<1x8x144xf32>
    %908 = vector.shape_cast %907 : vector<1x8x144xf32> to vector<8x144xf32>
    %909 = tpu.transpose %908, [1, 0] : vector<8x144xf32> -> vector<144x8xf32>
    %910 = vector.extract_strided_slice %898 {offsets = [1, 0, 0], sizes = [1, 8, 144], strides = [1, 1, 1]} : vector<4x8x144xf32> to vector<1x8x144xf32>
    %911 = vector.shape_cast %910 : vector<1x8x144xf32> to vector<8x144xf32>
    %912 = tpu.transpose %911, [1, 0] : vector<8x144xf32> -> vector<144x8xf32>
    %913 = vector.extract_strided_slice %898 {offsets = [2, 0, 0], sizes = [1, 8, 144], strides = [1, 1, 1]} : vector<4x8x144xf32> to vector<1x8x144xf32>
    %914 = vector.shape_cast %913 : vector<1x8x144xf32> to vector<8x144xf32>
    %915 = tpu.transpose %914, [1, 0] : vector<8x144xf32> -> vector<144x8xf32>
    %916 = vector.extract_strided_slice %898 {offsets = [3, 0, 0], sizes = [1, 8, 144], strides = [1, 1, 1]} : vector<4x8x144xf32> to vector<1x8x144xf32>
    %917 = vector.shape_cast %916 : vector<1x8x144xf32> to vector<8x144xf32>
    %918 = tpu.transpose %917, [1, 0] : vector<8x144xf32> -> vector<144x8xf32>
    %919 = vector.shape_cast %909 : vector<144x8xf32> to vector<1x144x8xf32>
    %920 = vector.shape_cast %912 : vector<144x8xf32> to vector<1x144x8xf32>
    %921 = vector.shape_cast %915 : vector<144x8xf32> to vector<1x144x8xf32>
    %922 = vector.shape_cast %918 : vector<144x8xf32> to vector<1x144x8xf32>
    %923 = tpu.concatenate %919, %920, %921, %922 in 0 : vector<1x144x8xf32>, vector<1x144x8xf32>, vector<1x144x8xf32>, vector<1x144x8xf32> -> vector<4x144x8xf32>
    "tpu.trace_start"() <{level = 10 : i32, message = "nqd,ndl->nql"}> : () -> ()
    %cst_155 = arith.constant dense<0.000000e+00> : vector<4x144x196xf32>
    %924 = tpu.matmul %923, %902, %cst_155 {dimension_numbers = #tpu.dot_dimension_numbers<[2], [1], [1], [2], [0, 0, 0, 1, 1, 2], [0], [0]>} : vector<4x144x8xf32>, vector<4x8x196xf32>, vector<4x144x196xf32> -> vector<4x144x196xf32>
    "tpu.trace_stop"() : () -> ()
    %cst_156 = arith.constant 0.353553385 : f32
    %925 = vector.broadcast %cst_156 : f32 to vector<4x144x196xf32>
    %926 = arith.mulf %924, %925 : vector<4x144x196xf32>
    %cst_157 = arith.constant dense<0xFF800000> : vector<4x144xf32>
    %927 = vector.multi_reduction <maximumf>, %926, %cst_157 [2] : vector<4x144x196xf32> to vector<4x144xf32>
    %928 = vector.shape_cast %927 : vector<4x144xf32> to vector<4x144x1xf32>
    %929 = vector.broadcast %928 : vector<4x144x1xf32> to vector<4x144x196xf32>
    %930 = arith.subf %926, %929 : vector<4x144x196xf32>
    %931 = math.exp %930 : vector<4x144x196xf32>
    %cst_158 = arith.constant dense<0.000000e+00> : vector<4x144xf32>
    %932 = vector.multi_reduction <add>, %931, %cst_158 [2] : vector<4x144x196xf32> to vector<4x144xf32>
    %933 = vector.shape_cast %932 : vector<4x144xf32> to vector<4x144x1xf32>
    %934 = tpu.reciprocal %933 {approx = true} : vector<4x144x1xf32> -> vector<4x144x1xf32>
    %935 = vector.broadcast %934 : vector<4x144x1xf32> to vector<4x144x196xf32>
    %936 = arith.mulf %931, %935 : vector<4x144x196xf32>
    "tpu.trace_start"() <{level = 10 : i32, message = "nel,nql->neq"}> : () -> ()
    %cst_159 = arith.constant dense<0.000000e+00> : vector<4x16x144xf32>
    %937 = tpu.matmul %906, %936, %cst_159 {dimension_numbers = #tpu.dot_dimension_numbers<[2], [2], [1], [1], [0, 0, 0, 1, 1, 1], [0], [0]>} : vector<4x16x196xf32>, vector<4x144x196xf32>, vector<4x16x144xf32> -> vector<4x16x144xf32>
    "tpu.trace_stop"() : () -> ()
    %938 = vector.shape_cast %937 : vector<4x16x144xf32> to vector<2x32x144xf32>
    %939 = arith.addf %938, %897 : vector<2x32x144xf32>
    %c0_160 = arith.constant 0 : index
    %c0_161 = arith.constant 0 : index
    %940 = vector.load %arg24[%c0_160, %c0_161] : memref<32x1xf32, #tpu.memory_space<vmem>>, vector<32x1xf32>
    %c0_162 = arith.constant 0 : index
    %c0_163 = arith.constant 0 : index
    %941 = vector.load %arg25[%c0_162, %c0_163] : memref<32x1xf32, #tpu.memory_space<vmem>>, vector<32x1xf32>
    %cst_164 = arith.constant dense<0.000000e+00> : vector<2x32xf32>
    %942 = vector.multi_reduction <add>, %939, %cst_164 [2] : vector<2x32x144xf32> to vector<2x32xf32>
    %943 = vector.shape_cast %942 : vector<2x32xf32> to vector<2x32x1xf32>
    %cst_165 = arith.constant dense<0.000000e+00> : vector<32x1xf32>
    %944 = vector.multi_reduction <add>, %943, %cst_165 [0] : vector<2x32x1xf32> to vector<32x1xf32>
    %945 = vector.shape_cast %944 : vector<32x1xf32> to vector<1x32x1xf32>
    %946 = arith.mulf %939, %939 : vector<2x32x144xf32>
    %cst_166 = arith.constant dense<0.000000e+00> : vector<2x32xf32>
    %947 = vector.multi_reduction <add>, %946, %cst_166 [2] : vector<2x32x144xf32> to vector<2x32xf32>
    %948 = vector.shape_cast %947 : vector<2x32xf32> to vector<2x32x1xf32>
    %cst_167 = arith.constant dense<0.000000e+00> : vector<32x1xf32>
    %949 = vector.multi_reduction <add>, %948, %cst_167 [0] : vector<2x32x1xf32> to vector<32x1xf32>
    %950 = vector.shape_cast %949 : vector<32x1xf32> to vector<1x32x1xf32>
    %cst_168 = arith.constant 0.00347222225 : f32
    %951 = vector.broadcast %cst_168 : f32 to vector<1x32x1xf32>
    %952 = arith.mulf %945, %951 : vector<1x32x1xf32>
    %cst_169 = arith.constant 0.00347222225 : f32
    %953 = vector.broadcast %cst_169 : f32 to vector<1x32x1xf32>
    %954 = arith.mulf %950, %953 : vector<1x32x1xf32>
    %955 = arith.mulf %952, %952 : vector<1x32x1xf32>
    %956 = arith.subf %954, %955 : vector<1x32x1xf32>
    %cst_170 = arith.constant 0.000000e+00 : f32
    %957 = vector.broadcast %cst_170 : f32 to vector<1x32x1xf32>
    %958 = arith.maximumf %956, %957 : vector<1x32x1xf32>
    %959 = vector.broadcast %952 : vector<1x32x1xf32> to vector<2x32x144xf32>
    %960 = arith.subf %939, %959 : vector<2x32x144xf32>
    %cst_171 = arith.constant 9.99999974E-6 : f32
    %961 = vector.broadcast %cst_171 : f32 to vector<1x32x1xf32>
    %962 = arith.addf %958, %961 : vector<1x32x1xf32>
    %963 = math.rsqrt %962 : vector<1x32x1xf32>
    %964 = vector.broadcast %963 : vector<1x32x1xf32> to vector<2x32x144xf32>
    %965 = arith.mulf %960, %964 : vector<2x32x144xf32>
    %966 = vector.shape_cast %940 : vector<32x1xf32> to vector<1x32x1xf32>
    %967 = vector.broadcast %966 : vector<1x32x1xf32> to vector<2x32x144xf32>
    %968 = arith.mulf %965, %967 : vector<2x32x144xf32>
    %969 = vector.shape_cast %941 : vector<32x1xf32> to vector<1x32x1xf32>
    %970 = vector.broadcast %969 : vector<1x32x1xf32> to vector<2x32x144xf32>
    %971 = arith.addf %968, %970 : vector<2x32x144xf32>
    %cst_172 = arith.constant 3.000000e+00 : f32
    %972 = vector.broadcast %cst_172 : f32 to vector<2x32x144xf32>
    %973 = arith.addf %971, %972 : vector<2x32x144xf32>
    %cst_173 = arith.constant 0.000000e+00 : f32
    %cst_174 = arith.constant 6.000000e+00 : f32
    %974 = vector.broadcast %cst_173 : f32 to vector<2x32x144xf32>
    %975 = arith.maximumf %974, %973 : vector<2x32x144xf32>
    %976 = vector.broadcast %cst_174 : f32 to vector<2x32x144xf32>
    %977 = arith.minimumf %976, %975 : vector<2x32x144xf32>
    %978 = arith.mulf %971, %977 : vector<2x32x144xf32>
    %cst_175 = arith.constant 0.166666672 : f32
    %979 = vector.broadcast %cst_175 : f32 to vector<2x32x144xf32>
    %980 = arith.mulf %978, %979 : vector<2x32x144xf32>
    %c0_176 = arith.constant 0 : index
    %c0_177 = arith.constant 0 : index
    %981 = vector.load %arg26[%c0_176, %c0_177] : memref<16x32xf32, #tpu.memory_space<vmem>>, vector<16x32xf32>
    %c0_178 = arith.constant 0 : index
    %c0_179 = arith.constant 0 : index
    %982 = vector.load %arg27[%c0_178, %c0_179] : memref<16x1xf32, #tpu.memory_space<vmem>>, vector<16x1xf32>
    %983 = vector.extract_strided_slice %980 {offsets = [0, 0, 0], sizes = [1, 32, 144], strides = [1, 1, 1]} : vector<2x32x144xf32> to vector<1x32x144xf32>
    %984 = vector.shape_cast %983 : vector<1x32x144xf32> to vector<32x144xf32>
    %cst_180 = arith.constant dense<0.000000e+00> : vector<16x144xf32>
    %985 = tpu.matmul %981, %984, %cst_180 {dimension_numbers = #tpu.dot_dimension_numbers<[1], [0], [0], [1], [0, 0, 1, 1], [], []>} : vector<16x32xf32>, vector<32x144xf32>, vector<16x144xf32> -> vector<16x144xf32>
    %986 = vector.broadcast %982 : vector<16x1xf32> to vector<16x144xf32>
    %987 = arith.addf %985, %986 : vector<16x144xf32>
    %c0_181 = arith.constant 0 : index
    %c0_182 = arith.constant 0 : index
    %c0_183 = arith.constant 0 : index
    %988 = vector.load %arg28[%c0_181, %c0_182, %c0_183] : memref<2x16x144xf32, #tpu.memory_space<vmem>>, vector<1x16x144xf32>
    %989 = vector.shape_cast %988 : vector<1x16x144xf32> to vector<16x144xf32>
    %990 = vector.shape_cast %987 : vector<16x144xf32> to vector<1x16x144xf32>
    tpu.vector_store %arg28[%c0_181, %c0_182, %c0_183], %990 {strides = array<i32>} : memref<2x16x144xf32, #tpu.memory_space<vmem>>, vector<1x16x144xf32>,
    %991 = vector.extract_strided_slice %980 {offsets = [1, 0, 0], sizes = [1, 32, 144], strides = [1, 1, 1]} : vector<2x32x144xf32> to vector<1x32x144xf32>
    %992 = vector.shape_cast %991 : vector<1x32x144xf32> to vector<32x144xf32>
    %cst_184 = arith.constant dense<0.000000e+00> : vector<16x144xf32>
    %993 = tpu.matmul %981, %992, %cst_184 {dimension_numbers = #tpu.dot_dimension_numbers<[1], [0], [0], [1], [0, 0, 1, 1], [], []>} : vector<16x32xf32>, vector<32x144xf32>, vector<16x144xf32> -> vector<16x144xf32>
    %994 = vector.broadcast %982 : vector<16x1xf32> to vector<16x144xf32>
    %995 = arith.addf %993, %994 : vector<16x144xf32>
    %c1 = arith.constant 1 : index
    %c0_185 = arith.constant 0 : index
    %c0_186 = arith.constant 0 : index
    %996 = vector.load %arg28[%c1, %c0_185, %c0_186] : memref<2x16x144xf32, #tpu.memory_space<vmem>>, vector<1x16x144xf32>
    %997 = vector.shape_cast %996 : vector<1x16x144xf32> to vector<16x144xf32>
    %998 = vector.shape_cast %995 : vector<16x144xf32> to vector<1x16x144xf32>
    tpu.vector_store %arg28[%c1, %c0_185, %c0_186], %998 {strides = array<i32>} : memref<2x16x144xf32, #tpu.memory_space<vmem>>, vector<1x16x144xf32>,
    return
  }
}

</mosaic_0001>

<llo_original>
// kernel: tpu_custom_call.1
$region0: #{tpu_custom_call.1}
  #allocation0 [shape = 'u32[]', space=smem, size = 0x4, offset = 0x4, fixed_abs, tag = 'smem constant byte address 0x4 - core index']
  #allocation1 [shape = 'u32[72,128]{1,0:T(1,128)}', space=vmem, size = 0x9000, scoped, tag = 'internal scratch']
  %s0 = inlined_call_operand.vmem [shape: f32[2,16,144], index: 0, kind: input, shape index: {}]
  %s1 = inlined_call_operand.vmem [shape: f32[16,1], index: 1, kind: input, shape index: {}]
  %s2 = inlined_call_operand.vmem [shape: f32[16,1], index: 2, kind: input, shape index: {}]
  %s3 = inlined_call_operand.vmem [shape: f32[64,16], index: 3, kind: input, shape index: {}]
  %s4 = inlined_call_operand.vmem [shape: f32[64,1], index: 4, kind: input, shape index: {}]
  %s5 = inlined_call_operand.vmem [shape: f32[64,1], index: 5, kind: input, shape index: {}]
  %s6 = inlined_call_operand.vmem [shape: f32[9,1,144], index: 6, kind: input, shape index: {}]
  %s7 = inlined_call_operand.vmem [shape: f32[9,16,1], index: 7, kind: input, shape index: {}]
  %s8 = inlined_call_operand.vmem [shape: f32[16,1], index: 8, kind: input, shape index: {}]
  %s9 = inlined_call_operand.vmem [shape: f32[16,1], index: 9, kind: input, shape index: {}]
  %s10 = inlined_call_operand.vmem [shape: f32[144,36], index: 10, kind: input, shape index: {}]
  %s11 = inlined_call_operand.vmem [shape: f32[25,1,144], index: 11, kind: input, shape index: {}]
  %s12 = inlined_call_operand.vmem [shape: f32[25,16,1], index: 12, kind: input, shape index: {}]
  %s13 = inlined_call_operand.vmem [shape: f32[16,1], index: 13, kind: input, shape index: {}]
  %s14 = inlined_call_operand.vmem [shape: f32[16,1], index: 14, kind: input, shape index: {}]
  %s15 = inlined_call_operand.vmem [shape: f32[144,16], index: 15, kind: input, shape index: {}]
  %s16 = inlined_call_operand.vmem [shape: f32[48,16], index: 16, kind: input, shape index: {}]
  %s17 = inlined_call_operand.vmem [shape: f32[48,1], index: 17, kind: input, shape index: {}]
  %s18 = inlined_call_operand.vmem [shape: f32[48,1], index: 18, kind: input, shape index: {}]
  %s19 = inlined_call_operand.vmem [shape: f32[48,16], index: 19, kind: input, shape index: {}]
  %s20 = inlined_call_operand.vmem [shape: f32[48,1], index: 20, kind: input, shape index: {}]
  %s21 = inlined_call_operand.vmem [shape: f32[48,1], index: 21, kind: input, shape index: {}]
  %s22 = inlined_call_operand.vmem [shape: f32[9,32,1], index: 22, kind: input, shape index: {}]
  %s23 = inlined_call_operand.vmem [shape: f32[32,1], index: 23, kind: input, shape index: {}]
  %s24 = inlined_call_operand.vmem [shape: f32[32,1], index: 24, kind: input, shape index: {}]
  %s25 = inlined_call_operand.vmem [shape: f32[32,1], index: 25, kind: input, shape index: {}]
  %s26 = inlined_call_operand.vmem [shape: f32[16,32], index: 26, kind: input, shape index: {}]
  %s27 = inlined_call_operand.vmem [shape: f32[16,1], index: 27, kind: input, shape index: {}]
  %s28 = inlined_call_operand.hbm [shape: f32[2,16,144], index: 28, kind: output, shape index: {}]
  %s29 = sld [smem:[#allocation0]]
  $region122: #{tpu_custom_call.1} parent=0
    _
  %s31 = ssub.s32 1, %s29
  %s32 = scalar_select 0, %s31, %s29
  $region1: #{tpu_custom_call.1} parent=0
    #allocation2 [shape = 'u8[32768]{0}', space=vmem, size = 0x8000, scoped, tag = 'output window, operand 0, single buffered']
    #allocation3 [shape = 's32[1]{0}', space=sflag, size = 0x4, scoped, tag = 'scoped memory for tpu_custom_call.1']
    %33 = vsyncpa [#allocation3], 0
    // Predicated region
    $region2: #{tpu_custom_call.1} parent=1 // pred_check
      _
    $region3: #{tpu_custom_call.1} parent=1 // pred_check_branch
      %35 = sbr.rel (0) target = $region5
    $region4: #{tpu_custom_call.1} parent=1 // pred_region
      _
    $region5: #{tpu_custom_call.1} parent=1 // pred_fallthru
      _
    // Predicated region
    $region6: #{tpu_custom_call.1} parent=1 // pred_check
      _
    $region7: #{tpu_custom_call.1} parent=1 // pred_check_branch
      %37 = sbr.rel (0) target = $region9
    $region8: #{tpu_custom_call.1} parent=1 // pred_region
      _
    $region9: #{tpu_custom_call.1} parent=1 // pred_fallthru
      _
    // Predicated region
    $region10: #{tpu_custom_call.1} parent=1 // pred_check
      _
    $region11: #{tpu_custom_call.1} parent=1 // pred_check_branch
      %39 = sbr.rel (0) target = $region13
    $region12: #{tpu_custom_call.1} parent=1 // pred_region
      _
    $region13: #{tpu_custom_call.1} parent=1 // pred_fallthru
      _
    // Predicated region
    $region14: #{tpu_custom_call.1} parent=1 // pred_check
      _
    $region15: #{tpu_custom_call.1} parent=1 // pred_check_branch
      %41 = sbr.rel (0) target = $region17
    $region16: #{tpu_custom_call.1} parent=1 // pred_region
      _
    $region17: #{tpu_custom_call.1} parent=1 // pred_fallthru
      _
    // Predicated region
    $region18: #{tpu_custom_call.1} parent=1 // pred_check
      _
    $region19: #{tpu_custom_call.1} parent=1 // pred_check_branch
      %43 = sbr.rel (0) target = $region21
    $region20: #{tpu_custom_call.1} parent=1 // pred_region
      _
    $region21: #{tpu_custom_call.1} parent=1 // pred_fallthru
      _
    // Predicated region
    $region22: #{tpu_custom_call.1} parent=1 // pred_check
      _
    $region23: #{tpu_custom_call.1} parent=1 // pred_check_branch
      %45 = sbr.rel (0) target = $region25
    $region24: #{tpu_custom_call.1} parent=1 // pred_region
      _
    $region25: #{tpu_custom_call.1} parent=1 // pred_fallthru
      _
    // Predicated region
    $region26: #{tpu_custom_call.1} parent=1 // pred_check
      _
    $region27: #{tpu_custom_call.1} parent=1 // pred_check_branch
      %47 = sbr.rel (0) target = $region29
    $region28: #{tpu_custom_call.1} parent=1 // pred_region
      _
    $region29: #{tpu_custom_call.1} parent=1 // pred_fallthru
      _
    // Predicated region
    $region30: #{tpu_custom_call.1} parent=1 // pred_check
      _
    $region31: #{tpu_custom_call.1} parent=1 // pred_check_branch
      %49 = sbr.rel (0) target = $region33
    $region32: #{tpu_custom_call.1} parent=1 // pred_region
      _
    $region33: #{tpu_custom_call.1} parent=1 // pred_fallthru
      _
    // Predicated region
    $region34: #{tpu_custom_call.1} parent=1 // pred_check
      _
    $region35: #{tpu_custom_call.1} parent=1 // pred_check_branch
      %51 = sbr.rel (0) target = $region37
    $region36: #{tpu_custom_call.1} parent=1 // pred_region
      _
    $region37: #{tpu_custom_call.1} parent=1 // pred_fallthru
      _
    // Predicated region
    $region38: #{tpu_custom_call.1} parent=1 // pred_check
      _
    $region39: #{tpu_custom_call.1} parent=1 // pred_check_branch
      %53 = sbr.rel (0) target = $region41
    $region40: #{tpu_custom_call.1} parent=1 // pred_region
      _
    $region41: #{tpu_custom_call.1} parent=1 // pred_fallthru
      _
    // Predicated region
    $region42: #{tpu_custom_call.1} parent=1 // pred_check
      _
    $region43: #{tpu_custom_call.1} parent=1 // pred_check_branch
      %55 = sbr.rel (0) target = $region45
    $region44: #{tpu_custom_call.1} parent=1 // pred_region
      _
    $region45: #{tpu_custom_call.1} parent=1 // pred_fallthru
      _
    // Predicated region
    $region46: #{tpu_custom_call.1} parent=1 // pred_check
      _
    $region47: #{tpu_custom_call.1} parent=1 // pred_check_branch
      %57 = sbr.rel (0) target = $region49
    $region48: #{tpu_custom_call.1} parent=1 // pred_region
      _
    $region49: #{tpu_custom_call.1} parent=1 // pred_fallthru
      _
    // Predicated region
    $region50: #{tpu_custom_call.1} parent=1 // pred_check
      _
    $region51: #{tpu_custom_call.1} parent=1 // pred_check_branch
      %59 = sbr.rel (0) target = $region53
    $region52: #{tpu_custom_call.1} parent=1 // pred_region
      _
    $region53: #{tpu_custom_call.1} parent=1 // pred_fallthru
      _
    // Predicated region
    $region54: #{tpu_custom_call.1} parent=1 // pred_check
      _
    $region55: #{tpu_custom_call.1} parent=1 // pred_check_branch
      %61 = sbr.rel (0) target = $region57
    $region56: #{tpu_custom_call.1} parent=1 // pred_region
      _
    $region57: #{tpu_custom_call.1} parent=1 // pred_fallthru
      _
    // Predicated region
    $region58: #{tpu_custom_call.1} parent=1 // pred_check
      _
    $region59: #{tpu_custom_call.1} parent=1 // pred_check_branch
      %63 = sbr.rel (0) target = $region61
    $region60: #{tpu_custom_call.1} parent=1 // pred_region
      _
    $region61: #{tpu_custom_call.1} parent=1 // pred_fallthru
      _
    // Predicated region
    $region62: #{tpu_custom_call.1} parent=1 // pred_check
      _
    $region63: #{tpu_custom_call.1} parent=1 // pred_check_branch
      %65 = sbr.rel (0) target = $region65
    $region64: #{tpu_custom_call.1} parent=1 // pred_region
      _
    $region65: #{tpu_custom_call.1} parent=1 // pred_fallthru
      _
    // Predicated region
    $region66: #{tpu_custom_call.1} parent=1 // pred_check
      _
    $region67: #{tpu_custom_call.1} parent=1 // pred_check_branch
      %67 = sbr.rel (0) target = $region69
    $region68: #{tpu_custom_call.1} parent=1 // pred_region
      _
    $region69: #{tpu_custom_call.1} parent=1 // pred_fallthru
      _
    // Predicated region
    $region70: #{tpu_custom_call.1} parent=1 // pred_check
      _
    $region71: #{tpu_custom_call.1} parent=1 // pred_check_branch
      %69 = sbr.rel (0) target = $region73
    $region72: #{tpu_custom_call.1} parent=1 // pred_region
      _
    $region73: #{tpu_custom_call.1} parent=1 // pred_fallthru
      _
    // Predicated region
    $region74: #{tpu_custom_call.1} parent=1 // pred_check
      _
    $region75: #{tpu_custom_call.1} parent=1 // pred_check_branch
      %71 = sbr.rel (0) target = $region77
    $region76: #{tpu_custom_call.1} parent=1 // pred_region
      _
    $region77: #{tpu_custom_call.1} parent=1 // pred_fallthru
      _
    // Predicated region
    $region78: #{tpu_custom_call.1} parent=1 // pred_check
      _
    $region79: #{tpu_custom_call.1} parent=1 // pred_check_branch
      %73 = sbr.rel (0) target = $region81
    $region80: #{tpu_custom_call.1} parent=1 // pred_region
      _
    $region81: #{tpu_custom_call.1} parent=1 // pred_fallthru
      _
    // Predicated region
    $region82: #{tpu_custom_call.1} parent=1 // pred_check
      _
    $region83: #{tpu_custom_call.1} parent=1 // pred_check_branch
      %75 = sbr.rel (0) target = $region85
    $region84: #{tpu_custom_call.1} parent=1 // pred_region
      _
    $region85: #{tpu_custom_call.1} parent=1 // pred_fallthru
      _
    // Predicated region
    $region86: #{tpu_custom_call.1} parent=1 // pred_check
      _
    $region87: #{tpu_custom_call.1} parent=1 // pred_check_branch
      %77 = sbr.rel (0) target = $region89
    $region88: #{tpu_custom_call.1} parent=1 // pred_region
      _
    $region89: #{tpu_custom_call.1} parent=1 // pred_fallthru
      _
    // Predicated region
    $region90: #{tpu_custom_call.1} parent=1 // pred_check
      _
    $region91: #{tpu_custom_call.1} parent=1 // pred_check_branch
      %79 = sbr.rel (0) target = $region93
    $region92: #{tpu_custom_call.1} parent=1 // pred_region
      _
    $region93: #{tpu_custom_call.1} parent=1 // pred_fallthru
      _
    // Predicated region
    $region94: #{tpu_custom_call.1} parent=1 // pred_check
      _
    $region95: #{tpu_custom_call.1} parent=1 // pred_check_branch
      %81 = sbr.rel (0) target = $region97
    $region96: #{tpu_custom_call.1} parent=1 // pred_region
      _
    $region97: #{tpu_custom_call.1} parent=1 // pred_fallthru
      _
    // Predicated region
    $region98: #{tpu_custom_call.1} parent=1 // pred_check
      _
    $region99: #{tpu_custom_call.1} parent=1 // pred_check_branch
      %83 = sbr.rel (0) target = $region101
    $region100: #{tpu_custom_call.1} parent=1 // pred_region
      _
    $region101: #{tpu_custom_call.1} parent=1 // pred_fallthru
      _
    // Predicated region
    $region102: #{tpu_custom_call.1} parent=1 // pred_check
      _
    $region103: #{tpu_custom_call.1} parent=1 // pred_check_branch
      %85 = sbr.rel (0) target = $region105
    $region104: #{tpu_custom_call.1} parent=1 // pred_region
      _
    $region105: #{tpu_custom_call.1} parent=1 // pred_fallthru
      _
    // Predicated region
    $region106: #{tpu_custom_call.1} parent=1 // pred_check
      _
    $region107: #{tpu_custom_call.1} parent=1 // pred_check_branch
      %87 = sbr.rel (0) target = $region109
    $region108: #{tpu_custom_call.1} parent=1 // pred_region
      _
    $region109: #{tpu_custom_call.1} parent=1 // pred_fallthru
      _
    // Predicated region
    $region110: #{tpu_custom_call.1} parent=1 // pred_check
      _
    $region111: #{tpu_custom_call.1} parent=1 // pred_check_branch
      %89 = sbr.rel (0) target = $region113
    $region112: #{tpu_custom_call.1} parent=1 // pred_region
      _
    $region113: #{tpu_custom_call.1} parent=1 // pred_fallthru
      _
    %v90 = vld [vmem:[%s0] sm:$0xff]
    %v91 = vld [vmem:[%s0 + $0x8] sm:$0xff]
    %v92 = vld [vmem:[%s0 + $0x10] sm:$0xff]
    %v93 = vld [vmem:[%s0 + $0x18] sm:$0xff]
    %v94 = vld [vmem:[%s0 + $0x20] sm:$0xff]
    %v95 = vld [vmem:[%s0 + $0x28] sm:$0xff]
    %v96 = vld [vmem:[%s0 + $0x30] sm:$0xff]
    %v97 = vld [vmem:[%s0 + $0x38] sm:$0xff]
    %v98 = vld [vmem:[%s1] sm:$0xff]
    %v99 = vld [vmem:[%s1 + $0x8] sm:$0xff]
    %v100 = vld [vmem:[%s2] sm:$0xff]
    %v101 = vld [vmem:[%s2 + $0x8] sm:$0xff]
    %vm102 = vcmask 130048
    %v103 = vsel %vm102, %v91, 0.0
    %v104 = vadd.f32 %v90, %v103
    %105 = vadd.xlane.f32.xlu0 %v104
    %v106 = vpop.xlane.xlu0 %105
    %v107 = vsel %vm102, %v93, 0.0
    %v108 = vadd.f32 %v92, %v107
    %109 = vadd.xlane.f32.xlu0 %v108
    %v110 = vpop.xlane.xlu0 %109
    %v111 = vsel %vm102, %v95, 0.0
    %v112 = vadd.f32 %v94, %v111
    %113 = vadd.xlane.f32.xlu0 %v112
    %v114 = vpop.xlane.xlu0 %113
    %v115 = vsel %vm102, %v97, 0.0
    %v116 = vadd.f32 %v96, %v115
    %117 = vadd.xlane.f32.xlu0 %v116
    %v118 = vpop.xlane.xlu0 %117
    %v119 = vadd.f32 %v106, %v114
    %v120 = vadd.f32 %v110, %v118
    %v121 = vmul.f32 %v90, %v90
    %v122 = vmul.f32 %v91, %v91
    %v123 = vmul.f32 %v92, %v92
    %v124 = vmul.f32 %v93, %v93
    %v125 = vmul.f32 %v94, %v94
    %v126 = vmul.f32 %v95, %v95
    %v127 = vmul.f32 %v96, %v96
    %v128 = vmul.f32 %v97, %v97
    %v129 = vsel %vm102, %v122, 0.0
    %v130 = vadd.f32 %v121, %v129
    %131 = vadd.xlane.f32.xlu0 %v130
    %v132 = vpop.xlane.xlu0 %131
    %v133 = vsel %vm102, %v124, 0.0
    %v134 = vadd.f32 %v123, %v133
    %135 = vadd.xlane.f32.xlu0 %v134
    %v136 = vpop.xlane.xlu0 %135
    %v137 = vsel %vm102, %v126, 0.0
    %v138 = vadd.f32 %v125, %v137
    %139 = vadd.xlane.f32.xlu0 %v138
    %v140 = vpop.xlane.xlu0 %139
    %v141 = vsel %vm102, %v128, 0.0
    %v142 = vadd.f32 %v127, %v141
    %143 = vadd.xlane.f32.xlu0 %v142
    %v144 = vpop.xlane.xlu0 %143
    %v145 = vadd.f32 %v132, %v140
    %v146 = vadd.f32 %v136, %v144
    %v147 = vmul.f32 %v119, 0.0034722222
    %v148 = vmul.f32 %v120, 0.0034722222
    %v149 = vmul.f32 %v145, 0.0034722222
    %v150 = vmul.f32 %v146, 0.0034722222
    %v151 = vmul.f32 %v147, %v147
    %v152 = vmul.f32 %v148, %v148
    %v153 = vsub.f32 %v149, %v151
    %v154 = vsub.f32 %v150, %v152
    %v155 = vmax.f32 %v153, 0.0
    %v156 = vmax.f32 %v154, 0.0
    %v157 = vsub.f32 %v90, %v147
    %v158 = vsub.f32 %v91, %v147
    %v159 = vsub.f32 %v92, %v148
    %v160 = vsub.f32 %v93, %v148
    %v161 = vsub.f32 %v94, %v147
    %v162 = vsub.f32 %v95, %v147
    %v163 = vsub.f32 %v96, %v148
    %v164 = vsub.f32 %v97, %v148
    %v165 = vadd.f32 %v155, 1e-05
    %v166 = vadd.f32 %v156, 1e-05
    %v167 = vrsqrt.pop %v165
    %v168 = vmul.f32 %v167, %v165
    %v169 = vmul.f32 %v168, %v167
    %v170 = vmul.f32 0.5, %v169
    %v171 = vsub.f32 1.5, %v170
    %v172 = vmul.f32 %v167, %v171
    %vm173 = vweird.f32 %v165
    %vm174 = vweird.f32 %v167
    %vm175 = vmor %vm173, %vm174
    %v176 = vsel %vm175, %v167, %v172
    %v177 = vrsqrt.pop %v166
    %v178 = vmul.f32 %v177, %v166
    %v179 = vmul.f32 %v178, %v177
    %v180 = vmul.f32 0.5, %v179
    %v181 = vsub.f32 1.5, %v180
    %v182 = vmul.f32 %v177, %v181
    %vm183 = vweird.f32 %v166
    %vm184 = vweird.f32 %v177
    %vm185 = vmor %vm183, %vm184
    %v186 = vsel %vm185, %v177, %v182
    %v187 = vmul.f32 %v157, %v176
    %v188 = vmul.f32 %v158, %v176
    %v189 = vmul.f32 %v159, %v186
    %v190 = vmul.f32 %v160, %v186
    %v191 = vmul.f32 %v161, %v176
    %v192 = vmul.f32 %v162, %v176
    %v193 = vmul.f32 %v163, %v186
    %v194 = vmul.f32 %v164, %v186
    %196 = vset.pattern.permute.xlu0 0
    %197 = vperm.xlu0 %196, %v98
    %v198 = vpop.permute.xlu0 %197
    %201 = vset.pattern.permute.xlu0 0
    %202 = vperm.xlu0 %201, %v99
    %v203 = vpop.permute.xlu0 %202
    %v205 = vmul.f32 %v187, %v198
    %v206 = vmul.f32 %v188, %v198
    %v207 = vmul.f32 %v189, %v203
    %v208 = vmul.f32 %v190, %v203
    %v209 = vmul.f32 %v191, %v198
    %v210 = vmul.f32 %v192, %v198
    %v211 = vmul.f32 %v193, %v203
    %v212 = vmul.f32 %v194, %v203
    %214 = vset.pattern.permute.xlu0 0
    %215 = vperm.xlu0 %214, %v100
    %v216 = vpop.permute.xlu0 %215
    %219 = vset.pattern.permute.xlu0 0
    %220 = vperm.xlu0 %219, %v101
    %v221 = vpop.permute.xlu0 %220
    %v223 = vadd.f32 %v205, %v216
    %v224 = vadd.f32 %v206, %v216
    %v225 = vadd.f32 %v207, %v221
    %v226 = vadd.f32 %v208, %v221
    %v227 = vadd.f32 %v209, %v216
    %v228 = vadd.f32 %v210, %v216
    %v229 = vadd.f32 %v211, %v221
    %v230 = vadd.f32 %v212, %v221
    %v231 = vld [vmem:[%s3] sm:$0xff]
    %v232 = vld [vmem:[%s3 + $0x8] sm:$0xff]
    %v233 = vld [vmem:[%s3 + $0x10] sm:$0xff]
    %v234 = vld [vmem:[%s3 + $0x18] sm:$0xff]
    %v235 = vld [vmem:[%s3 + $0x20] sm:$0xff]
    %v236 = vld [vmem:[%s3 + $0x28] sm:$0xff]
    %v237 = vld [vmem:[%s3 + $0x30] sm:$0xff]
    %v238 = vld [vmem:[%s3 + $0x38] sm:$0xff]
    %v240 = vsel %vm102, %v231, 0
    %v243 = vsel %vm102, %v232, 0
    %v246 = vsel %vm102, %v233, 0
    %v249 = vsel %vm102, %v234, 0
    %v252 = vsel %vm102, %v235, 0
    %v255 = vsel %vm102, %v236, 0
    %v258 = vsel %vm102, %v237, 0
    %v261 = vsel %vm102, %v238, 0
    %263 = vmatpush.msra.mxu0 0.0
    %264 = vmatpush.msra.mxu0 0.0
    %265 = vmatpush.msra.mxu0 0.0
    %266 = vmatpush.msra.mxu0 0.0
    %267 = vmatpush.msra.mxu0 0.0
    %268 = vmatpush.msra.mxu0 0.0
    %269 = vmatpush.msra.mxu0 0.0
    %270 = vmatpush.msra.mxu0 0.0
    %271 = vmatpush.msra.mxu0 0.0
    %272 = vmatpush.msra.mxu0 0.0
    %273 = vmatpush.msra.mxu0 0.0
    %274 = vmatpush.msra.mxu0 0.0
    %275 = vmatpush.msra.mxu0 0.0
    %276 = vmatpush.msra.mxu0 0.0
    %277 = vmatpush.msra.mxu0 %v225
    %278 = vmatpush.msra.mxu0 %v223
    %279 = vmatmul.f32.gmra.mxu0 %v240
    %v280 = vpop.f32.mrf.mxu0
    %v281 = vadd.f32 0.0, %v280
    %282 = vmatmul.f32.gmra.mxu0 %v243
    %v283 = vpop.f32.mrf.mxu0
    %v284 = vadd.f32 0.0, %v283
    %285 = vmatmul.f32.gmra.mxu0 %v246
    %v286 = vpop.f32.mrf.mxu0
    %v287 = vadd.f32 0.0, %v286
    %288 = vmatmul.f32.gmra.mxu0 %v249
    %v289 = vpop.f32.mrf.mxu0
    %v290 = vadd.f32 0.0, %v289
    %291 = vmatmul.f32.gmra.mxu0 %v252
    %v292 = vpop.f32.mrf.mxu0
    %v293 = vadd.f32 0.0, %v292
    %294 = vmatmul.f32.gmra.mxu0 %v255
    %v295 = vpop.f32.mrf.mxu0
    %v296 = vadd.f32 0.0, %v295
    %297 = vmatmul.f32.gmra.mxu0 %v258
    %v298 = vpop.f32.mrf.mxu0
    %v299 = vadd.f32 0.0, %v298
    %300 = vmatmul.f32.gmra.mxu0 %v261
    %v301 = vpop.f32.mrf.mxu0
    %v302 = vadd.f32 0.0, %v301
    %303 = vdwg.mxu0
    %304 = vmatpush.msra.mxu0 0.0
    %305 = vmatpush.msra.mxu0 0.0
    %306 = vmatpush.msra.mxu0 0.0
    %307 = vmatpush.msra.mxu0 0.0
    %308 = vmatpush.msra.mxu0 0.0
    %309 = vmatpush.msra.mxu0 0.0
    %310 = vmatpush.msra.mxu0 0.0
    %311 = vmatpush.msra.mxu0 0.0
    %312 = vmatpush.msra.mxu0 0.0
    %313 = vmatpush.msra.mxu0 0.0
    %314 = vmatpush.msra.mxu0 0.0
    %315 = vmatpush.msra.mxu0 0.0
    %316 = vmatpush.msra.mxu0 0.0
    %317 = vmatpush.msra.mxu0 0.0
    %318 = vmatpush.msra.mxu0 %v226
    %319 = vmatpush.msra.mxu0 %v224
    %320 = vmatmul.f32.gmra.mxu0 %v240
    %v321 = vpop.f32.mrf.mxu0
    %v322 = vadd.f32 0.0, %v321
    %323 = vmatmul.f32.gmra.mxu0 %v243
    %v324 = vpop.f32.mrf.mxu0
    %v325 = vadd.f32 0.0, %v324
    %326 = vmatmul.f32.gmra.mxu0 %v246
    %v327 = vpop.f32.mrf.mxu0
    %v328 = vadd.f32 0.0, %v327
    %329 = vmatmul.f32.gmra.mxu0 %v249
    %v330 = vpop.f32.mrf.mxu0
    %v331 = vadd.f32 0.0, %v330
    %332 = vmatmul.f32.gmra.mxu0 %v252
    %v333 = vpop.f32.mrf.mxu0
    %v334 = vadd.f32 0.0, %v333
    %335 = vmatmul.f32.gmra.mxu0 %v255
    %v336 = vpop.f32.mrf.mxu0
    %v337 = vadd.f32 0.0, %v336
    %338 = vmatmul.f32.gmra.mxu0 %v258
    %v339 = vpop.f32.mrf.mxu0
    %v340 = vadd.f32 0.0, %v339
    %341 = vmatmul.f32.gmra.mxu0 %v261
    %v342 = vpop.f32.mrf.mxu0
    %v343 = vadd.f32 0.0, %v342
    %344 = vdwg.mxu0
    %345 = vmatpush.msra.mxu0 0.0
    %346 = vmatpush.msra.mxu0 0.0
    %347 = vmatpush.msra.mxu0 0.0
    %348 = vmatpush.msra.mxu0 0.0
    %349 = vmatpush.msra.mxu0 0.0
    %350 = vmatpush.msra.mxu0 0.0
    %351 = vmatpush.msra.mxu0 0.0
    %352 = vmatpush.msra.mxu0 0.0
    %353 = vmatpush.msra.mxu0 0.0
    %354 = vmatpush.msra.mxu0 0.0
    %355 = vmatpush.msra.mxu0 0.0
    %356 = vmatpush.msra.mxu0 0.0
    %357 = vmatpush.msra.mxu0 0.0
    %358 = vmatpush.msra.mxu0 0.0
    %359 = vmatpush.msra.mxu0 %v229
    %360 = vmatpush.msra.mxu0 %v227
    %361 = vmatmul.f32.gmra.mxu0 %v240
    %v362 = vpop.f32.mrf.mxu0
    %v363 = vadd.f32 0.0, %v362
    %364 = vmatmul.f32.gmra.mxu0 %v243
    %v365 = vpop.f32.mrf.mxu0
    %v366 = vadd.f32 0.0, %v365
    %367 = vmatmul.f32.gmra.mxu0 %v246
    %v368 = vpop.f32.mrf.mxu0
    %v369 = vadd.f32 0.0, %v368
    %370 = vmatmul.f32.gmra.mxu0 %v249
    %v371 = vpop.f32.mrf.mxu0
    %v372 = vadd.f32 0.0, %v371
    %373 = vmatmul.f32.gmra.mxu0 %v252
    %v374 = vpop.f32.mrf.mxu0
    %v375 = vadd.f32 0.0, %v374
    %376 = vmatmul.f32.gmra.mxu0 %v255
    %v377 = vpop.f32.mrf.mxu0
    %v378 = vadd.f32 0.0, %v377
    %379 = vmatmul.f32.gmra.mxu0 %v258
    %v380 = vpop.f32.mrf.mxu0
    %v381 = vadd.f32 0.0, %v380
    %382 = vmatmul.f32.gmra.mxu0 %v261
    %v383 = vpop.f32.mrf.mxu0
    %v384 = vadd.f32 0.0, %v383
    %385 = vdwg.mxu0
    %386 = vmatpush.msra.mxu0 0.0
    %387 = vmatpush.msra.mxu0 0.0
    %388 = vmatpush.msra.mxu0 0.0
    %389 = vmatpush.msra.mxu0 0.0
    %390 = vmatpush.msra.mxu0 0.0
    %391 = vmatpush.msra.mxu0 0.0
    %392 = vmatpush.msra.mxu0 0.0
    %393 = vmatpush.msra.mxu0 0.0
    %394 = vmatpush.msra.mxu0 0.0
    %395 = vmatpush.msra.mxu0 0.0
    %396 = vmatpush.msra.mxu0 0.0
    %397 = vmatpush.msra.mxu0 0.0
    %398 = vmatpush.msra.mxu0 0.0
    %399 = vmatpush.msra.mxu0 0.0
    %400 = vmatpush.msra.mxu0 %v230
    %401 = vmatpush.msra.mxu0 %v228
    %402 = vmatmul.f32.gmra.mxu0 %v240
    %v403 = vpop.f32.mrf.mxu0
    %v404 = vadd.f32 0.0, %v403
    %405 = vmatmul.f32.gmra.mxu0 %v243
    %v406 = vpop.f32.mrf.mxu0
    %v407 = vadd.f32 0.0, %v406
    %408 = vmatmul.f32.gmra.mxu0 %v246
    %v409 = vpop.f32.mrf.mxu0
    %v410 = vadd.f32 0.0, %v409
    %411 = vmatmul.f32.gmra.mxu0 %v249
    %v412 = vpop.f32.mrf.mxu0
    %v413 = vadd.f32 0.0, %v412
    %414 = vmatmul.f32.gmra.mxu0 %v252
    %v415 = vpop.f32.mrf.mxu0
    %v416 = vadd.f32 0.0, %v415
    %417 = vmatmul.f32.gmra.mxu0 %v255
    %v418 = vpop.f32.mrf.mxu0
    %v419 = vadd.f32 0.0, %v418
    %420 = vmatmul.f32.gmra.mxu0 %v258
    %v421 = vpop.f32.mrf.mxu0
    %v422 = vadd.f32 0.0, %v421
    %423 = vmatmul.f32.gmra.mxu0 %v261
    %v424 = vpop.f32.mrf.mxu0
    %v425 = vadd.f32 0.0, %v424
    %426 = vdwg.mxu0
    %v427 = vld [vmem:[%s4] sm:$0xff]
    %v428 = vld [vmem:[%s4 + $0x8] sm:$0xff]
    %v429 = vld [vmem:[%s4 + $0x10] sm:$0xff]
    %v430 = vld [vmem:[%s4 + $0x18] sm:$0xff]
    %v431 = vld [vmem:[%s4 + $0x20] sm:$0xff]
    %v432 = vld [vmem:[%s4 + $0x28] sm:$0xff]
    %v433 = vld [vmem:[%s4 + $0x30] sm:$0xff]
    %v434 = vld [vmem:[%s4 + $0x38] sm:$0xff]
    %v435 = vld [vmem:[%s5] sm:$0xff]
    %v436 = vld [vmem:[%s5 + $0x8] sm:$0xff]
    %v437 = vld [vmem:[%s5 + $0x10] sm:$0xff]
    %v438 = vld [vmem:[%s5 + $0x18] sm:$0xff]
    %v439 = vld [vmem:[%s5 + $0x20] sm:$0xff]
    %v440 = vld [vmem:[%s5 + $0x28] sm:$0xff]
    %v441 = vld [vmem:[%s5 + $0x30] sm:$0xff]
    %v442 = vld [vmem:[%s5 + $0x38] sm:$0xff]
    %v443 = vsel %vm102, %v322, 0.0
    %v444 = vadd.f32 %v281, %v443
    %445 = vadd.xlane.f32.xlu0 %v444
    %v446 = vpop.xlane.xlu0 %445
    %v447 = vsel %vm102, %v325, 0.0
    %v448 = vadd.f32 %v284, %v447
    %449 = vadd.xlane.f32.xlu0 %v448
    %v450 = vpop.xlane.xlu0 %449
    %v451 = vsel %vm102, %v328, 0.0
    %v452 = vadd.f32 %v287, %v451
    %453 = vadd.xlane.f32.xlu0 %v452
    %v454 = vpop.xlane.xlu0 %453
    %v455 = vsel %vm102, %v331, 0.0
    %v456 = vadd.f32 %v290, %v455
    %457 = vadd.xlane.f32.xlu0 %v456
    %v458 = vpop.xlane.xlu0 %457
    %v459 = vsel %vm102, %v334, 0.0
    %v460 = vadd.f32 %v293, %v459
    %461 = vadd.xlane.f32.xlu0 %v460
    %v462 = vpop.xlane.xlu0 %461
    %v463 = vsel %vm102, %v337, 0.0
    %v464 = vadd.f32 %v296, %v463
    %465 = vadd.xlane.f32.xlu0 %v464
    %v466 = vpop.xlane.xlu0 %465
    %v467 = vsel %vm102, %v340, 0.0
    %v468 = vadd.f32 %v299, %v467
    %469 = vadd.xlane.f32.xlu0 %v468
    %v470 = vpop.xlane.xlu0 %469
    %v471 = vsel %vm102, %v343, 0.0
    %v472 = vadd.f32 %v302, %v471
    %473 = vadd.xlane.f32.xlu0 %v472
    %v474 = vpop.xlane.xlu0 %473
    %v475 = vsel %vm102, %v404, 0.0
    %v476 = vadd.f32 %v363, %v475
    %477 = vadd.xlane.f32.xlu0 %v476
    %v478 = vpop.xlane.xlu0 %477
    %v479 = vsel %vm102, %v407, 0.0
    %v480 = vadd.f32 %v366, %v479
    %481 = vadd.xlane.f32.xlu0 %v480
    %v482 = vpop.xlane.xlu0 %481
    %v483 = vsel %vm102, %v410, 0.0
    %v484 = vadd.f32 %v369, %v483
    %485 = vadd.xlane.f32.xlu0 %v484
    %v486 = vpop.xlane.xlu0 %485
    %v487 = vsel %vm102, %v413, 0.0
    %v488 = vadd.f32 %v372, %v487
    %489 = vadd.xlane.f32.xlu0 %v488
    %v490 = vpop.xlane.xlu0 %489
    %v491 = vsel %vm102, %v416, 0.0
    %v492 = vadd.f32 %v375, %v491
    %493 = vadd.xlane.f32.xlu0 %v492
    %v494 = vpop.xlane.xlu0 %493
    %v495 = vsel %vm102, %v419, 0.0
    %v496 = vadd.f32 %v378, %v495
    %497 = vadd.xlane.f32.xlu0 %v496
    %v498 = vpop.xlane.xlu0 %497
    %v499 = vsel %vm102, %v422, 0.0
    %v500 = vadd.f32 %v381, %v499
    %501 = vadd.xlane.f32.xlu0 %v500
    %v502 = vpop.xlane.xlu0 %501
    %v503 = vsel %vm102, %v425, 0.0
    %v504 = vadd.f32 %v384, %v503
    %505 = vadd.xlane.f32.xlu0 %v504
    %v506 = vpop.xlane.xlu0 %505
    %v507 = vadd.f32 %v446, %v478
    %v508 = vadd.f32 %v450, %v482
    %v509 = vadd.f32 %v454, %v486
    %v510 = vadd.f32 %v458, %v490
    %v511 = vadd.f32 %v462, %v494
    %v512 = vadd.f32 %v466, %v498
    %v513 = vadd.f32 %v470, %v502
    %v514 = vadd.f32 %v474, %v506
    %v515 = vmul.f32 %v281, %v281
    %v516 = vmul.f32 %v322, %v322
    %v517 = vmul.f32 %v284, %v284
    %v518 = vmul.f32 %v325, %v325
    %v519 = vmul.f32 %v287, %v287
    %v520 = vmul.f32 %v328, %v328
    %v521 = vmul.f32 %v290, %v290
    %v522 = vmul.f32 %v331, %v331
    %v523 = vmul.f32 %v293, %v293
    %v524 = vmul.f32 %v334, %v334
    %v525 = vmul.f32 %v296, %v296
    %v526 = vmul.f32 %v337, %v337
    %v527 = vmul.f32 %v299, %v299
    %v528 = vmul.f32 %v340, %v340
    %v529 = vmul.f32 %v302, %v302
    %v530 = vmul.f32 %v343, %v343
    %v531 = vmul.f32 %v363, %v363
    %v532 = vmul.f32 %v404, %v404
    %v533 = vmul.f32 %v366, %v366
    %v534 = vmul.f32 %v407, %v407
    %v535 = vmul.f32 %v369, %v369
    %v536 = vmul.f32 %v410, %v410
    %v537 = vmul.f32 %v372, %v372
    %v538 = vmul.f32 %v413, %v413
    %v539 = vmul.f32 %v375, %v375
    %v540 = vmul.f32 %v416, %v416
    %v541 = vmul.f32 %v378, %v378
    %v542 = vmul.f32 %v419, %v419
    %v543 = vmul.f32 %v381, %v381
    %v544 = vmul.f32 %v422, %v422
    %v545 = vmul.f32 %v384, %v384
    %v546 = vmul.f32 %v425, %v425
    %v547 = vsel %vm102, %v516, 0.0
    %v548 = vadd.f32 %v515, %v547
    %549 = vadd.xlane.f32.xlu0 %v548
    %v550 = vpop.xlane.xlu0 %549
    %v551 = vsel %vm102, %v518, 0.0
    %v552 = vadd.f32 %v517, %v551
    %553 = vadd.xlane.f32.xlu0 %v552
    %v554 = vpop.xlane.xlu0 %553
    %v555 = vsel %vm102, %v520, 0.0
    %v556 = vadd.f32 %v519, %v555
    %557 = vadd.xlane.f32.xlu0 %v556
    %v558 = vpop.xlane.xlu0 %557
    %v559 = vsel %vm102, %v522, 0.0
    %v560 = vadd.f32 %v521, %v559
    %561 = vadd.xlane.f32.xlu0 %v560
    %v562 = vpop.xlane.xlu0 %561
    %v563 = vsel %vm102, %v524, 0.0
    %v564 = vadd.f32 %v523, %v563
    %565 = vadd.xlane.f32.xlu0 %v564
    %v566 = vpop.xlane.xlu0 %565
    %v567 = vsel %vm102, %v526, 0.0
    %v568 = vadd.f32 %v525, %v567
    %569 = vadd.xlane.f32.xlu0 %v568
    %v570 = vpop.xlane.xlu0 %569
    %v571 = vsel %vm102, %v528, 0.0
    %v572 = vadd.f32 %v527, %v571
    %573 = vadd.xlane.f32.xlu0 %v572
    %v574 = vpop.xlane.xlu0 %573
    %v575 = vsel %vm102, %v530, 0.0
    %v576 = vadd.f32 %v529, %v575
    %577 = vadd.xlane.f32.xlu0 %v576
    %v578 = vpop.xlane.xlu0 %577
    %v579 = vsel %vm102, %v532, 0.0
    %v580 = vadd.f32 %v531, %v579
    %581 = vadd.xlane.f32.xlu0 %v580
    %v582 = vpop.xlane.xlu0 %581
    %v583 = vsel %vm102, %v534, 0.0
    %v584 = vadd.f32 %v533, %v583
    %585 = vadd.xlane.f32.xlu0 %v584
    %v586 = vpop.xlane.xlu0 %585
    %v587 = vsel %vm102, %v536, 0.0
    %v588 = vadd.f32 %v535, %v587
    %589 = vadd.xlane.f32.xlu0 %v588
    %v590 = vpop.xlane.xlu0 %589
    %v591 = vsel %vm102, %v538, 0.0
    %v592 = vadd.f32 %v537, %v591
    %593 = vadd.xlane.f32.xlu0 %v592
    %v594 = vpop.xlane.xlu0 %593
    %v595 = vsel %vm102, %v540, 0.0
    %v596 = vadd.f32 %v539, %v595
    %597 = vadd.xlane.f32.xlu0 %v596
    %v598 = vpop.xlane.xlu0 %597
    %v599 = vsel %vm102, %v542, 0.0
    %v600 = vadd.f32 %v541, %v599
    %601 = vadd.xlane.f32.xlu0 %v600
    %v602 = vpop.xlane.xlu0 %601
    %v603 = vsel %vm102, %v544, 0.0
    %v604 = vadd.f32 %v543, %v603
    %605 = vadd.xlane.f32.xlu0 %v604
    %v606 = vpop.xlane.xlu0 %605
    %v607 = vsel %vm102, %v546, 0.0
    %v608 = vadd.f32 %v545, %v607
    %609 = vadd.xlane.f32.xlu0 %v608
    %v610 = vpop.xlane.xlu0 %609
    %v611 = vadd.f32 %v550, %v582
    %v612 = vadd.f32 %v554, %v586
    %v613 = vadd.f32 %v558, %v590
    %v614 = vadd.f32 %v562, %v594
    %v615 = vadd.f32 %v566, %v598
    %v616 = vadd.f32 %v570, %v602
    %v617 = vadd.f32 %v574, %v606
    %v618 = vadd.f32 %v578, %v610
    %v619 = vmul.f32 %v507, 0.0034722222
    %v620 = vmul.f32 %v508, 0.0034722222
    %v621 = vmul.f32 %v509, 0.0034722222
    %v622 = vmul.f32 %v510, 0.0034722222
    %v623 = vmul.f32 %v511, 0.0034722222
    %v624 = vmul.f32 %v512, 0.0034722222
    %v625 = vmul.f32 %v513, 0.0034722222
    %v626 = vmul.f32 %v514, 0.0034722222
    %v627 = vmul.f32 %v611, 0.0034722222
    %v628 = vmul.f32 %v612, 0.0034722222
    %v629 = vmul.f32 %v613, 0.0034722222
    %v630 = vmul.f32 %v614, 0.0034722222
    %v631 = vmul.f32 %v615, 0.0034722222
    %v632 = vmul.f32 %v616, 0.0034722222
    %v633 = vmul.f32 %v617, 0.0034722222
    %v634 = vmul.f32 %v618, 0.0034722222
    %v635 = vmul.f32 %v619, %v619
    %v636 = vmul.f32 %v620, %v620
    %v637 = vmul.f32 %v621, %v621
    %v638 = vmul.f32 %v622, %v622
    %v639 = vmul.f32 %v623, %v623
    %v640 = vmul.f32 %v624, %v624
    %v641 = vmul.f32 %v625, %v625
    %v642 = vmul.f32 %v626, %v626
    %v643 = vsub.f32 %v627, %v635
    %v644 = vsub.f32 %v628, %v636
    %v645 = vsub.f32 %v629, %v637
    %v646 = vsub.f32 %v630, %v638
    %v647 = vsub.f32 %v631, %v639
    %v648 = vsub.f32 %v632, %v640
    %v649 = vsub.f32 %v633, %v641
    %v650 = vsub.f32 %v634, %v642
    %v651 = vmax.f32 %v643, 0.0
    %v652 = vmax.f32 %v644, 0.0
    %v653 = vmax.f32 %v645, 0.0
    %v654 = vmax.f32 %v646, 0.0
    %v655 = vmax.f32 %v647, 0.0
    %v656 = vmax.f32 %v648, 0.0
    %v657 = vmax.f32 %v649, 0.0
    %v658 = vmax.f32 %v650, 0.0
    %v659 = vsub.f32 %v281, %v619
    %v660 = vsub.f32 %v322, %v619
    %v661 = vsub.f32 %v284, %v620
    %v662 = vsub.f32 %v325, %v620
    %v663 = vsub.f32 %v287, %v621
    %v664 = vsub.f32 %v328, %v621
    %v665 = vsub.f32 %v290, %v622
    %v666 = vsub.f32 %v331, %v622
    %v667 = vsub.f32 %v293, %v623
    %v668 = vsub.f32 %v334, %v623
    %v669 = vsub.f32 %v296, %v624
    %v670 = vsub.f32 %v337, %v624
    %v671 = vsub.f32 %v299, %v625
    %v672 = vsub.f32 %v340, %v625
    %v673 = vsub.f32 %v302, %v626
    %v674 = vsub.f32 %v343, %v626
    %v675 = vsub.f32 %v363, %v619
    %v676 = vsub.f32 %v404, %v619
    %v677 = vsub.f32 %v366, %v620
    %v678 = vsub.f32 %v407, %v620
    %v679 = vsub.f32 %v369, %v621
    %v680 = vsub.f32 %v410, %v621
    %v681 = vsub.f32 %v372, %v622
    %v682 = vsub.f32 %v413, %v622
    %v683 = vsub.f32 %v375, %v623
    %v684 = vsub.f32 %v416, %v623
    %v685 = vsub.f32 %v378, %v624
    %v686 = vsub.f32 %v419, %v624
    %v687 = vsub.f32 %v381, %v625
    %v688 = vsub.f32 %v422, %v625
    %v689 = vsub.f32 %v384, %v626
    %v690 = vsub.f32 %v425, %v626
    %v691 = vadd.f32 %v651, 1e-05
    %v692 = vadd.f32 %v652, 1e-05
    %v693 = vadd.f32 %v653, 1e-05
    %v694 = vadd.f32 %v654, 1e-05
    %v695 = vadd.f32 %v655, 1e-05
    %v696 = vadd.f32 %v656, 1e-05
    %v697 = vadd.f32 %v657, 1e-05
    %v698 = vadd.f32 %v658, 1e-05
    %v699 = vrsqrt.pop %v691
    %v700 = vmul.f32 %v699, %v691
    %v701 = vmul.f32 %v700, %v699
    %v702 = vmul.f32 0.5, %v701
    %v703 = vsub.f32 1.5, %v702
    %v704 = vmul.f32 %v699, %v703
    %vm705 = vweird.f32 %v691
    %vm706 = vweird.f32 %v699
    %vm707 = vmor %vm705, %vm706
    %v708 = vsel %vm707, %v699, %v704
    %v709 = vrsqrt.pop %v692
    %v710 = vmul.f32 %v709, %v692
    %v711 = vmul.f32 %v710, %v709
    %v712 = vmul.f32 0.5, %v711
    %v713 = vsub.f32 1.5, %v712
    %v714 = vmul.f32 %v709, %v713
    %vm715 = vweird.f32 %v692
    %vm716 = vweird.f32 %v709
    %vm717 = vmor %vm715, %vm716
    %v718 = vsel %vm717, %v709, %v714
    %v719 = vrsqrt.pop %v693
    %v720 = vmul.f32 %v719, %v693
    %v721 = vmul.f32 %v720, %v719
    %v722 = vmul.f32 0.5, %v721
    %v723 = vsub.f32 1.5, %v722
    %v724 = vmul.f32 %v719, %v723
    %vm725 = vweird.f32 %v693
    %vm726 = vweird.f32 %v719
    %vm727 = vmor %vm725, %vm726
    %v728 = vsel %vm727, %v719, %v724
    %v729 = vrsqrt.pop %v694
    %v730 = vmul.f32 %v729, %v694
    %v731 = vmul.f32 %v730, %v729
    %v732 = vmul.f32 0.5, %v731
    %v733 = vsub.f32 1.5, %v732
    %v734 = vmul.f32 %v729, %v733
    %vm735 = vweird.f32 %v694
    %vm736 = vweird.f32 %v729
    %vm737 = vmor %vm735, %vm736
    %v738 = vsel %vm737, %v729, %v734
    %v739 = vrsqrt.pop %v695
    %v740 = vmul.f32 %v739, %v695
    %v741 = vmul.f32 %v740, %v739
    %v742 = vmul.f32 0.5, %v741
    %v743 = vsub.f32 1.5, %v742
    %v744 = vmul.f32 %v739, %v743
    %vm745 = vweird.f32 %v695
    %vm746 = vweird.f32 %v739
    %vm747 = vmor %vm745, %vm746
    %v748 = vsel %vm747, %v739, %v744
    %v749 = vrsqrt.pop %v696
    %v750 = vmul.f32 %v749, %v696
    %v751 = vmul.f32 %v750, %v749
    %v752 = vmul.f32 0.5, %v751
    %v753 = vsub.f32 1.5, %v752
    %v754 = vmul.f32 %v749, %v753
    %vm755 = vweird.f32 %v696
    %vm756 = vweird.f32 %v749
    %vm757 = vmor %vm755, %vm756
    %v758 = vsel %vm757, %v749, %v754
    %v759 = vrsqrt.pop %v697
    %v760 = vmul.f32 %v759, %v697
    %v761 = vmul.f32 %v760, %v759
    %v762 = vmul.f32 0.5, %v761
    %v763 = vsub.f32 1.5, %v762
    %v764 = vmul.f32 %v759, %v763
    %vm765 = vweird.f32 %v697
    %vm766 = vweird.f32 %v759
    %vm767 = vmor %vm765, %vm766
    %v768 = vsel %vm767, %v759, %v764
    %v769 = vrsqrt.pop %v698
    %v770 = vmul.f32 %v769, %v698
    %v771 = vmul.f32 %v770, %v769
    %v772 = vmul.f32 0.5, %v771
    %v773 = vsub.f32 1.5, %v772
    %v774 = vmul.f32 %v769, %v773
    %vm775 = vweird.f32 %v698
    %vm776 = vweird.f32 %v769
    %vm777 = vmor %vm775, %vm776
    %v778 = vsel %vm777, %v769, %v774
    %v779 = vmul.f32 %v659, %v708
    %v780 = vmul.f32 %v660, %v708
    %v781 = vmul.f32 %v661, %v718
    %v782 = vmul.f32 %v662, %v718
    %v783 = vmul.f32 %v663, %v728
    %v784 = vmul.f32 %v664, %v728
    %v785 = vmul.f32 %v665, %v738
    %v786 = vmul.f32 %v666, %v738
    %v787 = vmul.f32 %v667, %v748
    %v788 = vmul.f32 %v668, %v748
    %v789 = vmul.f32 %v669, %v758
    %v790 = vmul.f32 %v670, %v758
    %v791 = vmul.f32 %v671, %v768
    %v792 = vmul.f32 %v672, %v768
    %v793 = vmul.f32 %v673, %v778
    %v794 = vmul.f32 %v674, %v778
    %v795 = vmul.f32 %v675, %v708
    %v796 = vmul.f32 %v676, %v708
    %v797 = vmul.f32 %v677, %v718
    %v798 = vmul.f32 %v678, %v718
    %v799 = vmul.f32 %v679, %v728
    %v800 = vmul.f32 %v680, %v728
    %v801 = vmul.f32 %v681, %v738
    %v802 = vmul.f32 %v682, %v738
    %v803 = vmul.f32 %v683, %v748
    %v804 = vmul.f32 %v684, %v748
    %v805 = vmul.f32 %v685, %v758
    %v806 = vmul.f32 %v686, %v758
    %v807 = vmul.f32 %v687, %v768
    %v808 = vmul.f32 %v688, %v768
    %v809 = vmul.f32 %v689, %v778
    %v810 = vmul.f32 %v690, %v778
    %812 = vset.pattern.permute.xlu0 0
    %813 = vperm.xlu0 %812, %v427
    %v814 = vpop.permute.xlu0 %813
    %817 = vset.pattern.permute.xlu0 0
    %818 = vperm.xlu0 %817, %v428
    %v819 = vpop.permute.xlu0 %818
    %822 = vset.pattern.permute.xlu0 0
    %823 = vperm.xlu0 %822, %v429
    %v824 = vpop.permute.xlu0 %823
    %827 = vset.pattern.permute.xlu0 0
    %828 = vperm.xlu0 %827, %v430
    %v829 = vpop.permute.xlu0 %828
    %832 = vset.pattern.permute.xlu0 0
    %833 = vperm.xlu0 %832, %v431
    %v834 = vpop.permute.xlu0 %833
    %837 = vset.pattern.permute.xlu0 0
    %838 = vperm.xlu0 %837, %v432
    %v839 = vpop.permute.xlu0 %838
    %842 = vset.pattern.permute.xlu0 0
    %843 = vperm.xlu0 %842, %v433
    %v844 = vpop.permute.xlu0 %843
    %847 = vset.pattern.permute.xlu0 0
    %848 = vperm.xlu0 %847, %v434
    %v849 = vpop.permute.xlu0 %848
    %v851 = vmul.f32 %v779, %v814
    %v852 = vmul.f32 %v780, %v814
    %v853 = vmul.f32 %v781, %v819
    %v854 = vmul.f32 %v782, %v819
    %v855 = vmul.f32 %v783, %v824
    %v856 = vmul.f32 %v784, %v824
    %v857 = vmul.f32 %v785, %v829
    %v858 = vmul.f32 %v786, %v829
    %v859 = vmul.f32 %v787, %v834
    %v860 = vmul.f32 %v788, %v834
    %v861 = vmul.f32 %v789, %v839
    %v862 = vmul.f32 %v790, %v839
    %v863 = vmul.f32 %v791, %v844
    %v864 = vmul.f32 %v792, %v844
    %v865 = vmul.f32 %v793, %v849
    %v866 = vmul.f32 %v794, %v849
    %v867 = vmul.f32 %v795, %v814
    %v868 = vmul.f32 %v796, %v814
    %v869 = vmul.f32 %v797, %v819
    %v870 = vmul.f32 %v798, %v819
    %v871 = vmul.f32 %v799, %v824
    %v872 = vmul.f32 %v800, %v824
    %v873 = vmul.f32 %v801, %v829
    %v874 = vmul.f32 %v802, %v829
    %v875 = vmul.f32 %v803, %v834
    %v876 = vmul.f32 %v804, %v834
    %v877 = vmul.f32 %v805, %v839
    %v878 = vmul.f32 %v806, %v839
    %v879 = vmul.f32 %v807, %v844
    %v880 = vmul.f32 %v808, %v844
    %v881 = vmul.f32 %v809, %v849
    %v882 = vmul.f32 %v810, %v849
    %884 = vset.pattern.permute.xlu0 0
    %885 = vperm.xlu0 %884, %v435
    %v886 = vpop.permute.xlu0 %885
    %889 = vset.pattern.permute.xlu0 0
    %890 = vperm.xlu0 %889, %v436
    %v891 = vpop.permute.xlu0 %890
    %894 = vset.pattern.permute.xlu0 0
    %895 = vperm.xlu0 %894, %v437
    %v896 = vpop.permute.xlu0 %895
    %899 = vset.pattern.permute.xlu0 0
    %900 = vperm.xlu0 %899, %v438
    %v901 = vpop.permute.xlu0 %900
    %904 = vset.pattern.permute.xlu0 0
    %905 = vperm.xlu0 %904, %v439
    %v906 = vpop.permute.xlu0 %905
    %909 = vset.pattern.permute.xlu0 0
    %910 = vperm.xlu0 %909, %v440
    %v911 = vpop.permute.xlu0 %910
    %914 = vset.pattern.permute.xlu0 0
    %915 = vperm.xlu0 %914, %v441
    %v916 = vpop.permute.xlu0 %915
    %919 = vset.pattern.permute.xlu0 0
    %920 = vperm.xlu0 %919, %v442
    %v921 = vpop.permute.xlu0 %920
    %v923 = vadd.f32 %v851, %v886
    %v924 = vadd.f32 %v852, %v886
    %v925 = vadd.f32 %v853, %v891
    %v926 = vadd.f32 %v854, %v891
    %v927 = vadd.f32 %v855, %v896
    %v928 = vadd.f32 %v856, %v896
    %v929 = vadd.f32 %v857, %v901
    %v930 = vadd.f32 %v858, %v901
    %v931 = vadd.f32 %v859, %v906
    %v932 = vadd.f32 %v860, %v906
    %v933 = vadd.f32 %v861, %v911
    %v934 = vadd.f32 %v862, %v911
    %v935 = vadd.f32 %v863, %v916
    %v936 = vadd.f32 %v864, %v916
    %v937 = vadd.f32 %v865, %v921
    %v938 = vadd.f32 %v866, %v921
    %v939 = vadd.f32 %v867, %v886
    %v940 = vadd.f32 %v868, %v886
    %v941 = vadd.f32 %v869, %v891
    %v942 = vadd.f32 %v870, %v891
    %v943 = vadd.f32 %v871, %v896
    %v944 = vadd.f32 %v872, %v896
    %v945 = vadd.f32 %v873, %v901
    %v946 = vadd.f32 %v874, %v901
    %v947 = vadd.f32 %v875, %v906
    %v948 = vadd.f32 %v876, %v906
    %v949 = vadd.f32 %v877, %v911
    %v950 = vadd.f32 %v878, %v911
    %v951 = vadd.f32 %v879, %v916
    %v952 = vadd.f32 %v880, %v916
    %v953 = vadd.f32 %v881, %v921
    %v954 = vadd.f32 %v882, %v921
    %v955 = vld [vmem:[%s6] sm:$0x3]
    %v956 = vld [vmem:[%s6 + $0x2] sm:$0x3]
    %v957 = vld [vmem:[%s6 + $0x4] sm:$0x3]
    %v958 = vld [vmem:[%s6 + $0x6] sm:$0x3]
    %v959 = vld [vmem:[%s6 + $0x8] sm:$0x3]
    %v960 = vld [vmem:[%s6 + $0xa] sm:$0x3]
    %v961 = vld [vmem:[%s6 + $0xc] sm:$0x3]
    %v962 = vld [vmem:[%s6 + $0xe] sm:$0x3]
    %v963 = vld [vmem:[%s6 + $0x10] sm:$0x3]
    %v964 = vld [vmem:[%s7] sm:$0xff]
    %v965 = vld [vmem:[%s7 + $0x8] sm:$0xff]
    %v966 = vld [vmem:[%s7 + $0x10] sm:$0xff]
    %v967 = vld [vmem:[%s7 + $0x18] sm:$0xff]
    %v968 = vld [vmem:[%s7 + $0x20] sm:$0xff]
    %v969 = vld [vmem:[%s7 + $0x28] sm:$0xff]
    %v970 = vld [vmem:[%s7 + $0x30] sm:$0xff]
    %v971 = vld [vmem:[%s7 + $0x38] sm:$0xff]
    %v972 = vld [vmem:[%s7 + $0x40] sm:$0xff]
    %v973 = vld [vmem:[%s7 + $0x48] sm:$0xff]
    %v974 = vld [vmem:[%s7 + $0x50] sm:$0xff]
    %v975 = vld [vmem:[%s7 + $0x58] sm:$0xff]
    %v976 = vld [vmem:[%s7 + $0x60] sm:$0xff]
    %v977 = vld [vmem:[%s7 + $0x68] sm:$0xff]
    %v978 = vld [vmem:[%s7 + $0x70] sm:$0xff]
    %v979 = vld [vmem:[%s7 + $0x78] sm:$0xff]
    %v980 = vld [vmem:[%s7 + $0x80] sm:$0xff]
    %v981 = vld [vmem:[%s7 + $0x88] sm:$0xff]
    %990 = vrot.lane.b32.xlu0 %v223, 13
    %v991 = vpop.permute.xlu0 %990
    %992 = vrot.lane.b32.xlu0 %v224, 13
    %v993 = vpop.permute.xlu0 %992
    %994 = vrot.lane.b32.xlu0 %v225, 13
    %v995 = vpop.permute.xlu0 %994
    %996 = vrot.lane.b32.xlu0 %v226, 13
    %v997 = vpop.permute.xlu0 %996
    %998 = vrot.lane.b32.xlu0 %v227, 13
    %v999 = vpop.permute.xlu0 %998
    %1000 = vrot.lane.b32.xlu0 %v228, 13
    %v1001 = vpop.permute.xlu0 %1000
    %1002 = vrot.lane.b32.xlu0 %v229, 13
    %v1003 = vpop.permute.xlu0 %1002
    %1004 = vrot.lane.b32.xlu0 %v230, 13
    %v1005 = vpop.permute.xlu0 %1004
    %vm1006 = vcmask 105472
    %v1007 = vsel %vm1006, %v991, %v993
    %v1008 = vsel %vm1006, %v995, %v997
    %v1009 = vsel %vm1006, %v999, %v1001
    %v1010 = vsel %vm1006, %v1003, %v1005
    %v1019 = vsel %vm1006, 0.0, %v991
    %v1020 = vsel %vm1006, 0.0, %v995
    %v1021 = vsel %vm1006, 0.0, %v999
    %v1022 = vsel %vm1006, 0.0, %v1003
    %v1024 = vperm.slane %v955, 0
    %v1025 = vperm.slane %v955, 1
    %1029 = vset.pattern.permute.xlu0 0
    %1030 = vperm.xlu0 %1029, %v964
    %v1031 = vpop.permute.xlu0 %1030
    %1034 = vset.pattern.permute.xlu0 0
    %1035 = vperm.xlu0 %1034, %v965
    %v1036 = vpop.permute.xlu0 %1035
    %v1038 = vmul.f32 %v1024, %v1031
    %v1039 = vmul.f32 %v1025, %v1031
    %v1040 = vmul.f32 %v1024, %v1036
    %v1041 = vmul.f32 %v1025, %v1036
    %v1042 = vmul.f32 %v1019, %v1038
    %v1043 = vmul.f32 %v1007, %v1039
    %v1044 = vmul.f32 %v1020, %v1040
    %v1045 = vmul.f32 %v1008, %v1041
    %v1046 = vmul.f32 %v1021, %v1038
    %v1047 = vmul.f32 %v1009, %v1039
    %v1048 = vmul.f32 %v1022, %v1040
    %v1049 = vmul.f32 %v1010, %v1041
    %v1050 = vadd.f32 %v1042, 0.0
    %v1051 = vadd.f32 %v1043, 0.0
    %v1052 = vadd.f32 %v1044, 0.0
    %v1053 = vadd.f32 %v1045, 0.0
    %v1054 = vadd.f32 %v1046, 0.0
    %v1055 = vadd.f32 %v1047, 0.0
    %v1056 = vadd.f32 %v1048, 0.0
    %v1057 = vadd.f32 %v1049, 0.0
    %1058 = vrot.lane.b32.xlu0 %v223, 12
    %v1059 = vpop.permute.xlu0 %1058
    %1060 = vrot.lane.b32.xlu0 %v224, 12
    %v1061 = vpop.permute.xlu0 %1060
    %1062 = vrot.lane.b32.xlu0 %v225, 12
    %v1063 = vpop.permute.xlu0 %1062
    %1064 = vrot.lane.b32.xlu0 %v226, 12
    %v1065 = vpop.permute.xlu0 %1064
    %1066 = vrot.lane.b32.xlu0 %v227, 12
    %v1067 = vpop.permute.xlu0 %1066
    %1068 = vrot.lane.b32.xlu0 %v228, 12
    %v1069 = vpop.permute.xlu0 %1068
    %1070 = vrot.lane.b32.xlu0 %v229, 12
    %v1071 = vpop.permute.xlu0 %1070
    %1072 = vrot.lane.b32.xlu0 %v230, 12
    %v1073 = vpop.permute.xlu0 %1072
    %vm1074 = vcmask 97280
    %v1075 = vsel %vm1074, %v1059, %v1061
    %v1076 = vsel %vm1074, %v1063, %v1065
    %v1077 = vsel %vm1074, %v1067, %v1069
    %v1078 = vsel %vm1074, %v1071, %v1073
    %v1087 = vsel %vm1074, 0.0, %v1059
    %v1088 = vsel %vm1074, 0.0, %v1063
    %v1089 = vsel %vm1074, 0.0, %v1067
    %v1090 = vsel %vm1074, 0.0, %v1071
    %v1092 = vperm.slane %v956, 0
    %v1093 = vperm.slane %v956, 1
    %1097 = vset.pattern.permute.xlu0 0
    %1098 = vperm.xlu0 %1097, %v966
    %v1099 = vpop.permute.xlu0 %1098
    %1102 = vset.pattern.permute.xlu0 0
    %1103 = vperm.xlu0 %1102, %v967
    %v1104 = vpop.permute.xlu0 %1103
    %v1106 = vmul.f32 %v1092, %v1099
    %v1107 = vmul.f32 %v1093, %v1099
    %v1108 = vmul.f32 %v1092, %v1104
    %v1109 = vmul.f32 %v1093, %v1104
    %v1110 = vmul.f32 %v1087, %v1106
    %v1111 = vmul.f32 %v1075, %v1107
    %v1112 = vmul.f32 %v1088, %v1108
    %v1113 = vmul.f32 %v1076, %v1109
    %v1114 = vmul.f32 %v1089, %v1106
    %v1115 = vmul.f32 %v1077, %v1107
    %v1116 = vmul.f32 %v1090, %v1108
    %v1117 = vmul.f32 %v1078, %v1109
    %v1118 = vadd.f32 %v1050, %v1110
    %v1119 = vadd.f32 %v1051, %v1111
    %v1120 = vadd.f32 %v1052, %v1112
    %v1121 = vadd.f32 %v1053, %v1113
    %v1122 = vadd.f32 %v1054, %v1114
    %v1123 = vadd.f32 %v1055, %v1115
    %v1124 = vadd.f32 %v1056, %v1116
    %v1125 = vadd.f32 %v1057, %v1117
    %1126 = vrot.lane.b32.xlu0 %v223, 11
    %v1127 = vpop.permute.xlu0 %1126
    %1128 = vrot.lane.b32.xlu0 %v224, 11
    %v1129 = vpop.permute.xlu0 %1128
    %1130 = vrot.lane.b32.xlu0 %v225, 11
    %v1131 = vpop.permute.xlu0 %1130
    %1132 = vrot.lane.b32.xlu0 %v226, 11
    %v1133 = vpop.permute.xlu0 %1132
    %1134 = vrot.lane.b32.xlu0 %v227, 11
    %v1135 = vpop.permute.xlu0 %1134
    %1136 = vrot.lane.b32.xlu0 %v228, 11
    %v1137 = vpop.permute.xlu0 %1136
    %1138 = vrot.lane.b32.xlu0 %v229, 11
    %v1139 = vpop.permute.xlu0 %1138
    %1140 = vrot.lane.b32.xlu0 %v230, 11
    %v1141 = vpop.permute.xlu0 %1140
    %vm1142 = vcmask 89088
    %v1143 = vsel %vm1142, %v1127, %v1129
    %v1144 = vsel %vm1142, %v1131, %v1133
    %v1145 = vsel %vm1142, %v1135, %v1137
    %v1146 = vsel %vm1142, %v1139, %v1141
    %v1155 = vsel %vm1142, 0.0, %v1127
    %v1156 = vsel %vm1142, 0.0, %v1131
    %v1157 = vsel %vm1142, 0.0, %v1135
    %v1158 = vsel %vm1142, 0.0, %v1139
    %v1160 = vperm.slane %v957, 0
    %v1161 = vperm.slane %v957, 1
    %1165 = vset.pattern.permute.xlu0 0
    %1166 = vperm.xlu0 %1165, %v968
    %v1167 = vpop.permute.xlu0 %1166
    %1170 = vset.pattern.permute.xlu0 0
    %1171 = vperm.xlu0 %1170, %v969
    %v1172 = vpop.permute.xlu0 %1171
    %v1174 = vmul.f32 %v1160, %v1167
    %v1175 = vmul.f32 %v1161, %v1167
    %v1176 = vmul.f32 %v1160, %v1172
    %v1177 = vmul.f32 %v1161, %v1172
    %v1178 = vmul.f32 %v1155, %v1174
    %v1179 = vmul.f32 %v1143, %v1175
    %v1180 = vmul.f32 %v1156, %v1176
    %v1181 = vmul.f32 %v1144, %v1177
    %v1182 = vmul.f32 %v1157, %v1174
    %v1183 = vmul.f32 %v1145, %v1175
    %v1184 = vmul.f32 %v1158, %v1176
    %v1185 = vmul.f32 %v1146, %v1177
    %v1186 = vadd.f32 %v1118, %v1178
    %v1187 = vadd.f32 %v1119, %v1179
    %v1188 = vadd.f32 %v1120, %v1180
    %v1189 = vadd.f32 %v1121, %v1181
    %v1190 = vadd.f32 %v1122, %v1182
    %v1191 = vadd.f32 %v1123, %v1183
    %v1192 = vadd.f32 %v1124, %v1184
    %v1193 = vadd.f32 %v1125, %v1185
    %1194 = vrot.lane.b32.xlu0 %v223, 1
    %v1195 = vpop.permute.xlu0 %1194
    %1196 = vrot.lane.b32.xlu0 %v224, 1
    %v1197 = vpop.permute.xlu0 %1196
    %1198 = vrot.lane.b32.xlu0 %v225, 1
    %v1199 = vpop.permute.xlu0 %1198
    %1200 = vrot.lane.b32.xlu0 %v226, 1
    %v1201 = vpop.permute.xlu0 %1200
    %1202 = vrot.lane.b32.xlu0 %v227, 1
    %v1203 = vpop.permute.xlu0 %1202
    %1204 = vrot.lane.b32.xlu0 %v228, 1
    %v1205 = vpop.permute.xlu0 %1204
    %1206 = vrot.lane.b32.xlu0 %v229, 1
    %v1207 = vpop.permute.xlu0 %1206
    %1208 = vrot.lane.b32.xlu0 %v230, 1
    %v1209 = vpop.permute.xlu0 %1208
    %vm1210 = vcmask 7168
    %v1211 = vsel %vm1210, %v1195, %v1197
    %v1212 = vsel %vm1210, %v1199, %v1201
    %v1213 = vsel %vm1210, %v1203, %v1205
    %v1214 = vsel %vm1210, %v1207, %v1209
    %v1223 = vsel %vm1210, 0.0, %v1195
    %v1224 = vsel %vm1210, 0.0, %v1199
    %v1225 = vsel %vm1210, 0.0, %v1203
    %v1226 = vsel %vm1210, 0.0, %v1207
    %v1228 = vperm.slane %v958, 0
    %v1229 = vperm.slane %v958, 1
    %1233 = vset.pattern.permute.xlu0 0
    %1234 = vperm.xlu0 %1233, %v970
    %v1235 = vpop.permute.xlu0 %1234
    %1238 = vset.pattern.permute.xlu0 0
    %1239 = vperm.xlu0 %1238, %v971
    %v1240 = vpop.permute.xlu0 %1239
    %v1242 = vmul.f32 %v1228, %v1235
    %v1243 = vmul.f32 %v1229, %v1235
    %v1244 = vmul.f32 %v1228, %v1240
    %v1245 = vmul.f32 %v1229, %v1240
    %v1246 = vmul.f32 %v1223, %v1242
    %v1247 = vmul.f32 %v1211, %v1243
    %v1248 = vmul.f32 %v1224, %v1244
    %v1249 = vmul.f32 %v1212, %v1245
    %v1250 = vmul.f32 %v1225, %v1242
    %v1251 = vmul.f32 %v1213, %v1243
    %v1252 = vmul.f32 %v1226, %v1244
    %v1253 = vmul.f32 %v1214, %v1245
    %v1254 = vadd.f32 %v1186, %v1246
    %v1255 = vadd.f32 %v1187, %v1247
    %v1256 = vadd.f32 %v1188, %v1248
    %v1257 = vadd.f32 %v1189, %v1249
    %v1258 = vadd.f32 %v1190, %v1250
    %v1259 = vadd.f32 %v1191, %v1251
    %v1260 = vadd.f32 %v1192, %v1252
    %v1261 = vadd.f32 %v1193, %v1253
    %v1263 = vperm.slane %v959, 0
    %v1264 = vperm.slane %v959, 1
    %1268 = vset.pattern.permute.xlu0 0
    %1269 = vperm.xlu0 %1268, %v972
    %v1270 = vpop.permute.xlu0 %1269
    %1273 = vset.pattern.permute.xlu0 0
    %1274 = vperm.xlu0 %1273, %v973
    %v1275 = vpop.permute.xlu0 %1274
    %v1277 = vmul.f32 %v1263, %v1270
    %v1278 = vmul.f32 %v1264, %v1270
    %v1279 = vmul.f32 %v1263, %v1275
    %v1280 = vmul.f32 %v1264, %v1275
    %v1281 = vmul.f32 %v223, %v1277
    %v1282 = vmul.f32 %v224, %v1278
    %v1283 = vmul.f32 %v225, %v1279
    %v1284 = vmul.f32 %v226, %v1280
    %v1285 = vmul.f32 %v227, %v1277
    %v1286 = vmul.f32 %v228, %v1278
    %v1287 = vmul.f32 %v229, %v1279
    %v1288 = vmul.f32 %v230, %v1280
    %v1289 = vadd.f32 %v1254, %v1281
    %v1290 = vadd.f32 %v1255, %v1282
    %v1291 = vadd.f32 %v1256, %v1283
    %v1292 = vadd.f32 %v1257, %v1284
    %v1293 = vadd.f32 %v1258, %v1285
    %v1294 = vadd.f32 %v1259, %v1286
    %v1295 = vadd.f32 %v1260, %v1287
    %v1296 = vadd.f32 %v1261, %v1288
    %1297 = vrot.lane.b32.xlu0 %v223, 127
    %v1298 = vpop.permute.xlu0 %1297
    %1299 = vrot.lane.b32.xlu0 %v224, 127
    %v1300 = vpop.permute.xlu0 %1299
    %1301 = vrot.lane.b32.xlu0 %v225, 127
    %v1302 = vpop.permute.xlu0 %1301
    %1303 = vrot.lane.b32.xlu0 %v226, 127
    %v1304 = vpop.permute.xlu0 %1303
    %1305 = vrot.lane.b32.xlu0 %v227, 127
    %v1306 = vpop.permute.xlu0 %1305
    %1307 = vrot.lane.b32.xlu0 %v228, 127
    %v1308 = vpop.permute.xlu0 %1307
    %1309 = vrot.lane.b32.xlu0 %v229, 127
    %v1310 = vpop.permute.xlu0 %1309
    %1311 = vrot.lane.b32.xlu0 %v230, 127
    %v1312 = vpop.permute.xlu0 %1311
    %vm1313 = vcmask 1039360
    %v1314 = vsel %vm1313, %v1298, %v1300
    %v1315 = vsel %vm1313, %v1302, %v1304
    %v1316 = vsel %vm1313, %v1306, %v1308
    %v1317 = vsel %vm1313, %v1310, %v1312
    %vm1326 = vcmask 121856
    %v1327 = vsel %vm1326, %v1300, 0.0
    %v1328 = vsel %vm1326, %v1304, 0.0
    %v1329 = vsel %vm1326, %v1308, 0.0
    %v1330 = vsel %vm1326, %v1312, 0.0
    %v1332 = vperm.slane %v960, 0
    %v1333 = vperm.slane %v960, 1
    %1337 = vset.pattern.permute.xlu0 0
    %1338 = vperm.xlu0 %1337, %v974
    %v1339 = vpop.permute.xlu0 %1338
    %1342 = vset.pattern.permute.xlu0 0
    %1343 = vperm.xlu0 %1342, %v975
    %v1344 = vpop.permute.xlu0 %1343
    %v1346 = vmul.f32 %v1332, %v1339
    %v1347 = vmul.f32 %v1333, %v1339
    %v1348 = vmul.f32 %v1332, %v1344
    %v1349 = vmul.f32 %v1333, %v1344
    %v1350 = vmul.f32 %v1314, %v1346
    %v1351 = vmul.f32 %v1327, %v1347
    %v1352 = vmul.f32 %v1315, %v1348
    %v1353 = vmul.f32 %v1328, %v1349
    %v1354 = vmul.f32 %v1316, %v1346
    %v1355 = vmul.f32 %v1329, %v1347
    %v1356 = vmul.f32 %v1317, %v1348
    %v1357 = vmul.f32 %v1330, %v1349
    %v1358 = vadd.f32 %v1289, %v1350
    %v1359 = vadd.f32 %v1290, %v1351
    %v1360 = vadd.f32 %v1291, %v1352
    %v1361 = vadd.f32 %v1292, %v1353
    %v1362 = vadd.f32 %v1293, %v1354
    %v1363 = vadd.f32 %v1294, %v1355
    %v1364 = vadd.f32 %v1295, %v1356
    %v1365 = vadd.f32 %v1296, %v1357
    %1366 = vrot.lane.b32.xlu0 %v223, 117
    %v1367 = vpop.permute.xlu0 %1366
    %1368 = vrot.lane.b32.xlu0 %v224, 117
    %v1369 = vpop.permute.xlu0 %1368
    %1370 = vrot.lane.b32.xlu0 %v225, 117
    %v1371 = vpop.permute.xlu0 %1370
    %1372 = vrot.lane.b32.xlu0 %v226, 117
    %v1373 = vpop.permute.xlu0 %1372
    %1374 = vrot.lane.b32.xlu0 %v227, 117
    %v1375 = vpop.permute.xlu0 %1374
    %1376 = vrot.lane.b32.xlu0 %v228, 117
    %v1377 = vpop.permute.xlu0 %1376
    %1378 = vrot.lane.b32.xlu0 %v229, 117
    %v1379 = vpop.permute.xlu0 %1378
    %1380 = vrot.lane.b32.xlu0 %v230, 117
    %v1381 = vpop.permute.xlu0 %1380
    %vm1382 = vcmask 957440
    %v1383 = vsel %vm1382, %v1367, %v1369
    %v1384 = vsel %vm1382, %v1371, %v1373
    %v1385 = vsel %vm1382, %v1375, %v1377
    %v1386 = vsel %vm1382, %v1379, %v1381
    %vm1395 = vcmask 39936
    %v1396 = vsel %vm1395, %v1369, 0.0
    %v1397 = vsel %vm1395, %v1373, 0.0
    %v1398 = vsel %vm1395, %v1377, 0.0
    %v1399 = vsel %vm1395, %v1381, 0.0
    %v1401 = vperm.slane %v961, 0
    %v1402 = vperm.slane %v961, 1
    %1406 = vset.pattern.permute.xlu0 0
    %1407 = vperm.xlu0 %1406, %v976
    %v1408 = vpop.permute.xlu0 %1407
    %1411 = vset.pattern.permute.xlu0 0
    %1412 = vperm.xlu0 %1411, %v977
    %v1413 = vpop.permute.xlu0 %1412
    %v1415 = vmul.f32 %v1401, %v1408
    %v1416 = vmul.f32 %v1402, %v1408
    %v1417 = vmul.f32 %v1401, %v1413
    %v1418 = vmul.f32 %v1402, %v1413
    %v1419 = vmul.f32 %v1383, %v1415
    %v1420 = vmul.f32 %v1396, %v1416
    %v1421 = vmul.f32 %v1384, %v1417
    %v1422 = vmul.f32 %v1397, %v1418
    %v1423 = vmul.f32 %v1385, %v1415
    %v1424 = vmul.f32 %v1398, %v1416
    %v1425 = vmul.f32 %v1386, %v1417
    %v1426 = vmul.f32 %v1399, %v1418
    %v1427 = vadd.f32 %v1358, %v1419
    %v1428 = vadd.f32 %v1359, %v1420
    %v1429 = vadd.f32 %v1360, %v1421
    %v1430 = vadd.f32 %v1361, %v1422
    %v1431 = vadd.f32 %v1362, %v1423
    %v1432 = vadd.f32 %v1363, %v1424
    %v1433 = vadd.f32 %v1364, %v1425
    %v1434 = vadd.f32 %v1365, %v1426
    %1435 = vrot.lane.b32.xlu0 %v223, 116
    %v1436 = vpop.permute.xlu0 %1435
    %1437 = vrot.lane.b32.xlu0 %v224, 116
    %v1438 = vpop.permute.xlu0 %1437
    %1439 = vrot.lane.b32.xlu0 %v225, 116
    %v1440 = vpop.permute.xlu0 %1439
    %1441 = vrot.lane.b32.xlu0 %v226, 116
    %v1442 = vpop.permute.xlu0 %1441
    %1443 = vrot.lane.b32.xlu0 %v227, 116
    %v1444 = vpop.permute.xlu0 %1443
    %1445 = vrot.lane.b32.xlu0 %v228, 116
    %v1446 = vpop.permute.xlu0 %1445
    %1447 = vrot.lane.b32.xlu0 %v229, 116
    %v1448 = vpop.permute.xlu0 %1447
    %1449 = vrot.lane.b32.xlu0 %v230, 116
    %v1450 = vpop.permute.xlu0 %1449
    %vm1451 = vcmask 949248
    %v1452 = vsel %vm1451, %v1436, %v1438
    %v1453 = vsel %vm1451, %v1440, %v1442
    %v1454 = vsel %vm1451, %v1444, %v1446
    %v1455 = vsel %vm1451, %v1448, %v1450
    %vm1464 = vcmask 31744
    %v1465 = vsel %vm1464, %v1438, 0.0
    %v1466 = vsel %vm1464, %v1442, 0.0
    %v1467 = vsel %vm1464, %v1446, 0.0
    %v1468 = vsel %vm1464, %v1450, 0.0
    %v1470 = vperm.slane %v962, 0
    %v1471 = vperm.slane %v962, 1
    %1475 = vset.pattern.permute.xlu0 0
    %1476 = vperm.xlu0 %1475, %v978
    %v1477 = vpop.permute.xlu0 %1476
    %1480 = vset.pattern.permute.xlu0 0
    %1481 = vperm.xlu0 %1480, %v979
    %v1482 = vpop.permute.xlu0 %1481
    %v1484 = vmul.f32 %v1470, %v1477
    %v1485 = vmul.f32 %v1471, %v1477
    %v1486 = vmul.f32 %v1470, %v1482
    %v1487 = vmul.f32 %v1471, %v1482
    %v1488 = vmul.f32 %v1452, %v1484
    %v1489 = vmul.f32 %v1465, %v1485
    %v1490 = vmul.f32 %v1453, %v1486
    %v1491 = vmul.f32 %v1466, %v1487
    %v1492 = vmul.f32 %v1454, %v1484
    %v1493 = vmul.f32 %v1467, %v1485
    %v1494 = vmul.f32 %v1455, %v1486
    %v1495 = vmul.f32 %v1468, %v1487
    %v1496 = vadd.f32 %v1427, %v1488
    %v1497 = vadd.f32 %v1428, %v1489
    %v1498 = vadd.f32 %v1429, %v1490
    %v1499 = vadd.f32 %v1430, %v1491
    %v1500 = vadd.f32 %v1431, %v1492
    %v1501 = vadd.f32 %v1432, %v1493
    %v1502 = vadd.f32 %v1433, %v1494
    %v1503 = vadd.f32 %v1434, %v1495
    %1504 = vrot.lane.b32.xlu0 %v223, 115
    %v1505 = vpop.permute.xlu0 %1504
    %1506 = vrot.lane.b32.xlu0 %v224, 115
    %v1507 = vpop.permute.xlu0 %1506
    %1508 = vrot.lane.b32.xlu0 %v225, 115
    %v1509 = vpop.permute.xlu0 %1508
    %1510 = vrot.lane.b32.xlu0 %v226, 115
    %v1511 = vpop.permute.xlu0 %1510
    %1512 = vrot.lane.b32.xlu0 %v227, 115
    %v1513 = vpop.permute.xlu0 %1512
    %1514 = vrot.lane.b32.xlu0 %v228, 115
    %v1515 = vpop.permute.xlu0 %1514
    %1516 = vrot.lane.b32.xlu0 %v229, 115
    %v1517 = vpop.permute.xlu0 %1516
    %1518 = vrot.lane.b32.xlu0 %v230, 115
    %v1519 = vpop.permute.xlu0 %1518
    %vm1520 = vcmask 941056
    %v1521 = vsel %vm1520, %v1505, %v1507
    %v1522 = vsel %vm1520, %v1509, %v1511
    %v1523 = vsel %vm1520, %v1513, %v1515
    %v1524 = vsel %vm1520, %v1517, %v1519
    %vm1533 = vcmask 23552
    %v1534 = vsel %vm1533, %v1507, 0.0
    %v1535 = vsel %vm1533, %v1511, 0.0
    %v1536 = vsel %vm1533, %v1515, 0.0
    %v1537 = vsel %vm1533, %v1519, 0.0
    %v1539 = vperm.slane %v963, 0
    %v1540 = vperm.slane %v963, 1
    %1544 = vset.pattern.permute.xlu0 0
    %1545 = vperm.xlu0 %1544, %v980
    %v1546 = vpop.permute.xlu0 %1545
    %1549 = vset.pattern.permute.xlu0 0
    %1550 = vperm.xlu0 %1549, %v981
    %v1551 = vpop.permute.xlu0 %1550
    %v1553 = vmul.f32 %v1539, %v1546
    %v1554 = vmul.f32 %v1540, %v1546
    %v1555 = vmul.f32 %v1539, %v1551
    %v1556 = vmul.f32 %v1540, %v1551
    %v1557 = vmul.f32 %v1521, %v1553
    %v1558 = vmul.f32 %v1534, %v1554
    %v1559 = vmul.f32 %v1522, %v1555
    %v1560 = vmul.f32 %v1535, %v1556
    %v1561 = vmul.f32 %v1523, %v1553
    %v1562 = vmul.f32 %v1536, %v1554
    %v1563 = vmul.f32 %v1524, %v1555
    %v1564 = vmul.f32 %v1537, %v1556
    %v1565 = vadd.f32 %v1496, %v1557
    %v1566 = vadd.f32 %v1497, %v1558
    %v1567 = vadd.f32 %v1498, %v1559
    %v1568 = vadd.f32 %v1499, %v1560
    %v1569 = vadd.f32 %v1500, %v1561
    %v1570 = vadd.f32 %v1501, %v1562
    %v1571 = vadd.f32 %v1502, %v1563
    %v1572 = vadd.f32 %v1503, %v1564
    %v1573 = vld [vmem:[%s10] sm:$0xff]
    %v1574 = vld [vmem:[%s10 + $0x8] sm:$0xff]
    %v1575 = vld [vmem:[%s10 + $0x10] sm:$0xff]
    %v1576 = vld [vmem:[%s10 + $0x18] sm:$0xff]
    %v1577 = vld [vmem:[%s10 + $0x20] sm:$0xff]
    %v1578 = vld [vmem:[%s10 + $0x28] sm:$0xff]
    %v1579 = vld [vmem:[%s10 + $0x30] sm:$0xff]
    %v1580 = vld [vmem:[%s10 + $0x38] sm:$0xff]
    %v1581 = vld [vmem:[%s10 + $0x40] sm:$0xff]
    %v1582 = vld [vmem:[%s10 + $0x48] sm:$0xff]
    %v1583 = vld [vmem:[%s10 + $0x50] sm:$0xff]
    %v1584 = vld [vmem:[%s10 + $0x58] sm:$0xff]
    %v1585 = vld [vmem:[%s10 + $0x60] sm:$0xff]
    %v1586 = vld [vmem:[%s10 + $0x68] sm:$0xff]
    %v1587 = vld [vmem:[%s10 + $0x70] sm:$0xff]
    %v1588 = vld [vmem:[%s10 + $0x78] sm:$0xff]
    %v1589 = vld [vmem:[%s10 + $0x80] sm:$0xff]
    %v1590 = vld [vmem:[%s10 + $0x88] sm:$0xff]
    %v1592 = vsel %vm102, %v1566, 0
    %v1595 = vsel %vm102, %v1568, 0
    %v1598 = vsel %vm102, %v1570, 0
    %v1601 = vsel %vm102, %v1572, 0
    %1603 = vmatpush.msra.mxu0 %v1588
    %1604 = vmatpush.msra.mxu0 %v1587
    %1605 = vmatpush.msra.mxu0 %v1586
    %1606 = vmatpush.msra.mxu0 %v1585
    %1607 = vmatpush.msra.mxu0 %v1584
    %1608 = vmatpush.msra.mxu0 %v1583
    %1609 = vmatpush.msra.mxu0 %v1582
    %1610 = vmatpush.msra.mxu0 %v1581
    %1611 = vmatpush.msra.mxu0 %v1580
    %1612 = vmatpush.msra.mxu0 %v1579
    %1613 = vmatpush.msra.mxu0 %v1578
    %1614 = vmatpush.msra.mxu0 %v1577
    %1615 = vmatpush.msra.mxu0 %v1576
    %1616 = vmatpush.msra.mxu0 %v1575
    %1617 = vmatpush.msra.mxu0 %v1574
    %1618 = vmatpush.msra.mxu0 %v1573
    %1619 = vmatmul.f32.gmra.mxu0 %v1565
    %v1620 = vpop.f32.mrf.mxu0
    %v1621 = vadd.f32 0.0, %v1620
    %1622 = vmatmul.f32.gmra.mxu0 %v1567
    %v1623 = vpop.f32.mrf.mxu0
    %v1624 = vadd.f32 0.0, %v1623
    %1625 = vmatmul.f32.gmra.mxu0 %v1569
    %v1626 = vpop.f32.mrf.mxu0
    %v1627 = vadd.f32 0.0, %v1626
    %1628 = vmatmul.f32.gmra.mxu0 %v1571
    %v1629 = vpop.f32.mrf.mxu0
    %v1630 = vadd.f32 0.0, %v1629
    %1631 = vdwg.mxu0
    %1632 = vmatpush.msra.mxu0 0.0
    %1633 = vmatpush.msra.mxu0 0.0
    %1634 = vmatpush.msra.mxu0 0.0
    %1635 = vmatpush.msra.mxu0 0.0
    %1636 = vmatpush.msra.mxu0 0.0
    %1637 = vmatpush.msra.mxu0 0.0
    %1638 = vmatpush.msra.mxu0 0.0
    %1639 = vmatpush.msra.mxu0 0.0
    %1640 = vmatpush.msra.mxu0 0.0
    %1641 = vmatpush.msra.mxu0 0.0
    %1642 = vmatpush.msra.mxu0 0.0
    %1643 = vmatpush.msra.mxu0 0.0
    %1644 = vmatpush.msra.mxu0 0.0
    %1645 = vmatpush.msra.mxu0 0.0
    %1646 = vmatpush.msra.mxu0 %v1590
    %1647 = vmatpush.msra.mxu0 %v1589
    %1648 = vmatmul.f32.gmra.mxu0 %v1592
    %v1649 = vpop.f32.mrf.mxu0
    %v1650 = vadd.f32 %v1621, %v1649
    %1651 = vmatmul.f32.gmra.mxu0 %v1595
    %v1652 = vpop.f32.mrf.mxu0
    %v1653 = vadd.f32 %v1624, %v1652
    %1654 = vmatmul.f32.gmra.mxu0 %v1598
    %v1655 = vpop.f32.mrf.mxu0
    %v1656 = vadd.f32 %v1627, %v1655
    %1657 = vmatmul.f32.gmra.mxu0 %v1601
    %v1658 = vpop.f32.mrf.mxu0
    %v1659 = vadd.f32 %v1630, %v1658
    %1660 = vdwg.mxu0
    %v1661 = vld [vmem:[%s8] sm:$0xff]
    %v1662 = vld [vmem:[%s8 + $0x8] sm:$0xff]
    %v1663 = vld [vmem:[%s9] sm:$0xff]
    %v1664 = vld [vmem:[%s9 + $0x8] sm:$0xff]
    %vm1665 = vcmask 293888
    %v1666 = vsel %vm1665, %v1650, 0.0
    %1667 = vadd.xlane.f32.xlu0 %v1666
    %v1668 = vpop.xlane.xlu0 %1667
    %v1669 = vsel %vm1665, %v1653, 0.0
    %1670 = vadd.xlane.f32.xlu0 %v1669
    %v1671 = vpop.xlane.xlu0 %1670
    %v1672 = vsel %vm1665, %v1656, 0.0
    %1673 = vadd.xlane.f32.xlu0 %v1672
    %v1674 = vpop.xlane.xlu0 %1673
    %v1675 = vsel %vm1665, %v1659, 0.0
    %1676 = vadd.xlane.f32.xlu0 %v1675
    %v1677 = vpop.xlane.xlu0 %1676
    %v1678 = vadd.f32 %v1668, %v1674
    %v1679 = vadd.f32 %v1671, %v1677
    %v1680 = vmul.f32 %v1650, %v1650
    %v1681 = vmul.f32 %v1653, %v1653
    %v1682 = vmul.f32 %v1656, %v1656
    %v1683 = vmul.f32 %v1659, %v1659
    %v1684 = vsel %vm1665, %v1680, 0.0
    %1685 = vadd.xlane.f32.xlu0 %v1684
    %v1686 = vpop.xlane.xlu0 %1685
    %v1687 = vsel %vm1665, %v1681, 0.0
    %1688 = vadd.xlane.f32.xlu0 %v1687
    %v1689 = vpop.xlane.xlu0 %1688
    %v1690 = vsel %vm1665, %v1682, 0.0
    %1691 = vadd.xlane.f32.xlu0 %v1690
    %v1692 = vpop.xlane.xlu0 %1691
    %v1693 = vsel %vm1665, %v1683, 0.0
    %1694 = vadd.xlane.f32.xlu0 %v1693
    %v1695 = vpop.xlane.xlu0 %1694
    %v1696 = vadd.f32 %v1686, %v1692
    %v1697 = vadd.f32 %v1689, %v1695
    %v1698 = vmul.f32 %v1678, 0.013888889
    %v1699 = vmul.f32 %v1679, 0.013888889
    %v1700 = vmul.f32 %v1696, 0.013888889
    %v1701 = vmul.f32 %v1697, 0.013888889
    %v1702 = vmul.f32 %v1698, %v1698
    %v1703 = vmul.f32 %v1699, %v1699
    %v1704 = vsub.f32 %v1700, %v1702
    %v1705 = vsub.f32 %v1701, %v1703
    %v1706 = vmax.f32 %v1704, 0.0
    %v1707 = vmax.f32 %v1705, 0.0
    %v1708 = vsub.f32 %v1650, %v1698
    %v1709 = vsub.f32 %v1653, %v1699
    %v1710 = vsub.f32 %v1656, %v1698
    %v1711 = vsub.f32 %v1659, %v1699
    %v1712 = vadd.f32 %v1706, 1e-05
    %v1713 = vadd.f32 %v1707, 1e-05
    %v1714 = vrsqrt.pop %v1712
    %v1715 = vmul.f32 %v1714, %v1712
    %v1716 = vmul.f32 %v1715, %v1714
    %v1717 = vmul.f32 0.5, %v1716
    %v1718 = vsub.f32 1.5, %v1717
    %v1719 = vmul.f32 %v1714, %v1718
    %vm1720 = vweird.f32 %v1712
    %vm1721 = vweird.f32 %v1714
    %vm1722 = vmor %vm1720, %vm1721
    %v1723 = vsel %vm1722, %v1714, %v1719
    %v1724 = vrsqrt.pop %v1713
    %v1725 = vmul.f32 %v1724, %v1713
    %v1726 = vmul.f32 %v1725, %v1724
    %v1727 = vmul.f32 0.5, %v1726
    %v1728 = vsub.f32 1.5, %v1727
    %v1729 = vmul.f32 %v1724, %v1728
    %vm1730 = vweird.f32 %v1713
    %vm1731 = vweird.f32 %v1724
    %vm1732 = vmor %vm1730, %vm1731
    %v1733 = vsel %vm1732, %v1724, %v1729
    %v1734 = vmul.f32 %v1708, %v1723
    %v1735 = vmul.f32 %v1709, %v1733
    %v1736 = vmul.f32 %v1710, %v1723
    %v1737 = vmul.f32 %v1711, %v1733
    %1739 = vset.pattern.permute.xlu0 0
    %1740 = vperm.xlu0 %1739, %v1661
    %v1741 = vpop.permute.xlu0 %1740
    %1744 = vset.pattern.permute.xlu0 0
    %1745 = vperm.xlu0 %1744, %v1662
    %v1746 = vpop.permute.xlu0 %1745
    %v1748 = vmul.f32 %v1734, %v1741
    %v1749 = vmul.f32 %v1735, %v1746
    %v1750 = vmul.f32 %v1736, %v1741
    %v1751 = vmul.f32 %v1737, %v1746
    %1753 = vset.pattern.permute.xlu0 0
    %1754 = vperm.xlu0 %1753, %v1663
    %v1755 = vpop.permute.xlu0 %1754
    %1758 = vset.pattern.permute.xlu0 0
    %1759 = vperm.xlu0 %1758, %v1664
    %v1760 = vpop.permute.xlu0 %1759
    %v1762 = vadd.f32 %v1748, %v1755
    %v1763 = vadd.f32 %v1749, %v1760
    %v1764 = vadd.f32 %v1750, %v1755
    %v1765 = vadd.f32 %v1751, %v1760
    %v1766 = vld [vmem:[%s12] sm:$0xff]
    %v1767 = vld [vmem:[%s12 + $0x8] sm:$0xff]
    %v1768 = vld [vmem:[%s12 + $0x10] sm:$0xff]
    %v1769 = vld [vmem:[%s12 + $0x18] sm:$0xff]
    %v1770 = vld [vmem:[%s12 + $0x20] sm:$0xff]
    %v1771 = vld [vmem:[%s12 + $0x28] sm:$0xff]
    %v1772 = vld [vmem:[%s12 + $0x30] sm:$0xff]
    %v1773 = vld [vmem:[%s12 + $0x38] sm:$0xff]
    %v1774 = vld [vmem:[%s12 + $0x40] sm:$0xff]
    %v1775 = vld [vmem:[%s12 + $0x48] sm:$0xff]
    %v1776 = vld [vmem:[%s12 + $0x50] sm:$0xff]
    %v1777 = vld [vmem:[%s12 + $0x58] sm:$0xff]
    %v1778 = vld [vmem:[%s12 + $0x60] sm:$0xff]
    %v1779 = vld [vmem:[%s12 + $0x68] sm:$0xff]
    %v1780 = vld [vmem:[%s12 + $0x70] sm:$0xff]
    %v1781 = vld [vmem:[%s12 + $0x78] sm:$0xff]
    %v1782 = vld [vmem:[%s12 + $0x80] sm:$0xff]
    %v1783 = vld [vmem:[%s12 + $0x88] sm:$0xff]
    %v1784 = vld [vmem:[%s12 + $0x90] sm:$0xff]
    %v1785 = vld [vmem:[%s12 + $0x98] sm:$0xff]
    %v1786 = vld [vmem:[%s12 + $0xa0] sm:$0xff]
    %v1787 = vld [vmem:[%s12 + $0xa8] sm:$0xff]
    %v1788 = vld [vmem:[%s12 + $0xb0] sm:$0xff]
    %v1789 = vld [vmem:[%s12 + $0xb8] sm:$0xff]
    %v1790 = vld [vmem:[%s12 + $0xc0] sm:$0xff]
    %v1791 = vld [vmem:[%s12 + $0xc8] sm:$0xff]
    %v1792 = vld [vmem:[%s12 + $0xd0] sm:$0xff]
    %v1793 = vld [vmem:[%s12 + $0xd8] sm:$0xff]
    %v1794 = vld [vmem:[%s12 + $0xe0] sm:$0xff]
    %v1795 = vld [vmem:[%s12 + $0xe8] sm:$0xff]
    %v1796 = vld [vmem:[%s12 + $0xf0] sm:$0xff]
    %v1797 = vld [vmem:[%s12 + $0xf8] sm:$0xff]
    %v1798 = vld [vmem:[%s12 + $0x100] sm:$0xff]
    %v1799 = vld [vmem:[%s12 + $0x108] sm:$0xff]
    %v1800 = vld [vmem:[%s12 + $0x110] sm:$0xff]
    %v1801 = vld [vmem:[%s12 + $0x118] sm:$0xff]
    %v1802 = vld [vmem:[%s12 + $0x120] sm:$0xff]
    %v1803 = vld [vmem:[%s12 + $0x128] sm:$0xff]
    %v1804 = vld [vmem:[%s12 + $0x130] sm:$0xff]
    %v1805 = vld [vmem:[%s12 + $0x138] sm:$0xff]
    %v1806 = vld [vmem:[%s12 + $0x140] sm:$0xff]
    %v1807 = vld [vmem:[%s12 + $0x148] sm:$0xff]
    %v1808 = vld [vmem:[%s12 + $0x150] sm:$0xff]
    %v1809 = vld [vmem:[%s12 + $0x158] sm:$0xff]
    %v1810 = vld [vmem:[%s12 + $0x160] sm:$0xff]
    %v1811 = vld [vmem:[%s12 + $0x168] sm:$0xff]
    %v1812 = vld [vmem:[%s12 + $0x170] sm:$0xff]
    %v1813 = vld [vmem:[%s12 + $0x178] sm:$0xff]
    %v1814 = vld [vmem:[%s12 + $0x180] sm:$0xff]
    %v1815 = vld [vmem:[%s12 + $0x188] sm:$0xff]
    %v1816 = vld [vmem:[%s11] sm:$0x3]
    %v1817 = vld [vmem:[%s11 + $0x2] sm:$0x3]
    %v1818 = vld [vmem:[%s11 + $0x4] sm:$0x3]
    %v1819 = vld [vmem:[%s11 + $0x6] sm:$0x3]
    %v1820 = vld [vmem:[%s11 + $0x8] sm:$0x3]
    %v1821 = vld [vmem:[%s11 + $0xa] sm:$0x3]
    %v1822 = vld [vmem:[%s11 + $0xc] sm:$0x3]
    %v1823 = vld [vmem:[%s11 + $0xe] sm:$0x3]
    %v1824 = vld [vmem:[%s11 + $0x10] sm:$0x3]
    %v1825 = vld [vmem:[%s11 + $0x12] sm:$0x3]
    %v1826 = vld [vmem:[%s11 + $0x14] sm:$0x3]
    %v1827 = vld [vmem:[%s11 + $0x16] sm:$0x3]
    %v1828 = vld [vmem:[%s11 + $0x18] sm:$0x3]
    %v1829 = vld [vmem:[%s11 + $0x1a] sm:$0x3]
    %v1830 = vld [vmem:[%s11 + $0x1c] sm:$0x3]
    %v1831 = vld [vmem:[%s11 + $0x1e] sm:$0x3]
    %v1832 = vld [vmem:[%s11 + $0x20] sm:$0x3]
    %v1833 = vld [vmem:[%s11 + $0x22] sm:$0x3]
    %v1834 = vld [vmem:[%s11 + $0x24] sm:$0x3]
    %v1835 = vld [vmem:[%s11 + $0x26] sm:$0x3]
    %v1836 = vld [vmem:[%s11 + $0x28] sm:$0x3]
    %v1837 = vld [vmem:[%s11 + $0x2a] sm:$0x3]
    %v1838 = vld [vmem:[%s11 + $0x2c] sm:$0x3]
    %v1839 = vld [vmem:[%s11 + $0x2e] sm:$0x3]
    %v1840 = vld [vmem:[%s11 + $0x30] sm:$0x3]
    %1841 = vrot.lane.b32.xlu0 %v223, 26
    %v1842 = vpop.permute.xlu0 %1841
    %1843 = vrot.lane.b32.xlu0 %v225, 26
    %v1844 = vpop.permute.xlu0 %1843
    %1845 = vrot.lane.b32.xlu0 %v227, 26
    %v1846 = vpop.permute.xlu0 %1845
    %1847 = vrot.lane.b32.xlu0 %v229, 26
    %v1848 = vpop.permute.xlu0 %1847
    %vm1853 = vcmask 211968
    %v1854 = vsel %vm1853, 0.0, %v1842
    %v1855 = vsel %vm1853, 0.0, %v1844
    %v1856 = vsel %vm1853, 0.0, %v1846
    %v1857 = vsel %vm1853, 0.0, %v1848
    %v1859 = vperm.slane %v1816, 0
    %v1860 = vperm.slane %v1816, 1
    %1864 = vset.pattern.permute.xlu0 0
    %1865 = vperm.xlu0 %1864, %v1766
    %v1866 = vpop.permute.xlu0 %1865
    %1869 = vset.pattern.permute.xlu0 0
    %1870 = vperm.xlu0 %1869, %v1767
    %v1871 = vpop.permute.xlu0 %1870
    %v1873 = vmul.f32 %v1859, %v1866
    %v1874 = vmul.f32 %v1860, %v1866
    %v1875 = vmul.f32 %v1859, %v1871
    %v1876 = vmul.f32 %v1860, %v1871
    %v1877 = vmul.f32 %v1854, %v1873
    %v1878 = vmul.f32 %v1842, %v1874
    %v1879 = vmul.f32 %v1855, %v1875
    %v1880 = vmul.f32 %v1844, %v1876
    %v1881 = vmul.f32 %v1856, %v1873
    %v1882 = vmul.f32 %v1846, %v1874
    %v1883 = vmul.f32 %v1857, %v1875
    %v1884 = vmul.f32 %v1848, %v1876
    %v1885 = vadd.f32 %v1877, 0.0
    %v1886 = vadd.f32 %v1878, 0.0
    %v1887 = vadd.f32 %v1879, 0.0
    %v1888 = vadd.f32 %v1880, 0.0
    %v1889 = vadd.f32 %v1881, 0.0
    %v1890 = vadd.f32 %v1882, 0.0
    %v1891 = vadd.f32 %v1883, 0.0
    %v1892 = vadd.f32 %v1884, 0.0
    %1893 = vrot.lane.b32.xlu0 %v223, 25
    %v1894 = vpop.permute.xlu0 %1893
    %1895 = vrot.lane.b32.xlu0 %v225, 25
    %v1896 = vpop.permute.xlu0 %1895
    %1897 = vrot.lane.b32.xlu0 %v227, 25
    %v1898 = vpop.permute.xlu0 %1897
    %1899 = vrot.lane.b32.xlu0 %v229, 25
    %v1900 = vpop.permute.xlu0 %1899
    %vm1905 = vcmask 203776
    %v1906 = vsel %vm1905, 0.0, %v1894
    %v1907 = vsel %vm1905, 0.0, %v1896
    %v1908 = vsel %vm1905, 0.0, %v1898
    %v1909 = vsel %vm1905, 0.0, %v1900
    %v1911 = vperm.slane %v1817, 0
    %v1912 = vperm.slane %v1817, 1
    %1916 = vset.pattern.permute.xlu0 0
    %1917 = vperm.xlu0 %1916, %v1768
    %v1918 = vpop.permute.xlu0 %1917
    %1921 = vset.pattern.permute.xlu0 0
    %1922 = vperm.xlu0 %1921, %v1769
    %v1923 = vpop.permute.xlu0 %1922
    %v1925 = vmul.f32 %v1911, %v1918
    %v1926 = vmul.f32 %v1912, %v1918
    %v1927 = vmul.f32 %v1911, %v1923
    %v1928 = vmul.f32 %v1912, %v1923
    %v1929 = vmul.f32 %v1906, %v1925
    %v1930 = vmul.f32 %v1894, %v1926
    %v1931 = vmul.f32 %v1907, %v1927
    %v1932 = vmul.f32 %v1896, %v1928
    %v1933 = vmul.f32 %v1908, %v1925
    %v1934 = vmul.f32 %v1898, %v1926
    %v1935 = vmul.f32 %v1909, %v1927
    %v1936 = vmul.f32 %v1900, %v1928
    %v1937 = vadd.f32 %v1885, %v1929
    %v1938 = vadd.f32 %v1886, %v1930
    %v1939 = vadd.f32 %v1887, %v1931
    %v1940 = vadd.f32 %v1888, %v1932
    %v1941 = vadd.f32 %v1889, %v1933
    %v1942 = vadd.f32 %v1890, %v1934
    %v1943 = vadd.f32 %v1891, %v1935
    %v1944 = vadd.f32 %v1892, %v1936
    %1945 = vrot.lane.b32.xlu0 %v223, 24
    %v1946 = vpop.permute.xlu0 %1945
    %1947 = vrot.lane.b32.xlu0 %v225, 24
    %v1948 = vpop.permute.xlu0 %1947
    %1949 = vrot.lane.b32.xlu0 %v227, 24
    %v1950 = vpop.permute.xlu0 %1949
    %1951 = vrot.lane.b32.xlu0 %v229, 24
    %v1952 = vpop.permute.xlu0 %1951
    %vm1957 = vcmask 195584
    %v1958 = vsel %vm1957, 0.0, %v1946
    %v1959 = vsel %vm1957, 0.0, %v1948
    %v1960 = vsel %vm1957, 0.0, %v1950
    %v1961 = vsel %vm1957, 0.0, %v1952
    %v1963 = vperm.slane %v1818, 0
    %v1964 = vperm.slane %v1818, 1
    %1968 = vset.pattern.permute.xlu0 0
    %1969 = vperm.xlu0 %1968, %v1770
    %v1970 = vpop.permute.xlu0 %1969
    %1973 = vset.pattern.permute.xlu0 0
    %1974 = vperm.xlu0 %1973, %v1771
    %v1975 = vpop.permute.xlu0 %1974
    %v1977 = vmul.f32 %v1963, %v1970
    %v1978 = vmul.f32 %v1964, %v1970
    %v1979 = vmul.f32 %v1963, %v1975
    %v1980 = vmul.f32 %v1964, %v1975
    %v1981 = vmul.f32 %v1958, %v1977
    %v1982 = vmul.f32 %v1946, %v1978
    %v1983 = vmul.f32 %v1959, %v1979
    %v1984 = vmul.f32 %v1948, %v1980
    %v1985 = vmul.f32 %v1960, %v1977
    %v1986 = vmul.f32 %v1950, %v1978
    %v1987 = vmul.f32 %v1961, %v1979
    %v1988 = vmul.f32 %v1952, %v1980
    %v1989 = vadd.f32 %v1937, %v1981
    %v1990 = vadd.f32 %v1938, %v1982
    %v1991 = vadd.f32 %v1939, %v1983
    %v1992 = vadd.f32 %v1940, %v1984
    %v1993 = vadd.f32 %v1941, %v1985
    %v1994 = vadd.f32 %v1942, %v1986
    %v1995 = vadd.f32 %v1943, %v1987
    %v1996 = vadd.f32 %v1944, %v1988
    %1997 = vrot.lane.b32.xlu0 %v223, 23
    %v1998 = vpop.permute.xlu0 %1997
    %1999 = vrot.lane.b32.xlu0 %v225, 23
    %v2000 = vpop.permute.xlu0 %1999
    %2001 = vrot.lane.b32.xlu0 %v227, 23
    %v2002 = vpop.permute.xlu0 %2001
    %2003 = vrot.lane.b32.xlu0 %v229, 23
    %v2004 = vpop.permute.xlu0 %2003
    %vm2009 = vcmask 187392
    %v2010 = vsel %vm2009, 0.0, %v1998
    %v2011 = vsel %vm2009, 0.0, %v2000
    %v2012 = vsel %vm2009, 0.0, %v2002
    %v2013 = vsel %vm2009, 0.0, %v2004
    %v2015 = vperm.slane %v1819, 0
    %v2016 = vperm.slane %v1819, 1
    %2020 = vset.pattern.permute.xlu0 0
    %2021 = vperm.xlu0 %2020, %v1772
    %v2022 = vpop.permute.xlu0 %2021
    %2025 = vset.pattern.permute.xlu0 0
    %2026 = vperm.xlu0 %2025, %v1773
    %v2027 = vpop.permute.xlu0 %2026
    %v2029 = vmul.f32 %v2015, %v2022
    %v2030 = vmul.f32 %v2016, %v2022
    %v2031 = vmul.f32 %v2015, %v2027
    %v2032 = vmul.f32 %v2016, %v2027
    %v2033 = vmul.f32 %v2010, %v2029
    %v2034 = vmul.f32 %v1998, %v2030
    %v2035 = vmul.f32 %v2011, %v2031
    %v2036 = vmul.f32 %v2000, %v2032
    %v2037 = vmul.f32 %v2012, %v2029
    %v2038 = vmul.f32 %v2002, %v2030
    %v2039 = vmul.f32 %v2013, %v2031
    %v2040 = vmul.f32 %v2004, %v2032
    %v2041 = vadd.f32 %v1989, %v2033
    %v2042 = vadd.f32 %v1990, %v2034
    %v2043 = vadd.f32 %v1991, %v2035
    %v2044 = vadd.f32 %v1992, %v2036
    %v2045 = vadd.f32 %v1993, %v2037
    %v2046 = vadd.f32 %v1994, %v2038
    %v2047 = vadd.f32 %v1995, %v2039
    %v2048 = vadd.f32 %v1996, %v2040
    %2049 = vrot.lane.b32.xlu0 %v223, 22
    %v2050 = vpop.permute.xlu0 %2049
    %2051 = vrot.lane.b32.xlu0 %v225, 22
    %v2052 = vpop.permute.xlu0 %2051
    %2053 = vrot.lane.b32.xlu0 %v227, 22
    %v2054 = vpop.permute.xlu0 %2053
    %2055 = vrot.lane.b32.xlu0 %v229, 22
    %v2056 = vpop.permute.xlu0 %2055
    %vm2061 = vcmask 179200
    %v2062 = vsel %vm2061, 0.0, %v2050
    %v2063 = vsel %vm2061, 0.0, %v2052
    %v2064 = vsel %vm2061, 0.0, %v2054
    %v2065 = vsel %vm2061, 0.0, %v2056
    %v2067 = vperm.slane %v1820, 0
    %v2068 = vperm.slane %v1820, 1
    %2072 = vset.pattern.permute.xlu0 0
    %2073 = vperm.xlu0 %2072, %v1774
    %v2074 = vpop.permute.xlu0 %2073
    %2077 = vset.pattern.permute.xlu0 0
    %2078 = vperm.xlu0 %2077, %v1775
    %v2079 = vpop.permute.xlu0 %2078
    %v2081 = vmul.f32 %v2067, %v2074
    %v2082 = vmul.f32 %v2068, %v2074
    %v2083 = vmul.f32 %v2067, %v2079
    %v2084 = vmul.f32 %v2068, %v2079
    %v2085 = vmul.f32 %v2062, %v2081
    %v2086 = vmul.f32 %v2050, %v2082
    %v2087 = vmul.f32 %v2063, %v2083
    %v2088 = vmul.f32 %v2052, %v2084
    %v2089 = vmul.f32 %v2064, %v2081
    %v2090 = vmul.f32 %v2054, %v2082
    %v2091 = vmul.f32 %v2065, %v2083
    %v2092 = vmul.f32 %v2056, %v2084
    %v2093 = vadd.f32 %v2041, %v2085
    %v2094 = vadd.f32 %v2042, %v2086
    %v2095 = vadd.f32 %v2043, %v2087
    %v2096 = vadd.f32 %v2044, %v2088
    %v2097 = vadd.f32 %v2045, %v2089
    %v2098 = vadd.f32 %v2046, %v2090
    %v2099 = vadd.f32 %v2047, %v2091
    %v2100 = vadd.f32 %v2048, %v2092
    %2101 = vrot.lane.b32.xlu0 %v223, 14
    %v2102 = vpop.permute.xlu0 %2101
    %2103 = vrot.lane.b32.xlu0 %v224, 14
    %v2104 = vpop.permute.xlu0 %2103
    %2105 = vrot.lane.b32.xlu0 %v225, 14
    %v2106 = vpop.permute.xlu0 %2105
    %2107 = vrot.lane.b32.xlu0 %v226, 14
    %v2108 = vpop.permute.xlu0 %2107
    %2109 = vrot.lane.b32.xlu0 %v227, 14
    %v2110 = vpop.permute.xlu0 %2109
    %2111 = vrot.lane.b32.xlu0 %v228, 14
    %v2112 = vpop.permute.xlu0 %2111
    %2113 = vrot.lane.b32.xlu0 %v229, 14
    %v2114 = vpop.permute.xlu0 %2113
    %2115 = vrot.lane.b32.xlu0 %v230, 14
    %v2116 = vpop.permute.xlu0 %2115
    %vm2117 = vcmask 113664
    %v2118 = vsel %vm2117, %v2102, %v2104
    %v2119 = vsel %vm2117, %v2106, %v2108
    %v2120 = vsel %vm2117, %v2110, %v2112
    %v2121 = vsel %vm2117, %v2114, %v2116
    %v2130 = vsel %vm2117, 0.0, %v2102
    %v2131 = vsel %vm2117, 0.0, %v2106
    %v2132 = vsel %vm2117, 0.0, %v2110
    %v2133 = vsel %vm2117, 0.0, %v2114
    %v2135 = vperm.slane %v1821, 0
    %v2136 = vperm.slane %v1821, 1
    %2140 = vset.pattern.permute.xlu0 0
    %2141 = vperm.xlu0 %2140, %v1776
    %v2142 = vpop.permute.xlu0 %2141
    %2145 = vset.pattern.permute.xlu0 0
    %2146 = vperm.xlu0 %2145, %v1777
    %v2147 = vpop.permute.xlu0 %2146
    %v2149 = vmul.f32 %v2135, %v2142
    %v2150 = vmul.f32 %v2136, %v2142
    %v2151 = vmul.f32 %v2135, %v2147
    %v2152 = vmul.f32 %v2136, %v2147
    %v2153 = vmul.f32 %v2130, %v2149
    %v2154 = vmul.f32 %v2118, %v2150
    %v2155 = vmul.f32 %v2131, %v2151
    %v2156 = vmul.f32 %v2119, %v2152
    %v2157 = vmul.f32 %v2132, %v2149
    %v2158 = vmul.f32 %v2120, %v2150
    %v2159 = vmul.f32 %v2133, %v2151
    %v2160 = vmul.f32 %v2121, %v2152
    %v2161 = vadd.f32 %v2093, %v2153
    %v2162 = vadd.f32 %v2094, %v2154
    %v2163 = vadd.f32 %v2095, %v2155
    %v2164 = vadd.f32 %v2096, %v2156
    %v2165 = vadd.f32 %v2097, %v2157
    %v2166 = vadd.f32 %v2098, %v2158
    %v2167 = vadd.f32 %v2099, %v2159
    %v2168 = vadd.f32 %v2100, %v2160
    %v2170 = vperm.slane %v1822, 0
    %v2171 = vperm.slane %v1822, 1
    %2175 = vset.pattern.permute.xlu0 0
    %2176 = vperm.xlu0 %2175, %v1778
    %v2177 = vpop.permute.xlu0 %2176
    %2180 = vset.pattern.permute.xlu0 0
    %2181 = vperm.xlu0 %2180, %v1779
    %v2182 = vpop.permute.xlu0 %2181
    %v2184 = vmul.f32 %v2170, %v2177
    %v2185 = vmul.f32 %v2171, %v2177
    %v2186 = vmul.f32 %v2170, %v2182
    %v2187 = vmul.f32 %v2171, %v2182
    %v2188 = vmul.f32 %v1019, %v2184
    %v2189 = vmul.f32 %v1007, %v2185
    %v2190 = vmul.f32 %v1020, %v2186
    %v2191 = vmul.f32 %v1008, %v2187
    %v2192 = vmul.f32 %v1021, %v2184
    %v2193 = vmul.f32 %v1009, %v2185
    %v2194 = vmul.f32 %v1022, %v2186
    %v2195 = vmul.f32 %v1010, %v2187
    %v2196 = vadd.f32 %v2161, %v2188
    %v2197 = vadd.f32 %v2162, %v2189
    %v2198 = vadd.f32 %v2163, %v2190
    %v2199 = vadd.f32 %v2164, %v2191
    %v2200 = vadd.f32 %v2165, %v2192
    %v2201 = vadd.f32 %v2166, %v2193
    %v2202 = vadd.f32 %v2167, %v2194
    %v2203 = vadd.f32 %v2168, %v2195
    %v2205 = vperm.slane %v1823, 0
    %v2206 = vperm.slane %v1823, 1
    %2210 = vset.pattern.permute.xlu0 0
    %2211 = vperm.xlu0 %2210, %v1780
    %v2212 = vpop.permute.xlu0 %2211
    %2215 = vset.pattern.permute.xlu0 0
    %2216 = vperm.xlu0 %2215, %v1781
    %v2217 = vpop.permute.xlu0 %2216
    %v2219 = vmul.f32 %v2205, %v2212
    %v2220 = vmul.f32 %v2206, %v2212
    %v2221 = vmul.f32 %v2205, %v2217
    %v2222 = vmul.f32 %v2206, %v2217
    %v2223 = vmul.f32 %v1087, %v2219
    %v2224 = vmul.f32 %v1075, %v2220
    %v2225 = vmul.f32 %v1088, %v2221
    %v2226 = vmul.f32 %v1076, %v2222
    %v2227 = vmul.f32 %v1089, %v2219
    %v2228 = vmul.f32 %v1077, %v2220
    %v2229 = vmul.f32 %v1090, %v2221
    %v2230 = vmul.f32 %v1078, %v2222
    %v2231 = vadd.f32 %v2196, %v2223
    %v2232 = vadd.f32 %v2197, %v2224
    %v2233 = vadd.f32 %v2198, %v2225
    %v2234 = vadd.f32 %v2199, %v2226
    %v2235 = vadd.f32 %v2200, %v2227
    %v2236 = vadd.f32 %v2201, %v2228
    %v2237 = vadd.f32 %v2202, %v2229
    %v2238 = vadd.f32 %v2203, %v2230
    %v2240 = vperm.slane %v1824, 0
    %v2241 = vperm.slane %v1824, 1
    %2245 = vset.pattern.permute.xlu0 0
    %2246 = vperm.xlu0 %2245, %v1782
    %v2247 = vpop.permute.xlu0 %2246
    %2250 = vset.pattern.permute.xlu0 0
    %2251 = vperm.xlu0 %2250, %v1783
    %v2252 = vpop.permute.xlu0 %2251
    %v2254 = vmul.f32 %v2240, %v2247
    %v2255 = vmul.f32 %v2241, %v2247
    %v2256 = vmul.f32 %v2240, %v2252
    %v2257 = vmul.f32 %v2241, %v2252
    %v2258 = vmul.f32 %v1155, %v2254
    %v2259 = vmul.f32 %v1143, %v2255
    %v2260 = vmul.f32 %v1156, %v2256
    %v2261 = vmul.f32 %v1144, %v2257
    %v2262 = vmul.f32 %v1157, %v2254
    %v2263 = vmul.f32 %v1145, %v2255
    %v2264 = vmul.f32 %v1158, %v2256
    %v2265 = vmul.f32 %v1146, %v2257
    %v2266 = vadd.f32 %v2231, %v2258
    %v2267 = vadd.f32 %v2232, %v2259
    %v2268 = vadd.f32 %v2233, %v2260
    %v2269 = vadd.f32 %v2234, %v2261
    %v2270 = vadd.f32 %v2235, %v2262
    %v2271 = vadd.f32 %v2236, %v2263
    %v2272 = vadd.f32 %v2237, %v2264
    %v2273 = vadd.f32 %v2238, %v2265
    %2274 = vrot.lane.b32.xlu0 %v223, 10
    %v2275 = vpop.permute.xlu0 %2274
    %2276 = vrot.lane.b32.xlu0 %v224, 10
    %v2277 = vpop.permute.xlu0 %2276
    %2278 = vrot.lane.b32.xlu0 %v225, 10
    %v2279 = vpop.permute.xlu0 %2278
    %2280 = vrot.lane.b32.xlu0 %v226, 10
    %v2281 = vpop.permute.xlu0 %2280
    %2282 = vrot.lane.b32.xlu0 %v227, 10
    %v2283 = vpop.permute.xlu0 %2282
    %2284 = vrot.lane.b32.xlu0 %v228, 10
    %v2285 = vpop.permute.xlu0 %2284
    %2286 = vrot.lane.b32.xlu0 %v229, 10
    %v2287 = vpop.permute.xlu0 %2286
    %2288 = vrot.lane.b32.xlu0 %v230, 10
    %v2289 = vpop.permute.xlu0 %2288
    %vm2290 = vcmask 80896
    %v2291 = vsel %vm2290, %v2275, %v2277
    %v2292 = vsel %vm2290, %v2279, %v2281
    %v2293 = vsel %vm2290, %v2283, %v2285
    %v2294 = vsel %vm2290, %v2287, %v2289
    %v2303 = vsel %vm2290, 0.0, %v2275
    %v2304 = vsel %vm2290, 0.0, %v2279
    %v2305 = vsel %vm2290, 0.0, %v2283
    %v2306 = vsel %vm2290, 0.0, %v2287
    %v2308 = vperm.slane %v1825, 0
    %v2309 = vperm.slane %v1825, 1
    %2313 = vset.pattern.permute.xlu0 0
    %2314 = vperm.xlu0 %2313, %v1784
    %v2315 = vpop.permute.xlu0 %2314
    %2318 = vset.pattern.permute.xlu0 0
    %2319 = vperm.xlu0 %2318, %v1785
    %v2320 = vpop.permute.xlu0 %2319
    %v2322 = vmul.f32 %v2308, %v2315
    %v2323 = vmul.f32 %v2309, %v2315
    %v2324 = vmul.f32 %v2308, %v2320
    %v2325 = vmul.f32 %v2309, %v2320
    %v2326 = vmul.f32 %v2303, %v2322
    %v2327 = vmul.f32 %v2291, %v2323
    %v2328 = vmul.f32 %v2304, %v2324
    %v2329 = vmul.f32 %v2292, %v2325
    %v2330 = vmul.f32 %v2305, %v2322
    %v2331 = vmul.f32 %v2293, %v2323
    %v2332 = vmul.f32 %v2306, %v2324
    %v2333 = vmul.f32 %v2294, %v2325
    %v2334 = vadd.f32 %v2266, %v2326
    %v2335 = vadd.f32 %v2267, %v2327
    %v2336 = vadd.f32 %v2268, %v2328
    %v2337 = vadd.f32 %v2269, %v2329
    %v2338 = vadd.f32 %v2270, %v2330
    %v2339 = vadd.f32 %v2271, %v2331
    %v2340 = vadd.f32 %v2272, %v2332
    %v2341 = vadd.f32 %v2273, %v2333
    %2342 = vrot.lane.b32.xlu0 %v223, 2
    %v2343 = vpop.permute.xlu0 %2342
    %2344 = vrot.lane.b32.xlu0 %v224, 2
    %v2345 = vpop.permute.xlu0 %2344
    %2346 = vrot.lane.b32.xlu0 %v225, 2
    %v2347 = vpop.permute.xlu0 %2346
    %2348 = vrot.lane.b32.xlu0 %v226, 2
    %v2349 = vpop.permute.xlu0 %2348
    %2350 = vrot.lane.b32.xlu0 %v227, 2
    %v2351 = vpop.permute.xlu0 %2350
    %2352 = vrot.lane.b32.xlu0 %v228, 2
    %v2353 = vpop.permute.xlu0 %2352
    %2354 = vrot.lane.b32.xlu0 %v229, 2
    %v2355 = vpop.permute.xlu0 %2354
    %2356 = vrot.lane.b32.xlu0 %v230, 2
    %v2357 = vpop.permute.xlu0 %2356
    %vm2358 = vcmask 15360
    %v2359 = vsel %vm2358, %v2343, %v2345
    %v2360 = vsel %vm2358, %v2347, %v2349
    %v2361 = vsel %vm2358, %v2351, %v2353
    %v2362 = vsel %vm2358, %v2355, %v2357
    %v2371 = vsel %vm2358, 0.0, %v2343
    %v2372 = vsel %vm2358, 0.0, %v2347
    %v2373 = vsel %vm2358, 0.0, %v2351
    %v2374 = vsel %vm2358, 0.0, %v2355
    %v2376 = vperm.slane %v1826, 0
    %v2377 = vperm.slane %v1826, 1
    %2381 = vset.pattern.permute.xlu0 0
    %2382 = vperm.xlu0 %2381, %v1786
    %v2383 = vpop.permute.xlu0 %2382
    %2386 = vset.pattern.permute.xlu0 0
    %2387 = vperm.xlu0 %2386, %v1787
    %v2388 = vpop.permute.xlu0 %2387
    %v2390 = vmul.f32 %v2376, %v2383
    %v2391 = vmul.f32 %v2377, %v2383
    %v2392 = vmul.f32 %v2376, %v2388
    %v2393 = vmul.f32 %v2377, %v2388
    %v2394 = vmul.f32 %v2371, %v2390
    %v2395 = vmul.f32 %v2359, %v2391
    %v2396 = vmul.f32 %v2372, %v2392
    %v2397 = vmul.f32 %v2360, %v2393
    %v2398 = vmul.f32 %v2373, %v2390
    %v2399 = vmul.f32 %v2361, %v2391
    %v2400 = vmul.f32 %v2374, %v2392
    %v2401 = vmul.f32 %v2362, %v2393
    %v2402 = vadd.f32 %v2334, %v2394
    %v2403 = vadd.f32 %v2335, %v2395
    %v2404 = vadd.f32 %v2336, %v2396
    %v2405 = vadd.f32 %v2337, %v2397
    %v2406 = vadd.f32 %v2338, %v2398
    %v2407 = vadd.f32 %v2339, %v2399
    %v2408 = vadd.f32 %v2340, %v2400
    %v2409 = vadd.f32 %v2341, %v2401
    %v2411 = vperm.slane %v1827, 0
    %v2412 = vperm.slane %v1827, 1
    %2416 = vset.pattern.permute.xlu0 0
    %2417 = vperm.xlu0 %2416, %v1788
    %v2418 = vpop.permute.xlu0 %2417
    %2421 = vset.pattern.permute.xlu0 0
    %2422 = vperm.xlu0 %2421, %v1789
    %v2423 = vpop.permute.xlu0 %2422
    %v2425 = vmul.f32 %v2411, %v2418
    %v2426 = vmul.f32 %v2412, %v2418
    %v2427 = vmul.f32 %v2411, %v2423
    %v2428 = vmul.f32 %v2412, %v2423
    %v2429 = vmul.f32 %v1223, %v2425
    %v2430 = vmul.f32 %v1211, %v2426
    %v2431 = vmul.f32 %v1224, %v2427
    %v2432 = vmul.f32 %v1212, %v2428
    %v2433 = vmul.f32 %v1225, %v2425
    %v2434 = vmul.f32 %v1213, %v2426
    %v2435 = vmul.f32 %v1226, %v2427
    %v2436 = vmul.f32 %v1214, %v2428
    %v2437 = vadd.f32 %v2402, %v2429
    %v2438 = vadd.f32 %v2403, %v2430
    %v2439 = vadd.f32 %v2404, %v2431
    %v2440 = vadd.f32 %v2405, %v2432
    %v2441 = vadd.f32 %v2406, %v2433
    %v2442 = vadd.f32 %v2407, %v2434
    %v2443 = vadd.f32 %v2408, %v2435
    %v2444 = vadd.f32 %v2409, %v2436
    %v2446 = vperm.slane %v1828, 0
    %v2447 = vperm.slane %v1828, 1
    %2451 = vset.pattern.permute.xlu0 0
    %2452 = vperm.xlu0 %2451, %v1790
    %v2453 = vpop.permute.xlu0 %2452
    %2456 = vset.pattern.permute.xlu0 0
    %2457 = vperm.xlu0 %2456, %v1791
    %v2458 = vpop.permute.xlu0 %2457
    %v2460 = vmul.f32 %v2446, %v2453
    %v2461 = vmul.f32 %v2447, %v2453
    %v2462 = vmul.f32 %v2446, %v2458
    %v2463 = vmul.f32 %v2447, %v2458
    %v2464 = vmul.f32 %v223, %v2460
    %v2465 = vmul.f32 %v224, %v2461
    %v2466 = vmul.f32 %v225, %v2462
    %v2467 = vmul.f32 %v226, %v2463
    %v2468 = vmul.f32 %v227, %v2460
    %v2469 = vmul.f32 %v228, %v2461
    %v2470 = vmul.f32 %v229, %v2462
    %v2471 = vmul.f32 %v230, %v2463
    %v2472 = vadd.f32 %v2437, %v2464
    %v2473 = vadd.f32 %v2438, %v2465
    %v2474 = vadd.f32 %v2439, %v2466
    %v2475 = vadd.f32 %v2440, %v2467
    %v2476 = vadd.f32 %v2441, %v2468
    %v2477 = vadd.f32 %v2442, %v2469
    %v2478 = vadd.f32 %v2443, %v2470
    %v2479 = vadd.f32 %v2444, %v2471
    %v2481 = vperm.slane %v1829, 0
    %v2482 = vperm.slane %v1829, 1
    %2486 = vset.pattern.permute.xlu0 0
    %2487 = vperm.xlu0 %2486, %v1792
    %v2488 = vpop.permute.xlu0 %2487
    %2491 = vset.pattern.permute.xlu0 0
    %2492 = vperm.xlu0 %2491, %v1793
    %v2493 = vpop.permute.xlu0 %2492
    %v2495 = vmul.f32 %v2481, %v2488
    %v2496 = vmul.f32 %v2482, %v2488
    %v2497 = vmul.f32 %v2481, %v2493
    %v2498 = vmul.f32 %v2482, %v2493
    %v2499 = vmul.f32 %v1314, %v2495
    %v2500 = vmul.f32 %v1327, %v2496
    %v2501 = vmul.f32 %v1315, %v2497
    %v2502 = vmul.f32 %v1328, %v2498
    %v2503 = vmul.f32 %v1316, %v2495
    %v2504 = vmul.f32 %v1329, %v2496
    %v2505 = vmul.f32 %v1317, %v2497
    %v2506 = vmul.f32 %v1330, %v2498
    %v2507 = vadd.f32 %v2472, %v2499
    %v2508 = vadd.f32 %v2473, %v2500
    %v2509 = vadd.f32 %v2474, %v2501
    %v2510 = vadd.f32 %v2475, %v2502
    %v2511 = vadd.f32 %v2476, %v2503
    %v2512 = vadd.f32 %v2477, %v2504
    %v2513 = vadd.f32 %v2478, %v2505
    %v2514 = vadd.f32 %v2479, %v2506
    %2515 = vrot.lane.b32.xlu0 %v223, 126
    %v2516 = vpop.permute.xlu0 %2515
    %2517 = vrot.lane.b32.xlu0 %v224, 126
    %v2518 = vpop.permute.xlu0 %2517
    %2519 = vrot.lane.b32.xlu0 %v225, 126
    %v2520 = vpop.permute.xlu0 %2519
    %2521 = vrot.lane.b32.xlu0 %v226, 126
    %v2522 = vpop.permute.xlu0 %2521
    %2523 = vrot.lane.b32.xlu0 %v227, 126
    %v2524 = vpop.permute.xlu0 %2523
    %2525 = vrot.lane.b32.xlu0 %v228, 126
    %v2526 = vpop.permute.xlu0 %2525
    %2527 = vrot.lane.b32.xlu0 %v229, 126
    %v2528 = vpop.permute.xlu0 %2527
    %2529 = vrot.lane.b32.xlu0 %v230, 126
    %v2530 = vpop.permute.xlu0 %2529
    %vm2531 = vcmask 1031168
    %v2532 = vsel %vm2531, %v2516, %v2518
    %v2533 = vsel %vm2531, %v2520, %v2522
    %v2534 = vsel %vm2531, %v2524, %v2526
    %v2535 = vsel %vm2531, %v2528, %v2530
    %v2544 = vsel %vm2117, %v2518, 0.0
    %v2545 = vsel %vm2117, %v2522, 0.0
    %v2546 = vsel %vm2117, %v2526, 0.0
    %v2547 = vsel %vm2117, %v2530, 0.0
    %v2549 = vperm.slane %v1830, 0
    %v2550 = vperm.slane %v1830, 1
    %2554 = vset.pattern.permute.xlu0 0
    %2555 = vperm.xlu0 %2554, %v1794
    %v2556 = vpop.permute.xlu0 %2555
    %2559 = vset.pattern.permute.xlu0 0
    %2560 = vperm.xlu0 %2559, %v1795
    %v2561 = vpop.permute.xlu0 %2560
    %v2563 = vmul.f32 %v2549, %v2556
    %v2564 = vmul.f32 %v2550, %v2556
    %v2565 = vmul.f32 %v2549, %v2561
    %v2566 = vmul.f32 %v2550, %v2561
    %v2567 = vmul.f32 %v2532, %v2563
    %v2568 = vmul.f32 %v2544, %v2564
    %v2569 = vmul.f32 %v2533, %v2565
    %v2570 = vmul.f32 %v2545, %v2566
    %v2571 = vmul.f32 %v2534, %v2563
    %v2572 = vmul.f32 %v2546, %v2564
    %v2573 = vmul.f32 %v2535, %v2565
    %v2574 = vmul.f32 %v2547, %v2566
    %v2575 = vadd.f32 %v2507, %v2567
    %v2576 = vadd.f32 %v2508, %v2568
    %v2577 = vadd.f32 %v2509, %v2569
    %v2578 = vadd.f32 %v2510, %v2570
    %v2579 = vadd.f32 %v2511, %v2571
    %v2580 = vadd.f32 %v2512, %v2572
    %v2581 = vadd.f32 %v2513, %v2573
    %v2582 = vadd.f32 %v2514, %v2574
    %2583 = vrot.lane.b32.xlu0 %v223, 118
    %v2584 = vpop.permute.xlu0 %2583
    %2585 = vrot.lane.b32.xlu0 %v224, 118
    %v2586 = vpop.permute.xlu0 %2585
    %2587 = vrot.lane.b32.xlu0 %v225, 118
    %v2588 = vpop.permute.xlu0 %2587
    %2589 = vrot.lane.b32.xlu0 %v226, 118
    %v2590 = vpop.permute.xlu0 %2589
    %2591 = vrot.lane.b32.xlu0 %v227, 118
    %v2592 = vpop.permute.xlu0 %2591
    %2593 = vrot.lane.b32.xlu0 %v228, 118
    %v2594 = vpop.permute.xlu0 %2593
    %2595 = vrot.lane.b32.xlu0 %v229, 118
    %v2596 = vpop.permute.xlu0 %2595
    %2597 = vrot.lane.b32.xlu0 %v230, 118
    %v2598 = vpop.permute.xlu0 %2597
    %vm2599 = vcmask 965632
    %v2600 = vsel %vm2599, %v2584, %v2586
    %v2601 = vsel %vm2599, %v2588, %v2590
    %v2602 = vsel %vm2599, %v2592, %v2594
    %v2603 = vsel %vm2599, %v2596, %v2598
    %vm2612 = vcmask 48128
    %v2613 = vsel %vm2612, %v2586, 0.0
    %v2614 = vsel %vm2612, %v2590, 0.0
    %v2615 = vsel %vm2612, %v2594, 0.0
    %v2616 = vsel %vm2612, %v2598, 0.0
    %v2618 = vperm.slane %v1831, 0
    %v2619 = vperm.slane %v1831, 1
    %2623 = vset.pattern.permute.xlu0 0
    %2624 = vperm.xlu0 %2623, %v1796
    %v2625 = vpop.permute.xlu0 %2624
    %2628 = vset.pattern.permute.xlu0 0
    %2629 = vperm.xlu0 %2628, %v1797
    %v2630 = vpop.permute.xlu0 %2629
    %v2632 = vmul.f32 %v2618, %v2625
    %v2633 = vmul.f32 %v2619, %v2625
    %v2634 = vmul.f32 %v2618, %v2630
    %v2635 = vmul.f32 %v2619, %v2630
    %v2636 = vmul.f32 %v2600, %v2632
    %v2637 = vmul.f32 %v2613, %v2633
    %v2638 = vmul.f32 %v2601, %v2634
    %v2639 = vmul.f32 %v2614, %v2635
    %v2640 = vmul.f32 %v2602, %v2632
    %v2641 = vmul.f32 %v2615, %v2633
    %v2642 = vmul.f32 %v2603, %v2634
    %v2643 = vmul.f32 %v2616, %v2635
    %v2644 = vadd.f32 %v2575, %v2636
    %v2645 = vadd.f32 %v2576, %v2637
    %v2646 = vadd.f32 %v2577, %v2638
    %v2647 = vadd.f32 %v2578, %v2639
    %v2648 = vadd.f32 %v2579, %v2640
    %v2649 = vadd.f32 %v2580, %v2641
    %v2650 = vadd.f32 %v2581, %v2642
    %v2651 = vadd.f32 %v2582, %v2643
    %v2653 = vperm.slane %v1832, 0
    %v2654 = vperm.slane %v1832, 1
    %2658 = vset.pattern.permute.xlu0 0
    %2659 = vperm.xlu0 %2658, %v1798
    %v2660 = vpop.permute.xlu0 %2659
    %2663 = vset.pattern.permute.xlu0 0
    %2664 = vperm.xlu0 %2663, %v1799
    %v2665 = vpop.permute.xlu0 %2664
    %v2667 = vmul.f32 %v2653, %v2660
    %v2668 = vmul.f32 %v2654, %v2660
    %v2669 = vmul.f32 %v2653, %v2665
    %v2670 = vmul.f32 %v2654, %v2665
    %v2671 = vmul.f32 %v1383, %v2667
    %v2672 = vmul.f32 %v1396, %v2668
    %v2673 = vmul.f32 %v1384, %v2669
    %v2674 = vmul.f32 %v1397, %v2670
    %v2675 = vmul.f32 %v1385, %v2667
    %v2676 = vmul.f32 %v1398, %v2668
    %v2677 = vmul.f32 %v1386, %v2669
    %v2678 = vmul.f32 %v1399, %v2670
    %v2679 = vadd.f32 %v2644, %v2671
    %v2680 = vadd.f32 %v2645, %v2672
    %v2681 = vadd.f32 %v2646, %v2673
    %v2682 = vadd.f32 %v2647, %v2674
    %v2683 = vadd.f32 %v2648, %v2675
    %v2684 = vadd.f32 %v2649, %v2676
    %v2685 = vadd.f32 %v2650, %v2677
    %v2686 = vadd.f32 %v2651, %v2678
    %v2688 = vperm.slane %v1833, 0
    %v2689 = vperm.slane %v1833, 1
    %2693 = vset.pattern.permute.xlu0 0
    %2694 = vperm.xlu0 %2693, %v1800
    %v2695 = vpop.permute.xlu0 %2694
    %2698 = vset.pattern.permute.xlu0 0
    %2699 = vperm.xlu0 %2698, %v1801
    %v2700 = vpop.permute.xlu0 %2699
    %v2702 = vmul.f32 %v2688, %v2695
    %v2703 = vmul.f32 %v2689, %v2695
    %v2704 = vmul.f32 %v2688, %v2700
    %v2705 = vmul.f32 %v2689, %v2700
    %v2706 = vmul.f32 %v1452, %v2702
    %v2707 = vmul.f32 %v1465, %v2703
    %v2708 = vmul.f32 %v1453, %v2704
    %v2709 = vmul.f32 %v1466, %v2705
    %v2710 = vmul.f32 %v1454, %v2702
    %v2711 = vmul.f32 %v1467, %v2703
    %v2712 = vmul.f32 %v1455, %v2704
    %v2713 = vmul.f32 %v1468, %v2705
    %v2714 = vadd.f32 %v2679, %v2706
    %v2715 = vadd.f32 %v2680, %v2707
    %v2716 = vadd.f32 %v2681, %v2708
    %v2717 = vadd.f32 %v2682, %v2709
    %v2718 = vadd.f32 %v2683, %v2710
    %v2719 = vadd.f32 %v2684, %v2711
    %v2720 = vadd.f32 %v2685, %v2712
    %v2721 = vadd.f32 %v2686, %v2713
    %v2723 = vperm.slane %v1834, 0
    %v2724 = vperm.slane %v1834, 1
    %2728 = vset.pattern.permute.xlu0 0
    %2729 = vperm.xlu0 %2728, %v1802
    %v2730 = vpop.permute.xlu0 %2729
    %2733 = vset.pattern.permute.xlu0 0
    %2734 = vperm.xlu0 %2733, %v1803
    %v2735 = vpop.permute.xlu0 %2734
    %v2737 = vmul.f32 %v2723, %v2730
    %v2738 = vmul.f32 %v2724, %v2730
    %v2739 = vmul.f32 %v2723, %v2735
    %v2740 = vmul.f32 %v2724, %v2735
    %v2741 = vmul.f32 %v1521, %v2737
    %v2742 = vmul.f32 %v1534, %v2738
    %v2743 = vmul.f32 %v1522, %v2739
    %v2744 = vmul.f32 %v1535, %v2740
    %v2745 = vmul.f32 %v1523, %v2737
    %v2746 = vmul.f32 %v1536, %v2738
    %v2747 = vmul.f32 %v1524, %v2739
    %v2748 = vmul.f32 %v1537, %v2740
    %v2749 = vadd.f32 %v2714, %v2741
    %v2750 = vadd.f32 %v2715, %v2742
    %v2751 = vadd.f32 %v2716, %v2743
    %v2752 = vadd.f32 %v2717, %v2744
    %v2753 = vadd.f32 %v2718, %v2745
    %v2754 = vadd.f32 %v2719, %v2746
    %v2755 = vadd.f32 %v2720, %v2747
    %v2756 = vadd.f32 %v2721, %v2748
    %2757 = vrot.lane.b32.xlu0 %v223, 114
    %v2758 = vpop.permute.xlu0 %2757
    %2759 = vrot.lane.b32.xlu0 %v224, 114
    %v2760 = vpop.permute.xlu0 %2759
    %2761 = vrot.lane.b32.xlu0 %v225, 114
    %v2762 = vpop.permute.xlu0 %2761
    %2763 = vrot.lane.b32.xlu0 %v226, 114
    %v2764 = vpop.permute.xlu0 %2763
    %2765 = vrot.lane.b32.xlu0 %v227, 114
    %v2766 = vpop.permute.xlu0 %2765
    %2767 = vrot.lane.b32.xlu0 %v228, 114
    %v2768 = vpop.permute.xlu0 %2767
    %2769 = vrot.lane.b32.xlu0 %v229, 114
    %v2770 = vpop.permute.xlu0 %2769
    %2771 = vrot.lane.b32.xlu0 %v230, 114
    %v2772 = vpop.permute.xlu0 %2771
    %vm2773 = vcmask 932864
    %v2774 = vsel %vm2773, %v2758, %v2760
    %v2775 = vsel %vm2773, %v2762, %v2764
    %v2776 = vsel %vm2773, %v2766, %v2768
    %v2777 = vsel %vm2773, %v2770, %v2772
    %v2786 = vsel %vm2358, %v2760, 0.0
    %v2787 = vsel %vm2358, %v2764, 0.0
    %v2788 = vsel %vm2358, %v2768, 0.0
    %v2789 = vsel %vm2358, %v2772, 0.0
    %v2791 = vperm.slane %v1835, 0
    %v2792 = vperm.slane %v1835, 1
    %2796 = vset.pattern.permute.xlu0 0
    %2797 = vperm.xlu0 %2796, %v1804
    %v2798 = vpop.permute.xlu0 %2797
    %2801 = vset.pattern.permute.xlu0 0
    %2802 = vperm.xlu0 %2801, %v1805
    %v2803 = vpop.permute.xlu0 %2802
    %v2805 = vmul.f32 %v2791, %v2798
    %v2806 = vmul.f32 %v2792, %v2798
    %v2807 = vmul.f32 %v2791, %v2803
    %v2808 = vmul.f32 %v2792, %v2803
    %v2809 = vmul.f32 %v2774, %v2805
    %v2810 = vmul.f32 %v2786, %v2806
    %v2811 = vmul.f32 %v2775, %v2807
    %v2812 = vmul.f32 %v2787, %v2808
    %v2813 = vmul.f32 %v2776, %v2805
    %v2814 = vmul.f32 %v2788, %v2806
    %v2815 = vmul.f32 %v2777, %v2807
    %v2816 = vmul.f32 %v2789, %v2808
    %v2817 = vadd.f32 %v2749, %v2809
    %v2818 = vadd.f32 %v2750, %v2810
    %v2819 = vadd.f32 %v2751, %v2811
    %v2820 = vadd.f32 %v2752, %v2812
    %v2821 = vadd.f32 %v2753, %v2813
    %v2822 = vadd.f32 %v2754, %v2814
    %v2823 = vadd.f32 %v2755, %v2815
    %v2824 = vadd.f32 %v2756, %v2816
    %2825 = vrot.lane.b32.xlu0 %v223, 106
    %v2826 = vpop.permute.xlu0 %2825
    %2827 = vrot.lane.b32.xlu0 %v224, 106
    %v2828 = vpop.permute.xlu0 %2827
    %2829 = vrot.lane.b32.xlu0 %v225, 106
    %v2830 = vpop.permute.xlu0 %2829
    %2831 = vrot.lane.b32.xlu0 %v226, 106
    %v2832 = vpop.permute.xlu0 %2831
    %2833 = vrot.lane.b32.xlu0 %v227, 106
    %v2834 = vpop.permute.xlu0 %2833
    %2835 = vrot.lane.b32.xlu0 %v228, 106
    %v2836 = vpop.permute.xlu0 %2835
    %2837 = vrot.lane.b32.xlu0 %v229, 106
    %v2838 = vpop.permute.xlu0 %2837
    %2839 = vrot.lane.b32.xlu0 %v230, 106
    %v2840 = vpop.permute.xlu0 %2839
    %vm2841 = vcmask 867328
    %v2842 = vsel %vm2841, %v2826, %v2828
    %v2843 = vsel %vm2841, %v2830, %v2832
    %v2844 = vsel %vm2841, %v2834, %v2836
    %v2845 = vsel %vm2841, %v2838, %v2840
    %vm2850 = vcmask 998400
    %v2851 = vsel %vm2850, %v2842, 0.0
    %v2852 = vsel %vm2850, %v2843, 0.0
    %v2853 = vsel %vm2850, %v2844, 0.0
    %v2854 = vsel %vm2850, %v2845, 0.0
    %v2856 = vperm.slane %v1836, 0
    %v2857 = vperm.slane %v1836, 1
    %2861 = vset.pattern.permute.xlu0 0
    %2862 = vperm.xlu0 %2861, %v1806
    %v2863 = vpop.permute.xlu0 %2862
    %2866 = vset.pattern.permute.xlu0 0
    %2867 = vperm.xlu0 %2866, %v1807
    %v2868 = vpop.permute.xlu0 %2867
    %v2870 = vmul.f32 %v2856, %v2863
    %v2871 = vmul.f32 %v2857, %v2863
    %v2872 = vmul.f32 %v2856, %v2868
    %v2873 = vmul.f32 %v2857, %v2868
    %v2874 = vmul.f32 %v2851, %v2870
    %v2875 = vmul.f32 %v2871, 0.0
    %v2876 = vmul.f32 %v2852, %v2872
    %v2877 = vmul.f32 %v2873, 0.0
    %v2878 = vmul.f32 %v2853, %v2870
    %v2879 = vmul.f32 %v2854, %v2872
    %v2880 = vadd.f32 %v2817, %v2874
    %v2881 = vadd.f32 %v2818, %v2875
    %v2882 = vadd.f32 %v2819, %v2876
    %v2883 = vadd.f32 %v2820, %v2877
    %v2884 = vadd.f32 %v2821, %v2878
    %v2885 = vadd.f32 %v2822, %v2875
    %v2886 = vadd.f32 %v2823, %v2879
    %v2887 = vadd.f32 %v2824, %v2877
    %2888 = vrot.lane.b32.xlu0 %v223, 105
    %v2889 = vpop.permute.xlu0 %2888
    %2890 = vrot.lane.b32.xlu0 %v224, 105
    %v2891 = vpop.permute.xlu0 %2890
    %2892 = vrot.lane.b32.xlu0 %v225, 105
    %v2893 = vpop.permute.xlu0 %2892
    %2894 = vrot.lane.b32.xlu0 %v226, 105
    %v2895 = vpop.permute.xlu0 %2894
    %2896 = vrot.lane.b32.xlu0 %v227, 105
    %v2897 = vpop.permute.xlu0 %2896
    %2898 = vrot.lane.b32.xlu0 %v228, 105
    %v2899 = vpop.permute.xlu0 %2898
    %2900 = vrot.lane.b32.xlu0 %v229, 105
    %v2901 = vpop.permute.xlu0 %2900
    %2902 = vrot.lane.b32.xlu0 %v230, 105
    %v2903 = vpop.permute.xlu0 %2902
    %vm2904 = vcmask 859136
    %v2905 = vsel %vm2904, %v2889, %v2891
    %v2906 = vsel %vm2904, %v2893, %v2895
    %v2907 = vsel %vm2904, %v2897, %v2899
    %v2908 = vsel %vm2904, %v2901, %v2903
    %vm2913 = vcmask 990208
    %v2914 = vsel %vm2913, %v2905, 0.0
    %v2915 = vsel %vm2913, %v2906, 0.0
    %v2916 = vsel %vm2913, %v2907, 0.0
    %v2917 = vsel %vm2913, %v2908, 0.0
    %v2919 = vperm.slane %v1837, 0
    %v2920 = vperm.slane %v1837, 1
    %2924 = vset.pattern.permute.xlu0 0
    %2925 = vperm.xlu0 %2924, %v1808
    %v2926 = vpop.permute.xlu0 %2925
    %2929 = vset.pattern.permute.xlu0 0
    %2930 = vperm.xlu0 %2929, %v1809
    %v2931 = vpop.permute.xlu0 %2930
    %v2933 = vmul.f32 %v2919, %v2926
    %v2934 = vmul.f32 %v2920, %v2926
    %v2935 = vmul.f32 %v2919, %v2931
    %v2936 = vmul.f32 %v2920, %v2931
    %v2937 = vmul.f32 %v2914, %v2933
    %v2938 = vmul.f32 %v2934, 0.0
    %v2939 = vmul.f32 %v2915, %v2935
    %v2940 = vmul.f32 %v2936, 0.0
    %v2941 = vmul.f32 %v2916, %v2933
    %v2942 = vmul.f32 %v2917, %v2935
    %v2943 = vadd.f32 %v2880, %v2937
    %v2944 = vadd.f32 %v2881, %v2938
    %v2945 = vadd.f32 %v2882, %v2939
    %v2946 = vadd.f32 %v2883, %v2940
    %v2947 = vadd.f32 %v2884, %v2941
    %v2948 = vadd.f32 %v2885, %v2938
    %v2949 = vadd.f32 %v2886, %v2942
    %v2950 = vadd.f32 %v2887, %v2940
    %2951 = vrot.lane.b32.xlu0 %v223, 104
    %v2952 = vpop.permute.xlu0 %2951
    %2953 = vrot.lane.b32.xlu0 %v224, 104
    %v2954 = vpop.permute.xlu0 %2953
    %2955 = vrot.lane.b32.xlu0 %v225, 104
    %v2956 = vpop.permute.xlu0 %2955
    %2957 = vrot.lane.b32.xlu0 %v226, 104
    %v2958 = vpop.permute.xlu0 %2957
    %2959 = vrot.lane.b32.xlu0 %v227, 104
    %v2960 = vpop.permute.xlu0 %2959
    %2961 = vrot.lane.b32.xlu0 %v228, 104
    %v2962 = vpop.permute.xlu0 %2961
    %2963 = vrot.lane.b32.xlu0 %v229, 104
    %v2964 = vpop.permute.xlu0 %2963
    %2965 = vrot.lane.b32.xlu0 %v230, 104
    %v2966 = vpop.permute.xlu0 %2965
    %vm2967 = vcmask 850944
    %v2968 = vsel %vm2967, %v2952, %v2954
    %v2969 = vsel %vm2967, %v2956, %v2958
    %v2970 = vsel %vm2967, %v2960, %v2962
    %v2971 = vsel %vm2967, %v2964, %v2966
    %vm2976 = vcmask 982016
    %v2977 = vsel %vm2976, %v2968, 0.0
    %v2978 = vsel %vm2976, %v2969, 0.0
    %v2979 = vsel %vm2976, %v2970, 0.0
    %v2980 = vsel %vm2976, %v2971, 0.0
    %v2982 = vperm.slane %v1838, 0
    %v2983 = vperm.slane %v1838, 1
    %2987 = vset.pattern.permute.xlu0 0
    %2988 = vperm.xlu0 %2987, %v1810
    %v2989 = vpop.permute.xlu0 %2988
    %2992 = vset.pattern.permute.xlu0 0
    %2993 = vperm.xlu0 %2992, %v1811
    %v2994 = vpop.permute.xlu0 %2993
    %v2996 = vmul.f32 %v2982, %v2989
    %v2997 = vmul.f32 %v2983, %v2989
    %v2998 = vmul.f32 %v2982, %v2994
    %v2999 = vmul.f32 %v2983, %v2994
    %v3000 = vmul.f32 %v2977, %v2996
    %v3001 = vmul.f32 %v2997, 0.0
    %v3002 = vmul.f32 %v2978, %v2998
    %v3003 = vmul.f32 %v2999, 0.0
    %v3004 = vmul.f32 %v2979, %v2996
    %v3005 = vmul.f32 %v2980, %v2998
    %v3006 = vadd.f32 %v2943, %v3000
    %v3007 = vadd.f32 %v2944, %v3001
    %v3008 = vadd.f32 %v2945, %v3002
    %v3009 = vadd.f32 %v2946, %v3003
    %v3010 = vadd.f32 %v2947, %v3004
    %v3011 = vadd.f32 %v2948, %v3001
    %v3012 = vadd.f32 %v2949, %v3005
    %v3013 = vadd.f32 %v2950, %v3003
    %3014 = vrot.lane.b32.xlu0 %v223, 103
    %v3015 = vpop.permute.xlu0 %3014
    %3016 = vrot.lane.b32.xlu0 %v224, 103
    %v3017 = vpop.permute.xlu0 %3016
    %3018 = vrot.lane.b32.xlu0 %v225, 103
    %v3019 = vpop.permute.xlu0 %3018
    %3020 = vrot.lane.b32.xlu0 %v226, 103
    %v3021 = vpop.permute.xlu0 %3020
    %3022 = vrot.lane.b32.xlu0 %v227, 103
    %v3023 = vpop.permute.xlu0 %3022
    %3024 = vrot.lane.b32.xlu0 %v228, 103
    %v3025 = vpop.permute.xlu0 %3024
    %3026 = vrot.lane.b32.xlu0 %v229, 103
    %v3027 = vpop.permute.xlu0 %3026
    %3028 = vrot.lane.b32.xlu0 %v230, 103
    %v3029 = vpop.permute.xlu0 %3028
    %vm3030 = vcmask 842752
    %v3031 = vsel %vm3030, %v3015, %v3017
    %v3032 = vsel %vm3030, %v3019, %v3021
    %v3033 = vsel %vm3030, %v3023, %v3025
    %v3034 = vsel %vm3030, %v3027, %v3029
    %vm3039 = vcmask 973824
    %v3040 = vsel %vm3039, %v3031, 0.0
    %v3041 = vsel %vm3039, %v3032, 0.0
    %v3042 = vsel %vm3039, %v3033, 0.0
    %v3043 = vsel %vm3039, %v3034, 0.0
    %v3045 = vperm.slane %v1839, 0
    %v3046 = vperm.slane %v1839, 1
    %3050 = vset.pattern.permute.xlu0 0
    %3051 = vperm.xlu0 %3050, %v1812
    %v3052 = vpop.permute.xlu0 %3051
    %3055 = vset.pattern.permute.xlu0 0
    %3056 = vperm.xlu0 %3055, %v1813
    %v3057 = vpop.permute.xlu0 %3056
    %v3059 = vmul.f32 %v3045, %v3052
    %v3060 = vmul.f32 %v3046, %v3052
    %v3061 = vmul.f32 %v3045, %v3057
    %v3062 = vmul.f32 %v3046, %v3057
    %v3063 = vmul.f32 %v3040, %v3059
    %v3064 = vmul.f32 %v3060, 0.0
    %v3065 = vmul.f32 %v3041, %v3061
    %v3066 = vmul.f32 %v3062, 0.0
    %v3067 = vmul.f32 %v3042, %v3059
    %v3068 = vmul.f32 %v3043, %v3061
    %v3069 = vadd.f32 %v3006, %v3063
    %v3070 = vadd.f32 %v3007, %v3064
    %v3071 = vadd.f32 %v3008, %v3065
    %v3072 = vadd.f32 %v3009, %v3066
    %v3073 = vadd.f32 %v3010, %v3067
    %v3074 = vadd.f32 %v3011, %v3064
    %v3075 = vadd.f32 %v3012, %v3068
    %v3076 = vadd.f32 %v3013, %v3066
    %3077 = vrot.lane.b32.xlu0 %v223, 102
    %v3078 = vpop.permute.xlu0 %3077
    %3079 = vrot.lane.b32.xlu0 %v224, 102
    %v3080 = vpop.permute.xlu0 %3079
    %3081 = vrot.lane.b32.xlu0 %v225, 102
    %v3082 = vpop.permute.xlu0 %3081
    %3083 = vrot.lane.b32.xlu0 %v226, 102
    %v3084 = vpop.permute.xlu0 %3083
    %3085 = vrot.lane.b32.xlu0 %v227, 102
    %v3086 = vpop.permute.xlu0 %3085
    %3087 = vrot.lane.b32.xlu0 %v228, 102
    %v3088 = vpop.permute.xlu0 %3087
    %3089 = vrot.lane.b32.xlu0 %v229, 102
    %v3090 = vpop.permute.xlu0 %3089
    %3091 = vrot.lane.b32.xlu0 %v230, 102
    %v3092 = vpop.permute.xlu0 %3091
    %vm3093 = vcmask 834560
    %v3094 = vsel %vm3093, %v3078, %v3080
    %v3095 = vsel %vm3093, %v3082, %v3084
    %v3096 = vsel %vm3093, %v3086, %v3088
    %v3097 = vsel %vm3093, %v3090, %v3092
    %v3102 = vsel %vm2599, %v3094, 0.0
    %v3103 = vsel %vm2599, %v3095, 0.0
    %v3104 = vsel %vm2599, %v3096, 0.0
    %v3105 = vsel %vm2599, %v3097, 0.0
    %v3107 = vperm.slane %v1840, 0
    %v3108 = vperm.slane %v1840, 1
    %3112 = vset.pattern.permute.xlu0 0
    %3113 = vperm.xlu0 %3112, %v1814
    %v3114 = vpop.permute.xlu0 %3113
    %3117 = vset.pattern.permute.xlu0 0
    %3118 = vperm.xlu0 %3117, %v1815
    %v3119 = vpop.permute.xlu0 %3118
    %v3121 = vmul.f32 %v3107, %v3114
    %v3122 = vmul.f32 %v3108, %v3114
    %v3123 = vmul.f32 %v3107, %v3119
    %v3124 = vmul.f32 %v3108, %v3119
    %v3125 = vmul.f32 %v3102, %v3121
    %v3126 = vmul.f32 %v3122, 0.0
    %v3127 = vmul.f32 %v3103, %v3123
    %v3128 = vmul.f32 %v3124, 0.0
    %v3129 = vmul.f32 %v3104, %v3121
    %v3130 = vmul.f32 %v3105, %v3123
    %v3131 = vadd.f32 %v3069, %v3125
    %v3132 = vadd.f32 %v3070, %v3126
    %v3133 = vadd.f32 %v3071, %v3127
    %v3134 = vadd.f32 %v3072, %v3128
    %v3135 = vadd.f32 %v3073, %v3129
    %v3136 = vadd.f32 %v3074, %v3126
    %v3137 = vadd.f32 %v3075, %v3130
    %v3138 = vadd.f32 %v3076, %v3128
    %v3139 = vld [vmem:[%s15] sm:$0xff]
    %v3140 = vld [vmem:[%s15 + $0x8] sm:$0xff]
    %v3141 = vld [vmem:[%s15 + $0x10] sm:$0xff]
    %v3142 = vld [vmem:[%s15 + $0x18] sm:$0xff]
    %v3143 = vld [vmem:[%s15 + $0x20] sm:$0xff]
    %v3144 = vld [vmem:[%s15 + $0x28] sm:$0xff]
    %v3145 = vld [vmem:[%s15 + $0x30] sm:$0xff]
    %v3146 = vld [vmem:[%s15 + $0x38] sm:$0xff]
    %v3147 = vld [vmem:[%s15 + $0x40] sm:$0xff]
    %v3148 = vld [vmem:[%s15 + $0x48] sm:$0xff]
    %v3149 = vld [vmem:[%s15 + $0x50] sm:$0xff]
    %v3150 = vld [vmem:[%s15 + $0x58] sm:$0xff]
    %v3151 = vld [vmem:[%s15 + $0x60] sm:$0xff]
    %v3152 = vld [vmem:[%s15 + $0x68] sm:$0xff]
    %v3153 = vld [vmem:[%s15 + $0x70] sm:$0xff]
    %v3154 = vld [vmem:[%s15 + $0x78] sm:$0xff]
    %v3155 = vld [vmem:[%s15 + $0x80] sm:$0xff]
    %v3156 = vld [vmem:[%s15 + $0x88] sm:$0xff]
    %v3158 = vsel %vm102, %v3132, 0
    %v3161 = vsel %vm102, %v3134, 0
    %v3164 = vsel %vm102, %v3136, 0
    %v3167 = vsel %vm102, %v3138, 0
    %3169 = vmatpush.msra.mxu0 %v3154
    %3170 = vmatpush.msra.mxu0 %v3153
    %3171 = vmatpush.msra.mxu0 %v3152
    %3172 = vmatpush.msra.mxu0 %v3151
    %3173 = vmatpush.msra.mxu0 %v3150
    %3174 = vmatpush.msra.mxu0 %v3149
    %3175 = vmatpush.msra.mxu0 %v3148
    %3176 = vmatpush.msra.mxu0 %v3147
    %3177 = vmatpush.msra.mxu0 %v3146
    %3178 = vmatpush.msra.mxu0 %v3145
    %3179 = vmatpush.msra.mxu0 %v3144
    %3180 = vmatpush.msra.mxu0 %v3143
    %3181 = vmatpush.msra.mxu0 %v3142
    %3182 = vmatpush.msra.mxu0 %v3141
    %3183 = vmatpush.msra.mxu0 %v3140
    %3184 = vmatpush.msra.mxu0 %v3139
    %3185 = vmatmul.f32.gmra.mxu0 %v3131
    %v3186 = vpop.f32.mrf.mxu0
    %v3187 = vadd.f32 0.0, %v3186
    %3188 = vmatmul.f32.gmra.mxu0 %v3133
    %v3189 = vpop.f32.mrf.mxu0
    %v3190 = vadd.f32 0.0, %v3189
    %3191 = vmatmul.f32.gmra.mxu0 %v3135
    %v3192 = vpop.f32.mrf.mxu0
    %v3193 = vadd.f32 0.0, %v3192
    %3194 = vmatmul.f32.gmra.mxu0 %v3137
    %v3195 = vpop.f32.mrf.mxu0
    %v3196 = vadd.f32 0.0, %v3195
    %3197 = vdwg.mxu0
    %3198 = vmatpush.msra.mxu0 0.0
    %3199 = vmatpush.msra.mxu0 0.0
    %3200 = vmatpush.msra.mxu0 0.0
    %3201 = vmatpush.msra.mxu0 0.0
    %3202 = vmatpush.msra.mxu0 0.0
    %3203 = vmatpush.msra.mxu0 0.0
    %3204 = vmatpush.msra.mxu0 0.0
    %3205 = vmatpush.msra.mxu0 0.0
    %3206 = vmatpush.msra.mxu0 0.0
    %3207 = vmatpush.msra.mxu0 0.0
    %3208 = vmatpush.msra.mxu0 0.0
    %3209 = vmatpush.msra.mxu0 0.0
    %3210 = vmatpush.msra.mxu0 0.0
    %3211 = vmatpush.msra.mxu0 0.0
    %3212 = vmatpush.msra.mxu0 %v3156
    %3213 = vmatpush.msra.mxu0 %v3155
    %3214 = vmatmul.f32.gmra.mxu0 %v3158
    %v3215 = vpop.f32.mrf.mxu0
    %v3216 = vadd.f32 %v3187, %v3215
    %3217 = vmatmul.f32.gmra.mxu0 %v3161
    %v3218 = vpop.f32.mrf.mxu0
    %v3219 = vadd.f32 %v3190, %v3218
    %3220 = vmatmul.f32.gmra.mxu0 %v3164
    %v3221 = vpop.f32.mrf.mxu0
    %v3222 = vadd.f32 %v3193, %v3221
    %3223 = vmatmul.f32.gmra.mxu0 %v3167
    %v3224 = vpop.f32.mrf.mxu0
    %v3225 = vadd.f32 %v3196, %v3224
    %3226 = vdwg.mxu0
    %v3227 = vld [vmem:[%s13] sm:$0xff]
    %v3228 = vld [vmem:[%s13 + $0x8] sm:$0xff]
    %v3229 = vld [vmem:[%s14] sm:$0xff]
    %v3230 = vld [vmem:[%s14 + $0x8] sm:$0xff]
    %v3231 = vsel %vm102, %v3216, 0.0
    %3232 = vadd.xlane.f32.xlu0 %v3231
    %v3233 = vpop.xlane.xlu0 %3232
    %v3234 = vsel %vm102, %v3219, 0.0
    %3235 = vadd.xlane.f32.xlu0 %v3234
    %v3236 = vpop.xlane.xlu0 %3235
    %v3237 = vsel %vm102, %v3222, 0.0
    %3238 = vadd.xlane.f32.xlu0 %v3237
    %v3239 = vpop.xlane.xlu0 %3238
    %v3240 = vsel %vm102, %v3225, 0.0
    %3241 = vadd.xlane.f32.xlu0 %v3240
    %v3242 = vpop.xlane.xlu0 %3241
    %v3243 = vadd.f32 %v3233, %v3239
    %v3244 = vadd.f32 %v3236, %v3242
    %v3245 = vmul.f32 %v3216, %v3216
    %v3246 = vmul.f32 %v3219, %v3219
    %v3247 = vmul.f32 %v3222, %v3222
    %v3248 = vmul.f32 %v3225, %v3225
    %v3249 = vsel %vm102, %v3245, 0.0
    %3250 = vadd.xlane.f32.xlu0 %v3249
    %v3251 = vpop.xlane.xlu0 %3250
    %v3252 = vsel %vm102, %v3246, 0.0
    %3253 = vadd.xlane.f32.xlu0 %v3252
    %v3254 = vpop.xlane.xlu0 %3253
    %v3255 = vsel %vm102, %v3247, 0.0
    %3256 = vadd.xlane.f32.xlu0 %v3255
    %v3257 = vpop.xlane.xlu0 %3256
    %v3258 = vsel %vm102, %v3248, 0.0
    %3259 = vadd.xlane.f32.xlu0 %v3258
    %v3260 = vpop.xlane.xlu0 %3259
    %v3261 = vadd.f32 %v3251, %v3257
    %v3262 = vadd.f32 %v3254, %v3260
    %v3263 = vmul.f32 %v3243, 0.03125
    %v3264 = vmul.f32 %v3244, 0.03125
    %v3265 = vmul.f32 %v3261, 0.03125
    %v3266 = vmul.f32 %v3262, 0.03125
    %v3267 = vmul.f32 %v3263, %v3263
    %v3268 = vmul.f32 %v3264, %v3264
    %v3269 = vsub.f32 %v3265, %v3267
    %v3270 = vsub.f32 %v3266, %v3268
    %v3271 = vmax.f32 %v3269, 0.0
    %v3272 = vmax.f32 %v3270, 0.0
    %v3273 = vsub.f32 %v3216, %v3263
    %v3274 = vsub.f32 %v3219, %v3264
    %v3275 = vsub.f32 %v3222, %v3263
    %v3276 = vsub.f32 %v3225, %v3264
    %v3277 = vadd.f32 %v3271, 1e-05
    %v3278 = vadd.f32 %v3272, 1e-05
    %v3279 = vrsqrt.pop %v3277
    %v3280 = vmul.f32 %v3279, %v3277
    %v3281 = vmul.f32 %v3280, %v3279
    %v3282 = vmul.f32 0.5, %v3281
    %v3283 = vsub.f32 1.5, %v3282
    %v3284 = vmul.f32 %v3279, %v3283
    %vm3285 = vweird.f32 %v3277
    %vm3286 = vweird.f32 %v3279
    %vm3287 = vmor %vm3285, %vm3286
    %v3288 = vsel %vm3287, %v3279, %v3284
    %v3289 = vrsqrt.pop %v3278
    %v3290 = vmul.f32 %v3289, %v3278
    %v3291 = vmul.f32 %v3290, %v3289
    %v3292 = vmul.f32 0.5, %v3291
    %v3293 = vsub.f32 1.5, %v3292
    %v3294 = vmul.f32 %v3289, %v3293
    %vm3295 = vweird.f32 %v3278
    %vm3296 = vweird.f32 %v3289
    %vm3297 = vmor %vm3295, %vm3296
    %v3298 = vsel %vm3297, %v3289, %v3294
    %v3299 = vmul.f32 %v3273, %v3288
    %v3300 = vmul.f32 %v3274, %v3298
    %v3301 = vmul.f32 %v3275, %v3288
    %v3302 = vmul.f32 %v3276, %v3298
    %3304 = vset.pattern.permute.xlu0 0
    %3305 = vperm.xlu0 %3304, %v3227
    %v3306 = vpop.permute.xlu0 %3305
    %3309 = vset.pattern.permute.xlu0 0
    %3310 = vperm.xlu0 %3309, %v3228
    %v3311 = vpop.permute.xlu0 %3310
    %v3313 = vmul.f32 %v3299, %v3306
    %v3314 = vmul.f32 %v3300, %v3311
    %v3315 = vmul.f32 %v3301, %v3306
    %v3316 = vmul.f32 %v3302, %v3311
    %3318 = vset.pattern.permute.xlu0 0
    %3319 = vperm.xlu0 %3318, %v3229
    %v3320 = vpop.permute.xlu0 %3319
    %3323 = vset.pattern.permute.xlu0 0
    %3324 = vperm.xlu0 %3323, %v3230
    %v3325 = vpop.permute.xlu0 %3324
    %v3327 = vadd.f32 %v3313, %v3320
    %v3328 = vadd.f32 %v3314, %v3325
    %v3329 = vadd.f32 %v3315, %v3320
    %v3330 = vadd.f32 %v3316, %v3325
    %v3331 = vld [vmem:[%s16] sm:$0xff]
    %v3332 = vld [vmem:[%s16 + $0x8] sm:$0xff]
    %v3333 = vld [vmem:[%s16 + $0x10] sm:$0xff]
    %v3334 = vld [vmem:[%s16 + $0x18] sm:$0xff]
    %v3335 = vld [vmem:[%s16 + $0x20] sm:$0xff]
    %v3336 = vld [vmem:[%s16 + $0x28] sm:$0xff]
    %v3338 = vsel %vm102, %v3331, 0
    %v3341 = vsel %vm102, %v3332, 0
    %v3344 = vsel %vm102, %v3333, 0
    %v3347 = vsel %vm102, %v3334, 0
    %v3350 = vsel %vm102, %v3335, 0
    %v3353 = vsel %vm102, %v3336, 0
    %3355 = vmatpush.msra.mxu0 0.0
    %3356 = vmatpush.msra.mxu0 0.0
    %3357 = vmatpush.msra.mxu0 0.0
    %3358 = vmatpush.msra.mxu0 0.0
    %3359 = vmatpush.msra.mxu0 0.0
    %3360 = vmatpush.msra.mxu0 0.0
    %3361 = vmatpush.msra.mxu0 0.0
    %3362 = vmatpush.msra.mxu0 0.0
    %3363 = vmatpush.msra.mxu0 0.0
    %3364 = vmatpush.msra.mxu0 0.0
    %3365 = vmatpush.msra.mxu0 0.0
    %3366 = vmatpush.msra.mxu0 0.0
    %3367 = vmatpush.msra.mxu0 0.0
    %3368 = vmatpush.msra.mxu0 0.0
    %3369 = vmatpush.msra.mxu0 %v1763
    %3370 = vmatpush.msra.mxu0 %v1762
    %3371 = vmatmul.f32.gmra.mxu0 %v3338
    %v3372 = vpop.f32.mrf.mxu0
    %v3373 = vadd.f32 0.0, %v3372
    %3374 = vmatmul.f32.gmra.mxu0 %v3341
    %v3375 = vpop.f32.mrf.mxu0
    %v3376 = vadd.f32 0.0, %v3375
    %3377 = vmatmul.f32.gmra.mxu0 %v3344
    %v3378 = vpop.f32.mrf.mxu0
    %v3379 = vadd.f32 0.0, %v3378
    %3380 = vmatmul.f32.gmra.mxu0 %v3347
    %v3381 = vpop.f32.mrf.mxu0
    %v3382 = vadd.f32 0.0, %v3381
    %3383 = vmatmul.f32.gmra.mxu0 %v3350
    %v3384 = vpop.f32.mrf.mxu0
    %v3385 = vadd.f32 0.0, %v3384
    %3386 = vmatmul.f32.gmra.mxu0 %v3353
    %v3387 = vpop.f32.mrf.mxu0
    %v3388 = vadd.f32 0.0, %v3387
    %3389 = vdwg.mxu0
    %3390 = vmatpush.msra.mxu0 0.0
    %3391 = vmatpush.msra.mxu0 0.0
    %3392 = vmatpush.msra.mxu0 0.0
    %3393 = vmatpush.msra.mxu0 0.0
    %3394 = vmatpush.msra.mxu0 0.0
    %3395 = vmatpush.msra.mxu0 0.0
    %3396 = vmatpush.msra.mxu0 0.0
    %3397 = vmatpush.msra.mxu0 0.0
    %3398 = vmatpush.msra.mxu0 0.0
    %3399 = vmatpush.msra.mxu0 0.0
    %3400 = vmatpush.msra.mxu0 0.0
    %3401 = vmatpush.msra.mxu0 0.0
    %3402 = vmatpush.msra.mxu0 0.0
    %3403 = vmatpush.msra.mxu0 0.0
    %3404 = vmatpush.msra.mxu0 %v1765
    %3405 = vmatpush.msra.mxu0 %v1764
    %3406 = vmatmul.f32.gmra.mxu0 %v3338
    %v3407 = vpop.f32.mrf.mxu0
    %v3408 = vadd.f32 0.0, %v3407
    %3409 = vmatmul.f32.gmra.mxu0 %v3341
    %v3410 = vpop.f32.mrf.mxu0
    %v3411 = vadd.f32 0.0, %v3410
    %3412 = vmatmul.f32.gmra.mxu0 %v3344
    %v3413 = vpop.f32.mrf.mxu0
    %v3414 = vadd.f32 0.0, %v3413
    %3415 = vmatmul.f32.gmra.mxu0 %v3347
    %v3416 = vpop.f32.mrf.mxu0
    %v3417 = vadd.f32 0.0, %v3416
    %3418 = vmatmul.f32.gmra.mxu0 %v3350
    %v3419 = vpop.f32.mrf.mxu0
    %v3420 = vadd.f32 0.0, %v3419
    %3421 = vmatmul.f32.gmra.mxu0 %v3353
    %v3422 = vpop.f32.mrf.mxu0
    %v3423 = vadd.f32 0.0, %v3422
    %3424 = vdwg.mxu0
    %v3425 = vld [vmem:[%s17] sm:$0xff]
    %v3426 = vld [vmem:[%s17 + $0x8] sm:$0xff]
    %v3427 = vld [vmem:[%s17 + $0x10] sm:$0xff]
    %v3428 = vld [vmem:[%s17 + $0x18] sm:$0xff]
    %v3429 = vld [vmem:[%s17 + $0x20] sm:$0xff]
    %v3430 = vld [vmem:[%s17 + $0x28] sm:$0xff]
    %v3431 = vld [vmem:[%s18] sm:$0xff]
    %v3432 = vld [vmem:[%s18 + $0x8] sm:$0xff]
    %v3433 = vld [vmem:[%s18 + $0x10] sm:$0xff]
    %v3434 = vld [vmem:[%s18 + $0x18] sm:$0xff]
    %v3435 = vld [vmem:[%s18 + $0x20] sm:$0xff]
    %v3436 = vld [vmem:[%s18 + $0x28] sm:$0xff]
    %v3437 = vsel %vm1665, %v3373, 0.0
    %3438 = vadd.xlane.f32.xlu0 %v3437
    %v3439 = vpop.xlane.xlu0 %3438
    %v3440 = vsel %vm1665, %v3376, 0.0
    %3441 = vadd.xlane.f32.xlu0 %v3440
    %v3442 = vpop.xlane.xlu0 %3441
    %v3443 = vsel %vm1665, %v3379, 0.0
    %3444 = vadd.xlane.f32.xlu0 %v3443
    %v3445 = vpop.xlane.xlu0 %3444
    %v3446 = vsel %vm1665, %v3382, 0.0
    %3447 = vadd.xlane.f32.xlu0 %v3446
    %v3448 = vpop.xlane.xlu0 %3447
    %v3449 = vsel %vm1665, %v3385, 0.0
    %3450 = vadd.xlane.f32.xlu0 %v3449
    %v3451 = vpop.xlane.xlu0 %3450
    %v3452 = vsel %vm1665, %v3388, 0.0
    %3453 = vadd.xlane.f32.xlu0 %v3452
    %v3454 = vpop.xlane.xlu0 %3453
    %v3455 = vsel %vm1665, %v3408, 0.0
    %3456 = vadd.xlane.f32.xlu0 %v3455
    %v3457 = vpop.xlane.xlu0 %3456
    %v3458 = vsel %vm1665, %v3411, 0.0
    %3459 = vadd.xlane.f32.xlu0 %v3458
    %v3460 = vpop.xlane.xlu0 %3459
    %v3461 = vsel %vm1665, %v3414, 0.0
    %3462 = vadd.xlane.f32.xlu0 %v3461
    %v3463 = vpop.xlane.xlu0 %3462
    %v3464 = vsel %vm1665, %v3417, 0.0
    %3465 = vadd.xlane.f32.xlu0 %v3464
    %v3466 = vpop.xlane.xlu0 %3465
    %v3467 = vsel %vm1665, %v3420, 0.0
    %3468 = vadd.xlane.f32.xlu0 %v3467
    %v3469 = vpop.xlane.xlu0 %3468
    %v3470 = vsel %vm1665, %v3423, 0.0
    %3471 = vadd.xlane.f32.xlu0 %v3470
    %v3472 = vpop.xlane.xlu0 %3471
    %v3473 = vadd.f32 %v3439, %v3457
    %v3474 = vadd.f32 %v3442, %v3460
    %v3475 = vadd.f32 %v3445, %v3463
    %v3476 = vadd.f32 %v3448, %v3466
    %v3477 = vadd.f32 %v3451, %v3469
    %v3478 = vadd.f32 %v3454, %v3472
    %v3479 = vmul.f32 %v3373, %v3373
    %v3480 = vmul.f32 %v3376, %v3376
    %v3481 = vmul.f32 %v3379, %v3379
    %v3482 = vmul.f32 %v3382, %v3382
    %v3483 = vmul.f32 %v3385, %v3385
    %v3484 = vmul.f32 %v3388, %v3388
    %v3485 = vmul.f32 %v3408, %v3408
    %v3486 = vmul.f32 %v3411, %v3411
    %v3487 = vmul.f32 %v3414, %v3414
    %v3488 = vmul.f32 %v3417, %v3417
    %v3489 = vmul.f32 %v3420, %v3420
    %v3490 = vmul.f32 %v3423, %v3423
    %v3491 = vsel %vm1665, %v3479, 0.0
    %3492 = vadd.xlane.f32.xlu0 %v3491
    %v3493 = vpop.xlane.xlu0 %3492
    %v3494 = vsel %vm1665, %v3480, 0.0
    %3495 = vadd.xlane.f32.xlu0 %v3494
    %v3496 = vpop.xlane.xlu0 %3495
    %v3497 = vsel %vm1665, %v3481, 0.0
    %3498 = vadd.xlane.f32.xlu0 %v3497
    %v3499 = vpop.xlane.xlu0 %3498
    %v3500 = vsel %vm1665, %v3482, 0.0
    %3501 = vadd.xlane.f32.xlu0 %v3500
    %v3502 = vpop.xlane.xlu0 %3501
    %v3503 = vsel %vm1665, %v3483, 0.0
    %3504 = vadd.xlane.f32.xlu0 %v3503
    %v3505 = vpop.xlane.xlu0 %3504
    %v3506 = vsel %vm1665, %v3484, 0.0
    %3507 = vadd.xlane.f32.xlu0 %v3506
    %v3508 = vpop.xlane.xlu0 %3507
    %v3509 = vsel %vm1665, %v3485, 0.0
    %3510 = vadd.xlane.f32.xlu0 %v3509
    %v3511 = vpop.xlane.xlu0 %3510
    %v3512 = vsel %vm1665, %v3486, 0.0
    %3513 = vadd.xlane.f32.xlu0 %v3512
    %v3514 = vpop.xlane.xlu0 %3513
    %v3515 = vsel %vm1665, %v3487, 0.0
    %3516 = vadd.xlane.f32.xlu0 %v3515
    %v3517 = vpop.xlane.xlu0 %3516
    %v3518 = vsel %vm1665, %v3488, 0.0
    %3519 = vadd.xlane.f32.xlu0 %v3518
    %v3520 = vpop.xlane.xlu0 %3519
    %v3521 = vsel %vm1665, %v3489, 0.0
    %3522 = vadd.xlane.f32.xlu0 %v3521
    %v3523 = vpop.xlane.xlu0 %3522
    %v3524 = vsel %vm1665, %v3490, 0.0
    %3525 = vadd.xlane.f32.xlu0 %v3524
    %v3526 = vpop.xlane.xlu0 %3525
    %v3527 = vadd.f32 %v3493, %v3511
    %v3528 = vadd.f32 %v3496, %v3514
    %v3529 = vadd.f32 %v3499, %v3517
    %v3530 = vadd.f32 %v3502, %v3520
    %v3531 = vadd.f32 %v3505, %v3523
    %v3532 = vadd.f32 %v3508, %v3526
    %v3533 = vmul.f32 %v3473, 0.013888889
    %v3534 = vmul.f32 %v3474, 0.013888889
    %v3535 = vmul.f32 %v3475, 0.013888889
    %v3536 = vmul.f32 %v3476, 0.013888889
    %v3537 = vmul.f32 %v3477, 0.013888889
    %v3538 = vmul.f32 %v3478, 0.013888889
    %v3539 = vmul.f32 %v3527, 0.013888889
    %v3540 = vmul.f32 %v3528, 0.013888889
    %v3541 = vmul.f32 %v3529, 0.013888889
    %v3542 = vmul.f32 %v3530, 0.013888889
    %v3543 = vmul.f32 %v3531, 0.013888889
    %v3544 = vmul.f32 %v3532, 0.013888889
    %v3545 = vmul.f32 %v3533, %v3533
    %v3546 = vmul.f32 %v3534, %v3534
    %v3547 = vmul.f32 %v3535, %v3535
    %v3548 = vmul.f32 %v3536, %v3536
    %v3549 = vmul.f32 %v3537, %v3537
    %v3550 = vmul.f32 %v3538, %v3538
    %v3551 = vsub.f32 %v3539, %v3545
    %v3552 = vsub.f32 %v3540, %v3546
    %v3553 = vsub.f32 %v3541, %v3547
    %v3554 = vsub.f32 %v3542, %v3548
    %v3555 = vsub.f32 %v3543, %v3549
    %v3556 = vsub.f32 %v3544, %v3550
    %v3557 = vmax.f32 %v3551, 0.0
    %v3558 = vmax.f32 %v3552, 0.0
    %v3559 = vmax.f32 %v3553, 0.0
    %v3560 = vmax.f32 %v3554, 0.0
    %v3561 = vmax.f32 %v3555, 0.0
    %v3562 = vmax.f32 %v3556, 0.0
    %v3563 = vsub.f32 %v3373, %v3533
    %v3564 = vsub.f32 %v3376, %v3534
    %v3565 = vsub.f32 %v3379, %v3535
    %v3566 = vsub.f32 %v3382, %v3536
    %v3567 = vsub.f32 %v3385, %v3537
    %v3568 = vsub.f32 %v3388, %v3538
    %v3569 = vsub.f32 %v3408, %v3533
    %v3570 = vsub.f32 %v3411, %v3534
    %v3571 = vsub.f32 %v3414, %v3535
    %v3572 = vsub.f32 %v3417, %v3536
    %v3573 = vsub.f32 %v3420, %v3537
    %v3574 = vsub.f32 %v3423, %v3538
    %v3575 = vadd.f32 %v3557, 1e-05
    %v3576 = vadd.f32 %v3558, 1e-05
    %v3577 = vadd.f32 %v3559, 1e-05
    %v3578 = vadd.f32 %v3560, 1e-05
    %v3579 = vadd.f32 %v3561, 1e-05
    %v3580 = vadd.f32 %v3562, 1e-05
    %v3581 = vrsqrt.pop %v3575
    %v3582 = vmul.f32 %v3581, %v3575
    %v3583 = vmul.f32 %v3582, %v3581
    %v3584 = vmul.f32 0.5, %v3583
    %v3585 = vsub.f32 1.5, %v3584
    %v3586 = vmul.f32 %v3581, %v3585
    %vm3587 = vweird.f32 %v3575
    %vm3588 = vweird.f32 %v3581
    %vm3589 = vmor %vm3587, %vm3588
    %v3590 = vsel %vm3589, %v3581, %v3586
    %v3591 = vrsqrt.pop %v3576
    %v3592 = vmul.f32 %v3591, %v3576
    %v3593 = vmul.f32 %v3592, %v3591
    %v3594 = vmul.f32 0.5, %v3593
    %v3595 = vsub.f32 1.5, %v3594
    %v3596 = vmul.f32 %v3591, %v3595
    %vm3597 = vweird.f32 %v3576
    %vm3598 = vweird.f32 %v3591
    %vm3599 = vmor %vm3597, %vm3598
    %v3600 = vsel %vm3599, %v3591, %v3596
    %v3601 = vrsqrt.pop %v3577
    %v3602 = vmul.f32 %v3601, %v3577
    %v3603 = vmul.f32 %v3602, %v3601
    %v3604 = vmul.f32 0.5, %v3603
    %v3605 = vsub.f32 1.5, %v3604
    %v3606 = vmul.f32 %v3601, %v3605
    %vm3607 = vweird.f32 %v3577
    %vm3608 = vweird.f32 %v3601
    %vm3609 = vmor %vm3607, %vm3608
    %v3610 = vsel %vm3609, %v3601, %v3606
    %v3611 = vrsqrt.pop %v3578
    %v3612 = vmul.f32 %v3611, %v3578
    %v3613 = vmul.f32 %v3612, %v3611
    %v3614 = vmul.f32 0.5, %v3613
    %v3615 = vsub.f32 1.5, %v3614
    %v3616 = vmul.f32 %v3611, %v3615
    %vm3617 = vweird.f32 %v3578
    %vm3618 = vweird.f32 %v3611
    %vm3619 = vmor %vm3617, %vm3618
    %v3620 = vsel %vm3619, %v3611, %v3616
    %v3621 = vrsqrt.pop %v3579
    %v3622 = vmul.f32 %v3621, %v3579
    %v3623 = vmul.f32 %v3622, %v3621
    %v3624 = vmul.f32 0.5, %v3623
    %v3625 = vsub.f32 1.5, %v3624
    %v3626 = vmul.f32 %v3621, %v3625
    %vm3627 = vweird.f32 %v3579
    %vm3628 = vweird.f32 %v3621
    %vm3629 = vmor %vm3627, %vm3628
    %v3630 = vsel %vm3629, %v3621, %v3626
    %v3631 = vrsqrt.pop %v3580
    %v3632 = vmul.f32 %v3631, %v3580
    %v3633 = vmul.f32 %v3632, %v3631
    %v3634 = vmul.f32 0.5, %v3633
    %v3635 = vsub.f32 1.5, %v3634
    %v3636 = vmul.f32 %v3631, %v3635
    %vm3637 = vweird.f32 %v3580
    %vm3638 = vweird.f32 %v3631
    %vm3639 = vmor %vm3637, %vm3638
    %v3640 = vsel %vm3639, %v3631, %v3636
    %v3641 = vmul.f32 %v3563, %v3590
    %v3642 = vmul.f32 %v3564, %v3600
    %v3643 = vmul.f32 %v3565, %v3610
    %v3644 = vmul.f32 %v3566, %v3620
    %v3645 = vmul.f32 %v3567, %v3630
    %v3646 = vmul.f32 %v3568, %v3640
    %v3647 = vmul.f32 %v3569, %v3590
    %v3648 = vmul.f32 %v3570, %v3600
    %v3649 = vmul.f32 %v3571, %v3610
    %v3650 = vmul.f32 %v3572, %v3620
    %v3651 = vmul.f32 %v3573, %v3630
    %v3652 = vmul.f32 %v3574, %v3640
    %3654 = vset.pattern.permute.xlu0 0
    %3655 = vperm.xlu0 %3654, %v3425
    %v3656 = vpop.permute.xlu0 %3655
    %3659 = vset.pattern.permute.xlu0 0
    %3660 = vperm.xlu0 %3659, %v3426
    %v3661 = vpop.permute.xlu0 %3660
    %3664 = vset.pattern.permute.xlu0 0
    %3665 = vperm.xlu0 %3664, %v3427
    %v3666 = vpop.permute.xlu0 %3665
    %3669 = vset.pattern.permute.xlu0 0
    %3670 = vperm.xlu0 %3669, %v3428
    %v3671 = vpop.permute.xlu0 %3670
    %3674 = vset.pattern.permute.xlu0 0
    %3675 = vperm.xlu0 %3674, %v3429
    %v3676 = vpop.permute.xlu0 %3675
    %3679 = vset.pattern.permute.xlu0 0
    %3680 = vperm.xlu0 %3679, %v3430
    %v3681 = vpop.permute.xlu0 %3680
    %v3683 = vmul.f32 %v3641, %v3656
    %v3684 = vmul.f32 %v3642, %v3661
    %v3685 = vmul.f32 %v3643, %v3666
    %v3686 = vmul.f32 %v3644, %v3671
    %v3687 = vmul.f32 %v3645, %v3676
    %v3688 = vmul.f32 %v3646, %v3681
    %v3689 = vmul.f32 %v3647, %v3656
    %v3690 = vmul.f32 %v3648, %v3661
    %v3691 = vmul.f32 %v3649, %v3666
    %v3692 = vmul.f32 %v3650, %v3671
    %v3693 = vmul.f32 %v3651, %v3676
    %v3694 = vmul.f32 %v3652, %v3681
    %3696 = vset.pattern.permute.xlu0 0
    %3697 = vperm.xlu0 %3696, %v3431
    %v3698 = vpop.permute.xlu0 %3697
    %3701 = vset.pattern.permute.xlu0 0
    %3702 = vperm.xlu0 %3701, %v3432
    %v3703 = vpop.permute.xlu0 %3702
    %3706 = vset.pattern.permute.xlu0 0
    %3707 = vperm.xlu0 %3706, %v3433
    %v3708 = vpop.permute.xlu0 %3707
    %3711 = vset.pattern.permute.xlu0 0
    %3712 = vperm.xlu0 %3711, %v3434
    %v3713 = vpop.permute.xlu0 %3712
    %3716 = vset.pattern.permute.xlu0 0
    %3717 = vperm.xlu0 %3716, %v3435
    %v3718 = vpop.permute.xlu0 %3717
    %3721 = vset.pattern.permute.xlu0 0
    %3722 = vperm.xlu0 %3721, %v3436
    %v3723 = vpop.permute.xlu0 %3722
    %v3725 = vadd.f32 %v3683, %v3698
    %v3726 = vadd.f32 %v3684, %v3703
    %v3727 = vadd.f32 %v3685, %v3708
    %v3728 = vadd.f32 %v3686, %v3713
    %v3729 = vadd.f32 %v3687, %v3718
    %v3730 = vadd.f32 %v3688, %v3723
    %v3731 = vadd.f32 %v3689, %v3698
    %v3732 = vadd.f32 %v3690, %v3703
    %v3733 = vadd.f32 %v3691, %v3708
    %v3734 = vadd.f32 %v3692, %v3713
    %v3735 = vadd.f32 %v3693, %v3718
    %v3736 = vadd.f32 %v3694, %v3723
    %v3737 = vld [vmem:[%s19] sm:$0xff]
    %v3738 = vld [vmem:[%s19 + $0x8] sm:$0xff]
    %v3739 = vld [vmem:[%s19 + $0x10] sm:$0xff]
    %v3740 = vld [vmem:[%s19 + $0x18] sm:$0xff]
    %v3741 = vld [vmem:[%s19 + $0x20] sm:$0xff]
    %v3742 = vld [vmem:[%s19 + $0x28] sm:$0xff]
    %v3744 = vsel %vm102, %v3737, 0
    %v3747 = vsel %vm102, %v3738, 0
    %v3750 = vsel %vm102, %v3739, 0
    %v3753 = vsel %vm102, %v3740, 0
    %v3756 = vsel %vm102, %v3741, 0
    %v3759 = vsel %vm102, %v3742, 0
    %3761 = vmatpush.msra.mxu0 0.0
    %3762 = vmatpush.msra.mxu0 0.0
    %3763 = vmatpush.msra.mxu0 0.0
    %3764 = vmatpush.msra.mxu0 0.0
    %3765 = vmatpush.msra.mxu0 0.0
    %3766 = vmatpush.msra.mxu0 0.0
    %3767 = vmatpush.msra.mxu0 0.0
    %3768 = vmatpush.msra.mxu0 0.0
    %3769 = vmatpush.msra.mxu0 0.0
    %3770 = vmatpush.msra.mxu0 0.0
    %3771 = vmatpush.msra.mxu0 0.0
    %3772 = vmatpush.msra.mxu0 0.0
    %3773 = vmatpush.msra.mxu0 0.0
    %3774 = vmatpush.msra.mxu0 0.0
    %3775 = vmatpush.msra.mxu0 %v3328
    %3776 = vmatpush.msra.mxu0 %v3327
    %3777 = vmatmul.f32.gmra.mxu0 %v3744
    %v3778 = vpop.f32.mrf.mxu0
    %v3779 = vadd.f32 0.0, %v3778
    %3780 = vmatmul.f32.gmra.mxu0 %v3747
    %v3781 = vpop.f32.mrf.mxu0
    %v3782 = vadd.f32 0.0, %v3781
    %3783 = vmatmul.f32.gmra.mxu0 %v3750
    %v3784 = vpop.f32.mrf.mxu0
    %v3785 = vadd.f32 0.0, %v3784
    %3786 = vmatmul.f32.gmra.mxu0 %v3753
    %v3787 = vpop.f32.mrf.mxu0
    %v3788 = vadd.f32 0.0, %v3787
    %3789 = vmatmul.f32.gmra.mxu0 %v3756
    %v3790 = vpop.f32.mrf.mxu0
    %v3791 = vadd.f32 0.0, %v3790
    %3792 = vmatmul.f32.gmra.mxu0 %v3759
    %v3793 = vpop.f32.mrf.mxu0
    %v3794 = vadd.f32 0.0, %v3793
    %3795 = vdwg.mxu0
    %3796 = vmatpush.msra.mxu0 0.0
    %3797 = vmatpush.msra.mxu0 0.0
    %3798 = vmatpush.msra.mxu0 0.0
    %3799 = vmatpush.msra.mxu0 0.0
    %3800 = vmatpush.msra.mxu0 0.0
    %3801 = vmatpush.msra.mxu0 0.0
    %3802 = vmatpush.msra.mxu0 0.0
    %3803 = vmatpush.msra.mxu0 0.0
    %3804 = vmatpush.msra.mxu0 0.0
    %3805 = vmatpush.msra.mxu0 0.0
    %3806 = vmatpush.msra.mxu0 0.0
    %3807 = vmatpush.msra.mxu0 0.0
    %3808 = vmatpush.msra.mxu0 0.0
    %3809 = vmatpush.msra.mxu0 0.0
    %3810 = vmatpush.msra.mxu0 %v3330
    %3811 = vmatpush.msra.mxu0 %v3329
    %3812 = vmatmul.f32.gmra.mxu0 %v3744
    %v3813 = vpop.f32.mrf.mxu0
    %v3814 = vadd.f32 0.0, %v3813
    %3815 = vmatmul.f32.gmra.mxu0 %v3747
    %v3816 = vpop.f32.mrf.mxu0
    %v3817 = vadd.f32 0.0, %v3816
    %3818 = vmatmul.f32.gmra.mxu0 %v3750
    %v3819 = vpop.f32.mrf.mxu0
    %v3820 = vadd.f32 0.0, %v3819
    %3821 = vmatmul.f32.gmra.mxu0 %v3753
    %v3822 = vpop.f32.mrf.mxu0
    %v3823 = vadd.f32 0.0, %v3822
    %3824 = vmatmul.f32.gmra.mxu0 %v3756
    %v3825 = vpop.f32.mrf.mxu0
    %v3826 = vadd.f32 0.0, %v3825
    %3827 = vmatmul.f32.gmra.mxu0 %v3759
    %v3828 = vpop.f32.mrf.mxu0
    %v3829 = vadd.f32 0.0, %v3828
    %3830 = vdwg.mxu0
    %v3831 = vld [vmem:[%s20] sm:$0xff]
    %v3832 = vld [vmem:[%s20 + $0x8] sm:$0xff]
    %v3833 = vld [vmem:[%s20 + $0x10] sm:$0xff]
    %v3834 = vld [vmem:[%s20 + $0x18] sm:$0xff]
    %v3835 = vld [vmem:[%s20 + $0x20] sm:$0xff]
    %v3836 = vld [vmem:[%s20 + $0x28] sm:$0xff]
    %v3837 = vld [vmem:[%s21] sm:$0xff]
    %v3838 = vld [vmem:[%s21 + $0x8] sm:$0xff]
    %v3839 = vld [vmem:[%s21 + $0x10] sm:$0xff]
    %v3840 = vld [vmem:[%s21 + $0x18] sm:$0xff]
    %v3841 = vld [vmem:[%s21 + $0x20] sm:$0xff]
    %v3842 = vld [vmem:[%s21 + $0x28] sm:$0xff]
    %v3843 = vsel %vm102, %v3779, 0.0
    %3844 = vadd.xlane.f32.xlu0 %v3843
    %v3845 = vpop.xlane.xlu0 %3844
    %v3846 = vsel %vm102, %v3782, 0.0
    %3847 = vadd.xlane.f32.xlu0 %v3846
    %v3848 = vpop.xlane.xlu0 %3847
    %v3849 = vsel %vm102, %v3785, 0.0
    %3850 = vadd.xlane.f32.xlu0 %v3849
    %v3851 = vpop.xlane.xlu0 %3850
    %v3852 = vsel %vm102, %v3788, 0.0
    %3853 = vadd.xlane.f32.xlu0 %v3852
    %v3854 = vpop.xlane.xlu0 %3853
    %v3855 = vsel %vm102, %v3791, 0.0
    %3856 = vadd.xlane.f32.xlu0 %v3855
    %v3857 = vpop.xlane.xlu0 %3856
    %v3858 = vsel %vm102, %v3794, 0.0
    %3859 = vadd.xlane.f32.xlu0 %v3858
    %v3860 = vpop.xlane.xlu0 %3859
    %v3861 = vsel %vm102, %v3814, 0.0
    %3862 = vadd.xlane.f32.xlu0 %v3861
    %v3863 = vpop.xlane.xlu0 %3862
    %v3864 = vsel %vm102, %v3817, 0.0
    %3865 = vadd.xlane.f32.xlu0 %v3864
    %v3866 = vpop.xlane.xlu0 %3865
    %v3867 = vsel %vm102, %v3820, 0.0
    %3868 = vadd.xlane.f32.xlu0 %v3867
    %v3869 = vpop.xlane.xlu0 %3868
    %v3870 = vsel %vm102, %v3823, 0.0
    %3871 = vadd.xlane.f32.xlu0 %v3870
    %v3872 = vpop.xlane.xlu0 %3871
    %v3873 = vsel %vm102, %v3826, 0.0
    %3874 = vadd.xlane.f32.xlu0 %v3873
    %v3875 = vpop.xlane.xlu0 %3874
    %v3876 = vsel %vm102, %v3829, 0.0
    %3877 = vadd.xlane.f32.xlu0 %v3876
    %v3878 = vpop.xlane.xlu0 %3877
    %v3879 = vadd.f32 %v3845, %v3863
    %v3880 = vadd.f32 %v3848, %v3866
    %v3881 = vadd.f32 %v3851, %v3869
    %v3882 = vadd.f32 %v3854, %v3872
    %v3883 = vadd.f32 %v3857, %v3875
    %v3884 = vadd.f32 %v3860, %v3878
    %v3885 = vmul.f32 %v3779, %v3779
    %v3886 = vmul.f32 %v3782, %v3782
    %v3887 = vmul.f32 %v3785, %v3785
    %v3888 = vmul.f32 %v3788, %v3788
    %v3889 = vmul.f32 %v3791, %v3791
    %v3890 = vmul.f32 %v3794, %v3794
    %v3891 = vmul.f32 %v3814, %v3814
    %v3892 = vmul.f32 %v3817, %v3817
    %v3893 = vmul.f32 %v3820, %v3820
    %v3894 = vmul.f32 %v3823, %v3823
    %v3895 = vmul.f32 %v3826, %v3826
    %v3896 = vmul.f32 %v3829, %v3829
    %v3897 = vsel %vm102, %v3885, 0.0
    %3898 = vadd.xlane.f32.xlu0 %v3897
    %v3899 = vpop.xlane.xlu0 %3898
    %v3900 = vsel %vm102, %v3886, 0.0
    %3901 = vadd.xlane.f32.xlu0 %v3900
    %v3902 = vpop.xlane.xlu0 %3901
    %v3903 = vsel %vm102, %v3887, 0.0
    %3904 = vadd.xlane.f32.xlu0 %v3903
    %v3905 = vpop.xlane.xlu0 %3904
    %v3906 = vsel %vm102, %v3888, 0.0
    %3907 = vadd.xlane.f32.xlu0 %v3906
    %v3908 = vpop.xlane.xlu0 %3907
    %v3909 = vsel %vm102, %v3889, 0.0
    %3910 = vadd.xlane.f32.xlu0 %v3909
    %v3911 = vpop.xlane.xlu0 %3910
    %v3912 = vsel %vm102, %v3890, 0.0
    %3913 = vadd.xlane.f32.xlu0 %v3912
    %v3914 = vpop.xlane.xlu0 %3913
    %v3915 = vsel %vm102, %v3891, 0.0
    %3916 = vadd.xlane.f32.xlu0 %v3915
    %v3917 = vpop.xlane.xlu0 %3916
    %v3918 = vsel %vm102, %v3892, 0.0
    %3919 = vadd.xlane.f32.xlu0 %v3918
    %v3920 = vpop.xlane.xlu0 %3919
    %v3921 = vsel %vm102, %v3893, 0.0
    %3922 = vadd.xlane.f32.xlu0 %v3921
    %v3923 = vpop.xlane.xlu0 %3922
    %v3924 = vsel %vm102, %v3894, 0.0
    %3925 = vadd.xlane.f32.xlu0 %v3924
    %v3926 = vpop.xlane.xlu0 %3925
    %v3927 = vsel %vm102, %v3895, 0.0
    %3928 = vadd.xlane.f32.xlu0 %v3927
    %v3929 = vpop.xlane.xlu0 %3928
    %v3930 = vsel %vm102, %v3896, 0.0
    %3931 = vadd.xlane.f32.xlu0 %v3930
    %v3932 = vpop.xlane.xlu0 %3931
    %v3933 = vadd.f32 %v3899, %v3917
    %v3934 = vadd.f32 %v3902, %v3920
    %v3935 = vadd.f32 %v3905, %v3923
    %v3936 = vadd.f32 %v3908, %v3926
    %v3937 = vadd.f32 %v3911, %v3929
    %v3938 = vadd.f32 %v3914, %v3932
    %v3939 = vmul.f32 %v3879, 0.03125
    %v3940 = vmul.f32 %v3880, 0.03125
    %v3941 = vmul.f32 %v3881, 0.03125
    %v3942 = vmul.f32 %v3882, 0.03125
    %v3943 = vmul.f32 %v3883, 0.03125
    %v3944 = vmul.f32 %v3884, 0.03125
    %v3945 = vmul.f32 %v3933, 0.03125
    %v3946 = vmul.f32 %v3934, 0.03125
    %v3947 = vmul.f32 %v3935, 0.03125
    %v3948 = vmul.f32 %v3936, 0.03125
    %v3949 = vmul.f32 %v3937, 0.03125
    %v3950 = vmul.f32 %v3938, 0.03125
    %v3951 = vmul.f32 %v3939, %v3939
    %v3952 = vmul.f32 %v3940, %v3940
    %v3953 = vmul.f32 %v3941, %v3941
    %v3954 = vmul.f32 %v3942, %v3942
    %v3955 = vmul.f32 %v3943, %v3943
    %v3956 = vmul.f32 %v3944, %v3944
    %v3957 = vsub.f32 %v3945, %v3951
    %v3958 = vsub.f32 %v3946, %v3952
    %v3959 = vsub.f32 %v3947, %v3953
    %v3960 = vsub.f32 %v3948, %v3954
    %v3961 = vsub.f32 %v3949, %v3955
    %v3962 = vsub.f32 %v3950, %v3956
    %v3963 = vmax.f32 %v3957, 0.0
    %v3964 = vmax.f32 %v3958, 0.0
    %v3965 = vmax.f32 %v3959, 0.0
    %v3966 = vmax.f32 %v3960, 0.0
    %v3967 = vmax.f32 %v3961, 0.0
    %v3968 = vmax.f32 %v3962, 0.0
    %v3969 = vsub.f32 %v3779, %v3939
    %v3970 = vsub.f32 %v3782, %v3940
    %v3971 = vsub.f32 %v3785, %v3941
    %v3972 = vsub.f32 %v3788, %v3942
    %v3973 = vsub.f32 %v3791, %v3943
    %v3974 = vsub.f32 %v3794, %v3944
    %v3975 = vsub.f32 %v3814, %v3939
    %v3976 = vsub.f32 %v3817, %v3940
    %v3977 = vsub.f32 %v3820, %v3941
    %v3978 = vsub.f32 %v3823, %v3942
    %v3979 = vsub.f32 %v3826, %v3943
    %v3980 = vsub.f32 %v3829, %v3944
    %v3981 = vadd.f32 %v3963, 1e-05
    %v3982 = vadd.f32 %v3964, 1e-05
    %v3983 = vadd.f32 %v3965, 1e-05
    %v3984 = vadd.f32 %v3966, 1e-05
    %v3985 = vadd.f32 %v3967, 1e-05
    %v3986 = vadd.f32 %v3968, 1e-05
    %v3987 = vrsqrt.pop %v3981
    %v3988 = vmul.f32 %v3987, %v3981
    %v3989 = vmul.f32 %v3988, %v3987
    %v3990 = vmul.f32 0.5, %v3989
    %v3991 = vsub.f32 1.5, %v3990
    %v3992 = vmul.f32 %v3987, %v3991
    %vm3993 = vweird.f32 %v3981
    %vm3994 = vweird.f32 %v3987
    %vm3995 = vmor %vm3993, %vm3994
    %v3996 = vsel %vm3995, %v3987, %v3992
    %v3997 = vrsqrt.pop %v3982
    %v3998 = vmul.f32 %v3997, %v3982
    %v3999 = vmul.f32 %v3998, %v3997
    %v4000 = vmul.f32 0.5, %v3999
    %v4001 = vsub.f32 1.5, %v4000
    %v4002 = vmul.f32 %v3997, %v4001
    %vm4003 = vweird.f32 %v3982
    %vm4004 = vweird.f32 %v3997
    %vm4005 = vmor %vm4003, %vm4004
    %v4006 = vsel %vm4005, %v3997, %v4002
    %v4007 = vrsqrt.pop %v3983
    %v4008 = vmul.f32 %v4007, %v3983
    %v4009 = vmul.f32 %v4008, %v4007
    %v4010 = vmul.f32 0.5, %v4009
    %v4011 = vsub.f32 1.5, %v4010
    %v4012 = vmul.f32 %v4007, %v4011
    %vm4013 = vweird.f32 %v3983
    %vm4014 = vweird.f32 %v4007
    %vm4015 = vmor %vm4013, %vm4014
    %v4016 = vsel %vm4015, %v4007, %v4012
    %v4017 = vrsqrt.pop %v3984
    %v4018 = vmul.f32 %v4017, %v3984
    %v4019 = vmul.f32 %v4018, %v4017
    %v4020 = vmul.f32 0.5, %v4019
    %v4021 = vsub.f32 1.5, %v4020
    %v4022 = vmul.f32 %v4017, %v4021
    %vm4023 = vweird.f32 %v3984
    %vm4024 = vweird.f32 %v4017
    %vm4025 = vmor %vm4023, %vm4024
    %v4026 = vsel %vm4025, %v4017, %v4022
    %v4027 = vrsqrt.pop %v3985
    %v4028 = vmul.f32 %v4027, %v3985
    %v4029 = vmul.f32 %v4028, %v4027
    %v4030 = vmul.f32 0.5, %v4029
    %v4031 = vsub.f32 1.5, %v4030
    %v4032 = vmul.f32 %v4027, %v4031
    %vm4033 = vweird.f32 %v3985
    %vm4034 = vweird.f32 %v4027
    %vm4035 = vmor %vm4033, %vm4034
    %v4036 = vsel %vm4035, %v4027, %v4032
    %v4037 = vrsqrt.pop %v3986
    %v4038 = vmul.f32 %v4037, %v3986
    %v4039 = vmul.f32 %v4038, %v4037
    %v4040 = vmul.f32 0.5, %v4039
    %v4041 = vsub.f32 1.5, %v4040
    %v4042 = vmul.f32 %v4037, %v4041
    %vm4043 = vweird.f32 %v3986
    %vm4044 = vweird.f32 %v4037
    %vm4045 = vmor %vm4043, %vm4044
    %v4046 = vsel %vm4045, %v4037, %v4042
    %v4047 = vmul.f32 %v3969, %v3996
    %v4048 = vmul.f32 %v3970, %v4006
    %v4049 = vmul.f32 %v3971, %v4016
    %v4050 = vmul.f32 %v3972, %v4026
    %v4051 = vmul.f32 %v3973, %v4036
    %v4052 = vmul.f32 %v3974, %v4046
    %v4053 = vmul.f32 %v3975, %v3996
    %v4054 = vmul.f32 %v3976, %v4006
    %v4055 = vmul.f32 %v3977, %v4016
    %v4056 = vmul.f32 %v3978, %v4026
    %v4057 = vmul.f32 %v3979, %v4036
    %v4058 = vmul.f32 %v3980, %v4046
    %4060 = vset.pattern.permute.xlu0 0
    %4061 = vperm.xlu0 %4060, %v3831
    %v4062 = vpop.permute.xlu0 %4061
    %4065 = vset.pattern.permute.xlu0 0
    %4066 = vperm.xlu0 %4065, %v3832
    %v4067 = vpop.permute.xlu0 %4066
    %4070 = vset.pattern.permute.xlu0 0
    %4071 = vperm.xlu0 %4070, %v3833
    %v4072 = vpop.permute.xlu0 %4071
    %4075 = vset.pattern.permute.xlu0 0
    %4076 = vperm.xlu0 %4075, %v3834
    %v4077 = vpop.permute.xlu0 %4076
    %4080 = vset.pattern.permute.xlu0 0
    %4081 = vperm.xlu0 %4080, %v3835
    %v4082 = vpop.permute.xlu0 %4081
    %4085 = vset.pattern.permute.xlu0 0
    %4086 = vperm.xlu0 %4085, %v3836
    %v4087 = vpop.permute.xlu0 %4086
    %v4089 = vmul.f32 %v4047, %v4062
    %v4090 = vmul.f32 %v4048, %v4067
    %v4091 = vmul.f32 %v4049, %v4072
    %v4092 = vmul.f32 %v4050, %v4077
    %v4093 = vmul.f32 %v4051, %v4082
    %v4094 = vmul.f32 %v4052, %v4087
    %v4095 = vmul.f32 %v4053, %v4062
    %v4096 = vmul.f32 %v4054, %v4067
    %v4097 = vmul.f32 %v4055, %v4072
    %v4098 = vmul.f32 %v4056, %v4077
    %v4099 = vmul.f32 %v4057, %v4082
    %v4100 = vmul.f32 %v4058, %v4087
    %4102 = vset.pattern.permute.xlu0 0
    %4103 = vperm.xlu0 %4102, %v3837
    %v4104 = vpop.permute.xlu0 %4103
    %4107 = vset.pattern.permute.xlu0 0
    %4108 = vperm.xlu0 %4107, %v3838
    %v4109 = vpop.permute.xlu0 %4108
    %4112 = vset.pattern.permute.xlu0 0
    %4113 = vperm.xlu0 %4112, %v3839
    %v4114 = vpop.permute.xlu0 %4113
    %4117 = vset.pattern.permute.xlu0 0
    %4118 = vperm.xlu0 %4117, %v3840
    %v4119 = vpop.permute.xlu0 %4118
    %4122 = vset.pattern.permute.xlu0 0
    %4123 = vperm.xlu0 %4122, %v3841
    %v4124 = vpop.permute.xlu0 %4123
    %4127 = vset.pattern.permute.xlu0 0
    %4128 = vperm.xlu0 %4127, %v3842
    %v4129 = vpop.permute.xlu0 %4128
    %v4131 = vadd.f32 %v4089, %v4104
    %v4132 = vadd.f32 %v4090, %v4109
    %v4133 = vadd.f32 %v4091, %v4114
    %v4134 = vadd.f32 %v4092, %v4119
    %v4135 = vadd.f32 %v4093, %v4124
    %v4136 = vadd.f32 %v4094, %v4129
    %v4137 = vadd.f32 %v4095, %v4104
    %v4138 = vadd.f32 %v4096, %v4109
    %v4139 = vadd.f32 %v4097, %v4114
    %v4140 = vadd.f32 %v4098, %v4119
    %v4141 = vadd.f32 %v4099, %v4124
    %v4142 = vadd.f32 %v4100, %v4129
    %v4143 = vadd.f32 %v931, 3.0
    %v4144 = vadd.f32 %v932, 3.0
    %v4145 = vadd.f32 %v933, 3.0
    %v4146 = vadd.f32 %v934, 3.0
    %v4147 = vadd.f32 %v935, 3.0
    %v4148 = vadd.f32 %v936, 3.0
    %v4149 = vadd.f32 %v937, 3.0
    %v4150 = vadd.f32 %v938, 3.0
    %v4151 = vadd.f32 %v947, 3.0
    %v4152 = vadd.f32 %v948, 3.0
    %v4153 = vadd.f32 %v949, 3.0
    %v4154 = vadd.f32 %v950, 3.0
    %v4155 = vadd.f32 %v951, 3.0
    %v4156 = vadd.f32 %v952, 3.0
    %v4157 = vadd.f32 %v953, 3.0
    %v4158 = vadd.f32 %v954, 3.0
    %v4159 = vmax.f32 %v4143, 0.0
    %v4160 = vmax.f32 %v4144, 0.0
    %v4161 = vmax.f32 %v4145, 0.0
    %v4162 = vmax.f32 %v4146, 0.0
    %v4163 = vmax.f32 %v4147, 0.0
    %v4164 = vmax.f32 %v4148, 0.0
    %v4165 = vmax.f32 %v4149, 0.0
    %v4166 = vmax.f32 %v4150, 0.0
    %v4167 = vmax.f32 %v4151, 0.0
    %v4168 = vmax.f32 %v4152, 0.0
    %v4169 = vmax.f32 %v4153, 0.0
    %v4170 = vmax.f32 %v4154, 0.0
    %v4171 = vmax.f32 %v4155, 0.0
    %v4172 = vmax.f32 %v4156, 0.0
    %v4173 = vmax.f32 %v4157, 0.0
    %v4174 = vmax.f32 %v4158, 0.0
    %v4175 = vmin.f32 %v4159, 6.0
    %v4176 = vmin.f32 %v4160, 6.0
    %v4177 = vmin.f32 %v4161, 6.0
    %v4178 = vmin.f32 %v4162, 6.0
    %v4179 = vmin.f32 %v4163, 6.0
    %v4180 = vmin.f32 %v4164, 6.0
    %v4181 = vmin.f32 %v4165, 6.0
    %v4182 = vmin.f32 %v4166, 6.0
    %v4183 = vmin.f32 %v4167, 6.0
    %v4184 = vmin.f32 %v4168, 6.0
    %v4185 = vmin.f32 %v4169, 6.0
    %v4186 = vmin.f32 %v4170, 6.0
    %v4187 = vmin.f32 %v4171, 6.0
    %v4188 = vmin.f32 %v4172, 6.0
    %v4189 = vmin.f32 %v4173, 6.0
    %v4190 = vmin.f32 %v4174, 6.0
    %v4191 = vmul.f32 %v931, %v4175
    %v4192 = vmul.f32 %v932, %v4176
    %v4193 = vmul.f32 %v933, %v4177
    %v4194 = vmul.f32 %v934, %v4178
    %v4195 = vmul.f32 %v935, %v4179
    %v4196 = vmul.f32 %v936, %v4180
    %v4197 = vmul.f32 %v937, %v4181
    %v4198 = vmul.f32 %v938, %v4182
    %v4199 = vmul.f32 %v947, %v4183
    %v4200 = vmul.f32 %v948, %v4184
    %v4201 = vmul.f32 %v949, %v4185
    %v4202 = vmul.f32 %v950, %v4186
    %v4203 = vmul.f32 %v951, %v4187
    %v4204 = vmul.f32 %v952, %v4188
    %v4205 = vmul.f32 %v953, %v4189
    %v4206 = vmul.f32 %v954, %v4190
    %v4207 = vmul.f32 %v4191, 0.16666667
    %v4208 = vmul.f32 %v4192, 0.16666667
    %v4209 = vmul.f32 %v4193, 0.16666667
    %v4210 = vmul.f32 %v4194, 0.16666667
    %v4211 = vmul.f32 %v4195, 0.16666667
    %v4212 = vmul.f32 %v4196, 0.16666667
    %v4213 = vmul.f32 %v4197, 0.16666667
    %v4214 = vmul.f32 %v4198, 0.16666667
    %v4215 = vmul.f32 %v4199, 0.16666667
    %v4216 = vmul.f32 %v4200, 0.16666667
    %v4217 = vmul.f32 %v4201, 0.16666667
    %v4218 = vmul.f32 %v4202, 0.16666667
    %v4219 = vmul.f32 %v4203, 0.16666667
    %v4220 = vmul.f32 %v4204, 0.16666667
    %v4221 = vmul.f32 %v4205, 0.16666667
    %v4222 = vmul.f32 %v4206, 0.16666667
    %v4223 = vld [vmem:[%s22] sm:$0xff]
    %v4224 = vld [vmem:[%s22 + $0x8] sm:$0xff]
    %v4225 = vld [vmem:[%s22 + $0x10] sm:$0xff]
    %v4226 = vld [vmem:[%s22 + $0x18] sm:$0xff]
    %v4227 = vld [vmem:[%s22 + $0x20] sm:$0xff]
    %v4228 = vld [vmem:[%s22 + $0x28] sm:$0xff]
    %v4229 = vld [vmem:[%s22 + $0x30] sm:$0xff]
    %v4230 = vld [vmem:[%s22 + $0x38] sm:$0xff]
    %v4231 = vld [vmem:[%s22 + $0x40] sm:$0xff]
    %v4232 = vld [vmem:[%s22 + $0x48] sm:$0xff]
    %v4233 = vld [vmem:[%s22 + $0x50] sm:$0xff]
    %v4234 = vld [vmem:[%s22 + $0x58] sm:$0xff]
    %v4235 = vld [vmem:[%s22 + $0x60] sm:$0xff]
    %v4236 = vld [vmem:[%s22 + $0x68] sm:$0xff]
    %v4237 = vld [vmem:[%s22 + $0x70] sm:$0xff]
    %v4238 = vld [vmem:[%s22 + $0x78] sm:$0xff]
    %v4239 = vld [vmem:[%s22 + $0x80] sm:$0xff]
    %v4240 = vld [vmem:[%s22 + $0x88] sm:$0xff]
    %v4241 = vld [vmem:[%s22 + $0x90] sm:$0xff]
    %v4242 = vld [vmem:[%s22 + $0x98] sm:$0xff]
    %v4243 = vld [vmem:[%s22 + $0xa0] sm:$0xff]
    %v4244 = vld [vmem:[%s22 + $0xa8] sm:$0xff]
    %v4245 = vld [vmem:[%s22 + $0xb0] sm:$0xff]
    %v4246 = vld [vmem:[%s22 + $0xb8] sm:$0xff]
    %v4247 = vld [vmem:[%s22 + $0xc0] sm:$0xff]
    %v4248 = vld [vmem:[%s22 + $0xc8] sm:$0xff]
    %v4249 = vld [vmem:[%s22 + $0xd0] sm:$0xff]
    %v4250 = vld [vmem:[%s22 + $0xd8] sm:$0xff]
    %v4251 = vld [vmem:[%s22 + $0xe0] sm:$0xff]
    %v4252 = vld [vmem:[%s22 + $0xe8] sm:$0xff]
    %v4253 = vld [vmem:[%s22 + $0xf0] sm:$0xff]
    %v4254 = vld [vmem:[%s22 + $0xf8] sm:$0xff]
    %v4255 = vld [vmem:[%s22 + $0x100] sm:$0xff]
    %v4256 = vld [vmem:[%s22 + $0x108] sm:$0xff]
    %v4257 = vld [vmem:[%s22 + $0x110] sm:$0xff]
    %v4258 = vld [vmem:[%s22 + $0x118] sm:$0xff]
    %4275 = vrot.lane.b32.xlu0 %v4207, 13
    %v4276 = vpop.permute.xlu0 %4275
    %4277 = vrot.lane.b32.xlu0 %v4208, 13
    %v4278 = vpop.permute.xlu0 %4277
    %4279 = vrot.lane.b32.xlu0 %v4209, 13
    %v4280 = vpop.permute.xlu0 %4279
    %4281 = vrot.lane.b32.xlu0 %v4210, 13
    %v4282 = vpop.permute.xlu0 %4281
    %4283 = vrot.lane.b32.xlu0 %v4211, 13
    %v4284 = vpop.permute.xlu0 %4283
    %4285 = vrot.lane.b32.xlu0 %v4212, 13
    %v4286 = vpop.permute.xlu0 %4285
    %4287 = vrot.lane.b32.xlu0 %v4213, 13
    %v4288 = vpop.permute.xlu0 %4287
    %4289 = vrot.lane.b32.xlu0 %v4214, 13
    %v4290 = vpop.permute.xlu0 %4289
    %4291 = vrot.lane.b32.xlu0 %v4215, 13
    %v4292 = vpop.permute.xlu0 %4291
    %4293 = vrot.lane.b32.xlu0 %v4216, 13
    %v4294 = vpop.permute.xlu0 %4293
    %4295 = vrot.lane.b32.xlu0 %v4217, 13
    %v4296 = vpop.permute.xlu0 %4295
    %4297 = vrot.lane.b32.xlu0 %v4218, 13
    %v4298 = vpop.permute.xlu0 %4297
    %4299 = vrot.lane.b32.xlu0 %v4219, 13
    %v4300 = vpop.permute.xlu0 %4299
    %4301 = vrot.lane.b32.xlu0 %v4220, 13
    %v4302 = vpop.permute.xlu0 %4301
    %4303 = vrot.lane.b32.xlu0 %v4221, 13
    %v4304 = vpop.permute.xlu0 %4303
    %4305 = vrot.lane.b32.xlu0 %v4222, 13
    %v4306 = vpop.permute.xlu0 %4305
    %v4307 = vsel %vm1006, %v4276, %v4278
    %v4308 = vsel %vm1006, %v4280, %v4282
    %v4309 = vsel %vm1006, %v4284, %v4286
    %v4310 = vsel %vm1006, %v4288, %v4290
    %v4311 = vsel %vm1006, %v4292, %v4294
    %v4312 = vsel %vm1006, %v4296, %v4298
    %v4313 = vsel %vm1006, %v4300, %v4302
    %v4314 = vsel %vm1006, %v4304, %v4306
    %v4331 = vsel %vm1006, 0.0, %v4276
    %v4332 = vsel %vm1006, 0.0, %v4280
    %v4333 = vsel %vm1006, 0.0, %v4284
    %v4334 = vsel %vm1006, 0.0, %v4288
    %v4335 = vsel %vm1006, 0.0, %v4292
    %v4336 = vsel %vm1006, 0.0, %v4296
    %v4337 = vsel %vm1006, 0.0, %v4300
    %v4338 = vsel %vm1006, 0.0, %v4304
    %4340 = vset.pattern.permute.xlu0 0
    %4341 = vperm.xlu0 %4340, %v4223
    %v4342 = vpop.permute.xlu0 %4341
    %4345 = vset.pattern.permute.xlu0 0
    %4346 = vperm.xlu0 %4345, %v4224
    %v4347 = vpop.permute.xlu0 %4346
    %4350 = vset.pattern.permute.xlu0 0
    %4351 = vperm.xlu0 %4350, %v4225
    %v4352 = vpop.permute.xlu0 %4351
    %4355 = vset.pattern.permute.xlu0 0
    %4356 = vperm.xlu0 %4355, %v4226
    %v4357 = vpop.permute.xlu0 %4356
    %v4359 = vmul.f32 %v1024, %v4342
    %v4360 = vmul.f32 %v1025, %v4342
    %v4361 = vmul.f32 %v1024, %v4347
    %v4362 = vmul.f32 %v1025, %v4347
    %v4363 = vmul.f32 %v1024, %v4352
    %v4364 = vmul.f32 %v1025, %v4352
    %v4365 = vmul.f32 %v1024, %v4357
    %v4366 = vmul.f32 %v1025, %v4357
    %v4367 = vmul.f32 %v4331, %v4359
    %v4368 = vmul.f32 %v4307, %v4360
    %v4369 = vmul.f32 %v4332, %v4361
    %v4370 = vmul.f32 %v4308, %v4362
    %v4371 = vmul.f32 %v4333, %v4363
    %v4372 = vmul.f32 %v4309, %v4364
    %v4373 = vmul.f32 %v4334, %v4365
    %v4374 = vmul.f32 %v4310, %v4366
    %v4375 = vmul.f32 %v4335, %v4359
    %v4376 = vmul.f32 %v4311, %v4360
    %v4377 = vmul.f32 %v4336, %v4361
    %v4378 = vmul.f32 %v4312, %v4362
    %v4379 = vmul.f32 %v4337, %v4363
    %v4380 = vmul.f32 %v4313, %v4364
    %v4381 = vmul.f32 %v4338, %v4365
    %v4382 = vmul.f32 %v4314, %v4366
    %v4383 = vadd.f32 %v4367, 0.0
    %v4384 = vadd.f32 %v4368, 0.0
    %v4385 = vadd.f32 %v4369, 0.0
    %v4386 = vadd.f32 %v4370, 0.0
    %v4387 = vadd.f32 %v4371, 0.0
    %v4388 = vadd.f32 %v4372, 0.0
    %v4389 = vadd.f32 %v4373, 0.0
    %v4390 = vadd.f32 %v4374, 0.0
    %v4391 = vadd.f32 %v4375, 0.0
    %v4392 = vadd.f32 %v4376, 0.0
    %v4393 = vadd.f32 %v4377, 0.0
    %v4394 = vadd.f32 %v4378, 0.0
    %v4395 = vadd.f32 %v4379, 0.0
    %v4396 = vadd.f32 %v4380, 0.0
    %v4397 = vadd.f32 %v4381, 0.0
    %v4398 = vadd.f32 %v4382, 0.0
    %4399 = vrot.lane.b32.xlu0 %v4207, 12
    %v4400 = vpop.permute.xlu0 %4399
    %4401 = vrot.lane.b32.xlu0 %v4208, 12
    %v4402 = vpop.permute.xlu0 %4401
    %4403 = vrot.lane.b32.xlu0 %v4209, 12
    %v4404 = vpop.permute.xlu0 %4403
    %4405 = vrot.lane.b32.xlu0 %v4210, 12
    %v4406 = vpop.permute.xlu0 %4405
    %4407 = vrot.lane.b32.xlu0 %v4211, 12
    %v4408 = vpop.permute.xlu0 %4407
    %4409 = vrot.lane.b32.xlu0 %v4212, 12
    %v4410 = vpop.permute.xlu0 %4409
    %4411 = vrot.lane.b32.xlu0 %v4213, 12
    %v4412 = vpop.permute.xlu0 %4411
    %4413 = vrot.lane.b32.xlu0 %v4214, 12
    %v4414 = vpop.permute.xlu0 %4413
    %4415 = vrot.lane.b32.xlu0 %v4215, 12
    %v4416 = vpop.permute.xlu0 %4415
    %4417 = vrot.lane.b32.xlu0 %v4216, 12
    %v4418 = vpop.permute.xlu0 %4417
    %4419 = vrot.lane.b32.xlu0 %v4217, 12
    %v4420 = vpop.permute.xlu0 %4419
    %4421 = vrot.lane.b32.xlu0 %v4218, 12
    %v4422 = vpop.permute.xlu0 %4421
    %4423 = vrot.lane.b32.xlu0 %v4219, 12
    %v4424 = vpop.permute.xlu0 %4423
    %4425 = vrot.lane.b32.xlu0 %v4220, 12
    %v4426 = vpop.permute.xlu0 %4425
    %4427 = vrot.lane.b32.xlu0 %v4221, 12
    %v4428 = vpop.permute.xlu0 %4427
    %4429 = vrot.lane.b32.xlu0 %v4222, 12
    %v4430 = vpop.permute.xlu0 %4429
    %v4431 = vsel %vm1074, %v4400, %v4402
    %v4432 = vsel %vm1074, %v4404, %v4406
    %v4433 = vsel %vm1074, %v4408, %v4410
    %v4434 = vsel %vm1074, %v4412, %v4414
    %v4435 = vsel %vm1074, %v4416, %v4418
    %v4436 = vsel %vm1074, %v4420, %v4422
    %v4437 = vsel %vm1074, %v4424, %v4426
    %v4438 = vsel %vm1074, %v4428, %v4430
    %v4455 = vsel %vm1074, 0.0, %v4400
    %v4456 = vsel %vm1074, 0.0, %v4404
    %v4457 = vsel %vm1074, 0.0, %v4408
    %v4458 = vsel %vm1074, 0.0, %v4412
    %v4459 = vsel %vm1074, 0.0, %v4416
    %v4460 = vsel %vm1074, 0.0, %v4420
    %v4461 = vsel %vm1074, 0.0, %v4424
    %v4462 = vsel %vm1074, 0.0, %v4428
    %4464 = vset.pattern.permute.xlu0 0
    %4465 = vperm.xlu0 %4464, %v4227
    %v4466 = vpop.permute.xlu0 %4465
    %4469 = vset.pattern.permute.xlu0 0
    %4470 = vperm.xlu0 %4469, %v4228
    %v4471 = vpop.permute.xlu0 %4470
    %4474 = vset.pattern.permute.xlu0 0
    %4475 = vperm.xlu0 %4474, %v4229
    %v4476 = vpop.permute.xlu0 %4475
    %4479 = vset.pattern.permute.xlu0 0
    %4480 = vperm.xlu0 %4479, %v4230
    %v4481 = vpop.permute.xlu0 %4480
    %v4483 = vmul.f32 %v1092, %v4466
    %v4484 = vmul.f32 %v1093, %v4466
    %v4485 = vmul.f32 %v1092, %v4471
    %v4486 = vmul.f32 %v1093, %v4471
    %v4487 = vmul.f32 %v1092, %v4476
    %v4488 = vmul.f32 %v1093, %v4476
    %v4489 = vmul.f32 %v1092, %v4481
    %v4490 = vmul.f32 %v1093, %v4481
    %v4491 = vmul.f32 %v4455, %v4483
    %v4492 = vmul.f32 %v4431, %v4484
    %v4493 = vmul.f32 %v4456, %v4485
    %v4494 = vmul.f32 %v4432, %v4486
    %v4495 = vmul.f32 %v4457, %v4487
    %v4496 = vmul.f32 %v4433, %v4488
    %v4497 = vmul.f32 %v4458, %v4489
    %v4498 = vmul.f32 %v4434, %v4490
    %v4499 = vmul.f32 %v4459, %v4483
    %v4500 = vmul.f32 %v4435, %v4484
    %v4501 = vmul.f32 %v4460, %v4485
    %v4502 = vmul.f32 %v4436, %v4486
    %v4503 = vmul.f32 %v4461, %v4487
    %v4504 = vmul.f32 %v4437, %v4488
    %v4505 = vmul.f32 %v4462, %v4489
    %v4506 = vmul.f32 %v4438, %v4490
    %v4507 = vadd.f32 %v4383, %v4491
    %v4508 = vadd.f32 %v4384, %v4492
    %v4509 = vadd.f32 %v4385, %v4493
    %v4510 = vadd.f32 %v4386, %v4494
    %v4511 = vadd.f32 %v4387, %v4495
    %v4512 = vadd.f32 %v4388, %v4496
    %v4513 = vadd.f32 %v4389, %v4497
    %v4514 = vadd.f32 %v4390, %v4498
    %v4515 = vadd.f32 %v4391, %v4499
    %v4516 = vadd.f32 %v4392, %v4500
    %v4517 = vadd.f32 %v4393, %v4501
    %v4518 = vadd.f32 %v4394, %v4502
    %v4519 = vadd.f32 %v4395, %v4503
    %v4520 = vadd.f32 %v4396, %v4504
    %v4521 = vadd.f32 %v4397, %v4505
    %v4522 = vadd.f32 %v4398, %v4506
    %4523 = vrot.lane.b32.xlu0 %v4207, 11
    %v4524 = vpop.permute.xlu0 %4523
    %4525 = vrot.lane.b32.xlu0 %v4208, 11
    %v4526 = vpop.permute.xlu0 %4525
    %4527 = vrot.lane.b32.xlu0 %v4209, 11
    %v4528 = vpop.permute.xlu0 %4527
    %4529 = vrot.lane.b32.xlu0 %v4210, 11
    %v4530 = vpop.permute.xlu0 %4529
    %4531 = vrot.lane.b32.xlu0 %v4211, 11
    %v4532 = vpop.permute.xlu0 %4531
    %4533 = vrot.lane.b32.xlu0 %v4212, 11
    %v4534 = vpop.permute.xlu0 %4533
    %4535 = vrot.lane.b32.xlu0 %v4213, 11
    %v4536 = vpop.permute.xlu0 %4535
    %4537 = vrot.lane.b32.xlu0 %v4214, 11
    %v4538 = vpop.permute.xlu0 %4537
    %4539 = vrot.lane.b32.xlu0 %v4215, 11
    %v4540 = vpop.permute.xlu0 %4539
    %4541 = vrot.lane.b32.xlu0 %v4216, 11
    %v4542 = vpop.permute.xlu0 %4541
    %4543 = vrot.lane.b32.xlu0 %v4217, 11
    %v4544 = vpop.permute.xlu0 %4543
    %4545 = vrot.lane.b32.xlu0 %v4218, 11
    %v4546 = vpop.permute.xlu0 %4545
    %4547 = vrot.lane.b32.xlu0 %v4219, 11
    %v4548 = vpop.permute.xlu0 %4547
    %4549 = vrot.lane.b32.xlu0 %v4220, 11
    %v4550 = vpop.permute.xlu0 %4549
    %4551 = vrot.lane.b32.xlu0 %v4221, 11
    %v4552 = vpop.permute.xlu0 %4551
    %4553 = vrot.lane.b32.xlu0 %v4222, 11
    %v4554 = vpop.permute.xlu0 %4553
    %v4555 = vsel %vm1142, %v4524, %v4526
    %v4556 = vsel %vm1142, %v4528, %v4530
    %v4557 = vsel %vm1142, %v4532, %v4534
    %v4558 = vsel %vm1142, %v4536, %v4538
    %v4559 = vsel %vm1142, %v4540, %v4542
    %v4560 = vsel %vm1142, %v4544, %v4546
    %v4561 = vsel %vm1142, %v4548, %v4550
    %v4562 = vsel %vm1142, %v4552, %v4554
    %v4579 = vsel %vm1142, 0.0, %v4524
    %v4580 = vsel %vm1142, 0.0, %v4528
    %v4581 = vsel %vm1142, 0.0, %v4532
    %v4582 = vsel %vm1142, 0.0, %v4536
    %v4583 = vsel %vm1142, 0.0, %v4540
    %v4584 = vsel %vm1142, 0.0, %v4544
    %v4585 = vsel %vm1142, 0.0, %v4548
    %v4586 = vsel %vm1142, 0.0, %v4552
    %4588 = vset.pattern.permute.xlu0 0
    %4589 = vperm.xlu0 %4588, %v4231
    %v4590 = vpop.permute.xlu0 %4589
    %4593 = vset.pattern.permute.xlu0 0
    %4594 = vperm.xlu0 %4593, %v4232
    %v4595 = vpop.permute.xlu0 %4594
    %4598 = vset.pattern.permute.xlu0 0
    %4599 = vperm.xlu0 %4598, %v4233
    %v4600 = vpop.permute.xlu0 %4599
    %4603 = vset.pattern.permute.xlu0 0
    %4604 = vperm.xlu0 %4603, %v4234
    %v4605 = vpop.permute.xlu0 %4604
    %v4607 = vmul.f32 %v1160, %v4590
    %v4608 = vmul.f32 %v1161, %v4590
    %v4609 = vmul.f32 %v1160, %v4595
    %v4610 = vmul.f32 %v1161, %v4595
    %v4611 = vmul.f32 %v1160, %v4600
    %v4612 = vmul.f32 %v1161, %v4600
    %v4613 = vmul.f32 %v1160, %v4605
    %v4614 = vmul.f32 %v1161, %v4605
    %v4615 = vmul.f32 %v4579, %v4607
    %v4616 = vmul.f32 %v4555, %v4608
    %v4617 = vmul.f32 %v4580, %v4609
    %v4618 = vmul.f32 %v4556, %v4610
    %v4619 = vmul.f32 %v4581, %v4611
    %v4620 = vmul.f32 %v4557, %v4612
    %v4621 = vmul.f32 %v4582, %v4613
    %v4622 = vmul.f32 %v4558, %v4614
    %v4623 = vmul.f32 %v4583, %v4607
    %v4624 = vmul.f32 %v4559, %v4608
    %v4625 = vmul.f32 %v4584, %v4609
    %v4626 = vmul.f32 %v4560, %v4610
    %v4627 = vmul.f32 %v4585, %v4611
    %v4628 = vmul.f32 %v4561, %v4612
    %v4629 = vmul.f32 %v4586, %v4613
    %v4630 = vmul.f32 %v4562, %v4614
    %v4631 = vadd.f32 %v4507, %v4615
    %v4632 = vadd.f32 %v4508, %v4616
    %v4633 = vadd.f32 %v4509, %v4617
    %v4634 = vadd.f32 %v4510, %v4618
    %v4635 = vadd.f32 %v4511, %v4619
    %v4636 = vadd.f32 %v4512, %v4620
    %v4637 = vadd.f32 %v4513, %v4621
    %v4638 = vadd.f32 %v4514, %v4622
    %v4639 = vadd.f32 %v4515, %v4623
    %v4640 = vadd.f32 %v4516, %v4624
    %v4641 = vadd.f32 %v4517, %v4625
    %v4642 = vadd.f32 %v4518, %v4626
    %v4643 = vadd.f32 %v4519, %v4627
    %v4644 = vadd.f32 %v4520, %v4628
    %v4645 = vadd.f32 %v4521, %v4629
    %v4646 = vadd.f32 %v4522, %v4630
    %4647 = vrot.lane.b32.xlu0 %v4207, 1
    %v4648 = vpop.permute.xlu0 %4647
    %4649 = vrot.lane.b32.xlu0 %v4208, 1
    %v4650 = vpop.permute.xlu0 %4649
    %4651 = vrot.lane.b32.xlu0 %v4209, 1
    %v4652 = vpop.permute.xlu0 %4651
    %4653 = vrot.lane.b32.xlu0 %v4210, 1
    %v4654 = vpop.permute.xlu0 %4653
    %4655 = vrot.lane.b32.xlu0 %v4211, 1
    %v4656 = vpop.permute.xlu0 %4655
    %4657 = vrot.lane.b32.xlu0 %v4212, 1
    %v4658 = vpop.permute.xlu0 %4657
    %4659 = vrot.lane.b32.xlu0 %v4213, 1
    %v4660 = vpop.permute.xlu0 %4659
    %4661 = vrot.lane.b32.xlu0 %v4214, 1
    %v4662 = vpop.permute.xlu0 %4661
    %4663 = vrot.lane.b32.xlu0 %v4215, 1
    %v4664 = vpop.permute.xlu0 %4663
    %4665 = vrot.lane.b32.xlu0 %v4216, 1
    %v4666 = vpop.permute.xlu0 %4665
    %4667 = vrot.lane.b32.xlu0 %v4217, 1
    %v4668 = vpop.permute.xlu0 %4667
    %4669 = vrot.lane.b32.xlu0 %v4218, 1
    %v4670 = vpop.permute.xlu0 %4669
    %4671 = vrot.lane.b32.xlu0 %v4219, 1
    %v4672 = vpop.permute.xlu0 %4671
    %4673 = vrot.lane.b32.xlu0 %v4220, 1
    %v4674 = vpop.permute.xlu0 %4673
    %4675 = vrot.lane.b32.xlu0 %v4221, 1
    %v4676 = vpop.permute.xlu0 %4675
    %4677 = vrot.lane.b32.xlu0 %v4222, 1
    %v4678 = vpop.permute.xlu0 %4677
    %v4679 = vsel %vm1210, %v4648, %v4650
    %v4680 = vsel %vm1210, %v4652, %v4654
    %v4681 = vsel %vm1210, %v4656, %v4658
    %v4682 = vsel %vm1210, %v4660, %v4662
    %v4683 = vsel %vm1210, %v4664, %v4666
    %v4684 = vsel %vm1210, %v4668, %v4670
    %v4685 = vsel %vm1210, %v4672, %v4674
    %v4686 = vsel %vm1210, %v4676, %v4678
    %v4703 = vsel %vm1210, 0.0, %v4648
    %v4704 = vsel %vm1210, 0.0, %v4652
    %v4705 = vsel %vm1210, 0.0, %v4656
    %v4706 = vsel %vm1210, 0.0, %v4660
    %v4707 = vsel %vm1210, 0.0, %v4664
    %v4708 = vsel %vm1210, 0.0, %v4668
    %v4709 = vsel %vm1210, 0.0, %v4672
    %v4710 = vsel %vm1210, 0.0, %v4676
    %4712 = vset.pattern.permute.xlu0 0
    %4713 = vperm.xlu0 %4712, %v4235
    %v4714 = vpop.permute.xlu0 %4713
    %4717 = vset.pattern.permute.xlu0 0
    %4718 = vperm.xlu0 %4717, %v4236
    %v4719 = vpop.permute.xlu0 %4718
    %4722 = vset.pattern.permute.xlu0 0
    %4723 = vperm.xlu0 %4722, %v4237
    %v4724 = vpop.permute.xlu0 %4723
    %4727 = vset.pattern.permute.xlu0 0
    %4728 = vperm.xlu0 %4727, %v4238
    %v4729 = vpop.permute.xlu0 %4728
    %v4731 = vmul.f32 %v1228, %v4714
    %v4732 = vmul.f32 %v1229, %v4714
    %v4733 = vmul.f32 %v1228, %v4719
    %v4734 = vmul.f32 %v1229, %v4719
    %v4735 = vmul.f32 %v1228, %v4724
    %v4736 = vmul.f32 %v1229, %v4724
    %v4737 = vmul.f32 %v1228, %v4729
    %v4738 = vmul.f32 %v1229, %v4729
    %v4739 = vmul.f32 %v4703, %v4731
    %v4740 = vmul.f32 %v4679, %v4732
    %v4741 = vmul.f32 %v4704, %v4733
    %v4742 = vmul.f32 %v4680, %v4734
    %v4743 = vmul.f32 %v4705, %v4735
    %v4744 = vmul.f32 %v4681, %v4736
    %v4745 = vmul.f32 %v4706, %v4737
    %v4746 = vmul.f32 %v4682, %v4738
    %v4747 = vmul.f32 %v4707, %v4731
    %v4748 = vmul.f32 %v4683, %v4732
    %v4749 = vmul.f32 %v4708, %v4733
    %v4750 = vmul.f32 %v4684, %v4734
    %v4751 = vmul.f32 %v4709, %v4735
    %v4752 = vmul.f32 %v4685, %v4736
    %v4753 = vmul.f32 %v4710, %v4737
    %v4754 = vmul.f32 %v4686, %v4738
    %v4755 = vadd.f32 %v4631, %v4739
    %v4756 = vadd.f32 %v4632, %v4740
    %v4757 = vadd.f32 %v4633, %v4741
    %v4758 = vadd.f32 %v4634, %v4742
    %v4759 = vadd.f32 %v4635, %v4743
    %v4760 = vadd.f32 %v4636, %v4744
    %v4761 = vadd.f32 %v4637, %v4745
    %v4762 = vadd.f32 %v4638, %v4746
    %v4763 = vadd.f32 %v4639, %v4747
    %v4764 = vadd.f32 %v4640, %v4748
    %v4765 = vadd.f32 %v4641, %v4749
    %v4766 = vadd.f32 %v4642, %v4750
    %v4767 = vadd.f32 %v4643, %v4751
    %v4768 = vadd.f32 %v4644, %v4752
    %v4769 = vadd.f32 %v4645, %v4753
    %v4770 = vadd.f32 %v4646, %v4754
    %4772 = vset.pattern.permute.xlu0 0
    %4773 = vperm.xlu0 %4772, %v4239
    %v4774 = vpop.permute.xlu0 %4773
    %4777 = vset.pattern.permute.xlu0 0
    %4778 = vperm.xlu0 %4777, %v4240
    %v4779 = vpop.permute.xlu0 %4778
    %4782 = vset.pattern.permute.xlu0 0
    %4783 = vperm.xlu0 %4782, %v4241
    %v4784 = vpop.permute.xlu0 %4783
    %4787 = vset.pattern.permute.xlu0 0
    %4788 = vperm.xlu0 %4787, %v4242
    %v4789 = vpop.permute.xlu0 %4788
    %v4791 = vmul.f32 %v1263, %v4774
    %v4792 = vmul.f32 %v1264, %v4774
    %v4793 = vmul.f32 %v1263, %v4779
    %v4794 = vmul.f32 %v1264, %v4779
    %v4795 = vmul.f32 %v1263, %v4784
    %v4796 = vmul.f32 %v1264, %v4784
    %v4797 = vmul.f32 %v1263, %v4789
    %v4798 = vmul.f32 %v1264, %v4789
    %v4799 = vmul.f32 %v4207, %v4791
    %v4800 = vmul.f32 %v4208, %v4792
    %v4801 = vmul.f32 %v4209, %v4793
    %v4802 = vmul.f32 %v4210, %v4794
    %v4803 = vmul.f32 %v4211, %v4795
    %v4804 = vmul.f32 %v4212, %v4796
    %v4805 = vmul.f32 %v4213, %v4797
    %v4806 = vmul.f32 %v4214, %v4798
    %v4807 = vmul.f32 %v4215, %v4791
    %v4808 = vmul.f32 %v4216, %v4792
    %v4809 = vmul.f32 %v4217, %v4793
    %v4810 = vmul.f32 %v4218, %v4794
    %v4811 = vmul.f32 %v4219, %v4795
    %v4812 = vmul.f32 %v4220, %v4796
    %v4813 = vmul.f32 %v4221, %v4797
    %v4814 = vmul.f32 %v4222, %v4798
    %v4815 = vadd.f32 %v4755, %v4799
    %v4816 = vadd.f32 %v4756, %v4800
    %v4817 = vadd.f32 %v4757, %v4801
    %v4818 = vadd.f32 %v4758, %v4802
    %v4819 = vadd.f32 %v4759, %v4803
    %v4820 = vadd.f32 %v4760, %v4804
    %v4821 = vadd.f32 %v4761, %v4805
    %v4822 = vadd.f32 %v4762, %v4806
    %v4823 = vadd.f32 %v4763, %v4807
    %v4824 = vadd.f32 %v4764, %v4808
    %v4825 = vadd.f32 %v4765, %v4809
    %v4826 = vadd.f32 %v4766, %v4810
    %v4827 = vadd.f32 %v4767, %v4811
    %v4828 = vadd.f32 %v4768, %v4812
    %v4829 = vadd.f32 %v4769, %v4813
    %v4830 = vadd.f32 %v4770, %v4814
    %4831 = vrot.lane.b32.xlu0 %v4207, 127
    %v4832 = vpop.permute.xlu0 %4831
    %4833 = vrot.lane.b32.xlu0 %v4208, 127
    %v4834 = vpop.permute.xlu0 %4833
    %4835 = vrot.lane.b32.xlu0 %v4209, 127
    %v4836 = vpop.permute.xlu0 %4835
    %4837 = vrot.lane.b32.xlu0 %v4210, 127
    %v4838 = vpop.permute.xlu0 %4837
    %4839 = vrot.lane.b32.xlu0 %v4211, 127
    %v4840 = vpop.permute.xlu0 %4839
    %4841 = vrot.lane.b32.xlu0 %v4212, 127
    %v4842 = vpop.permute.xlu0 %4841
    %4843 = vrot.lane.b32.xlu0 %v4213, 127
    %v4844 = vpop.permute.xlu0 %4843
    %4845 = vrot.lane.b32.xlu0 %v4214, 127
    %v4846 = vpop.permute.xlu0 %4845
    %4847 = vrot.lane.b32.xlu0 %v4215, 127
    %v4848 = vpop.permute.xlu0 %4847
    %4849 = vrot.lane.b32.xlu0 %v4216, 127
    %v4850 = vpop.permute.xlu0 %4849
    %4851 = vrot.lane.b32.xlu0 %v4217, 127
    %v4852 = vpop.permute.xlu0 %4851
    %4853 = vrot.lane.b32.xlu0 %v4218, 127
    %v4854 = vpop.permute.xlu0 %4853
    %4855 = vrot.lane.b32.xlu0 %v4219, 127
    %v4856 = vpop.permute.xlu0 %4855
    %4857 = vrot.lane.b32.xlu0 %v4220, 127
    %v4858 = vpop.permute.xlu0 %4857
    %4859 = vrot.lane.b32.xlu0 %v4221, 127
    %v4860 = vpop.permute.xlu0 %4859
    %4861 = vrot.lane.b32.xlu0 %v4222, 127
    %v4862 = vpop.permute.xlu0 %4861
    %v4863 = vsel %vm1313, %v4832, %v4834
    %v4864 = vsel %vm1313, %v4836, %v4838
    %v4865 = vsel %vm1313, %v4840, %v4842
    %v4866 = vsel %vm1313, %v4844, %v4846
    %v4867 = vsel %vm1313, %v4848, %v4850
    %v4868 = vsel %vm1313, %v4852, %v4854
    %v4869 = vsel %vm1313, %v4856, %v4858
    %v4870 = vsel %vm1313, %v4860, %v4862
    %v4887 = vsel %vm1326, %v4834, 0.0
    %v4888 = vsel %vm1326, %v4838, 0.0
    %v4889 = vsel %vm1326, %v4842, 0.0
    %v4890 = vsel %vm1326, %v4846, 0.0
    %v4891 = vsel %vm1326, %v4850, 0.0
    %v4892 = vsel %vm1326, %v4854, 0.0
    %v4893 = vsel %vm1326, %v4858, 0.0
    %v4894 = vsel %vm1326, %v4862, 0.0
    %4896 = vset.pattern.permute.xlu0 0
    %4897 = vperm.xlu0 %4896, %v4243
    %v4898 = vpop.permute.xlu0 %4897
    %4901 = vset.pattern.permute.xlu0 0
    %4902 = vperm.xlu0 %4901, %v4244
    %v4903 = vpop.permute.xlu0 %4902
    %4906 = vset.pattern.permute.xlu0 0
    %4907 = vperm.xlu0 %4906, %v4245
    %v4908 = vpop.permute.xlu0 %4907
    %4911 = vset.pattern.permute.xlu0 0
    %4912 = vperm.xlu0 %4911, %v4246
    %v4913 = vpop.permute.xlu0 %4912
    %v4915 = vmul.f32 %v1332, %v4898
    %v4916 = vmul.f32 %v1333, %v4898
    %v4917 = vmul.f32 %v1332, %v4903
    %v4918 = vmul.f32 %v1333, %v4903
    %v4919 = vmul.f32 %v1332, %v4908
    %v4920 = vmul.f32 %v1333, %v4908
    %v4921 = vmul.f32 %v1332, %v4913
    %v4922 = vmul.f32 %v1333, %v4913
    %v4923 = vmul.f32 %v4863, %v4915
    %v4924 = vmul.f32 %v4887, %v4916
    %v4925 = vmul.f32 %v4864, %v4917
    %v4926 = vmul.f32 %v4888, %v4918
    %v4927 = vmul.f32 %v4865, %v4919
    %v4928 = vmul.f32 %v4889, %v4920
    %v4929 = vmul.f32 %v4866, %v4921
    %v4930 = vmul.f32 %v4890, %v4922
    %v4931 = vmul.f32 %v4867, %v4915
    %v4932 = vmul.f32 %v4891, %v4916
    %v4933 = vmul.f32 %v4868, %v4917
    %v4934 = vmul.f32 %v4892, %v4918
    %v4935 = vmul.f32 %v4869, %v4919
    %v4936 = vmul.f32 %v4893, %v4920
    %v4937 = vmul.f32 %v4870, %v4921
    %v4938 = vmul.f32 %v4894, %v4922
    %v4939 = vadd.f32 %v4815, %v4923
    %v4940 = vadd.f32 %v4816, %v4924
    %v4941 = vadd.f32 %v4817, %v4925
    %v4942 = vadd.f32 %v4818, %v4926
    %v4943 = vadd.f32 %v4819, %v4927
    %v4944 = vadd.f32 %v4820, %v4928
    %v4945 = vadd.f32 %v4821, %v4929
    %v4946 = vadd.f32 %v4822, %v4930
    %v4947 = vadd.f32 %v4823, %v4931
    %v4948 = vadd.f32 %v4824, %v4932
    %v4949 = vadd.f32 %v4825, %v4933
    %v4950 = vadd.f32 %v4826, %v4934
    %v4951 = vadd.f32 %v4827, %v4935
    %v4952 = vadd.f32 %v4828, %v4936
    %v4953 = vadd.f32 %v4829, %v4937
    %v4954 = vadd.f32 %v4830, %v4938
    %4955 = vrot.lane.b32.xlu0 %v4207, 117
    %v4956 = vpop.permute.xlu0 %4955
    %4957 = vrot.lane.b32.xlu0 %v4208, 117
    %v4958 = vpop.permute.xlu0 %4957
    %4959 = vrot.lane.b32.xlu0 %v4209, 117
    %v4960 = vpop.permute.xlu0 %4959
    %4961 = vrot.lane.b32.xlu0 %v4210, 117
    %v4962 = vpop.permute.xlu0 %4961
    %4963 = vrot.lane.b32.xlu0 %v4211, 117
    %v4964 = vpop.permute.xlu0 %4963
    %4965 = vrot.lane.b32.xlu0 %v4212, 117
    %v4966 = vpop.permute.xlu0 %4965
    %4967 = vrot.lane.b32.xlu0 %v4213, 117
    %v4968 = vpop.permute.xlu0 %4967
    %4969 = vrot.lane.b32.xlu0 %v4214, 117
    %v4970 = vpop.permute.xlu0 %4969
    %4971 = vrot.lane.b32.xlu0 %v4215, 117
    %v4972 = vpop.permute.xlu0 %4971
    %4973 = vrot.lane.b32.xlu0 %v4216, 117
    %v4974 = vpop.permute.xlu0 %4973
    %4975 = vrot.lane.b32.xlu0 %v4217, 117
    %v4976 = vpop.permute.xlu0 %4975
    %4977 = vrot.lane.b32.xlu0 %v4218, 117
    %v4978 = vpop.permute.xlu0 %4977
    %4979 = vrot.lane.b32.xlu0 %v4219, 117
    %v4980 = vpop.permute.xlu0 %4979
    %4981 = vrot.lane.b32.xlu0 %v4220, 117
    %v4982 = vpop.permute.xlu0 %4981
    %4983 = vrot.lane.b32.xlu0 %v4221, 117
    %v4984 = vpop.permute.xlu0 %4983
    %4985 = vrot.lane.b32.xlu0 %v4222, 117
    %v4986 = vpop.permute.xlu0 %4985
    %v4987 = vsel %vm1382, %v4956, %v4958
    %v4988 = vsel %vm1382, %v4960, %v4962
    %v4989 = vsel %vm1382, %v4964, %v4966
    %v4990 = vsel %vm1382, %v4968, %v4970
    %v4991 = vsel %vm1382, %v4972, %v4974
    %v4992 = vsel %vm1382, %v4976, %v4978
    %v4993 = vsel %vm1382, %v4980, %v4982
    %v4994 = vsel %vm1382, %v4984, %v4986
    %v5011 = vsel %vm1395, %v4958, 0.0
    %v5012 = vsel %vm1395, %v4962, 0.0
    %v5013 = vsel %vm1395, %v4966, 0.0
    %v5014 = vsel %vm1395, %v4970, 0.0
    %v5015 = vsel %vm1395, %v4974, 0.0
    %v5016 = vsel %vm1395, %v4978, 0.0
    %v5017 = vsel %vm1395, %v4982, 0.0
    %v5018 = vsel %vm1395, %v4986, 0.0
    %5020 = vset.pattern.permute.xlu0 0
    %5021 = vperm.xlu0 %5020, %v4247
    %v5022 = vpop.permute.xlu0 %5021
    %5025 = vset.pattern.permute.xlu0 0
    %5026 = vperm.xlu0 %5025, %v4248
    %v5027 = vpop.permute.xlu0 %5026
    %5030 = vset.pattern.permute.xlu0 0
    %5031 = vperm.xlu0 %5030, %v4249
    %v5032 = vpop.permute.xlu0 %5031
    %5035 = vset.pattern.permute.xlu0 0
    %5036 = vperm.xlu0 %5035, %v4250
    %v5037 = vpop.permute.xlu0 %5036
    %v5039 = vmul.f32 %v1401, %v5022
    %v5040 = vmul.f32 %v1402, %v5022
    %v5041 = vmul.f32 %v1401, %v5027
    %v5042 = vmul.f32 %v1402, %v5027
    %v5043 = vmul.f32 %v1401, %v5032
    %v5044 = vmul.f32 %v1402, %v5032
    %v5045 = vmul.f32 %v1401, %v5037
    %v5046 = vmul.f32 %v1402, %v5037
    %v5047 = vmul.f32 %v4987, %v5039
    %v5048 = vmul.f32 %v5011, %v5040
    %v5049 = vmul.f32 %v4988, %v5041
    %v5050 = vmul.f32 %v5012, %v5042
    %v5051 = vmul.f32 %v4989, %v5043
    %v5052 = vmul.f32 %v5013, %v5044
    %v5053 = vmul.f32 %v4990, %v5045
    %v5054 = vmul.f32 %v5014, %v5046
    %v5055 = vmul.f32 %v4991, %v5039
    %v5056 = vmul.f32 %v5015, %v5040
    %v5057 = vmul.f32 %v4992, %v5041
    %v5058 = vmul.f32 %v5016, %v5042
    %v5059 = vmul.f32 %v4993, %v5043
    %v5060 = vmul.f32 %v5017, %v5044
    %v5061 = vmul.f32 %v4994, %v5045
    %v5062 = vmul.f32 %v5018, %v5046
    %v5063 = vadd.f32 %v4939, %v5047
    %v5064 = vadd.f32 %v4940, %v5048
    %v5065 = vadd.f32 %v4941, %v5049
    %v5066 = vadd.f32 %v4942, %v5050
    %v5067 = vadd.f32 %v4943, %v5051
    %v5068 = vadd.f32 %v4944, %v5052
    %v5069 = vadd.f32 %v4945, %v5053
    %v5070 = vadd.f32 %v4946, %v5054
    %v5071 = vadd.f32 %v4947, %v5055
    %v5072 = vadd.f32 %v4948, %v5056
    %v5073 = vadd.f32 %v4949, %v5057
    %v5074 = vadd.f32 %v4950, %v5058
    %v5075 = vadd.f32 %v4951, %v5059
    %v5076 = vadd.f32 %v4952, %v5060
    %v5077 = vadd.f32 %v4953, %v5061
    %v5078 = vadd.f32 %v4954, %v5062
    %5079 = vrot.lane.b32.xlu0 %v4207, 116
    %v5080 = vpop.permute.xlu0 %5079
    %5081 = vrot.lane.b32.xlu0 %v4208, 116
    %v5082 = vpop.permute.xlu0 %5081
    %5083 = vrot.lane.b32.xlu0 %v4209, 116
    %v5084 = vpop.permute.xlu0 %5083
    %5085 = vrot.lane.b32.xlu0 %v4210, 116
    %v5086 = vpop.permute.xlu0 %5085
    %5087 = vrot.lane.b32.xlu0 %v4211, 116
    %v5088 = vpop.permute.xlu0 %5087
    %5089 = vrot.lane.b32.xlu0 %v4212, 116
    %v5090 = vpop.permute.xlu0 %5089
    %5091 = vrot.lane.b32.xlu0 %v4213, 116
    %v5092 = vpop.permute.xlu0 %5091
    %5093 = vrot.lane.b32.xlu0 %v4214, 116
    %v5094 = vpop.permute.xlu0 %5093
    %5095 = vrot.lane.b32.xlu0 %v4215, 116
    %v5096 = vpop.permute.xlu0 %5095
    %5097 = vrot.lane.b32.xlu0 %v4216, 116
    %v5098 = vpop.permute.xlu0 %5097
    %5099 = vrot.lane.b32.xlu0 %v4217, 116
    %v5100 = vpop.permute.xlu0 %5099
    %5101 = vrot.lane.b32.xlu0 %v4218, 116
    %v5102 = vpop.permute.xlu0 %5101
    %5103 = vrot.lane.b32.xlu0 %v4219, 116
    %v5104 = vpop.permute.xlu0 %5103
    %5105 = vrot.lane.b32.xlu0 %v4220, 116
    %v5106 = vpop.permute.xlu0 %5105
    %5107 = vrot.lane.b32.xlu0 %v4221, 116
    %v5108 = vpop.permute.xlu0 %5107
    %5109 = vrot.lane.b32.xlu0 %v4222, 116
    %v5110 = vpop.permute.xlu0 %5109
    %v5111 = vsel %vm1451, %v5080, %v5082
    %v5112 = vsel %vm1451, %v5084, %v5086
    %v5113 = vsel %vm1451, %v5088, %v5090
    %v5114 = vsel %vm1451, %v5092, %v5094
    %v5115 = vsel %vm1451, %v5096, %v5098
    %v5116 = vsel %vm1451, %v5100, %v5102
    %v5117 = vsel %vm1451, %v5104, %v5106
    %v5118 = vsel %vm1451, %v5108, %v5110
    %v5135 = vsel %vm1464, %v5082, 0.0
    %v5136 = vsel %vm1464, %v5086, 0.0
    %v5137 = vsel %vm1464, %v5090, 0.0
    %v5138 = vsel %vm1464, %v5094, 0.0
    %v5139 = vsel %vm1464, %v5098, 0.0
    %v5140 = vsel %vm1464, %v5102, 0.0
    %v5141 = vsel %vm1464, %v5106, 0.0
    %v5142 = vsel %vm1464, %v5110, 0.0
    %5144 = vset.pattern.permute.xlu0 0
    %5145 = vperm.xlu0 %5144, %v4251
    %v5146 = vpop.permute.xlu0 %5145
    %5149 = vset.pattern.permute.xlu0 0
    %5150 = vperm.xlu0 %5149, %v4252
    %v5151 = vpop.permute.xlu0 %5150
    %5154 = vset.pattern.permute.xlu0 0
    %5155 = vperm.xlu0 %5154, %v4253
    %v5156 = vpop.permute.xlu0 %5155
    %5159 = vset.pattern.permute.xlu0 0
    %5160 = vperm.xlu0 %5159, %v4254
    %v5161 = vpop.permute.xlu0 %5160
    %v5163 = vmul.f32 %v1470, %v5146
    %v5164 = vmul.f32 %v1471, %v5146
    %v5165 = vmul.f32 %v1470, %v5151
    %v5166 = vmul.f32 %v1471, %v5151
    %v5167 = vmul.f32 %v1470, %v5156
    %v5168 = vmul.f32 %v1471, %v5156
    %v5169 = vmul.f32 %v1470, %v5161
    %v5170 = vmul.f32 %v1471, %v5161
    %v5171 = vmul.f32 %v5111, %v5163
    %v5172 = vmul.f32 %v5135, %v5164
    %v5173 = vmul.f32 %v5112, %v5165
    %v5174 = vmul.f32 %v5136, %v5166
    %v5175 = vmul.f32 %v5113, %v5167
    %v5176 = vmul.f32 %v5137, %v5168
    %v5177 = vmul.f32 %v5114, %v5169
    %v5178 = vmul.f32 %v5138, %v5170
    %v5179 = vmul.f32 %v5115, %v5163
    %v5180 = vmul.f32 %v5139, %v5164
    %v5181 = vmul.f32 %v5116, %v5165
    %v5182 = vmul.f32 %v5140, %v5166
    %v5183 = vmul.f32 %v5117, %v5167
    %v5184 = vmul.f32 %v5141, %v5168
    %v5185 = vmul.f32 %v5118, %v5169
    %v5186 = vmul.f32 %v5142, %v5170
    %v5187 = vadd.f32 %v5063, %v5171
    %v5188 = vadd.f32 %v5064, %v5172
    %v5189 = vadd.f32 %v5065, %v5173
    %v5190 = vadd.f32 %v5066, %v5174
    %v5191 = vadd.f32 %v5067, %v5175
    %v5192 = vadd.f32 %v5068, %v5176
    %v5193 = vadd.f32 %v5069, %v5177
    %v5194 = vadd.f32 %v5070, %v5178
    %v5195 = vadd.f32 %v5071, %v5179
    %v5196 = vadd.f32 %v5072, %v5180
    %v5197 = vadd.f32 %v5073, %v5181
    %v5198 = vadd.f32 %v5074, %v5182
    %v5199 = vadd.f32 %v5075, %v5183
    %v5200 = vadd.f32 %v5076, %v5184
    %v5201 = vadd.f32 %v5077, %v5185
    %v5202 = vadd.f32 %v5078, %v5186
    %5203 = vrot.lane.b32.xlu0 %v4207, 115
    %v5204 = vpop.permute.xlu0 %5203
    %5205 = vrot.lane.b32.xlu0 %v4208, 115
    %v5206 = vpop.permute.xlu0 %5205
    %5207 = vrot.lane.b32.xlu0 %v4209, 115
    %v5208 = vpop.permute.xlu0 %5207
    %5209 = vrot.lane.b32.xlu0 %v4210, 115
    %v5210 = vpop.permute.xlu0 %5209
    %5211 = vrot.lane.b32.xlu0 %v4211, 115
    %v5212 = vpop.permute.xlu0 %5211
    %5213 = vrot.lane.b32.xlu0 %v4212, 115
    %v5214 = vpop.permute.xlu0 %5213
    %5215 = vrot.lane.b32.xlu0 %v4213, 115
    %v5216 = vpop.permute.xlu0 %5215
    %5217 = vrot.lane.b32.xlu0 %v4214, 115
    %v5218 = vpop.permute.xlu0 %5217
    %5219 = vrot.lane.b32.xlu0 %v4215, 115
    %v5220 = vpop.permute.xlu0 %5219
    %5221 = vrot.lane.b32.xlu0 %v4216, 115
    %v5222 = vpop.permute.xlu0 %5221
    %5223 = vrot.lane.b32.xlu0 %v4217, 115
    %v5224 = vpop.permute.xlu0 %5223
    %5225 = vrot.lane.b32.xlu0 %v4218, 115
    %v5226 = vpop.permute.xlu0 %5225
    %5227 = vrot.lane.b32.xlu0 %v4219, 115
    %v5228 = vpop.permute.xlu0 %5227
    %5229 = vrot.lane.b32.xlu0 %v4220, 115
    %v5230 = vpop.permute.xlu0 %5229
    %5231 = vrot.lane.b32.xlu0 %v4221, 115
    %v5232 = vpop.permute.xlu0 %5231
    %5233 = vrot.lane.b32.xlu0 %v4222, 115
    %v5234 = vpop.permute.xlu0 %5233
    %v5235 = vsel %vm1520, %v5204, %v5206
    %v5236 = vsel %vm1520, %v5208, %v5210
    %v5237 = vsel %vm1520, %v5212, %v5214
    %v5238 = vsel %vm1520, %v5216, %v5218
    %v5239 = vsel %vm1520, %v5220, %v5222
    %v5240 = vsel %vm1520, %v5224, %v5226
    %v5241 = vsel %vm1520, %v5228, %v5230
    %v5242 = vsel %vm1520, %v5232, %v5234
    %v5259 = vsel %vm1533, %v5206, 0.0
    %v5260 = vsel %vm1533, %v5210, 0.0
    %v5261 = vsel %vm1533, %v5214, 0.0
    %v5262 = vsel %vm1533, %v5218, 0.0
    %v5263 = vsel %vm1533, %v5222, 0.0
    %v5264 = vsel %vm1533, %v5226, 0.0
    %v5265 = vsel %vm1533, %v5230, 0.0
    %v5266 = vsel %vm1533, %v5234, 0.0
    %5268 = vset.pattern.permute.xlu0 0
    %5269 = vperm.xlu0 %5268, %v4255
    %v5270 = vpop.permute.xlu0 %5269
    %5273 = vset.pattern.permute.xlu0 0
    %5274 = vperm.xlu0 %5273, %v4256
    %v5275 = vpop.permute.xlu0 %5274
    %5278 = vset.pattern.permute.xlu0 0
    %5279 = vperm.xlu0 %5278, %v4257
    %v5280 = vpop.permute.xlu0 %5279
    %5283 = vset.pattern.permute.xlu0 0
    %5284 = vperm.xlu0 %5283, %v4258
    %v5285 = vpop.permute.xlu0 %5284
    %v5287 = vmul.f32 %v1539, %v5270
    %v5288 = vmul.f32 %v1540, %v5270
    %v5289 = vmul.f32 %v1539, %v5275
    %v5290 = vmul.f32 %v1540, %v5275
    %v5291 = vmul.f32 %v1539, %v5280
    %v5292 = vmul.f32 %v1540, %v5280
    %v5293 = vmul.f32 %v1539, %v5285
    %v5294 = vmul.f32 %v1540, %v5285
    %v5295 = vmul.f32 %v5235, %v5287
    %v5296 = vmul.f32 %v5259, %v5288
    %v5297 = vmul.f32 %v5236, %v5289
    %v5298 = vmul.f32 %v5260, %v5290
    %v5299 = vmul.f32 %v5237, %v5291
    %v5300 = vmul.f32 %v5261, %v5292
    %v5301 = vmul.f32 %v5238, %v5293
    %v5302 = vmul.f32 %v5262, %v5294
    %v5303 = vmul.f32 %v5239, %v5287
    %v5304 = vmul.f32 %v5263, %v5288
    %v5305 = vmul.f32 %v5240, %v5289
    %v5306 = vmul.f32 %v5264, %v5290
    %v5307 = vmul.f32 %v5241, %v5291
    %v5308 = vmul.f32 %v5265, %v5292
    %v5309 = vmul.f32 %v5242, %v5293
    %v5310 = vmul.f32 %v5266, %v5294
    %v5311 = vadd.f32 %v5187, %v5295
    %v5312 = vadd.f32 %v5188, %v5296
    %v5313 = vadd.f32 %v5189, %v5297
    %v5314 = vadd.f32 %v5190, %v5298
    %v5315 = vadd.f32 %v5191, %v5299
    %v5316 = vadd.f32 %v5192, %v5300
    %v5317 = vadd.f32 %v5193, %v5301
    %v5318 = vadd.f32 %v5194, %v5302
    %v5319 = vadd.f32 %v5195, %v5303
    %v5320 = vadd.f32 %v5196, %v5304
    %v5321 = vadd.f32 %v5197, %v5305
    %v5322 = vadd.f32 %v5198, %v5306
    %v5323 = vadd.f32 %v5199, %v5307
    %v5324 = vadd.f32 %v5200, %v5308
    %v5325 = vadd.f32 %v5201, %v5309
    %v5326 = vadd.f32 %v5202, %v5310
    %v5327 = vld [vmem:[%s23] sm:$0xff]
    %v5328 = vld [vmem:[%s23 + $0x8] sm:$0xff]
    %v5329 = vld [vmem:[%s23 + $0x10] sm:$0xff]
    %v5330 = vld [vmem:[%s23 + $0x18] sm:$0xff]
    %5332 = vset.pattern.permute.xlu0 0
    %5333 = vperm.xlu0 %5332, %v5327
    %v5334 = vpop.permute.xlu0 %5333
    %5337 = vset.pattern.permute.xlu0 0
    %5338 = vperm.xlu0 %5337, %v5328
    %v5339 = vpop.permute.xlu0 %5338
    %5342 = vset.pattern.permute.xlu0 0
    %5343 = vperm.xlu0 %5342, %v5329
    %v5344 = vpop.permute.xlu0 %5343
    %5347 = vset.pattern.permute.xlu0 0
    %5348 = vperm.xlu0 %5347, %v5330
    %v5349 = vpop.permute.xlu0 %5348
    %v5351 = vadd.f32 %v5311, %v5334
    %v5352 = vadd.f32 %v5312, %v5334
    %v5353 = vadd.f32 %v5313, %v5339
    %v5354 = vadd.f32 %v5314, %v5339
    %v5355 = vadd.f32 %v5315, %v5344
    %v5356 = vadd.f32 %v5316, %v5344
    %v5357 = vadd.f32 %v5317, %v5349
    %v5358 = vadd.f32 %v5318, %v5349
    %v5359 = vadd.f32 %v5319, %v5334
    %v5360 = vadd.f32 %v5320, %v5334
    %v5361 = vadd.f32 %v5321, %v5339
    %v5362 = vadd.f32 %v5322, %v5339
    %v5363 = vadd.f32 %v5323, %v5344
    %v5364 = vadd.f32 %v5324, %v5344
    %v5365 = vadd.f32 %v5325, %v5349
    %v5366 = vadd.f32 %v5326, %v5349
    %5371 = vrot.lane.b32.xlu0 %v3725, 16
    %v5372 = vpop.permute.xlu0 %5371
    %5373 = vrot.lane.b32.xlu0 %v3726, 16
    %v5374 = vpop.permute.xlu0 %5373
    %5375 = vrot.lane.b32.xlu0 %v3731, 16
    %v5376 = vpop.permute.xlu0 %5375
    %5377 = vrot.lane.b32.xlu0 %v3732, 16
    %v5378 = vpop.permute.xlu0 %5377
    %5387 = vrot.lane.b32.xlu0 %v4131, 52
    %v5388 = vpop.permute.xlu0 %5387
    %5389 = vrot.lane.b32.xlu0 %v4132, 52
    %v5390 = vpop.permute.xlu0 %5389
    %5391 = vrot.lane.b32.xlu0 %v4137, 52
    %v5392 = vpop.permute.xlu0 %5391
    %5393 = vrot.lane.b32.xlu0 %v4138, 52
    %v5394 = vpop.permute.xlu0 %5393
    %v5399 = vsel %vm102, %v928, %v5372
    %v5400 = vsel %vm102, %v930, %v5374
    %v5401 = vsel %vm102, %v944, %v5376
    %v5402 = vsel %vm102, %v946, %v5378
    %vm5403 = vcmask 424960
    %v5404 = vsel %vm5403, %v5399, %v5388
    %v5405 = vsel %vm5403, %v5400, %v5390
    %v5406 = vsel %vm5403, %v5401, %v5392
    %v5407 = vsel %vm5403, %v5402, %v5394
    %5416 = vrot.lane.b32.xlu0 %v3727, 16
    %v5417 = vpop.permute.xlu0 %5416
    %5418 = vrot.lane.b32.xlu0 %v3728, 16
    %v5419 = vpop.permute.xlu0 %5418
    %5420 = vrot.lane.b32.xlu0 %v3729, 16
    %v5421 = vpop.permute.xlu0 %5420
    %5422 = vrot.lane.b32.xlu0 %v3730, 16
    %v5423 = vpop.permute.xlu0 %5422
    %5424 = vrot.lane.b32.xlu0 %v3733, 16
    %v5425 = vpop.permute.xlu0 %5424
    %5426 = vrot.lane.b32.xlu0 %v3734, 16
    %v5427 = vpop.permute.xlu0 %5426
    %5428 = vrot.lane.b32.xlu0 %v3735, 16
    %v5429 = vpop.permute.xlu0 %5428
    %5430 = vrot.lane.b32.xlu0 %v3736, 16
    %v5431 = vpop.permute.xlu0 %5430
    %5448 = vrot.lane.b32.xlu0 %v4133, 52
    %v5449 = vpop.permute.xlu0 %5448
    %5450 = vrot.lane.b32.xlu0 %v4134, 52
    %v5451 = vpop.permute.xlu0 %5450
    %5452 = vrot.lane.b32.xlu0 %v4135, 52
    %v5453 = vpop.permute.xlu0 %5452
    %5454 = vrot.lane.b32.xlu0 %v4136, 52
    %v5455 = vpop.permute.xlu0 %5454
    %5456 = vrot.lane.b32.xlu0 %v4139, 52
    %v5457 = vpop.permute.xlu0 %5456
    %5458 = vrot.lane.b32.xlu0 %v4140, 52
    %v5459 = vpop.permute.xlu0 %5458
    %5460 = vrot.lane.b32.xlu0 %v4141, 52
    %v5461 = vpop.permute.xlu0 %5460
    %5462 = vrot.lane.b32.xlu0 %v4142, 52
    %v5463 = vpop.permute.xlu0 %5462
    %v5472 = vsel %vm102, %v932, %v5417
    %v5473 = vsel %vm102, %v934, %v5419
    %v5474 = vsel %vm102, %v936, %v5421
    %v5475 = vsel %vm102, %v938, %v5423
    %v5476 = vsel %vm102, %v948, %v5425
    %v5477 = vsel %vm102, %v950, %v5427
    %v5478 = vsel %vm102, %v952, %v5429
    %v5479 = vsel %vm102, %v954, %v5431
    %v5480 = vsel %vm5403, %v5472, %v5449
    %v5481 = vsel %vm5403, %v5473, %v5451
    %v5482 = vsel %vm5403, %v5474, %v5453
    %v5483 = vsel %vm5403, %v5475, %v5455
    %v5484 = vsel %vm5403, %v5476, %v5457
    %v5485 = vsel %vm5403, %v5477, %v5459
    %v5486 = vsel %vm5403, %v5478, %v5461
    %v5487 = vsel %vm5403, %v5479, %v5463
    %5488 = vxpose.xlu0.b32.start [1/16] %v923, 128
    %5489 = vxpose.xlu0.b32.cont [2/16] 0.0, 128
    %5490 = vxpose.xlu0.b32.cont [3/16] 0.0, 128
    %5491 = vxpose.xlu0.b32.cont [4/16] 0.0, 128
    %5492 = vxpose.xlu0.b32.cont [5/16] 0.0, 128
    %5493 = vxpose.xlu0.b32.cont [6/16] 0.0, 128
    %5494 = vxpose.xlu0.b32.cont [7/16] 0.0, 128
    %5495 = vxpose.xlu0.b32.cont [8/16] 0.0, 128
    %5496 = vxpose.xlu0.b32.cont [9/16] 0.0, 128
    %5497 = vxpose.xlu0.b32.cont [10/16] 0.0, 128
    %5498 = vxpose.xlu0.b32.cont [11/16] 0.0, 128
    %5499 = vxpose.xlu0.b32.cont [12/16] 0.0, 128
    %5500 = vxpose.xlu0.b32.cont [13/16] 0.0, 128
    %5501 = vxpose.xlu0.b32.cont [14/16] 0.0, 128
    %5502 = vxpose.xlu0.b32.cont [15/16] 0.0, 128
    %5503 = vxpose.xlu0.b32.end [16/16] 0.0, 128
    %v5504 = vpop.trf.xlu0
    %v5505 = vpop.trf.xlu0
    %v5506 = vpop.trf.xlu0
    %v5507 = vpop.trf.xlu0
    %v5508 = vpop.trf.xlu0
    %v5509 = vpop.trf.xlu0
    %v5510 = vpop.trf.xlu0
    %v5511 = vpop.trf.xlu0
    %v5512 = vpop.trf.xlu0
    %v5513 = vpop.trf.xlu0
    %v5514 = vpop.trf.xlu0
    %v5515 = vpop.trf.xlu0
    %v5516 = vpop.trf.xlu0
    %v5517 = vpop.trf.xlu0
    %v5518 = vpop.trf.xlu0
    %v5519 = vpop.trf.xlu0
    %5520 = vxpose.xlu0.b32.start [1/16] %v924, 128
    %5521 = vxpose.xlu0.b32.cont [2/16] 0.0, 128
    %5522 = vxpose.xlu0.b32.cont [3/16] 0.0, 128
    %5523 = vxpose.xlu0.b32.cont [4/16] 0.0, 128
    %5524 = vxpose.xlu0.b32.cont [5/16] 0.0, 128
    %5525 = vxpose.xlu0.b32.cont [6/16] 0.0, 128
    %5526 = vxpose.xlu0.b32.cont [7/16] 0.0, 128
    %5527 = vxpose.xlu0.b32.cont [8/16] 0.0, 128
    %5528 = vxpose.xlu0.b32.cont [9/16] 0.0, 128
    %5529 = vxpose.xlu0.b32.cont [10/16] 0.0, 128
    %5530 = vxpose.xlu0.b32.cont [11/16] 0.0, 128
    %5531 = vxpose.xlu0.b32.cont [12/16] 0.0, 128
    %5532 = vxpose.xlu0.b32.cont [13/16] 0.0, 128
    %5533 = vxpose.xlu0.b32.cont [14/16] 0.0, 128
    %5534 = vxpose.xlu0.b32.cont [15/16] 0.0, 128
    %5535 = vxpose.xlu0.b32.end [16/16] 0.0, 128
    %v5536 = vpop.trf.xlu0
    %v5537 = vpop.trf.xlu0
    %v5538 = vpop.trf.xlu0
    %v5539 = vpop.trf.xlu0
    %v5540 = vpop.trf.xlu0
    %v5541 = vpop.trf.xlu0
    %v5542 = vpop.trf.xlu0
    %v5543 = vpop.trf.xlu0
    %v5544 = vpop.trf.xlu0
    %v5545 = vpop.trf.xlu0
    %v5546 = vpop.trf.xlu0
    %v5547 = vpop.trf.xlu0
    %v5548 = vpop.trf.xlu0
    %v5549 = vpop.trf.xlu0
    %v5550 = vpop.trf.xlu0
    %v5551 = vpop.trf.xlu0
    %5552 = vxpose.xlu0.b32.start [1/16] %v925, 128
    %5553 = vxpose.xlu0.b32.cont [2/16] 0.0, 128
    %5554 = vxpose.xlu0.b32.cont [3/16] 0.0, 128
    %5555 = vxpose.xlu0.b32.cont [4/16] 0.0, 128
    %5556 = vxpose.xlu0.b32.cont [5/16] 0.0, 128
    %5557 = vxpose.xlu0.b32.cont [6/16] 0.0, 128
    %5558 = vxpose.xlu0.b32.cont [7/16] 0.0, 128
    %5559 = vxpose.xlu0.b32.cont [8/16] 0.0, 128
    %5560 = vxpose.xlu0.b32.cont [9/16] 0.0, 128
    %5561 = vxpose.xlu0.b32.cont [10/16] 0.0, 128
    %5562 = vxpose.xlu0.b32.cont [11/16] 0.0, 128
    %5563 = vxpose.xlu0.b32.cont [12/16] 0.0, 128
    %5564 = vxpose.xlu0.b32.cont [13/16] 0.0, 128
    %5565 = vxpose.xlu0.b32.cont [14/16] 0.0, 128
    %5566 = vxpose.xlu0.b32.cont [15/16] 0.0, 128
    %5567 = vxpose.xlu0.b32.end [16/16] 0.0, 128
    %v5568 = vpop.trf.xlu0
    %v5569 = vpop.trf.xlu0
    %v5570 = vpop.trf.xlu0
    %v5571 = vpop.trf.xlu0
    %v5572 = vpop.trf.xlu0
    %v5573 = vpop.trf.xlu0
    %v5574 = vpop.trf.xlu0
    %v5575 = vpop.trf.xlu0
    %v5576 = vpop.trf.xlu0
    %v5577 = vpop.trf.xlu0
    %v5578 = vpop.trf.xlu0
    %v5579 = vpop.trf.xlu0
    %v5580 = vpop.trf.xlu0
    %v5581 = vpop.trf.xlu0
    %v5582 = vpop.trf.xlu0
    %v5583 = vpop.trf.xlu0
    %5584 = vxpose.xlu0.b32.start [1/16] %v926, 128
    %5585 = vxpose.xlu0.b32.cont [2/16] 0.0, 128
    %5586 = vxpose.xlu0.b32.cont [3/16] 0.0, 128
    %5587 = vxpose.xlu0.b32.cont [4/16] 0.0, 128
    %5588 = vxpose.xlu0.b32.cont [5/16] 0.0, 128
    %5589 = vxpose.xlu0.b32.cont [6/16] 0.0, 128
    %5590 = vxpose.xlu0.b32.cont [7/16] 0.0, 128
    %5591 = vxpose.xlu0.b32.cont [8/16] 0.0, 128
    %5592 = vxpose.xlu0.b32.cont [9/16] 0.0, 128
    %5593 = vxpose.xlu0.b32.cont [10/16] 0.0, 128
    %5594 = vxpose.xlu0.b32.cont [11/16] 0.0, 128
    %5595 = vxpose.xlu0.b32.cont [12/16] 0.0, 128
    %5596 = vxpose.xlu0.b32.cont [13/16] 0.0, 128
    %5597 = vxpose.xlu0.b32.cont [14/16] 0.0, 128
    %5598 = vxpose.xlu0.b32.cont [15/16] 0.0, 128
    %5599 = vxpose.xlu0.b32.end [16/16] 0.0, 128
    %v5600 = vpop.trf.xlu0
    %v5601 = vpop.trf.xlu0
    %v5602 = vpop.trf.xlu0
    %v5603 = vpop.trf.xlu0
    %v5604 = vpop.trf.xlu0
    %v5605 = vpop.trf.xlu0
    %v5606 = vpop.trf.xlu0
    %v5607 = vpop.trf.xlu0
    %v5608 = vpop.trf.xlu0
    %v5609 = vpop.trf.xlu0
    %v5610 = vpop.trf.xlu0
    %v5611 = vpop.trf.xlu0
    %v5612 = vpop.trf.xlu0
    %v5613 = vpop.trf.xlu0
    %v5614 = vpop.trf.xlu0
    %v5615 = vpop.trf.xlu0
    %5616 = vxpose.xlu0.b32.start [1/16] %v939, 128
    %5617 = vxpose.xlu0.b32.cont [2/16] 0.0, 128
    %5618 = vxpose.xlu0.b32.cont [3/16] 0.0, 128
    %5619 = vxpose.xlu0.b32.cont [4/16] 0.0, 128
    %5620 = vxpose.xlu0.b32.cont [5/16] 0.0, 128
    %5621 = vxpose.xlu0.b32.cont [6/16] 0.0, 128
    %5622 = vxpose.xlu0.b32.cont [7/16] 0.0, 128
    %5623 = vxpose.xlu0.b32.cont [8/16] 0.0, 128
    %5624 = vxpose.xlu0.b32.cont [9/16] 0.0, 128
    %5625 = vxpose.xlu0.b32.cont [10/16] 0.0, 128
    %5626 = vxpose.xlu0.b32.cont [11/16] 0.0, 128
    %5627 = vxpose.xlu0.b32.cont [12/16] 0.0, 128
    %5628 = vxpose.xlu0.b32.cont [13/16] 0.0, 128
    %5629 = vxpose.xlu0.b32.cont [14/16] 0.0, 128
    %5630 = vxpose.xlu0.b32.cont [15/16] 0.0, 128
    %5631 = vxpose.xlu0.b32.end [16/16] 0.0, 128
    %v5632 = vpop.trf.xlu0
    %v5633 = vpop.trf.xlu0
    %v5634 = vpop.trf.xlu0
    %v5635 = vpop.trf.xlu0
    %v5636 = vpop.trf.xlu0
    %v5637 = vpop.trf.xlu0
    %v5638 = vpop.trf.xlu0
    %v5639 = vpop.trf.xlu0
    %v5640 = vpop.trf.xlu0
    %v5641 = vpop.trf.xlu0
    %v5642 = vpop.trf.xlu0
    %v5643 = vpop.trf.xlu0
    %v5644 = vpop.trf.xlu0
    %v5645 = vpop.trf.xlu0
    %v5646 = vpop.trf.xlu0
    %v5647 = vpop.trf.xlu0
    %5648 = vxpose.xlu0.b32.start [1/16] %v940, 128
    %5649 = vxpose.xlu0.b32.cont [2/16] 0.0, 128
    %5650 = vxpose.xlu0.b32.cont [3/16] 0.0, 128
    %5651 = vxpose.xlu0.b32.cont [4/16] 0.0, 128
    %5652 = vxpose.xlu0.b32.cont [5/16] 0.0, 128
    %5653 = vxpose.xlu0.b32.cont [6/16] 0.0, 128
    %5654 = vxpose.xlu0.b32.cont [7/16] 0.0, 128
    %5655 = vxpose.xlu0.b32.cont [8/16] 0.0, 128
    %5656 = vxpose.xlu0.b32.cont [9/16] 0.0, 128
    %5657 = vxpose.xlu0.b32.cont [10/16] 0.0, 128
    %5658 = vxpose.xlu0.b32.cont [11/16] 0.0, 128
    %5659 = vxpose.xlu0.b32.cont [12/16] 0.0, 128
    %5660 = vxpose.xlu0.b32.cont [13/16] 0.0, 128
    %5661 = vxpose.xlu0.b32.cont [14/16] 0.0, 128
    %5662 = vxpose.xlu0.b32.cont [15/16] 0.0, 128
    %5663 = vxpose.xlu0.b32.end [16/16] 0.0, 128
    %v5664 = vpop.trf.xlu0
    %v5665 = vpop.trf.xlu0
    %v5666 = vpop.trf.xlu0
    %v5667 = vpop.trf.xlu0
    %v5668 = vpop.trf.xlu0
    %v5669 = vpop.trf.xlu0
    %v5670 = vpop.trf.xlu0
    %v5671 = vpop.trf.xlu0
    %v5672 = vpop.trf.xlu0
    %v5673 = vpop.trf.xlu0
    %v5674 = vpop.trf.xlu0
    %v5675 = vpop.trf.xlu0
    %v5676 = vpop.trf.xlu0
    %v5677 = vpop.trf.xlu0
    %v5678 = vpop.trf.xlu0
    %v5679 = vpop.trf.xlu0
    %5680 = vxpose.xlu0.b32.start [1/16] %v941, 128
    %5681 = vxpose.xlu0.b32.cont [2/16] 0.0, 128
    %5682 = vxpose.xlu0.b32.cont [3/16] 0.0, 128
    %5683 = vxpose.xlu0.b32.cont [4/16] 0.0, 128
    %5684 = vxpose.xlu0.b32.cont [5/16] 0.0, 128
    %5685 = vxpose.xlu0.b32.cont [6/16] 0.0, 128
    %5686 = vxpose.xlu0.b32.cont [7/16] 0.0, 128
    %5687 = vxpose.xlu0.b32.cont [8/16] 0.0, 128
    %5688 = vxpose.xlu0.b32.cont [9/16] 0.0, 128
    %5689 = vxpose.xlu0.b32.cont [10/16] 0.0, 128
    %5690 = vxpose.xlu0.b32.cont [11/16] 0.0, 128
    %5691 = vxpose.xlu0.b32.cont [12/16] 0.0, 128
    %5692 = vxpose.xlu0.b32.cont [13/16] 0.0, 128
    %5693 = vxpose.xlu0.b32.cont [14/16] 0.0, 128
    %5694 = vxpose.xlu0.b32.cont [15/16] 0.0, 128
    %5695 = vxpose.xlu0.b32.end [16/16] 0.0, 128
    %v5696 = vpop.trf.xlu0
    %v5697 = vpop.trf.xlu0
    %v5698 = vpop.trf.xlu0
    %v5699 = vpop.trf.xlu0
    %v5700 = vpop.trf.xlu0
    %v5701 = vpop.trf.xlu0
    %v5702 = vpop.trf.xlu0
    %v5703 = vpop.trf.xlu0
    %v5704 = vpop.trf.xlu0
    %v5705 = vpop.trf.xlu0
    %v5706 = vpop.trf.xlu0
    %v5707 = vpop.trf.xlu0
    %v5708 = vpop.trf.xlu0
    %v5709 = vpop.trf.xlu0
    %v5710 = vpop.trf.xlu0
    %v5711 = vpop.trf.xlu0
    %5712 = vxpose.xlu0.b32.start [1/16] %v942, 128
    %5713 = vxpose.xlu0.b32.cont [2/16] 0.0, 128
    %5714 = vxpose.xlu0.b32.cont [3/16] 0.0, 128
    %5715 = vxpose.xlu0.b32.cont [4/16] 0.0, 128
    %5716 = vxpose.xlu0.b32.cont [5/16] 0.0, 128
    %5717 = vxpose.xlu0.b32.cont [6/16] 0.0, 128
    %5718 = vxpose.xlu0.b32.cont [7/16] 0.0, 128
    %5719 = vxpose.xlu0.b32.cont [8/16] 0.0, 128
    %5720 = vxpose.xlu0.b32.cont [9/16] 0.0, 128
    %5721 = vxpose.xlu0.b32.cont [10/16] 0.0, 128
    %5722 = vxpose.xlu0.b32.cont [11/16] 0.0, 128
    %5723 = vxpose.xlu0.b32.cont [12/16] 0.0, 128
    %5724 = vxpose.xlu0.b32.cont [13/16] 0.0, 128
    %5725 = vxpose.xlu0.b32.cont [14/16] 0.0, 128
    %5726 = vxpose.xlu0.b32.cont [15/16] 0.0, 128
    %5727 = vxpose.xlu0.b32.end [16/16] 0.0, 128
    %v5728 = vpop.trf.xlu0
    %v5729 = vpop.trf.xlu0
    %v5730 = vpop.trf.xlu0
    %v5731 = vpop.trf.xlu0
    %v5732 = vpop.trf.xlu0
    %v5733 = vpop.trf.xlu0
    %v5734 = vpop.trf.xlu0
    %v5735 = vpop.trf.xlu0
    %v5736 = vpop.trf.xlu0
    %v5737 = vpop.trf.xlu0
    %v5738 = vpop.trf.xlu0
    %v5739 = vpop.trf.xlu0
    %v5740 = vpop.trf.xlu0
    %v5741 = vpop.trf.xlu0
    %v5742 = vpop.trf.xlu0
    %v5743 = vpop.trf.xlu0
    %vm5744 = vcmask 64512
    %v5746 = vsel %vm5744, %v5504, 0
    %v5749 = vsel %vm5744, %v5505, 0
    %v5752 = vsel %vm5744, %v5506, 0
    %v5755 = vsel %vm5744, %v5507, 0
    %v5758 = vsel %vm5744, %v5508, 0
    %v5761 = vsel %vm5744, %v5509, 0
    %v5764 = vsel %vm5744, %v5510, 0
    %v5767 = vsel %vm5744, %v5511, 0
    %v5770 = vsel %vm5744, %v5512, 0
    %v5773 = vsel %vm5744, %v5513, 0
    %v5776 = vsel %vm5744, %v5514, 0
    %v5779 = vsel %vm5744, %v5515, 0
    %v5782 = vsel %vm5744, %v5516, 0
    %v5785 = vsel %vm5744, %v5517, 0
    %v5788 = vsel %vm5744, %v5518, 0
    %v5791 = vsel %vm5744, %v5519, 0
    %v5794 = vsel %vm5744, %v5536, 0
    %v5797 = vsel %vm5744, %v5537, 0
    %5799 = vmatpush.msra.mxu0 0.0
    %5800 = vmatpush.msra.mxu0 0.0
    %5801 = vmatpush.msra.mxu0 0.0
    %5802 = vmatpush.msra.mxu0 0.0
    %5803 = vmatpush.msra.mxu0 0.0
    %5804 = vmatpush.msra.mxu0 0.0
    %5805 = vmatpush.msra.mxu0 0.0
    %5806 = vmatpush.msra.mxu0 0.0
    %5807 = vmatpush.msra.mxu0 0.0
    %5808 = vmatpush.msra.mxu0 0.0
    %5809 = vmatpush.msra.mxu0 0.0
    %5810 = vmatpush.msra.mxu0 0.0
    %5811 = vmatpush.msra.mxu0 0.0
    %5812 = vmatpush.msra.mxu0 0.0
    %5813 = vmatpush.msra.mxu0 0.0
    %5814 = vmatpush.msra.mxu0 %v927
    %5815 = vmatmul.f32.gmra.mxu0 %v5746
    %v5816 = vpop.f32.mrf.mxu0
    %v5817 = vadd.f32 0.0, %v5816
    %5818 = vmatmul.f32.gmra.mxu0 %v5749
    %v5819 = vpop.f32.mrf.mxu0
    %v5820 = vadd.f32 0.0, %v5819
    %5821 = vmatmul.f32.gmra.mxu0 %v5752
    %v5822 = vpop.f32.mrf.mxu0
    %v5823 = vadd.f32 0.0, %v5822
    %5824 = vmatmul.f32.gmra.mxu0 %v5755
    %v5825 = vpop.f32.mrf.mxu0
    %v5826 = vadd.f32 0.0, %v5825
    %5827 = vmatmul.f32.gmra.mxu0 %v5758
    %v5828 = vpop.f32.mrf.mxu0
    %v5829 = vadd.f32 0.0, %v5828
    %5830 = vmatmul.f32.gmra.mxu0 %v5761
    %v5831 = vpop.f32.mrf.mxu0
    %v5832 = vadd.f32 0.0, %v5831
    %5833 = vmatmul.f32.gmra.mxu0 %v5764
    %v5834 = vpop.f32.mrf.mxu0
    %v5835 = vadd.f32 0.0, %v5834
    %5836 = vmatmul.f32.gmra.mxu0 %v5767
    %v5837 = vpop.f32.mrf.mxu0
    %v5838 = vadd.f32 0.0, %v5837
    %5839 = vmatmul.f32.gmra.mxu0 %v5770
    %v5840 = vpop.f32.mrf.mxu0
    %v5841 = vadd.f32 0.0, %v5840
    %5842 = vmatmul.f32.gmra.mxu0 %v5773
    %v5843 = vpop.f32.mrf.mxu0
    %v5844 = vadd.f32 0.0, %v5843
    %5845 = vmatmul.f32.gmra.mxu0 %v5776
    %v5846 = vpop.f32.mrf.mxu0
    %v5847 = vadd.f32 0.0, %v5846
    %5848 = vmatmul.f32.gmra.mxu0 %v5779
    %v5849 = vpop.f32.mrf.mxu0
    %v5850 = vadd.f32 0.0, %v5849
    %5851 = vmatmul.f32.gmra.mxu0 %v5782
    %v5852 = vpop.f32.mrf.mxu0
    %v5853 = vadd.f32 0.0, %v5852
    %5854 = vmatmul.f32.gmra.mxu0 %v5785
    %v5855 = vpop.f32.mrf.mxu0
    %v5856 = vadd.f32 0.0, %v5855
    %5857 = vmatmul.f32.gmra.mxu0 %v5788
    %v5858 = vpop.f32.mrf.mxu0
    %v5859 = vadd.f32 0.0, %v5858
    %5860 = vmatmul.f32.gmra.mxu0 %v5791
    %v5861 = vpop.f32.mrf.mxu0
    %v5862 = vadd.f32 0.0, %v5861
    %5863 = vmatmul.f32.gmra.mxu0 %v5794
    %v5864 = vpop.f32.mrf.mxu0
    %v5865 = vadd.f32 0.0, %v5864
    %5866 = vmatmul.f32.gmra.mxu0 %v5797
    %v5867 = vpop.f32.mrf.mxu0
    %v5868 = vadd.f32 0.0, %v5867
    %5869 = vdwg.mxu0
    %5870 = vmatpush.msra.mxu0 0.0
    %5871 = vmatpush.msra.mxu0 0.0
    %5872 = vmatpush.msra.mxu0 0.0
    %5873 = vmatpush.msra.mxu0 0.0
    %5874 = vmatpush.msra.mxu0 0.0
    %5875 = vmatpush.msra.mxu0 0.0
    %5876 = vmatpush.msra.mxu0 0.0
    %5877 = vmatpush.msra.mxu0 0.0
    %5878 = vmatpush.msra.mxu0 0.0
    %5879 = vmatpush.msra.mxu0 0.0
    %5880 = vmatpush.msra.mxu0 0.0
    %5881 = vmatpush.msra.mxu0 0.0
    %5882 = vmatpush.msra.mxu0 0.0
    %5883 = vmatpush.msra.mxu0 0.0
    %5884 = vmatpush.msra.mxu0 0.0
    %5885 = vmatpush.msra.mxu0 %v5404
    %5886 = vmatmul.f32.gmra.mxu0 %v5746
    %v5887 = vpop.f32.mrf.mxu0
    %v5888 = vadd.f32 0.0, %v5887
    %5889 = vmatmul.f32.gmra.mxu0 %v5749
    %v5890 = vpop.f32.mrf.mxu0
    %v5891 = vadd.f32 0.0, %v5890
    %5892 = vmatmul.f32.gmra.mxu0 %v5752
    %v5893 = vpop.f32.mrf.mxu0
    %v5894 = vadd.f32 0.0, %v5893
    %5895 = vmatmul.f32.gmra.mxu0 %v5755
    %v5896 = vpop.f32.mrf.mxu0
    %v5897 = vadd.f32 0.0, %v5896
    %5898 = vmatmul.f32.gmra.mxu0 %v5758
    %v5899 = vpop.f32.mrf.mxu0
    %v5900 = vadd.f32 0.0, %v5899
    %5901 = vmatmul.f32.gmra.mxu0 %v5761
    %v5902 = vpop.f32.mrf.mxu0
    %v5903 = vadd.f32 0.0, %v5902
    %5904 = vmatmul.f32.gmra.mxu0 %v5764
    %v5905 = vpop.f32.mrf.mxu0
    %v5906 = vadd.f32 0.0, %v5905
    %5907 = vmatmul.f32.gmra.mxu0 %v5767
    %v5908 = vpop.f32.mrf.mxu0
    %v5909 = vadd.f32 0.0, %v5908
    %5910 = vmatmul.f32.gmra.mxu0 %v5770
    %v5911 = vpop.f32.mrf.mxu0
    %v5912 = vadd.f32 0.0, %v5911
    %5913 = vmatmul.f32.gmra.mxu0 %v5773
    %v5914 = vpop.f32.mrf.mxu0
    %v5915 = vadd.f32 0.0, %v5914
    %5916 = vmatmul.f32.gmra.mxu0 %v5776
    %v5917 = vpop.f32.mrf.mxu0
    %v5918 = vadd.f32 0.0, %v5917
    %5919 = vmatmul.f32.gmra.mxu0 %v5779
    %v5920 = vpop.f32.mrf.mxu0
    %v5921 = vadd.f32 0.0, %v5920
    %5922 = vmatmul.f32.gmra.mxu0 %v5782
    %v5923 = vpop.f32.mrf.mxu0
    %v5924 = vadd.f32 0.0, %v5923
    %5925 = vmatmul.f32.gmra.mxu0 %v5785
    %v5926 = vpop.f32.mrf.mxu0
    %v5927 = vadd.f32 0.0, %v5926
    %5928 = vmatmul.f32.gmra.mxu0 %v5788
    %v5929 = vpop.f32.mrf.mxu0
    %v5930 = vadd.f32 0.0, %v5929
    %5931 = vmatmul.f32.gmra.mxu0 %v5791
    %v5932 = vpop.f32.mrf.mxu0
    %v5933 = vadd.f32 0.0, %v5932
    %5934 = vmatmul.f32.gmra.mxu0 %v5794
    %v5935 = vpop.f32.mrf.mxu0
    %v5936 = vadd.f32 0.0, %v5935
    %5937 = vmatmul.f32.gmra.mxu0 %v5797
    %v5938 = vpop.f32.mrf.mxu0
    %v5939 = vadd.f32 0.0, %v5938
    %5940 = vdwg.mxu0
    %v5942 = vsel %vm5744, %v5568, 0
    %v5945 = vsel %vm5744, %v5569, 0
    %v5948 = vsel %vm5744, %v5570, 0
    %v5951 = vsel %vm5744, %v5571, 0
    %v5954 = vsel %vm5744, %v5572, 0
    %v5957 = vsel %vm5744, %v5573, 0
    %v5960 = vsel %vm5744, %v5574, 0
    %v5963 = vsel %vm5744, %v5575, 0
    %v5966 = vsel %vm5744, %v5576, 0
    %v5969 = vsel %vm5744, %v5577, 0
    %v5972 = vsel %vm5744, %v5578, 0
    %v5975 = vsel %vm5744, %v5579, 0
    %v5978 = vsel %vm5744, %v5580, 0
    %v5981 = vsel %vm5744, %v5581, 0
    %v5984 = vsel %vm5744, %v5582, 0
    %v5987 = vsel %vm5744, %v5583, 0
    %v5990 = vsel %vm5744, %v5600, 0
    %v5993 = vsel %vm5744, %v5601, 0
    %5995 = vmatpush.msra.mxu0 0.0
    %5996 = vmatpush.msra.mxu0 0.0
    %5997 = vmatpush.msra.mxu0 0.0
    %5998 = vmatpush.msra.mxu0 0.0
    %5999 = vmatpush.msra.mxu0 0.0
    %6000 = vmatpush.msra.mxu0 0.0
    %6001 = vmatpush.msra.mxu0 0.0
    %6002 = vmatpush.msra.mxu0 0.0
    %6003 = vmatpush.msra.mxu0 0.0
    %6004 = vmatpush.msra.mxu0 0.0
    %6005 = vmatpush.msra.mxu0 0.0
    %6006 = vmatpush.msra.mxu0 0.0
    %6007 = vmatpush.msra.mxu0 0.0
    %6008 = vmatpush.msra.mxu0 0.0
    %6009 = vmatpush.msra.mxu0 0.0
    %6010 = vmatpush.msra.mxu0 %v929
    %6011 = vmatmul.f32.gmra.mxu0 %v5942
    %v6012 = vpop.f32.mrf.mxu0
    %v6013 = vadd.f32 0.0, %v6012
    %6014 = vmatmul.f32.gmra.mxu0 %v5945
    %v6015 = vpop.f32.mrf.mxu0
    %v6016 = vadd.f32 0.0, %v6015
    %6017 = vmatmul.f32.gmra.mxu0 %v5948
    %v6018 = vpop.f32.mrf.mxu0
    %v6019 = vadd.f32 0.0, %v6018
    %6020 = vmatmul.f32.gmra.mxu0 %v5951
    %v6021 = vpop.f32.mrf.mxu0
    %v6022 = vadd.f32 0.0, %v6021
    %6023 = vmatmul.f32.gmra.mxu0 %v5954
    %v6024 = vpop.f32.mrf.mxu0
    %v6025 = vadd.f32 0.0, %v6024
    %6026 = vmatmul.f32.gmra.mxu0 %v5957
    %v6027 = vpop.f32.mrf.mxu0
    %v6028 = vadd.f32 0.0, %v6027
    %6029 = vmatmul.f32.gmra.mxu0 %v5960
    %v6030 = vpop.f32.mrf.mxu0
    %v6031 = vadd.f32 0.0, %v6030
    %6032 = vmatmul.f32.gmra.mxu0 %v5963
    %v6033 = vpop.f32.mrf.mxu0
    %v6034 = vadd.f32 0.0, %v6033
    %6035 = vmatmul.f32.gmra.mxu0 %v5966
    %v6036 = vpop.f32.mrf.mxu0
    %v6037 = vadd.f32 0.0, %v6036
    %6038 = vmatmul.f32.gmra.mxu0 %v5969
    %v6039 = vpop.f32.mrf.mxu0
    %v6040 = vadd.f32 0.0, %v6039
    %6041 = vmatmul.f32.gmra.mxu0 %v5972
    %v6042 = vpop.f32.mrf.mxu0
    %v6043 = vadd.f32 0.0, %v6042
    %6044 = vmatmul.f32.gmra.mxu0 %v5975
    %v6045 = vpop.f32.mrf.mxu0
    %v6046 = vadd.f32 0.0, %v6045
    %6047 = vmatmul.f32.gmra.mxu0 %v5978
    %v6048 = vpop.f32.mrf.mxu0
    %v6049 = vadd.f32 0.0, %v6048
    %6050 = vmatmul.f32.gmra.mxu0 %v5981
    %v6051 = vpop.f32.mrf.mxu0
    %v6052 = vadd.f32 0.0, %v6051
    %6053 = vmatmul.f32.gmra.mxu0 %v5984
    %v6054 = vpop.f32.mrf.mxu0
    %v6055 = vadd.f32 0.0, %v6054
    %6056 = vmatmul.f32.gmra.mxu0 %v5987
    %v6057 = vpop.f32.mrf.mxu0
    %v6058 = vadd.f32 0.0, %v6057
    %6059 = vmatmul.f32.gmra.mxu0 %v5990
    %v6060 = vpop.f32.mrf.mxu0
    %v6061 = vadd.f32 0.0, %v6060
    %6062 = vmatmul.f32.gmra.mxu0 %v5993
    %v6063 = vpop.f32.mrf.mxu0
    %v6064 = vadd.f32 0.0, %v6063
    %6065 = vdwg.mxu0
    %6066 = vmatpush.msra.mxu0 0.0
    %6067 = vmatpush.msra.mxu0 0.0
    %6068 = vmatpush.msra.mxu0 0.0
    %6069 = vmatpush.msra.mxu0 0.0
    %6070 = vmatpush.msra.mxu0 0.0
    %6071 = vmatpush.msra.mxu0 0.0
    %6072 = vmatpush.msra.mxu0 0.0
    %6073 = vmatpush.msra.mxu0 0.0
    %6074 = vmatpush.msra.mxu0 0.0
    %6075 = vmatpush.msra.mxu0 0.0
    %6076 = vmatpush.msra.mxu0 0.0
    %6077 = vmatpush.msra.mxu0 0.0
    %6078 = vmatpush.msra.mxu0 0.0
    %6079 = vmatpush.msra.mxu0 0.0
    %6080 = vmatpush.msra.mxu0 0.0
    %6081 = vmatpush.msra.mxu0 %v5405
    %6082 = vmatmul.f32.gmra.mxu0 %v5942
    %v6083 = vpop.f32.mrf.mxu0
    %v6084 = vadd.f32 0.0, %v6083
    %6085 = vmatmul.f32.gmra.mxu0 %v5945
    %v6086 = vpop.f32.mrf.mxu0
    %v6087 = vadd.f32 0.0, %v6086
    %6088 = vmatmul.f32.gmra.mxu0 %v5948
    %v6089 = vpop.f32.mrf.mxu0
    %v6090 = vadd.f32 0.0, %v6089
    %6091 = vmatmul.f32.gmra.mxu0 %v5951
    %v6092 = vpop.f32.mrf.mxu0
    %v6093 = vadd.f32 0.0, %v6092
    %6094 = vmatmul.f32.gmra.mxu0 %v5954
    %v6095 = vpop.f32.mrf.mxu0
    %v6096 = vadd.f32 0.0, %v6095
    %6097 = vmatmul.f32.gmra.mxu0 %v5957
    %v6098 = vpop.f32.mrf.mxu0
    %v6099 = vadd.f32 0.0, %v6098
    %6100 = vmatmul.f32.gmra.mxu0 %v5960
    %v6101 = vpop.f32.mrf.mxu0
    %v6102 = vadd.f32 0.0, %v6101
    %6103 = vmatmul.f32.gmra.mxu0 %v5963
    %v6104 = vpop.f32.mrf.mxu0
    %v6105 = vadd.f32 0.0, %v6104
    %6106 = vmatmul.f32.gmra.mxu0 %v5966
    %v6107 = vpop.f32.mrf.mxu0
    %v6108 = vadd.f32 0.0, %v6107
    %6109 = vmatmul.f32.gmra.mxu0 %v5969
    %v6110 = vpop.f32.mrf.mxu0
    %v6111 = vadd.f32 0.0, %v6110
    %6112 = vmatmul.f32.gmra.mxu0 %v5972
    %v6113 = vpop.f32.mrf.mxu0
    %v6114 = vadd.f32 0.0, %v6113
    %6115 = vmatmul.f32.gmra.mxu0 %v5975
    %v6116 = vpop.f32.mrf.mxu0
    %v6117 = vadd.f32 0.0, %v6116
    %6118 = vmatmul.f32.gmra.mxu0 %v5978
    %v6119 = vpop.f32.mrf.mxu0
    %v6120 = vadd.f32 0.0, %v6119
    %6121 = vmatmul.f32.gmra.mxu0 %v5981
    %v6122 = vpop.f32.mrf.mxu0
    %v6123 = vadd.f32 0.0, %v6122
    %6124 = vmatmul.f32.gmra.mxu0 %v5984
    %v6125 = vpop.f32.mrf.mxu0
    %v6126 = vadd.f32 0.0, %v6125
    %6127 = vmatmul.f32.gmra.mxu0 %v5987
    %v6128 = vpop.f32.mrf.mxu0
    %v6129 = vadd.f32 0.0, %v6128
    %6130 = vmatmul.f32.gmra.mxu0 %v5990
    %v6131 = vpop.f32.mrf.mxu0
    %v6132 = vadd.f32 0.0, %v6131
    %6133 = vmatmul.f32.gmra.mxu0 %v5993
    %v6134 = vpop.f32.mrf.mxu0
    %v6135 = vadd.f32 0.0, %v6134
    %6136 = vdwg.mxu0
    %v6138 = vsel %vm5744, %v5632, 0
    %v6141 = vsel %vm5744, %v5633, 0
    %v6144 = vsel %vm5744, %v5634, 0
    %v6147 = vsel %vm5744, %v5635, 0
    %v6150 = vsel %vm5744, %v5636, 0
    %v6153 = vsel %vm5744, %v5637, 0
    %v6156 = vsel %vm5744, %v5638, 0
    %v6159 = vsel %vm5744, %v5639, 0
    %v6162 = vsel %vm5744, %v5640, 0
    %v6165 = vsel %vm5744, %v5641, 0
    %v6168 = vsel %vm5744, %v5642, 0
    %v6171 = vsel %vm5744, %v5643, 0
    %v6174 = vsel %vm5744, %v5644, 0
    %v6177 = vsel %vm5744, %v5645, 0
    %v6180 = vsel %vm5744, %v5646, 0
    %v6183 = vsel %vm5744, %v5647, 0
    %v6186 = vsel %vm5744, %v5664, 0
    %v6189 = vsel %vm5744, %v5665, 0
    %6191 = vmatpush.msra.mxu0 0.0
    %6192 = vmatpush.msra.mxu0 0.0
    %6193 = vmatpush.msra.mxu0 0.0
    %6194 = vmatpush.msra.mxu0 0.0
    %6195 = vmatpush.msra.mxu0 0.0
    %6196 = vmatpush.msra.mxu0 0.0
    %6197 = vmatpush.msra.mxu0 0.0
    %6198 = vmatpush.msra.mxu0 0.0
    %6199 = vmatpush.msra.mxu0 0.0
    %6200 = vmatpush.msra.mxu0 0.0
    %6201 = vmatpush.msra.mxu0 0.0
    %6202 = vmatpush.msra.mxu0 0.0
    %6203 = vmatpush.msra.mxu0 0.0
    %6204 = vmatpush.msra.mxu0 0.0
    %6205 = vmatpush.msra.mxu0 0.0
    %6206 = vmatpush.msra.mxu0 %v943
    %6207 = vmatmul.f32.gmra.mxu0 %v6138
    %v6208 = vpop.f32.mrf.mxu0
    %v6209 = vadd.f32 0.0, %v6208
    %6210 = vmatmul.f32.gmra.mxu0 %v6141
    %v6211 = vpop.f32.mrf.mxu0
    %v6212 = vadd.f32 0.0, %v6211
    %6213 = vmatmul.f32.gmra.mxu0 %v6144
    %v6214 = vpop.f32.mrf.mxu0
    %v6215 = vadd.f32 0.0, %v6214
    %6216 = vmatmul.f32.gmra.mxu0 %v6147
    %v6217 = vpop.f32.mrf.mxu0
    %v6218 = vadd.f32 0.0, %v6217
    %6219 = vmatmul.f32.gmra.mxu0 %v6150
    %v6220 = vpop.f32.mrf.mxu0
    %v6221 = vadd.f32 0.0, %v6220
    %6222 = vmatmul.f32.gmra.mxu0 %v6153
    %v6223 = vpop.f32.mrf.mxu0
    %v6224 = vadd.f32 0.0, %v6223
    %6225 = vmatmul.f32.gmra.mxu0 %v6156
    %v6226 = vpop.f32.mrf.mxu0
    %v6227 = vadd.f32 0.0, %v6226
    %6228 = vmatmul.f32.gmra.mxu0 %v6159
    %v6229 = vpop.f32.mrf.mxu0
    %v6230 = vadd.f32 0.0, %v6229
    %6231 = vmatmul.f32.gmra.mxu0 %v6162
    %v6232 = vpop.f32.mrf.mxu0
    %v6233 = vadd.f32 0.0, %v6232
    %6234 = vmatmul.f32.gmra.mxu0 %v6165
    %v6235 = vpop.f32.mrf.mxu0
    %v6236 = vadd.f32 0.0, %v6235
    %6237 = vmatmul.f32.gmra.mxu0 %v6168
    %v6238 = vpop.f32.mrf.mxu0
    %v6239 = vadd.f32 0.0, %v6238
    %6240 = vmatmul.f32.gmra.mxu0 %v6171
    %v6241 = vpop.f32.mrf.mxu0
    %v6242 = vadd.f32 0.0, %v6241
    %6243 = vmatmul.f32.gmra.mxu0 %v6174
    %v6244 = vpop.f32.mrf.mxu0
    %v6245 = vadd.f32 0.0, %v6244
    %6246 = vmatmul.f32.gmra.mxu0 %v6177
    %v6247 = vpop.f32.mrf.mxu0
    %v6248 = vadd.f32 0.0, %v6247
    %6249 = vmatmul.f32.gmra.mxu0 %v6180
    %v6250 = vpop.f32.mrf.mxu0
    %v6251 = vadd.f32 0.0, %v6250
    %6252 = vmatmul.f32.gmra.mxu0 %v6183
    %v6253 = vpop.f32.mrf.mxu0
    %v6254 = vadd.f32 0.0, %v6253
    %6255 = vmatmul.f32.gmra.mxu0 %v6186
    %v6256 = vpop.f32.mrf.mxu0
    %v6257 = vadd.f32 0.0, %v6256
    %6258 = vmatmul.f32.gmra.mxu0 %v6189
    %v6259 = vpop.f32.mrf.mxu0
    %v6260 = vadd.f32 0.0, %v6259
    %6261 = vdwg.mxu0
    %6262 = vmatpush.msra.mxu0 0.0
    %6263 = vmatpush.msra.mxu0 0.0
    %6264 = vmatpush.msra.mxu0 0.0
    %6265 = vmatpush.msra.mxu0 0.0
    %6266 = vmatpush.msra.mxu0 0.0
    %6267 = vmatpush.msra.mxu0 0.0
    %6268 = vmatpush.msra.mxu0 0.0
    %6269 = vmatpush.msra.mxu0 0.0
    %6270 = vmatpush.msra.mxu0 0.0
    %6271 = vmatpush.msra.mxu0 0.0
    %6272 = vmatpush.msra.mxu0 0.0
    %6273 = vmatpush.msra.mxu0 0.0
    %6274 = vmatpush.msra.mxu0 0.0
    %6275 = vmatpush.msra.mxu0 0.0
    %6276 = vmatpush.msra.mxu0 0.0
    %6277 = vmatpush.msra.mxu0 %v5406
    %6278 = vmatmul.f32.gmra.mxu0 %v6138
    %v6279 = vpop.f32.mrf.mxu0
    %v6280 = vadd.f32 0.0, %v6279
    %6281 = vmatmul.f32.gmra.mxu0 %v6141
    %v6282 = vpop.f32.mrf.mxu0
    %v6283 = vadd.f32 0.0, %v6282
    %6284 = vmatmul.f32.gmra.mxu0 %v6144
    %v6285 = vpop.f32.mrf.mxu0
    %v6286 = vadd.f32 0.0, %v6285
    %6287 = vmatmul.f32.gmra.mxu0 %v6147
    %v6288 = vpop.f32.mrf.mxu0
    %v6289 = vadd.f32 0.0, %v6288
    %6290 = vmatmul.f32.gmra.mxu0 %v6150
    %v6291 = vpop.f32.mrf.mxu0
    %v6292 = vadd.f32 0.0, %v6291
    %6293 = vmatmul.f32.gmra.mxu0 %v6153
    %v6294 = vpop.f32.mrf.mxu0
    %v6295 = vadd.f32 0.0, %v6294
    %6296 = vmatmul.f32.gmra.mxu0 %v6156
    %v6297 = vpop.f32.mrf.mxu0
    %v6298 = vadd.f32 0.0, %v6297
    %6299 = vmatmul.f32.gmra.mxu0 %v6159
    %v6300 = vpop.f32.mrf.mxu0
    %v6301 = vadd.f32 0.0, %v6300
    %6302 = vmatmul.f32.gmra.mxu0 %v6162
    %v6303 = vpop.f32.mrf.mxu0
    %v6304 = vadd.f32 0.0, %v6303
    %6305 = vmatmul.f32.gmra.mxu0 %v6165
    %v6306 = vpop.f32.mrf.mxu0
    %v6307 = vadd.f32 0.0, %v6306
    %6308 = vmatmul.f32.gmra.mxu0 %v6168
    %v6309 = vpop.f32.mrf.mxu0
    %v6310 = vadd.f32 0.0, %v6309
    %6311 = vmatmul.f32.gmra.mxu0 %v6171
    %v6312 = vpop.f32.mrf.mxu0
    %v6313 = vadd.f32 0.0, %v6312
    %6314 = vmatmul.f32.gmra.mxu0 %v6174
    %v6315 = vpop.f32.mrf.mxu0
    %v6316 = vadd.f32 0.0, %v6315
    %6317 = vmatmul.f32.gmra.mxu0 %v6177
    %v6318 = vpop.f32.mrf.mxu0
    %v6319 = vadd.f32 0.0, %v6318
    %6320 = vmatmul.f32.gmra.mxu0 %v6180
    %v6321 = vpop.f32.mrf.mxu0
    %v6322 = vadd.f32 0.0, %v6321
    %6323 = vmatmul.f32.gmra.mxu0 %v6183
    %v6324 = vpop.f32.mrf.mxu0
    %v6325 = vadd.f32 0.0, %v6324
    %6326 = vmatmul.f32.gmra.mxu0 %v6186
    %v6327 = vpop.f32.mrf.mxu0
    %v6328 = vadd.f32 0.0, %v6327
    %6329 = vmatmul.f32.gmra.mxu0 %v6189
    %v6330 = vpop.f32.mrf.mxu0
    %v6331 = vadd.f32 0.0, %v6330
    %6332 = vdwg.mxu0
    %v6334 = vsel %vm5744, %v5696, 0
    %v6337 = vsel %vm5744, %v5697, 0
    %v6340 = vsel %vm5744, %v5698, 0
    %v6343 = vsel %vm5744, %v5699, 0
    %v6346 = vsel %vm5744, %v5700, 0
    %v6349 = vsel %vm5744, %v5701, 0
    %v6352 = vsel %vm5744, %v5702, 0
    %v6355 = vsel %vm5744, %v5703, 0
    %v6358 = vsel %vm5744, %v5704, 0
    %v6361 = vsel %vm5744, %v5705, 0
    %v6364 = vsel %vm5744, %v5706, 0
    %v6367 = vsel %vm5744, %v5707, 0
    %v6370 = vsel %vm5744, %v5708, 0
    %v6373 = vsel %vm5744, %v5709, 0
    %v6376 = vsel %vm5744, %v5710, 0
    %v6379 = vsel %vm5744, %v5711, 0
    %v6382 = vsel %vm5744, %v5728, 0
    %v6385 = vsel %vm5744, %v5729, 0
    %6387 = vmatpush.msra.mxu0 0.0
    %6388 = vmatpush.msra.mxu0 0.0
    %6389 = vmatpush.msra.mxu0 0.0
    %6390 = vmatpush.msra.mxu0 0.0
    %6391 = vmatpush.msra.mxu0 0.0
    %6392 = vmatpush.msra.mxu0 0.0
    %6393 = vmatpush.msra.mxu0 0.0
    %6394 = vmatpush.msra.mxu0 0.0
    %6395 = vmatpush.msra.mxu0 0.0
    %6396 = vmatpush.msra.mxu0 0.0
    %6397 = vmatpush.msra.mxu0 0.0
    %6398 = vmatpush.msra.mxu0 0.0
    %6399 = vmatpush.msra.mxu0 0.0
    %6400 = vmatpush.msra.mxu0 0.0
    %6401 = vmatpush.msra.mxu0 0.0
    %6402 = vmatpush.msra.mxu0 %v945
    %6403 = vmatmul.f32.gmra.mxu0 %v6334
    %v6404 = vpop.f32.mrf.mxu0
    %v6405 = vadd.f32 0.0, %v6404
    %6406 = vmatmul.f32.gmra.mxu0 %v6337
    %v6407 = vpop.f32.mrf.mxu0
    %v6408 = vadd.f32 0.0, %v6407
    %6409 = vmatmul.f32.gmra.mxu0 %v6340
    %v6410 = vpop.f32.mrf.mxu0
    %v6411 = vadd.f32 0.0, %v6410
    %6412 = vmatmul.f32.gmra.mxu0 %v6343
    %v6413 = vpop.f32.mrf.mxu0
    %v6414 = vadd.f32 0.0, %v6413
    %6415 = vmatmul.f32.gmra.mxu0 %v6346
    %v6416 = vpop.f32.mrf.mxu0
    %v6417 = vadd.f32 0.0, %v6416
    %6418 = vmatmul.f32.gmra.mxu0 %v6349
    %v6419 = vpop.f32.mrf.mxu0
    %v6420 = vadd.f32 0.0, %v6419
    %6421 = vmatmul.f32.gmra.mxu0 %v6352
    %v6422 = vpop.f32.mrf.mxu0
    %v6423 = vadd.f32 0.0, %v6422
    %6424 = vmatmul.f32.gmra.mxu0 %v6355
    %v6425 = vpop.f32.mrf.mxu0
    %v6426 = vadd.f32 0.0, %v6425
    %6427 = vmatmul.f32.gmra.mxu0 %v6358
    %v6428 = vpop.f32.mrf.mxu0
    %v6429 = vadd.f32 0.0, %v6428
    %6430 = vmatmul.f32.gmra.mxu0 %v6361
    %v6431 = vpop.f32.mrf.mxu0
    %v6432 = vadd.f32 0.0, %v6431
    %6433 = vmatmul.f32.gmra.mxu0 %v6364
    %v6434 = vpop.f32.mrf.mxu0
    %v6435 = vadd.f32 0.0, %v6434
    %6436 = vmatmul.f32.gmra.mxu0 %v6367
    %v6437 = vpop.f32.mrf.mxu0
    %v6438 = vadd.f32 0.0, %v6437
    %6439 = vmatmul.f32.gmra.mxu0 %v6370
    %v6440 = vpop.f32.mrf.mxu0
    %v6441 = vadd.f32 0.0, %v6440
    %6442 = vmatmul.f32.gmra.mxu0 %v6373
    %v6443 = vpop.f32.mrf.mxu0
    %v6444 = vadd.f32 0.0, %v6443
    %6445 = vmatmul.f32.gmra.mxu0 %v6376
    %v6446 = vpop.f32.mrf.mxu0
    %v6447 = vadd.f32 0.0, %v6446
    %6448 = vmatmul.f32.gmra.mxu0 %v6379
    %v6449 = vpop.f32.mrf.mxu0
    %v6450 = vadd.f32 0.0, %v6449
    %6451 = vmatmul.f32.gmra.mxu0 %v6382
    %v6452 = vpop.f32.mrf.mxu0
    %v6453 = vadd.f32 0.0, %v6452
    %6454 = vmatmul.f32.gmra.mxu0 %v6385
    %v6455 = vpop.f32.mrf.mxu0
    %v6456 = vadd.f32 0.0, %v6455
    %6457 = vdwg.mxu0
    %6458 = vmatpush.msra.mxu0 0.0
    %6459 = vmatpush.msra.mxu0 0.0
    %6460 = vmatpush.msra.mxu0 0.0
    %6461 = vmatpush.msra.mxu0 0.0
    %6462 = vmatpush.msra.mxu0 0.0
    %6463 = vmatpush.msra.mxu0 0.0
    %6464 = vmatpush.msra.mxu0 0.0
    %6465 = vmatpush.msra.mxu0 0.0
    %6466 = vmatpush.msra.mxu0 0.0
    %6467 = vmatpush.msra.mxu0 0.0
    %6468 = vmatpush.msra.mxu0 0.0
    %6469 = vmatpush.msra.mxu0 0.0
    %6470 = vmatpush.msra.mxu0 0.0
    %6471 = vmatpush.msra.mxu0 0.0
    %6472 = vmatpush.msra.mxu0 0.0
    %6473 = vmatpush.msra.mxu0 %v5407
    %6474 = vmatmul.f32.gmra.mxu0 %v6334
    %v6475 = vpop.f32.mrf.mxu0
    %v6476 = vadd.f32 0.0, %v6475
    %6477 = vmatmul.f32.gmra.mxu0 %v6337
    %v6478 = vpop.f32.mrf.mxu0
    %v6479 = vadd.f32 0.0, %v6478
    %6480 = vmatmul.f32.gmra.mxu0 %v6340
    %v6481 = vpop.f32.mrf.mxu0
    %v6482 = vadd.f32 0.0, %v6481
    %6483 = vmatmul.f32.gmra.mxu0 %v6343
    %v6484 = vpop.f32.mrf.mxu0
    %v6485 = vadd.f32 0.0, %v6484
    %6486 = vmatmul.f32.gmra.mxu0 %v6346
    %v6487 = vpop.f32.mrf.mxu0
    %v6488 = vadd.f32 0.0, %v6487
    %6489 = vmatmul.f32.gmra.mxu0 %v6349
    %v6490 = vpop.f32.mrf.mxu0
    %v6491 = vadd.f32 0.0, %v6490
    %6492 = vmatmul.f32.gmra.mxu0 %v6352
    %v6493 = vpop.f32.mrf.mxu0
    %v6494 = vadd.f32 0.0, %v6493
    %6495 = vmatmul.f32.gmra.mxu0 %v6355
    %v6496 = vpop.f32.mrf.mxu0
    %v6497 = vadd.f32 0.0, %v6496
    %6498 = vmatmul.f32.gmra.mxu0 %v6358
    %v6499 = vpop.f32.mrf.mxu0
    %v6500 = vadd.f32 0.0, %v6499
    %6501 = vmatmul.f32.gmra.mxu0 %v6361
    %v6502 = vpop.f32.mrf.mxu0
    %v6503 = vadd.f32 0.0, %v6502
    %6504 = vmatmul.f32.gmra.mxu0 %v6364
    %v6505 = vpop.f32.mrf.mxu0
    %v6506 = vadd.f32 0.0, %v6505
    %6507 = vmatmul.f32.gmra.mxu0 %v6367
    %v6508 = vpop.f32.mrf.mxu0
    %v6509 = vadd.f32 0.0, %v6508
    %6510 = vmatmul.f32.gmra.mxu0 %v6370
    %v6511 = vpop.f32.mrf.mxu0
    %v6512 = vadd.f32 0.0, %v6511
    %6513 = vmatmul.f32.gmra.mxu0 %v6373
    %v6514 = vpop.f32.mrf.mxu0
    %v6515 = vadd.f32 0.0, %v6514
    %6516 = vmatmul.f32.gmra.mxu0 %v6376
    %v6517 = vpop.f32.mrf.mxu0
    %v6518 = vadd.f32 0.0, %v6517
    %6519 = vmatmul.f32.gmra.mxu0 %v6379
    %v6520 = vpop.f32.mrf.mxu0
    %v6521 = vadd.f32 0.0, %v6520
    %6522 = vmatmul.f32.gmra.mxu0 %v6382
    %v6523 = vpop.f32.mrf.mxu0
    %v6524 = vadd.f32 0.0, %v6523
    %6525 = vmatmul.f32.gmra.mxu0 %v6385
    %v6526 = vpop.f32.mrf.mxu0
    %v6527 = vadd.f32 0.0, %v6526
    %6528 = vdwg.mxu0
    %v6529 = vmul.f32 %v5817, 0.35355338
    %v6530 = vmul.f32 %v5888, 0.35355338
    %v6531 = vmul.f32 %v5820, 0.35355338
    %v6532 = vmul.f32 %v5891, 0.35355338
    %v6533 = vmul.f32 %v5823, 0.35355338
    %v6534 = vmul.f32 %v5894, 0.35355338
    %v6535 = vmul.f32 %v5826, 0.35355338
    %v6536 = vmul.f32 %v5897, 0.35355338
    %v6537 = vmul.f32 %v5829, 0.35355338
    %v6538 = vmul.f32 %v5900, 0.35355338
    %v6539 = vmul.f32 %v5832, 0.35355338
    %v6540 = vmul.f32 %v5903, 0.35355338
    %v6541 = vmul.f32 %v5835, 0.35355338
    %v6542 = vmul.f32 %v5906, 0.35355338
    %v6543 = vmul.f32 %v5838, 0.35355338
    %v6544 = vmul.f32 %v5909, 0.35355338
    %v6545 = vmul.f32 %v5841, 0.35355338
    %v6546 = vmul.f32 %v5912, 0.35355338
    %v6547 = vmul.f32 %v5844, 0.35355338
    %v6548 = vmul.f32 %v5915, 0.35355338
    %v6549 = vmul.f32 %v5847, 0.35355338
    %v6550 = vmul.f32 %v5918, 0.35355338
    %v6551 = vmul.f32 %v5850, 0.35355338
    %v6552 = vmul.f32 %v5921, 0.35355338
    %v6553 = vmul.f32 %v5853, 0.35355338
    %v6554 = vmul.f32 %v5924, 0.35355338
    %v6555 = vmul.f32 %v5856, 0.35355338
    %v6556 = vmul.f32 %v5927, 0.35355338
    %v6557 = vmul.f32 %v5859, 0.35355338
    %v6558 = vmul.f32 %v5930, 0.35355338
    %v6559 = vmul.f32 %v5862, 0.35355338
    %v6560 = vmul.f32 %v5933, 0.35355338
    %v6561 = vmul.f32 %v5865, 0.35355338
    %v6562 = vmul.f32 %v5936, 0.35355338
    %v6563 = vmul.f32 %v5868, 0.35355338
    %v6564 = vmul.f32 %v5939, 0.35355338
    %v6565 = vmul.f32 %v6013, 0.35355338
    %v6566 = vmul.f32 %v6084, 0.35355338
    %v6567 = vmul.f32 %v6016, 0.35355338
    %v6568 = vmul.f32 %v6087, 0.35355338
    %v6569 = vmul.f32 %v6019, 0.35355338
    %v6570 = vmul.f32 %v6090, 0.35355338
    %v6571 = vmul.f32 %v6022, 0.35355338
    %v6572 = vmul.f32 %v6093, 0.35355338
    %v6573 = vmul.f32 %v6025, 0.35355338
    %v6574 = vmul.f32 %v6096, 0.35355338
    %v6575 = vmul.f32 %v6028, 0.35355338
    %v6576 = vmul.f32 %v6099, 0.35355338
    %v6577 = vmul.f32 %v6031, 0.35355338
    %v6578 = vmul.f32 %v6102, 0.35355338
    %v6579 = vmul.f32 %v6034, 0.35355338
    %v6580 = vmul.f32 %v6105, 0.35355338
    %v6581 = vmul.f32 %v6037, 0.35355338
    %v6582 = vmul.f32 %v6108, 0.35355338
    %v6583 = vmul.f32 %v6040, 0.35355338
    %v6584 = vmul.f32 %v6111, 0.35355338
    %v6585 = vmul.f32 %v6043, 0.35355338
    %v6586 = vmul.f32 %v6114, 0.35355338
    %v6587 = vmul.f32 %v6046, 0.35355338
    %v6588 = vmul.f32 %v6117, 0.35355338
    %v6589 = vmul.f32 %v6049, 0.35355338
    %v6590 = vmul.f32 %v6120, 0.35355338
    %v6591 = vmul.f32 %v6052, 0.35355338
    %v6592 = vmul.f32 %v6123, 0.35355338
    %v6593 = vmul.f32 %v6055, 0.35355338
    %v6594 = vmul.f32 %v6126, 0.35355338
    %v6595 = vmul.f32 %v6058, 0.35355338
    %v6596 = vmul.f32 %v6129, 0.35355338
    %v6597 = vmul.f32 %v6061, 0.35355338
    %v6598 = vmul.f32 %v6132, 0.35355338
    %v6599 = vmul.f32 %v6064, 0.35355338
    %v6600 = vmul.f32 %v6135, 0.35355338
    %v6601 = vmul.f32 %v6209, 0.35355338
    %v6602 = vmul.f32 %v6280, 0.35355338
    %v6603 = vmul.f32 %v6212, 0.35355338
    %v6604 = vmul.f32 %v6283, 0.35355338
    %v6605 = vmul.f32 %v6215, 0.35355338
    %v6606 = vmul.f32 %v6286, 0.35355338
    %v6607 = vmul.f32 %v6218, 0.35355338
    %v6608 = vmul.f32 %v6289, 0.35355338
    %v6609 = vmul.f32 %v6221, 0.35355338
    %v6610 = vmul.f32 %v6292, 0.35355338
    %v6611 = vmul.f32 %v6224, 0.35355338
    %v6612 = vmul.f32 %v6295, 0.35355338
    %v6613 = vmul.f32 %v6227, 0.35355338
    %v6614 = vmul.f32 %v6298, 0.35355338
    %v6615 = vmul.f32 %v6230, 0.35355338
    %v6616 = vmul.f32 %v6301, 0.35355338
    %v6617 = vmul.f32 %v6233, 0.35355338
    %v6618 = vmul.f32 %v6304, 0.35355338
    %v6619 = vmul.f32 %v6236, 0.35355338
    %v6620 = vmul.f32 %v6307, 0.35355338
    %v6621 = vmul.f32 %v6239, 0.35355338
    %v6622 = vmul.f32 %v6310, 0.35355338
    %v6623 = vmul.f32 %v6242, 0.35355338
    %v6624 = vmul.f32 %v6313, 0.35355338
    %v6625 = vmul.f32 %v6245, 0.35355338
    %v6626 = vmul.f32 %v6316, 0.35355338
    %v6627 = vmul.f32 %v6248, 0.35355338
    %v6628 = vmul.f32 %v6319, 0.35355338
    %v6629 = vmul.f32 %v6251, 0.35355338
    %v6630 = vmul.f32 %v6322, 0.35355338
    %v6631 = vmul.f32 %v6254, 0.35355338
    %v6632 = vmul.f32 %v6325, 0.35355338
    %v6633 = vmul.f32 %v6257, 0.35355338
    %v6634 = vmul.f32 %v6328, 0.35355338
    %v6635 = vmul.f32 %v6260, 0.35355338
    %v6636 = vmul.f32 %v6331, 0.35355338
    %v6637 = vmul.f32 %v6405, 0.35355338
    %v6638 = vmul.f32 %v6476, 0.35355338
    %v6639 = vmul.f32 %v6408, 0.35355338
    %v6640 = vmul.f32 %v6479, 0.35355338
    %v6641 = vmul.f32 %v6411, 0.35355338
    %v6642 = vmul.f32 %v6482, 0.35355338
    %v6643 = vmul.f32 %v6414, 0.35355338
    %v6644 = vmul.f32 %v6485, 0.35355338
    %v6645 = vmul.f32 %v6417, 0.35355338
    %v6646 = vmul.f32 %v6488, 0.35355338
    %v6647 = vmul.f32 %v6420, 0.35355338
    %v6648 = vmul.f32 %v6491, 0.35355338
    %v6649 = vmul.f32 %v6423, 0.35355338
    %v6650 = vmul.f32 %v6494, 0.35355338
    %v6651 = vmul.f32 %v6426, 0.35355338
    %v6652 = vmul.f32 %v6497, 0.35355338
    %v6653 = vmul.f32 %v6429, 0.35355338
    %v6654 = vmul.f32 %v6500, 0.35355338
    %v6655 = vmul.f32 %v6432, 0.35355338
    %v6656 = vmul.f32 %v6503, 0.35355338
    %v6657 = vmul.f32 %v6435, 0.35355338
    %v6658 = vmul.f32 %v6506, 0.35355338
    %v6659 = vmul.f32 %v6438, 0.35355338
    %v6660 = vmul.f32 %v6509, 0.35355338
    %v6661 = vmul.f32 %v6441, 0.35355338
    %v6662 = vmul.f32 %v6512, 0.35355338
    %v6663 = vmul.f32 %v6444, 0.35355338
    %v6664 = vmul.f32 %v6515, 0.35355338
    %v6665 = vmul.f32 %v6447, 0.35355338
    %v6666 = vmul.f32 %v6518, 0.35355338
    %v6667 = vmul.f32 %v6450, 0.35355338
    %v6668 = vmul.f32 %v6521, 0.35355338
    %v6669 = vmul.f32 %v6453, 0.35355338
    %v6670 = vmul.f32 %v6524, 0.35355338
    %v6671 = vmul.f32 %v6456, 0.35355338
    %v6672 = vmul.f32 %v6527, 0.35355338
    %vm6673 = vcmask 556032
    %v6674 = vsel %vm6673, %v6530, -inf
    %v6675 = vmax.f32 %v6529, %v6674
    %6676 = vmax.xlane.f32.xlu0 %v6675
    %v6677 = vpop.xlane.xlu0 %6676
    %v6678 = vsel %vm6673, %v6532, -inf
    %v6679 = vmax.f32 %v6531, %v6678
    %6680 = vmax.xlane.f32.xlu0 %v6679
    %v6681 = vpop.xlane.xlu0 %6680
    %v6682 = vsel %vm6673, %v6534, -inf
    %v6683 = vmax.f32 %v6533, %v6682
    %6684 = vmax.xlane.f32.xlu0 %v6683
    %v6685 = vpop.xlane.xlu0 %6684
    %v6686 = vsel %vm6673, %v6536, -inf
    %v6687 = vmax.f32 %v6535, %v6686
    %6688 = vmax.xlane.f32.xlu0 %v6687
    %v6689 = vpop.xlane.xlu0 %6688
    %v6690 = vsel %vm6673, %v6538, -inf
    %v6691 = vmax.f32 %v6537, %v6690
    %6692 = vmax.xlane.f32.xlu0 %v6691
    %v6693 = vpop.xlane.xlu0 %6692
    %v6694 = vsel %vm6673, %v6540, -inf
    %v6695 = vmax.f32 %v6539, %v6694
    %6696 = vmax.xlane.f32.xlu0 %v6695
    %v6697 = vpop.xlane.xlu0 %6696
    %v6698 = vsel %vm6673, %v6542, -inf
    %v6699 = vmax.f32 %v6541, %v6698
    %6700 = vmax.xlane.f32.xlu0 %v6699
    %v6701 = vpop.xlane.xlu0 %6700
    %v6702 = vsel %vm6673, %v6544, -inf
    %v6703 = vmax.f32 %v6543, %v6702
    %6704 = vmax.xlane.f32.xlu0 %v6703
    %v6705 = vpop.xlane.xlu0 %6704
    %v6706 = vsel %vm6673, %v6546, -inf
    %v6707 = vmax.f32 %v6545, %v6706
    %6708 = vmax.xlane.f32.xlu0 %v6707
    %v6709 = vpop.xlane.xlu0 %6708
    %v6710 = vsel %vm6673, %v6548, -inf
    %v6711 = vmax.f32 %v6547, %v6710
    %6712 = vmax.xlane.f32.xlu0 %v6711
    %v6713 = vpop.xlane.xlu0 %6712
    %v6714 = vsel %vm6673, %v6550, -inf
    %v6715 = vmax.f32 %v6549, %v6714
    %6716 = vmax.xlane.f32.xlu0 %v6715
    %v6717 = vpop.xlane.xlu0 %6716
    %v6718 = vsel %vm6673, %v6552, -inf
    %v6719 = vmax.f32 %v6551, %v6718
    %6720 = vmax.xlane.f32.xlu0 %v6719
    %v6721 = vpop.xlane.xlu0 %6720
    %v6722 = vsel %vm6673, %v6554, -inf
    %v6723 = vmax.f32 %v6553, %v6722
    %6724 = vmax.xlane.f32.xlu0 %v6723
    %v6725 = vpop.xlane.xlu0 %6724
    %v6726 = vsel %vm6673, %v6556, -inf
    %v6727 = vmax.f32 %v6555, %v6726
    %6728 = vmax.xlane.f32.xlu0 %v6727
    %v6729 = vpop.xlane.xlu0 %6728
    %v6730 = vsel %vm6673, %v6558, -inf
    %v6731 = vmax.f32 %v6557, %v6730
    %6732 = vmax.xlane.f32.xlu0 %v6731
    %v6733 = vpop.xlane.xlu0 %6732
    %v6734 = vsel %vm6673, %v6560, -inf
    %v6735 = vmax.f32 %v6559, %v6734
    %6736 = vmax.xlane.f32.xlu0 %v6735
    %v6737 = vpop.xlane.xlu0 %6736
    %v6738 = vsel %vm6673, %v6562, -inf
    %v6739 = vmax.f32 %v6561, %v6738
    %6740 = vmax.xlane.f32.xlu0 %v6739
    %v6741 = vpop.xlane.xlu0 %6740
    %v6742 = vsel %vm6673, %v6564, -inf
    %v6743 = vmax.f32 %v6563, %v6742
    %6744 = vmax.xlane.f32.xlu0 %v6743
    %v6745 = vpop.xlane.xlu0 %6744
    %v6746 = vsel %vm6673, %v6566, -inf
    %v6747 = vmax.f32 %v6565, %v6746
    %6748 = vmax.xlane.f32.xlu0 %v6747
    %v6749 = vpop.xlane.xlu0 %6748
    %v6750 = vsel %vm6673, %v6568, -inf
    %v6751 = vmax.f32 %v6567, %v6750
    %6752 = vmax.xlane.f32.xlu0 %v6751
    %v6753 = vpop.xlane.xlu0 %6752
    %v6754 = vsel %vm6673, %v6570, -inf
    %v6755 = vmax.f32 %v6569, %v6754
    %6756 = vmax.xlane.f32.xlu0 %v6755
    %v6757 = vpop.xlane.xlu0 %6756
    %v6758 = vsel %vm6673, %v6572, -inf
    %v6759 = vmax.f32 %v6571, %v6758
    %6760 = vmax.xlane.f32.xlu0 %v6759
    %v6761 = vpop.xlane.xlu0 %6760
    %v6762 = vsel %vm6673, %v6574, -inf
    %v6763 = vmax.f32 %v6573, %v6762
    %6764 = vmax.xlane.f32.xlu0 %v6763
    %v6765 = vpop.xlane.xlu0 %6764
    %v6766 = vsel %vm6673, %v6576, -inf
    %v6767 = vmax.f32 %v6575, %v6766
    %6768 = vmax.xlane.f32.xlu0 %v6767
    %v6769 = vpop.xlane.xlu0 %6768
    %v6770 = vsel %vm6673, %v6578, -inf
    %v6771 = vmax.f32 %v6577, %v6770
    %6772 = vmax.xlane.f32.xlu0 %v6771
    %v6773 = vpop.xlane.xlu0 %6772
    %v6774 = vsel %vm6673, %v6580, -inf
    %v6775 = vmax.f32 %v6579, %v6774
    %6776 = vmax.xlane.f32.xlu0 %v6775
    %v6777 = vpop.xlane.xlu0 %6776
    %v6778 = vsel %vm6673, %v6582, -inf
    %v6779 = vmax.f32 %v6581, %v6778
    %6780 = vmax.xlane.f32.xlu0 %v6779
    %v6781 = vpop.xlane.xlu0 %6780
    %v6782 = vsel %vm6673, %v6584, -inf
    %v6783 = vmax.f32 %v6583, %v6782
    %6784 = vmax.xlane.f32.xlu0 %v6783
    %v6785 = vpop.xlane.xlu0 %6784
    %v6786 = vsel %vm6673, %v6586, -inf
    %v6787 = vmax.f32 %v6585, %v6786
    %6788 = vmax.xlane.f32.xlu0 %v6787
    %v6789 = vpop.xlane.xlu0 %6788
    %v6790 = vsel %vm6673, %v6588, -inf
    %v6791 = vmax.f32 %v6587, %v6790
    %6792 = vmax.xlane.f32.xlu0 %v6791
    %v6793 = vpop.xlane.xlu0 %6792
    %v6794 = vsel %vm6673, %v6590, -inf
    %v6795 = vmax.f32 %v6589, %v6794
    %6796 = vmax.xlane.f32.xlu0 %v6795
    %v6797 = vpop.xlane.xlu0 %6796
    %v6798 = vsel %vm6673, %v6592, -inf
    %v6799 = vmax.f32 %v6591, %v6798
    %6800 = vmax.xlane.f32.xlu0 %v6799
    %v6801 = vpop.xlane.xlu0 %6800
    %v6802 = vsel %vm6673, %v6594, -inf
    %v6803 = vmax.f32 %v6593, %v6802
    %6804 = vmax.xlane.f32.xlu0 %v6803
    %v6805 = vpop.xlane.xlu0 %6804
    %v6806 = vsel %vm6673, %v6596, -inf
    %v6807 = vmax.f32 %v6595, %v6806
    %6808 = vmax.xlane.f32.xlu0 %v6807
    %v6809 = vpop.xlane.xlu0 %6808
    %v6810 = vsel %vm6673, %v6598, -inf
    %v6811 = vmax.f32 %v6597, %v6810
    %6812 = vmax.xlane.f32.xlu0 %v6811
    %v6813 = vpop.xlane.xlu0 %6812
    %v6814 = vsel %vm6673, %v6600, -inf
    %v6815 = vmax.f32 %v6599, %v6814
    %6816 = vmax.xlane.f32.xlu0 %v6815
    %v6817 = vpop.xlane.xlu0 %6816
    %v6818 = vsel %vm6673, %v6602, -inf
    %v6819 = vmax.f32 %v6601, %v6818
    %6820 = vmax.xlane.f32.xlu0 %v6819
    %v6821 = vpop.xlane.xlu0 %6820
    %v6822 = vsel %vm6673, %v6604, -inf
    %v6823 = vmax.f32 %v6603, %v6822
    %6824 = vmax.xlane.f32.xlu0 %v6823
    %v6825 = vpop.xlane.xlu0 %6824
    %v6826 = vsel %vm6673, %v6606, -inf
    %v6827 = vmax.f32 %v6605, %v6826
    %6828 = vmax.xlane.f32.xlu0 %v6827
    %v6829 = vpop.xlane.xlu0 %6828
    %v6830 = vsel %vm6673, %v6608, -inf
    %v6831 = vmax.f32 %v6607, %v6830
    %6832 = vmax.xlane.f32.xlu0 %v6831
    %v6833 = vpop.xlane.xlu0 %6832
    %v6834 = vsel %vm6673, %v6610, -inf
    %v6835 = vmax.f32 %v6609, %v6834
    %6836 = vmax.xlane.f32.xlu0 %v6835
    %v6837 = vpop.xlane.xlu0 %6836
    %v6838 = vsel %vm6673, %v6612, -inf
    %v6839 = vmax.f32 %v6611, %v6838
    %6840 = vmax.xlane.f32.xlu0 %v6839
    %v6841 = vpop.xlane.xlu0 %6840
    %v6842 = vsel %vm6673, %v6614, -inf
    %v6843 = vmax.f32 %v6613, %v6842
    %6844 = vmax.xlane.f32.xlu0 %v6843
    %v6845 = vpop.xlane.xlu0 %6844
    %v6846 = vsel %vm6673, %v6616, -inf
    %v6847 = vmax.f32 %v6615, %v6846
    %6848 = vmax.xlane.f32.xlu0 %v6847
    %v6849 = vpop.xlane.xlu0 %6848
    %v6850 = vsel %vm6673, %v6618, -inf
    %v6851 = vmax.f32 %v6617, %v6850
    %6852 = vmax.xlane.f32.xlu0 %v6851
    %v6853 = vpop.xlane.xlu0 %6852
    %v6854 = vsel %vm6673, %v6620, -inf
    %v6855 = vmax.f32 %v6619, %v6854
    %6856 = vmax.xlane.f32.xlu0 %v6855
    %v6857 = vpop.xlane.xlu0 %6856
    %v6858 = vsel %vm6673, %v6622, -inf
    %v6859 = vmax.f32 %v6621, %v6858
    %6860 = vmax.xlane.f32.xlu0 %v6859
    %v6861 = vpop.xlane.xlu0 %6860
    %v6862 = vsel %vm6673, %v6624, -inf
    %v6863 = vmax.f32 %v6623, %v6862
    %6864 = vmax.xlane.f32.xlu0 %v6863
    %v6865 = vpop.xlane.xlu0 %6864
    %v6866 = vsel %vm6673, %v6626, -inf
    %v6867 = vmax.f32 %v6625, %v6866
    %6868 = vmax.xlane.f32.xlu0 %v6867
    %v6869 = vpop.xlane.xlu0 %6868
    %v6870 = vsel %vm6673, %v6628, -inf
    %v6871 = vmax.f32 %v6627, %v6870
    %6872 = vmax.xlane.f32.xlu0 %v6871
    %v6873 = vpop.xlane.xlu0 %6872
    %v6874 = vsel %vm6673, %v6630, -inf
    %v6875 = vmax.f32 %v6629, %v6874
    %6876 = vmax.xlane.f32.xlu0 %v6875
    %v6877 = vpop.xlane.xlu0 %6876
    %v6878 = vsel %vm6673, %v6632, -inf
    %v6879 = vmax.f32 %v6631, %v6878
    %6880 = vmax.xlane.f32.xlu0 %v6879
    %v6881 = vpop.xlane.xlu0 %6880
    %v6882 = vsel %vm6673, %v6634, -inf
    %v6883 = vmax.f32 %v6633, %v6882
    %6884 = vmax.xlane.f32.xlu0 %v6883
    %v6885 = vpop.xlane.xlu0 %6884
    %v6886 = vsel %vm6673, %v6636, -inf
    %v6887 = vmax.f32 %v6635, %v6886
    %6888 = vmax.xlane.f32.xlu0 %v6887
    %v6889 = vpop.xlane.xlu0 %6888
    %v6890 = vsel %vm6673, %v6638, -inf
    %v6891 = vmax.f32 %v6637, %v6890
    %6892 = vmax.xlane.f32.xlu0 %v6891
    %v6893 = vpop.xlane.xlu0 %6892
    %v6894 = vsel %vm6673, %v6640, -inf
    %v6895 = vmax.f32 %v6639, %v6894
    %6896 = vmax.xlane.f32.xlu0 %v6895
    %v6897 = vpop.xlane.xlu0 %6896
    %v6898 = vsel %vm6673, %v6642, -inf
    %v6899 = vmax.f32 %v6641, %v6898
    %6900 = vmax.xlane.f32.xlu0 %v6899
    %v6901 = vpop.xlane.xlu0 %6900
    %v6902 = vsel %vm6673, %v6644, -inf
    %v6903 = vmax.f32 %v6643, %v6902
    %6904 = vmax.xlane.f32.xlu0 %v6903
    %v6905 = vpop.xlane.xlu0 %6904
    %v6906 = vsel %vm6673, %v6646, -inf
    %v6907 = vmax.f32 %v6645, %v6906
    %6908 = vmax.xlane.f32.xlu0 %v6907
    %v6909 = vpop.xlane.xlu0 %6908
    %v6910 = vsel %vm6673, %v6648, -inf
    %v6911 = vmax.f32 %v6647, %v6910
    %6912 = vmax.xlane.f32.xlu0 %v6911
    %v6913 = vpop.xlane.xlu0 %6912
    %v6914 = vsel %vm6673, %v6650, -inf
    %v6915 = vmax.f32 %v6649, %v6914
    %6916 = vmax.xlane.f32.xlu0 %v6915
    %v6917 = vpop.xlane.xlu0 %6916
    %v6918 = vsel %vm6673, %v6652, -inf
    %v6919 = vmax.f32 %v6651, %v6918
    %6920 = vmax.xlane.f32.xlu0 %v6919
    %v6921 = vpop.xlane.xlu0 %6920
    %v6922 = vsel %vm6673, %v6654, -inf
    %v6923 = vmax.f32 %v6653, %v6922
    %6924 = vmax.xlane.f32.xlu0 %v6923
    %v6925 = vpop.xlane.xlu0 %6924
    %v6926 = vsel %vm6673, %v6656, -inf
    %v6927 = vmax.f32 %v6655, %v6926
    %6928 = vmax.xlane.f32.xlu0 %v6927
    %v6929 = vpop.xlane.xlu0 %6928
    %v6930 = vsel %vm6673, %v6658, -inf
    %v6931 = vmax.f32 %v6657, %v6930
    %6932 = vmax.xlane.f32.xlu0 %v6931
    %v6933 = vpop.xlane.xlu0 %6932
    %v6934 = vsel %vm6673, %v6660, -inf
    %v6935 = vmax.f32 %v6659, %v6934
    %6936 = vmax.xlane.f32.xlu0 %v6935
    %v6937 = vpop.xlane.xlu0 %6936
    %v6938 = vsel %vm6673, %v6662, -inf
    %v6939 = vmax.f32 %v6661, %v6938
    %6940 = vmax.xlane.f32.xlu0 %v6939
    %v6941 = vpop.xlane.xlu0 %6940
    %v6942 = vsel %vm6673, %v6664, -inf
    %v6943 = vmax.f32 %v6663, %v6942
    %6944 = vmax.xlane.f32.xlu0 %v6943
    %v6945 = vpop.xlane.xlu0 %6944
    %v6946 = vsel %vm6673, %v6666, -inf
    %v6947 = vmax.f32 %v6665, %v6946
    %6948 = vmax.xlane.f32.xlu0 %v6947
    %v6949 = vpop.xlane.xlu0 %6948
    %v6950 = vsel %vm6673, %v6668, -inf
    %v6951 = vmax.f32 %v6667, %v6950
    %6952 = vmax.xlane.f32.xlu0 %v6951
    %v6953 = vpop.xlane.xlu0 %6952
    %v6954 = vsel %vm6673, %v6670, -inf
    %v6955 = vmax.f32 %v6669, %v6954
    %6956 = vmax.xlane.f32.xlu0 %v6955
    %v6957 = vpop.xlane.xlu0 %6956
    %v6958 = vsel %vm6673, %v6672, -inf
    %v6959 = vmax.f32 %v6671, %v6958
    %6960 = vmax.xlane.f32.xlu0 %v6959
    %v6961 = vpop.xlane.xlu0 %6960
    %v6962 = vsub.f32 %v6529, %v6677
    %v6963 = vsub.f32 %v6530, %v6677
    %v6964 = vsub.f32 %v6531, %v6681
    %v6965 = vsub.f32 %v6532, %v6681
    %v6966 = vsub.f32 %v6533, %v6685
    %v6967 = vsub.f32 %v6534, %v6685
    %v6968 = vsub.f32 %v6535, %v6689
    %v6969 = vsub.f32 %v6536, %v6689
    %v6970 = vsub.f32 %v6537, %v6693
    %v6971 = vsub.f32 %v6538, %v6693
    %v6972 = vsub.f32 %v6539, %v6697
    %v6973 = vsub.f32 %v6540, %v6697
    %v6974 = vsub.f32 %v6541, %v6701
    %v6975 = vsub.f32 %v6542, %v6701
    %v6976 = vsub.f32 %v6543, %v6705
    %v6977 = vsub.f32 %v6544, %v6705
    %v6978 = vsub.f32 %v6545, %v6709
    %v6979 = vsub.f32 %v6546, %v6709
    %v6980 = vsub.f32 %v6547, %v6713
    %v6981 = vsub.f32 %v6548, %v6713
    %v6982 = vsub.f32 %v6549, %v6717
    %v6983 = vsub.f32 %v6550, %v6717
    %v6984 = vsub.f32 %v6551, %v6721
    %v6985 = vsub.f32 %v6552, %v6721
    %v6986 = vsub.f32 %v6553, %v6725
    %v6987 = vsub.f32 %v6554, %v6725
    %v6988 = vsub.f32 %v6555, %v6729
    %v6989 = vsub.f32 %v6556, %v6729
    %v6990 = vsub.f32 %v6557, %v6733
    %v6991 = vsub.f32 %v6558, %v6733
    %v6992 = vsub.f32 %v6559, %v6737
    %v6993 = vsub.f32 %v6560, %v6737
    %v6994 = vsub.f32 %v6561, %v6741
    %v6995 = vsub.f32 %v6562, %v6741
    %v6996 = vsub.f32 %v6563, %v6745
    %v6997 = vsub.f32 %v6564, %v6745
    %v6998 = vsub.f32 %v6565, %v6749
    %v6999 = vsub.f32 %v6566, %v6749
    %v7000 = vsub.f32 %v6567, %v6753
    %v7001 = vsub.f32 %v6568, %v6753
    %v7002 = vsub.f32 %v6569, %v6757
    %v7003 = vsub.f32 %v6570, %v6757
    %v7004 = vsub.f32 %v6571, %v6761
    %v7005 = vsub.f32 %v6572, %v6761
    %v7006 = vsub.f32 %v6573, %v6765
    %v7007 = vsub.f32 %v6574, %v6765
    %v7008 = vsub.f32 %v6575, %v6769
    %v7009 = vsub.f32 %v6576, %v6769
    %v7010 = vsub.f32 %v6577, %v6773
    %v7011 = vsub.f32 %v6578, %v6773
    %v7012 = vsub.f32 %v6579, %v6777
    %v7013 = vsub.f32 %v6580, %v6777
    %v7014 = vsub.f32 %v6581, %v6781
    %v7015 = vsub.f32 %v6582, %v6781
    %v7016 = vsub.f32 %v6583, %v6785
    %v7017 = vsub.f32 %v6584, %v6785
    %v7018 = vsub.f32 %v6585, %v6789
    %v7019 = vsub.f32 %v6586, %v6789
    %v7020 = vsub.f32 %v6587, %v6793
    %v7021 = vsub.f32 %v6588, %v6793
    %v7022 = vsub.f32 %v6589, %v6797
    %v7023 = vsub.f32 %v6590, %v6797
    %v7024 = vsub.f32 %v6591, %v6801
    %v7025 = vsub.f32 %v6592, %v6801
    %v7026 = vsub.f32 %v6593, %v6805
    %v7027 = vsub.f32 %v6594, %v6805
    %v7028 = vsub.f32 %v6595, %v6809
    %v7029 = vsub.f32 %v6596, %v6809
    %v7030 = vsub.f32 %v6597, %v6813
    %v7031 = vsub.f32 %v6598, %v6813
    %v7032 = vsub.f32 %v6599, %v6817
    %v7033 = vsub.f32 %v6600, %v6817
    %v7034 = vsub.f32 %v6601, %v6821
    %v7035 = vsub.f32 %v6602, %v6821
    %v7036 = vsub.f32 %v6603, %v6825
    %v7037 = vsub.f32 %v6604, %v6825
    %v7038 = vsub.f32 %v6605, %v6829
    %v7039 = vsub.f32 %v6606, %v6829
    %v7040 = vsub.f32 %v6607, %v6833
    %v7041 = vsub.f32 %v6608, %v6833
    %v7042 = vsub.f32 %v6609, %v6837
    %v7043 = vsub.f32 %v6610, %v6837
    %v7044 = vsub.f32 %v6611, %v6841
    %v7045 = vsub.f32 %v6612, %v6841
    %v7046 = vsub.f32 %v6613, %v6845
    %v7047 = vsub.f32 %v6614, %v6845
    %v7048 = vsub.f32 %v6615, %v6849
    %v7049 = vsub.f32 %v6616, %v6849
    %v7050 = vsub.f32 %v6617, %v6853
    %v7051 = vsub.f32 %v6618, %v6853
    %v7052 = vsub.f32 %v6619, %v6857
    %v7053 = vsub.f32 %v6620, %v6857
    %v7054 = vsub.f32 %v6621, %v6861
    %v7055 = vsub.f32 %v6622, %v6861
    %v7056 = vsub.f32 %v6623, %v6865
    %v7057 = vsub.f32 %v6624, %v6865
    %v7058 = vsub.f32 %v6625, %v6869
    %v7059 = vsub.f32 %v6626, %v6869
    %v7060 = vsub.f32 %v6627, %v6873
    %v7061 = vsub.f32 %v6628, %v6873
    %v7062 = vsub.f32 %v6629, %v6877
    %v7063 = vsub.f32 %v6630, %v6877
    %v7064 = vsub.f32 %v6631, %v6881
    %v7065 = vsub.f32 %v6632, %v6881
    %v7066 = vsub.f32 %v6633, %v6885
    %v7067 = vsub.f32 %v6634, %v6885
    %v7068 = vsub.f32 %v6635, %v6889
    %v7069 = vsub.f32 %v6636, %v6889
    %v7070 = vsub.f32 %v6637, %v6893
    %v7071 = vsub.f32 %v6638, %v6893
    %v7072 = vsub.f32 %v6639, %v6897
    %v7073 = vsub.f32 %v6640, %v6897
    %v7074 = vsub.f32 %v6641, %v6901
    %v7075 = vsub.f32 %v6642, %v6901
    %v7076 = vsub.f32 %v6643, %v6905
    %v7077 = vsub.f32 %v6644, %v6905
    %v7078 = vsub.f32 %v6645, %v6909
    %v7079 = vsub.f32 %v6646, %v6909
    %v7080 = vsub.f32 %v6647, %v6913
    %v7081 = vsub.f32 %v6648, %v6913
    %v7082 = vsub.f32 %v6649, %v6917
    %v7083 = vsub.f32 %v6650, %v6917
    %v7084 = vsub.f32 %v6651, %v6921
    %v7085 = vsub.f32 %v6652, %v6921
    %v7086 = vsub.f32 %v6653, %v6925
    %v7087 = vsub.f32 %v6654, %v6925
    %v7088 = vsub.f32 %v6655, %v6929
    %v7089 = vsub.f32 %v6656, %v6929
    %v7090 = vsub.f32 %v6657, %v6933
    %v7091 = vsub.f32 %v6658, %v6933
    %v7092 = vsub.f32 %v6659, %v6937
    %v7093 = vsub.f32 %v6660, %v6937
    %v7094 = vsub.f32 %v6661, %v6941
    %v7095 = vsub.f32 %v6662, %v6941
    %v7096 = vsub.f32 %v6663, %v6945
    %v7097 = vsub.f32 %v6664, %v6945
    %v7098 = vsub.f32 %v6665, %v6949
    %v7099 = vsub.f32 %v6666, %v6949
    %v7100 = vsub.f32 %v6667, %v6953
    %v7101 = vsub.f32 %v6668, %v6953
    %v7102 = vsub.f32 %v6669, %v6957
    %v7103 = vsub.f32 %v6670, %v6957
    %v7104 = vsub.f32 %v6671, %v6961
    %v7105 = vsub.f32 %v6672, %v6961
    %v7106 = vmul.f32 %v6962, 1.442695
    %v7107 = vpow.pop %v7106
    %v7108 = vmul.f32 %v6963, 1.442695
    %v7109 = vpow.pop %v7108
    %v7110 = vmul.f32 %v6964, 1.442695
    %v7111 = vpow.pop %v7110
    %v7112 = vmul.f32 %v6965, 1.442695
    %v7113 = vpow.pop %v7112
    %v7114 = vmul.f32 %v6966, 1.442695
    %v7115 = vpow.pop %v7114
    %v7116 = vmul.f32 %v6967, 1.442695
    %v7117 = vpow.pop %v7116
    %v7118 = vmul.f32 %v6968, 1.442695
    %v7119 = vpow.pop %v7118
    %v7120 = vmul.f32 %v6969, 1.442695
    %v7121 = vpow.pop %v7120
    %v7122 = vmul.f32 %v6970, 1.442695
    %v7123 = vpow.pop %v7122
    %v7124 = vmul.f32 %v6971, 1.442695
    %v7125 = vpow.pop %v7124
    %v7126 = vmul.f32 %v6972, 1.442695
    %v7127 = vpow.pop %v7126
    %v7128 = vmul.f32 %v6973, 1.442695
    %v7129 = vpow.pop %v7128
    %v7130 = vmul.f32 %v6974, 1.442695
    %v7131 = vpow.pop %v7130
    %v7132 = vmul.f32 %v6975, 1.442695
    %v7133 = vpow.pop %v7132
    %v7134 = vmul.f32 %v6976, 1.442695
    %v7135 = vpow.pop %v7134
    %v7136 = vmul.f32 %v6977, 1.442695
    %v7137 = vpow.pop %v7136
    %v7138 = vmul.f32 %v6978, 1.442695
    %v7139 = vpow.pop %v7138
    %v7140 = vmul.f32 %v6979, 1.442695
    %v7141 = vpow.pop %v7140
    %v7142 = vmul.f32 %v6980, 1.442695
    %v7143 = vpow.pop %v7142
    %v7144 = vmul.f32 %v6981, 1.442695
    %v7145 = vpow.pop %v7144
    %v7146 = vmul.f32 %v6982, 1.442695
    %v7147 = vpow.pop %v7146
    %v7148 = vmul.f32 %v6983, 1.442695
    %v7149 = vpow.pop %v7148
    %v7150 = vmul.f32 %v6984, 1.442695
    %v7151 = vpow.pop %v7150
    %v7152 = vmul.f32 %v6985, 1.442695
    %v7153 = vpow.pop %v7152
    %v7154 = vmul.f32 %v6986, 1.442695
    %v7155 = vpow.pop %v7154
    %v7156 = vmul.f32 %v6987, 1.442695
    %v7157 = vpow.pop %v7156
    %v7158 = vmul.f32 %v6988, 1.442695
    %v7159 = vpow.pop %v7158
    %v7160 = vmul.f32 %v6989, 1.442695
    %v7161 = vpow.pop %v7160
    %v7162 = vmul.f32 %v6990, 1.442695
    %v7163 = vpow.pop %v7162
    %v7164 = vmul.f32 %v6991, 1.442695
    %v7165 = vpow.pop %v7164
    %v7166 = vmul.f32 %v6992, 1.442695
    %v7167 = vpow.pop %v7166
    %v7168 = vmul.f32 %v6993, 1.442695
    %v7169 = vpow.pop %v7168
    %v7170 = vmul.f32 %v6994, 1.442695
    %v7171 = vpow.pop %v7170
    %v7172 = vmul.f32 %v6995, 1.442695
    %v7173 = vpow.pop %v7172
    %v7174 = vmul.f32 %v6996, 1.442695
    %v7175 = vpow.pop %v7174
    %v7176 = vmul.f32 %v6997, 1.442695
    %v7177 = vpow.pop %v7176
    %v7178 = vmul.f32 %v6998, 1.442695
    %v7179 = vpow.pop %v7178
    %v7180 = vmul.f32 %v6999, 1.442695
    %v7181 = vpow.pop %v7180
    %v7182 = vmul.f32 %v7000, 1.442695
    %v7183 = vpow.pop %v7182
    %v7184 = vmul.f32 %v7001, 1.442695
    %v7185 = vpow.pop %v7184
    %v7186 = vmul.f32 %v7002, 1.442695
    %v7187 = vpow.pop %v7186
    %v7188 = vmul.f32 %v7003, 1.442695
    %v7189 = vpow.pop %v7188
    %v7190 = vmul.f32 %v7004, 1.442695
    %v7191 = vpow.pop %v7190
    %v7192 = vmul.f32 %v7005, 1.442695
    %v7193 = vpow.pop %v7192
    %v7194 = vmul.f32 %v7006, 1.442695
    %v7195 = vpow.pop %v7194
    %v7196 = vmul.f32 %v7007, 1.442695
    %v7197 = vpow.pop %v7196
    %v7198 = vmul.f32 %v7008, 1.442695
    %v7199 = vpow.pop %v7198
    %v7200 = vmul.f32 %v7009, 1.442695
    %v7201 = vpow.pop %v7200
    %v7202 = vmul.f32 %v7010, 1.442695
    %v7203 = vpow.pop %v7202
    %v7204 = vmul.f32 %v7011, 1.442695
    %v7205 = vpow.pop %v7204
    %v7206 = vmul.f32 %v7012, 1.442695
    %v7207 = vpow.pop %v7206
    %v7208 = vmul.f32 %v7013, 1.442695
    %v7209 = vpow.pop %v7208
    %v7210 = vmul.f32 %v7014, 1.442695
    %v7211 = vpow.pop %v7210
    %v7212 = vmul.f32 %v7015, 1.442695
    %v7213 = vpow.pop %v7212
    %v7214 = vmul.f32 %v7016, 1.442695
    %v7215 = vpow.pop %v7214
    %v7216 = vmul.f32 %v7017, 1.442695
    %v7217 = vpow.pop %v7216
    %v7218 = vmul.f32 %v7018, 1.442695
    %v7219 = vpow.pop %v7218
    %v7220 = vmul.f32 %v7019, 1.442695
    %v7221 = vpow.pop %v7220
    %v7222 = vmul.f32 %v7020, 1.442695
    %v7223 = vpow.pop %v7222
    %v7224 = vmul.f32 %v7021, 1.442695
    %v7225 = vpow.pop %v7224
    %v7226 = vmul.f32 %v7022, 1.442695
    %v7227 = vpow.pop %v7226
    %v7228 = vmul.f32 %v7023, 1.442695
    %v7229 = vpow.pop %v7228
    %v7230 = vmul.f32 %v7024, 1.442695
    %v7231 = vpow.pop %v7230
    %v7232 = vmul.f32 %v7025, 1.442695
    %v7233 = vpow.pop %v7232
    %v7234 = vmul.f32 %v7026, 1.442695
    %v7235 = vpow.pop %v7234
    %v7236 = vmul.f32 %v7027, 1.442695
    %v7237 = vpow.pop %v7236
    %v7238 = vmul.f32 %v7028, 1.442695
    %v7239 = vpow.pop %v7238
    %v7240 = vmul.f32 %v7029, 1.442695
    %v7241 = vpow.pop %v7240
    %v7242 = vmul.f32 %v7030, 1.442695
    %v7243 = vpow.pop %v7242
    %v7244 = vmul.f32 %v7031, 1.442695
    %v7245 = vpow.pop %v7244
    %v7246 = vmul.f32 %v7032, 1.442695
    %v7247 = vpow.pop %v7246
    %v7248 = vmul.f32 %v7033, 1.442695
    %v7249 = vpow.pop %v7248
    %v7250 = vmul.f32 %v7034, 1.442695
    %v7251 = vpow.pop %v7250
    %v7252 = vmul.f32 %v7035, 1.442695
    %v7253 = vpow.pop %v7252
    %v7254 = vmul.f32 %v7036, 1.442695
    %v7255 = vpow.pop %v7254
    %v7256 = vmul.f32 %v7037, 1.442695
    %v7257 = vpow.pop %v7256
    %v7258 = vmul.f32 %v7038, 1.442695
    %v7259 = vpow.pop %v7258
    %v7260 = vmul.f32 %v7039, 1.442695
    %v7261 = vpow.pop %v7260
    %v7262 = vmul.f32 %v7040, 1.442695
    %v7263 = vpow.pop %v7262
    %v7264 = vmul.f32 %v7041, 1.442695
    %v7265 = vpow.pop %v7264
    %v7266 = vmul.f32 %v7042, 1.442695
    %v7267 = vpow.pop %v7266
    %v7268 = vmul.f32 %v7043, 1.442695
    %v7269 = vpow.pop %v7268
    %v7270 = vmul.f32 %v7044, 1.442695
    %v7271 = vpow.pop %v7270
    %v7272 = vmul.f32 %v7045, 1.442695
    %v7273 = vpow.pop %v7272
    %v7274 = vmul.f32 %v7046, 1.442695
    %v7275 = vpow.pop %v7274
    %v7276 = vmul.f32 %v7047, 1.442695
    %v7277 = vpow.pop %v7276
    %v7278 = vmul.f32 %v7048, 1.442695
    %v7279 = vpow.pop %v7278
    %v7280 = vmul.f32 %v7049, 1.442695
    %v7281 = vpow.pop %v7280
    %v7282 = vmul.f32 %v7050, 1.442695
    %v7283 = vpow.pop %v7282
    %v7284 = vmul.f32 %v7051, 1.442695
    %v7285 = vpow.pop %v7284
    %v7286 = vmul.f32 %v7052, 1.442695
    %v7287 = vpow.pop %v7286
    %v7288 = vmul.f32 %v7053, 1.442695
    %v7289 = vpow.pop %v7288
    %v7290 = vmul.f32 %v7054, 1.442695
    %v7291 = vpow.pop %v7290
    %v7292 = vmul.f32 %v7055, 1.442695
    %v7293 = vpow.pop %v7292
    %v7294 = vmul.f32 %v7056, 1.442695
    %v7295 = vpow.pop %v7294
    %v7296 = vmul.f32 %v7057, 1.442695
    %v7297 = vpow.pop %v7296
    %v7298 = vmul.f32 %v7058, 1.442695
    %v7299 = vpow.pop %v7298
    %v7300 = vmul.f32 %v7059, 1.442695
    %v7301 = vpow.pop %v7300
    %v7302 = vmul.f32 %v7060, 1.442695
    %v7303 = vpow.pop %v7302
    %v7304 = vmul.f32 %v7061, 1.442695
    %v7305 = vpow.pop %v7304
    %v7306 = vmul.f32 %v7062, 1.442695
    %v7307 = vpow.pop %v7306
    %v7308 = vmul.f32 %v7063, 1.442695
    %v7309 = vpow.pop %v7308
    %v7310 = vmul.f32 %v7064, 1.442695
    %v7311 = vpow.pop %v7310
    %v7312 = vmul.f32 %v7065, 1.442695
    %v7313 = vpow.pop %v7312
    %v7314 = vmul.f32 %v7066, 1.442695
    %v7315 = vpow.pop %v7314
    %v7316 = vmul.f32 %v7067, 1.442695
    %v7317 = vpow.pop %v7316
    %v7318 = vmul.f32 %v7068, 1.442695
    %v7319 = vpow.pop %v7318
    %v7320 = vmul.f32 %v7069, 1.442695
    %v7321 = vpow.pop %v7320
    %v7322 = vmul.f32 %v7070, 1.442695
    %v7323 = vpow.pop %v7322
    %v7324 = vmul.f32 %v7071, 1.442695
    %v7325 = vpow.pop %v7324
    %v7326 = vmul.f32 %v7072, 1.442695
    %v7327 = vpow.pop %v7326
    %v7328 = vmul.f32 %v7073, 1.442695
    %v7329 = vpow.pop %v7328
    %v7330 = vmul.f32 %v7074, 1.442695
    %v7331 = vpow.pop %v7330
    %v7332 = vmul.f32 %v7075, 1.442695
    %v7333 = vpow.pop %v7332
    %v7334 = vmul.f32 %v7076, 1.442695
    %v7335 = vpow.pop %v7334
    %v7336 = vmul.f32 %v7077, 1.442695
    %v7337 = vpow.pop %v7336
    %v7338 = vmul.f32 %v7078, 1.442695
    %v7339 = vpow.pop %v7338
    %v7340 = vmul.f32 %v7079, 1.442695
    %v7341 = vpow.pop %v7340
    %v7342 = vmul.f32 %v7080, 1.442695
    %v7343 = vpow.pop %v7342
    %v7344 = vmul.f32 %v7081, 1.442695
    %v7345 = vpow.pop %v7344
    %v7346 = vmul.f32 %v7082, 1.442695
    %v7347 = vpow.pop %v7346
    %v7348 = vmul.f32 %v7083, 1.442695
    %v7349 = vpow.pop %v7348
    %v7350 = vmul.f32 %v7084, 1.442695
    %v7351 = vpow.pop %v7350
    %v7352 = vmul.f32 %v7085, 1.442695
    %v7353 = vpow.pop %v7352
    %v7354 = vmul.f32 %v7086, 1.442695
    %v7355 = vpow.pop %v7354
    %v7356 = vmul.f32 %v7087, 1.442695
    %v7357 = vpow.pop %v7356
    %v7358 = vmul.f32 %v7088, 1.442695
    %v7359 = vpow.pop %v7358
    %v7360 = vmul.f32 %v7089, 1.442695
    %v7361 = vpow.pop %v7360
    %v7362 = vmul.f32 %v7090, 1.442695
    %v7363 = vpow.pop %v7362
    %v7364 = vmul.f32 %v7091, 1.442695
    %v7365 = vpow.pop %v7364
    %v7366 = vmul.f32 %v7092, 1.442695
    %v7367 = vpow.pop %v7366
    %v7368 = vmul.f32 %v7093, 1.442695
    %v7369 = vpow.pop %v7368
    %v7370 = vmul.f32 %v7094, 1.442695
    %v7371 = vpow.pop %v7370
    %v7372 = vmul.f32 %v7095, 1.442695
    %v7373 = vpow.pop %v7372
    %v7374 = vmul.f32 %v7096, 1.442695
    %v7375 = vpow.pop %v7374
    %v7376 = vmul.f32 %v7097, 1.442695
    %v7377 = vpow.pop %v7376
    %v7378 = vmul.f32 %v7098, 1.442695
    %v7379 = vpow.pop %v7378
    %v7380 = vmul.f32 %v7099, 1.442695
    %v7381 = vpow.pop %v7380
    %v7382 = vmul.f32 %v7100, 1.442695
    %v7383 = vpow.pop %v7382
    %v7384 = vmul.f32 %v7101, 1.442695
    %v7385 = vpow.pop %v7384
    %v7386 = vmul.f32 %v7102, 1.442695
    %v7387 = vpow.pop %v7386
    %v7388 = vmul.f32 %v7103, 1.442695
    %v7389 = vpow.pop %v7388
    %v7390 = vmul.f32 %v7104, 1.442695
    %v7391 = vpow.pop %v7390
    %v7392 = vmul.f32 %v7105, 1.442695
    %v7393 = vpow.pop %v7392
    %v7394 = vsel %vm6673, %v7109, 0.0
    %v7395 = vadd.f32 %v7107, %v7394
    %7396 = vadd.xlane.f32.xlu0 %v7395
    %v7397 = vpop.xlane.xlu0 %7396
    %v7398 = vsel %vm6673, %v7113, 0.0
    %v7399 = vadd.f32 %v7111, %v7398
    %7400 = vadd.xlane.f32.xlu0 %v7399
    %v7401 = vpop.xlane.xlu0 %7400
    %v7402 = vsel %vm6673, %v7117, 0.0
    %v7403 = vadd.f32 %v7115, %v7402
    %7404 = vadd.xlane.f32.xlu0 %v7403
    %v7405 = vpop.xlane.xlu0 %7404
    %v7406 = vsel %vm6673, %v7121, 0.0
    %v7407 = vadd.f32 %v7119, %v7406
    %7408 = vadd.xlane.f32.xlu0 %v7407
    %v7409 = vpop.xlane.xlu0 %7408
    %v7410 = vsel %vm6673, %v7125, 0.0
    %v7411 = vadd.f32 %v7123, %v7410
    %7412 = vadd.xlane.f32.xlu0 %v7411
    %v7413 = vpop.xlane.xlu0 %7412
    %v7414 = vsel %vm6673, %v7129, 0.0
    %v7415 = vadd.f32 %v7127, %v7414
    %7416 = vadd.xlane.f32.xlu0 %v7415
    %v7417 = vpop.xlane.xlu0 %7416
    %v7418 = vsel %vm6673, %v7133, 0.0
    %v7419 = vadd.f32 %v7131, %v7418
    %7420 = vadd.xlane.f32.xlu0 %v7419
    %v7421 = vpop.xlane.xlu0 %7420
    %v7422 = vsel %vm6673, %v7137, 0.0
    %v7423 = vadd.f32 %v7135, %v7422
    %7424 = vadd.xlane.f32.xlu0 %v7423
    %v7425 = vpop.xlane.xlu0 %7424
    %v7426 = vsel %vm6673, %v7141, 0.0
    %v7427 = vadd.f32 %v7139, %v7426
    %7428 = vadd.xlane.f32.xlu0 %v7427
    %v7429 = vpop.xlane.xlu0 %7428
    %v7430 = vsel %vm6673, %v7145, 0.0
    %v7431 = vadd.f32 %v7143, %v7430
    %7432 = vadd.xlane.f32.xlu0 %v7431
    %v7433 = vpop.xlane.xlu0 %7432
    %v7434 = vsel %vm6673, %v7149, 0.0
    %v7435 = vadd.f32 %v7147, %v7434
    %7436 = vadd.xlane.f32.xlu0 %v7435
    %v7437 = vpop.xlane.xlu0 %7436
    %v7438 = vsel %vm6673, %v7153, 0.0
    %v7439 = vadd.f32 %v7151, %v7438
    %7440 = vadd.xlane.f32.xlu0 %v7439
    %v7441 = vpop.xlane.xlu0 %7440
    %v7442 = vsel %vm6673, %v7157, 0.0
    %v7443 = vadd.f32 %v7155, %v7442
    %7444 = vadd.xlane.f32.xlu0 %v7443
    %v7445 = vpop.xlane.xlu0 %7444
    %v7446 = vsel %vm6673, %v7161, 0.0
    %v7447 = vadd.f32 %v7159, %v7446
    %7448 = vadd.xlane.f32.xlu0 %v7447
    %v7449 = vpop.xlane.xlu0 %7448
    %v7450 = vsel %vm6673, %v7165, 0.0
    %v7451 = vadd.f32 %v7163, %v7450
    %7452 = vadd.xlane.f32.xlu0 %v7451
    %v7453 = vpop.xlane.xlu0 %7452
    %v7454 = vsel %vm6673, %v7169, 0.0
    %v7455 = vadd.f32 %v7167, %v7454
    %7456 = vadd.xlane.f32.xlu0 %v7455
    %v7457 = vpop.xlane.xlu0 %7456
    %v7458 = vsel %vm6673, %v7173, 0.0
    %v7459 = vadd.f32 %v7171, %v7458
    %7460 = vadd.xlane.f32.xlu0 %v7459
    %v7461 = vpop.xlane.xlu0 %7460
    %v7462 = vsel %vm6673, %v7177, 0.0
    %v7463 = vadd.f32 %v7175, %v7462
    %7464 = vadd.xlane.f32.xlu0 %v7463
    %v7465 = vpop.xlane.xlu0 %7464
    %v7466 = vsel %vm6673, %v7181, 0.0
    %v7467 = vadd.f32 %v7179, %v7466
    %7468 = vadd.xlane.f32.xlu0 %v7467
    %v7469 = vpop.xlane.xlu0 %7468
    %v7470 = vsel %vm6673, %v7185, 0.0
    %v7471 = vadd.f32 %v7183, %v7470
    %7472 = vadd.xlane.f32.xlu0 %v7471
    %v7473 = vpop.xlane.xlu0 %7472
    %v7474 = vsel %vm6673, %v7189, 0.0
    %v7475 = vadd.f32 %v7187, %v7474
    %7476 = vadd.xlane.f32.xlu0 %v7475
    %v7477 = vpop.xlane.xlu0 %7476
    %v7478 = vsel %vm6673, %v7193, 0.0
    %v7479 = vadd.f32 %v7191, %v7478
    %7480 = vadd.xlane.f32.xlu0 %v7479
    %v7481 = vpop.xlane.xlu0 %7480
    %v7482 = vsel %vm6673, %v7197, 0.0
    %v7483 = vadd.f32 %v7195, %v7482
    %7484 = vadd.xlane.f32.xlu0 %v7483
    %v7485 = vpop.xlane.xlu0 %7484
    %v7486 = vsel %vm6673, %v7201, 0.0
    %v7487 = vadd.f32 %v7199, %v7486
    %7488 = vadd.xlane.f32.xlu0 %v7487
    %v7489 = vpop.xlane.xlu0 %7488
    %v7490 = vsel %vm6673, %v7205, 0.0
    %v7491 = vadd.f32 %v7203, %v7490
    %7492 = vadd.xlane.f32.xlu0 %v7491
    %v7493 = vpop.xlane.xlu0 %7492
    %v7494 = vsel %vm6673, %v7209, 0.0
    %v7495 = vadd.f32 %v7207, %v7494
    %7496 = vadd.xlane.f32.xlu0 %v7495
    %v7497 = vpop.xlane.xlu0 %7496
    %v7498 = vsel %vm6673, %v7213, 0.0
    %v7499 = vadd.f32 %v7211, %v7498
    %7500 = vadd.xlane.f32.xlu0 %v7499
    %v7501 = vpop.xlane.xlu0 %7500
    %v7502 = vsel %vm6673, %v7217, 0.0
    %v7503 = vadd.f32 %v7215, %v7502
    %7504 = vadd.xlane.f32.xlu0 %v7503
    %v7505 = vpop.xlane.xlu0 %7504
    %v7506 = vsel %vm6673, %v7221, 0.0
    %v7507 = vadd.f32 %v7219, %v7506
    %7508 = vadd.xlane.f32.xlu0 %v7507
    %v7509 = vpop.xlane.xlu0 %7508
    %v7510 = vsel %vm6673, %v7225, 0.0
    %v7511 = vadd.f32 %v7223, %v7510
    %7512 = vadd.xlane.f32.xlu0 %v7511
    %v7513 = vpop.xlane.xlu0 %7512
    %v7514 = vsel %vm6673, %v7229, 0.0
    %v7515 = vadd.f32 %v7227, %v7514
    %7516 = vadd.xlane.f32.xlu0 %v7515
    %v7517 = vpop.xlane.xlu0 %7516
    %v7518 = vsel %vm6673, %v7233, 0.0
    %v7519 = vadd.f32 %v7231, %v7518
    %7520 = vadd.xlane.f32.xlu0 %v7519
    %v7521 = vpop.xlane.xlu0 %7520
    %v7522 = vsel %vm6673, %v7237, 0.0
    %v7523 = vadd.f32 %v7235, %v7522
    %7524 = vadd.xlane.f32.xlu0 %v7523
    %v7525 = vpop.xlane.xlu0 %7524
    %v7526 = vsel %vm6673, %v7241, 0.0
    %v7527 = vadd.f32 %v7239, %v7526
    %7528 = vadd.xlane.f32.xlu0 %v7527
    %v7529 = vpop.xlane.xlu0 %7528
    %v7530 = vsel %vm6673, %v7245, 0.0
    %v7531 = vadd.f32 %v7243, %v7530
    %7532 = vadd.xlane.f32.xlu0 %v7531
    %v7533 = vpop.xlane.xlu0 %7532
    %v7534 = vsel %vm6673, %v7249, 0.0
    %v7535 = vadd.f32 %v7247, %v7534
    %7536 = vadd.xlane.f32.xlu0 %v7535
    %v7537 = vpop.xlane.xlu0 %7536
    %v7538 = vsel %vm6673, %v7253, 0.0
    %v7539 = vadd.f32 %v7251, %v7538
    %7540 = vadd.xlane.f32.xlu0 %v7539
    %v7541 = vpop.xlane.xlu0 %7540
    %v7542 = vsel %vm6673, %v7257, 0.0
    %v7543 = vadd.f32 %v7255, %v7542
    %7544 = vadd.xlane.f32.xlu0 %v7543
    %v7545 = vpop.xlane.xlu0 %7544
    %v7546 = vsel %vm6673, %v7261, 0.0
    %v7547 = vadd.f32 %v7259, %v7546
    %7548 = vadd.xlane.f32.xlu0 %v7547
    %v7549 = vpop.xlane.xlu0 %7548
    %v7550 = vsel %vm6673, %v7265, 0.0
    %v7551 = vadd.f32 %v7263, %v7550
    %7552 = vadd.xlane.f32.xlu0 %v7551
    %v7553 = vpop.xlane.xlu0 %7552
    %v7554 = vsel %vm6673, %v7269, 0.0
    %v7555 = vadd.f32 %v7267, %v7554
    %7556 = vadd.xlane.f32.xlu0 %v7555
    %v7557 = vpop.xlane.xlu0 %7556
    %v7558 = vsel %vm6673, %v7273, 0.0
    %v7559 = vadd.f32 %v7271, %v7558
    %7560 = vadd.xlane.f32.xlu0 %v7559
    %v7561 = vpop.xlane.xlu0 %7560
    %v7562 = vsel %vm6673, %v7277, 0.0
    %v7563 = vadd.f32 %v7275, %v7562
    %7564 = vadd.xlane.f32.xlu0 %v7563
    %v7565 = vpop.xlane.xlu0 %7564
    %v7566 = vsel %vm6673, %v7281, 0.0
    %v7567 = vadd.f32 %v7279, %v7566
    %7568 = vadd.xlane.f32.xlu0 %v7567
    %v7569 = vpop.xlane.xlu0 %7568
    %v7570 = vsel %vm6673, %v7285, 0.0
    %v7571 = vadd.f32 %v7283, %v7570
    %7572 = vadd.xlane.f32.xlu0 %v7571
    %v7573 = vpop.xlane.xlu0 %7572
    %v7574 = vsel %vm6673, %v7289, 0.0
    %v7575 = vadd.f32 %v7287, %v7574
    %7576 = vadd.xlane.f32.xlu0 %v7575
    %v7577 = vpop.xlane.xlu0 %7576
    %v7578 = vsel %vm6673, %v7293, 0.0
    %v7579 = vadd.f32 %v7291, %v7578
    %7580 = vadd.xlane.f32.xlu0 %v7579
    %v7581 = vpop.xlane.xlu0 %7580
    %v7582 = vsel %vm6673, %v7297, 0.0
    %v7583 = vadd.f32 %v7295, %v7582
    %7584 = vadd.xlane.f32.xlu0 %v7583
    %v7585 = vpop.xlane.xlu0 %7584
    %v7586 = vsel %vm6673, %v7301, 0.0
    %v7587 = vadd.f32 %v7299, %v7586
    %7588 = vadd.xlane.f32.xlu0 %v7587
    %v7589 = vpop.xlane.xlu0 %7588
    %v7590 = vsel %vm6673, %v7305, 0.0
    %v7591 = vadd.f32 %v7303, %v7590
    %7592 = vadd.xlane.f32.xlu0 %v7591
    %v7593 = vpop.xlane.xlu0 %7592
    %v7594 = vsel %vm6673, %v7309, 0.0
    %v7595 = vadd.f32 %v7307, %v7594
    %7596 = vadd.xlane.f32.xlu0 %v7595
    %v7597 = vpop.xlane.xlu0 %7596
    %v7598 = vsel %vm6673, %v7313, 0.0
    %v7599 = vadd.f32 %v7311, %v7598
    %7600 = vadd.xlane.f32.xlu0 %v7599
    %v7601 = vpop.xlane.xlu0 %7600
    %v7602 = vsel %vm6673, %v7317, 0.0
    %v7603 = vadd.f32 %v7315, %v7602
    %7604 = vadd.xlane.f32.xlu0 %v7603
    %v7605 = vpop.xlane.xlu0 %7604
    %v7606 = vsel %vm6673, %v7321, 0.0
    %v7607 = vadd.f32 %v7319, %v7606
    %7608 = vadd.xlane.f32.xlu0 %v7607
    %v7609 = vpop.xlane.xlu0 %7608
    %v7610 = vsel %vm6673, %v7325, 0.0
    %v7611 = vadd.f32 %v7323, %v7610
    %7612 = vadd.xlane.f32.xlu0 %v7611
    %v7613 = vpop.xlane.xlu0 %7612
    %v7614 = vsel %vm6673, %v7329, 0.0
    %v7615 = vadd.f32 %v7327, %v7614
    %7616 = vadd.xlane.f32.xlu0 %v7615
    %v7617 = vpop.xlane.xlu0 %7616
    %v7618 = vsel %vm6673, %v7333, 0.0
    %v7619 = vadd.f32 %v7331, %v7618
    %7620 = vadd.xlane.f32.xlu0 %v7619
    %v7621 = vpop.xlane.xlu0 %7620
    %v7622 = vsel %vm6673, %v7337, 0.0
    %v7623 = vadd.f32 %v7335, %v7622
    %7624 = vadd.xlane.f32.xlu0 %v7623
    %v7625 = vpop.xlane.xlu0 %7624
    %v7626 = vsel %vm6673, %v7341, 0.0
    %v7627 = vadd.f32 %v7339, %v7626
    %7628 = vadd.xlane.f32.xlu0 %v7627
    %v7629 = vpop.xlane.xlu0 %7628
    %v7630 = vsel %vm6673, %v7345, 0.0
    %v7631 = vadd.f32 %v7343, %v7630
    %7632 = vadd.xlane.f32.xlu0 %v7631
    %v7633 = vpop.xlane.xlu0 %7632
    %v7634 = vsel %vm6673, %v7349, 0.0
    %v7635 = vadd.f32 %v7347, %v7634
    %7636 = vadd.xlane.f32.xlu0 %v7635
    %v7637 = vpop.xlane.xlu0 %7636
    %v7638 = vsel %vm6673, %v7353, 0.0
    %v7639 = vadd.f32 %v7351, %v7638
    %7640 = vadd.xlane.f32.xlu0 %v7639
    %v7641 = vpop.xlane.xlu0 %7640
    %v7642 = vsel %vm6673, %v7357, 0.0
    %v7643 = vadd.f32 %v7355, %v7642
    %7644 = vadd.xlane.f32.xlu0 %v7643
    %v7645 = vpop.xlane.xlu0 %7644
    %v7646 = vsel %vm6673, %v7361, 0.0
    %v7647 = vadd.f32 %v7359, %v7646
    %7648 = vadd.xlane.f32.xlu0 %v7647
    %v7649 = vpop.xlane.xlu0 %7648
    %v7650 = vsel %vm6673, %v7365, 0.0
    %v7651 = vadd.f32 %v7363, %v7650
    %7652 = vadd.xlane.f32.xlu0 %v7651
    %v7653 = vpop.xlane.xlu0 %7652
    %v7654 = vsel %vm6673, %v7369, 0.0
    %v7655 = vadd.f32 %v7367, %v7654
    %7656 = vadd.xlane.f32.xlu0 %v7655
    %v7657 = vpop.xlane.xlu0 %7656
    %v7658 = vsel %vm6673, %v7373, 0.0
    %v7659 = vadd.f32 %v7371, %v7658
    %7660 = vadd.xlane.f32.xlu0 %v7659
    %v7661 = vpop.xlane.xlu0 %7660
    %v7662 = vsel %vm6673, %v7377, 0.0
    %v7663 = vadd.f32 %v7375, %v7662
    %7664 = vadd.xlane.f32.xlu0 %v7663
    %v7665 = vpop.xlane.xlu0 %7664
    %v7666 = vsel %vm6673, %v7381, 0.0
    %v7667 = vadd.f32 %v7379, %v7666
    %7668 = vadd.xlane.f32.xlu0 %v7667
    %v7669 = vpop.xlane.xlu0 %7668
    %v7670 = vsel %vm6673, %v7385, 0.0
    %v7671 = vadd.f32 %v7383, %v7670
    %7672 = vadd.xlane.f32.xlu0 %v7671
    %v7673 = vpop.xlane.xlu0 %7672
    %v7674 = vsel %vm6673, %v7389, 0.0
    %v7675 = vadd.f32 %v7387, %v7674
    %7676 = vadd.xlane.f32.xlu0 %v7675
    %v7677 = vpop.xlane.xlu0 %7676
    %v7678 = vsel %vm6673, %v7393, 0.0
    %v7679 = vadd.f32 %v7391, %v7678
    %7680 = vadd.xlane.f32.xlu0 %v7679
    %v7681 = vpop.xlane.xlu0 %7680
    %v7682 = vrcp.pop %v7397
    %v7683 = vrcp.pop %v7401
    %v7684 = vrcp.pop %v7405
    %v7685 = vrcp.pop %v7409
    %v7686 = vrcp.pop %v7413
    %v7687 = vrcp.pop %v7417
    %v7688 = vrcp.pop %v7421
    %v7689 = vrcp.pop %v7425
    %v7690 = vrcp.pop %v7429
    %v7691 = vrcp.pop %v7433
    %v7692 = vrcp.pop %v7437
    %v7693 = vrcp.pop %v7441
    %v7694 = vrcp.pop %v7445
    %v7695 = vrcp.pop %v7449
    %v7696 = vrcp.pop %v7453
    %v7697 = vrcp.pop %v7457
    %v7698 = vrcp.pop %v7461
    %v7699 = vrcp.pop %v7465
    %v7700 = vrcp.pop %v7469
    %v7701 = vrcp.pop %v7473
    %v7702 = vrcp.pop %v7477
    %v7703 = vrcp.pop %v7481
    %v7704 = vrcp.pop %v7485
    %v7705 = vrcp.pop %v7489
    %v7706 = vrcp.pop %v7493
    %v7707 = vrcp.pop %v7497
    %v7708 = vrcp.pop %v7501
    %v7709 = vrcp.pop %v7505
    %v7710 = vrcp.pop %v7509
    %v7711 = vrcp.pop %v7513
    %v7712 = vrcp.pop %v7517
    %v7713 = vrcp.pop %v7521
    %v7714 = vrcp.pop %v7525
    %v7715 = vrcp.pop %v7529
    %v7716 = vrcp.pop %v7533
    %v7717 = vrcp.pop %v7537
    %v7718 = vrcp.pop %v7541
    %v7719 = vrcp.pop %v7545
    %v7720 = vrcp.pop %v7549
    %v7721 = vrcp.pop %v7553
    %v7722 = vrcp.pop %v7557
    %v7723 = vrcp.pop %v7561
    %v7724 = vrcp.pop %v7565
    %v7725 = vrcp.pop %v7569
    %v7726 = vrcp.pop %v7573
    %v7727 = vrcp.pop %v7577
    %v7728 = vrcp.pop %v7581
    %v7729 = vrcp.pop %v7585
    %v7730 = vrcp.pop %v7589
    %v7731 = vrcp.pop %v7593
    %v7732 = vrcp.pop %v7597
    %v7733 = vrcp.pop %v7601
    %v7734 = vrcp.pop %v7605
    %v7735 = vrcp.pop %v7609
    %v7736 = vrcp.pop %v7613
    %v7737 = vrcp.pop %v7617
    %v7738 = vrcp.pop %v7621
    %v7739 = vrcp.pop %v7625
    %v7740 = vrcp.pop %v7629
    %v7741 = vrcp.pop %v7633
    %v7742 = vrcp.pop %v7637
    %v7743 = vrcp.pop %v7641
    %v7744 = vrcp.pop %v7645
    %v7745 = vrcp.pop %v7649
    %v7746 = vrcp.pop %v7653
    %v7747 = vrcp.pop %v7657
    %v7748 = vrcp.pop %v7661
    %v7749 = vrcp.pop %v7665
    %v7750 = vrcp.pop %v7669
    %v7751 = vrcp.pop %v7673
    %v7752 = vrcp.pop %v7677
    %v7753 = vrcp.pop %v7681
    %v7754 = vmul.f32 %v7107, %v7682
    %v7755 = vmul.f32 %v7109, %v7682
    %v7756 = vmul.f32 %v7111, %v7683
    %v7757 = vmul.f32 %v7113, %v7683
    %v7758 = vmul.f32 %v7115, %v7684
    %v7759 = vmul.f32 %v7117, %v7684
    %v7760 = vmul.f32 %v7119, %v7685
    %v7761 = vmul.f32 %v7121, %v7685
    %v7762 = vmul.f32 %v7123, %v7686
    %v7763 = vmul.f32 %v7125, %v7686
    %v7764 = vmul.f32 %v7127, %v7687
    %v7765 = vmul.f32 %v7129, %v7687
    %v7766 = vmul.f32 %v7131, %v7688
    %v7767 = vmul.f32 %v7133, %v7688
    %v7768 = vmul.f32 %v7135, %v7689
    %v7769 = vmul.f32 %v7137, %v7689
    %v7770 = vmul.f32 %v7139, %v7690
    %v7771 = vmul.f32 %v7141, %v7690
    %v7772 = vmul.f32 %v7143, %v7691
    %v7773 = vmul.f32 %v7145, %v7691
    %v7774 = vmul.f32 %v7147, %v7692
    %v7775 = vmul.f32 %v7149, %v7692
    %v7776 = vmul.f32 %v7151, %v7693
    %v7777 = vmul.f32 %v7153, %v7693
    %v7778 = vmul.f32 %v7155, %v7694
    %v7779 = vmul.f32 %v7157, %v7694
    %v7780 = vmul.f32 %v7159, %v7695
    %v7781 = vmul.f32 %v7161, %v7695
    %v7782 = vmul.f32 %v7163, %v7696
    %v7783 = vmul.f32 %v7165, %v7696
    %v7784 = vmul.f32 %v7167, %v7697
    %v7785 = vmul.f32 %v7169, %v7697
    %v7786 = vmul.f32 %v7171, %v7698
    %v7787 = vmul.f32 %v7173, %v7698
    %v7788 = vmul.f32 %v7175, %v7699
    %v7789 = vmul.f32 %v7177, %v7699
    %v7790 = vmul.f32 %v7179, %v7700
    %v7791 = vmul.f32 %v7181, %v7700
    %v7792 = vmul.f32 %v7183, %v7701
    %v7793 = vmul.f32 %v7185, %v7701
    %v7794 = vmul.f32 %v7187, %v7702
    %v7795 = vmul.f32 %v7189, %v7702
    %v7796 = vmul.f32 %v7191, %v7703
    %v7797 = vmul.f32 %v7193, %v7703
    %v7798 = vmul.f32 %v7195, %v7704
    %v7799 = vmul.f32 %v7197, %v7704
    %v7800 = vmul.f32 %v7199, %v7705
    %v7801 = vmul.f32 %v7201, %v7705
    %v7802 = vmul.f32 %v7203, %v7706
    %v7803 = vmul.f32 %v7205, %v7706
    %v7804 = vmul.f32 %v7207, %v7707
    %v7805 = vmul.f32 %v7209, %v7707
    %v7806 = vmul.f32 %v7211, %v7708
    %v7807 = vmul.f32 %v7213, %v7708
    %v7808 = vmul.f32 %v7215, %v7709
    %v7809 = vmul.f32 %v7217, %v7709
    %v7810 = vmul.f32 %v7219, %v7710
    %v7811 = vmul.f32 %v7221, %v7710
    %v7812 = vmul.f32 %v7223, %v7711
    %v7813 = vmul.f32 %v7225, %v7711
    %v7814 = vmul.f32 %v7227, %v7712
    %v7815 = vmul.f32 %v7229, %v7712
    %v7816 = vmul.f32 %v7231, %v7713
    %v7817 = vmul.f32 %v7233, %v7713
    %v7818 = vmul.f32 %v7235, %v7714
    %v7819 = vmul.f32 %v7237, %v7714
    %v7820 = vmul.f32 %v7239, %v7715
    %v7821 = vmul.f32 %v7241, %v7715
    %v7822 = vmul.f32 %v7243, %v7716
    %v7823 = vmul.f32 %v7245, %v7716
    %v7824 = vmul.f32 %v7247, %v7717
    %v7825 = vmul.f32 %v7249, %v7717
    %v7826 = vmul.f32 %v7251, %v7718
    %v7827 = vmul.f32 %v7253, %v7718
    %v7828 = vmul.f32 %v7255, %v7719
    %v7829 = vmul.f32 %v7257, %v7719
    %v7830 = vmul.f32 %v7259, %v7720
    %v7831 = vmul.f32 %v7261, %v7720
    %v7832 = vmul.f32 %v7263, %v7721
    %v7833 = vmul.f32 %v7265, %v7721
    %v7834 = vmul.f32 %v7267, %v7722
    %v7835 = vmul.f32 %v7269, %v7722
    %v7836 = vmul.f32 %v7271, %v7723
    %v7837 = vmul.f32 %v7273, %v7723
    %v7838 = vmul.f32 %v7275, %v7724
    %v7839 = vmul.f32 %v7277, %v7724
    %v7840 = vmul.f32 %v7279, %v7725
    %v7841 = vmul.f32 %v7281, %v7725
    %v7842 = vmul.f32 %v7283, %v7726
    %v7843 = vmul.f32 %v7285, %v7726
    %v7844 = vmul.f32 %v7287, %v7727
    %v7845 = vmul.f32 %v7289, %v7727
    %v7846 = vmul.f32 %v7291, %v7728
    %v7847 = vmul.f32 %v7293, %v7728
    %v7848 = vmul.f32 %v7295, %v7729
    %v7849 = vmul.f32 %v7297, %v7729
    %v7850 = vmul.f32 %v7299, %v7730
    %v7851 = vmul.f32 %v7301, %v7730
    %v7852 = vmul.f32 %v7303, %v7731
    %v7853 = vmul.f32 %v7305, %v7731
    %v7854 = vmul.f32 %v7307, %v7732
    %v7855 = vmul.f32 %v7309, %v7732
    %v7856 = vmul.f32 %v7311, %v7733
    %v7857 = vmul.f32 %v7313, %v7733
    %v7858 = vmul.f32 %v7315, %v7734
    %v7859 = vmul.f32 %v7317, %v7734
    %v7860 = vmul.f32 %v7319, %v7735
    %v7861 = vmul.f32 %v7321, %v7735
    %v7862 = vmul.f32 %v7323, %v7736
    %v7863 = vmul.f32 %v7325, %v7736
    %v7864 = vmul.f32 %v7327, %v7737
    %v7865 = vmul.f32 %v7329, %v7737
    %v7866 = vmul.f32 %v7331, %v7738
    %v7867 = vmul.f32 %v7333, %v7738
    %v7868 = vmul.f32 %v7335, %v7739
    %v7869 = vmul.f32 %v7337, %v7739
    %v7870 = vmul.f32 %v7339, %v7740
    %v7871 = vmul.f32 %v7341, %v7740
    %v7872 = vmul.f32 %v7343, %v7741
    %v7873 = vmul.f32 %v7345, %v7741
    %v7874 = vmul.f32 %v7347, %v7742
    %v7875 = vmul.f32 %v7349, %v7742
    %v7876 = vmul.f32 %v7351, %v7743
    %v7877 = vmul.f32 %v7353, %v7743
    %v7878 = vmul.f32 %v7355, %v7744
    %v7879 = vmul.f32 %v7357, %v7744
    %v7880 = vmul.f32 %v7359, %v7745
    %v7881 = vmul.f32 %v7361, %v7745
    %v7882 = vmul.f32 %v7363, %v7746
    %v7883 = vmul.f32 %v7365, %v7746
    %v7884 = vmul.f32 %v7367, %v7747
    %v7885 = vmul.f32 %v7369, %v7747
    %v7886 = vmul.f32 %v7371, %v7748
    %v7887 = vmul.f32 %v7373, %v7748
    %v7888 = vmul.f32 %v7375, %v7749
    %v7889 = vmul.f32 %v7377, %v7749
    %v7890 = vmul.f32 %v7379, %v7750
    %v7891 = vmul.f32 %v7381, %v7750
    %v7892 = vmul.f32 %v7383, %v7751
    %v7893 = vmul.f32 %v7385, %v7751
    %v7894 = vmul.f32 %v7387, %v7752
    %v7895 = vmul.f32 %v7389, %v7752
    %v7896 = vmul.f32 %v7391, %v7753
    %v7897 = vmul.f32 %v7393, %v7753
    %v7899 = vsel %vm6673, %v5480, 0
    %v7902 = vsel %vm6673, %v5481, 0
    %v7905 = vsel %vm6673, %v7755, 0
    %v7908 = vsel %vm6673, %v7757, 0
    %v7911 = vsel %vm6673, %v7759, 0
    %v7914 = vsel %vm6673, %v7761, 0
    %v7917 = vsel %vm6673, %v7763, 0
    %v7920 = vsel %vm6673, %v7765, 0
    %v7923 = vsel %vm6673, %v7767, 0
    %v7926 = vsel %vm6673, %v7769, 0
    %v7929 = vsel %vm6673, %v7771, 0
    %v7932 = vsel %vm6673, %v7773, 0
    %v7935 = vsel %vm6673, %v7775, 0
    %v7938 = vsel %vm6673, %v7777, 0
    %v7941 = vsel %vm6673, %v7779, 0
    %v7944 = vsel %vm6673, %v7781, 0
    %v7947 = vsel %vm6673, %v7783, 0
    %v7950 = vsel %vm6673, %v7785, 0
    %v7953 = vsel %vm6673, %v7787, 0
    %v7956 = vsel %vm6673, %v7789, 0
    %7958 = vmatpush.xpose.msra.mxu0 %v7784
    %7959 = vmatpush.xpose.msra.mxu0 %v7782
    %7960 = vmatpush.xpose.msra.mxu0 %v7780
    %7961 = vmatpush.xpose.msra.mxu0 %v7778
    %7962 = vmatpush.xpose.msra.mxu0 %v7776
    %7963 = vmatpush.xpose.msra.mxu0 %v7774
    %7964 = vmatpush.xpose.msra.mxu0 %v7772
    %7965 = vmatpush.xpose.msra.mxu0 %v7770
    %7966 = vmatpush.xpose.msra.mxu0 %v7768
    %7967 = vmatpush.xpose.msra.mxu0 %v7766
    %7968 = vmatpush.xpose.msra.mxu0 %v7764
    %7969 = vmatpush.xpose.msra.mxu0 %v7762
    %7970 = vmatpush.xpose.msra.mxu0 %v7760
    %7971 = vmatpush.xpose.msra.mxu0 %v7758
    %7972 = vmatpush.xpose.msra.mxu0 %v7756
    %7973 = vmatpush.xpose.msra.mxu0 %v7754
    %7974 = vmatmul.f32.gmra.mxu0 %v931
    %v7975 = vpop.f32.mrf.mxu0
    %v7976 = vadd.f32 0.0, %v7975
    %7977 = vmatmul.f32.gmra.mxu0 %v933
    %v7978 = vpop.f32.mrf.mxu0
    %v7979 = vadd.f32 0.0, %v7978
    %7980 = vdwg.mxu0
    %7981 = vmatpush.xpose.msra.mxu0 %v7950
    %7982 = vmatpush.xpose.msra.mxu0 %v7947
    %7983 = vmatpush.xpose.msra.mxu0 %v7944
    %7984 = vmatpush.xpose.msra.mxu0 %v7941
    %7985 = vmatpush.xpose.msra.mxu0 %v7938
    %7986 = vmatpush.xpose.msra.mxu0 %v7935
    %7987 = vmatpush.xpose.msra.mxu0 %v7932
    %7988 = vmatpush.xpose.msra.mxu0 %v7929
    %7989 = vmatpush.xpose.msra.mxu0 %v7926
    %7990 = vmatpush.xpose.msra.mxu0 %v7923
    %7991 = vmatpush.xpose.msra.mxu0 %v7920
    %7992 = vmatpush.xpose.msra.mxu0 %v7917
    %7993 = vmatpush.xpose.msra.mxu0 %v7914
    %7994 = vmatpush.xpose.msra.mxu0 %v7911
    %7995 = vmatpush.xpose.msra.mxu0 %v7908
    %7996 = vmatpush.xpose.msra.mxu0 %v7905
    %7997 = vmatmul.f32.gmra.mxu0 %v7899
    %v7998 = vpop.f32.mrf.mxu0
    %v7999 = vadd.f32 %v7976, %v7998
    %8000 = vmatmul.f32.gmra.mxu0 %v7902
    %v8001 = vpop.f32.mrf.mxu0
    %v8002 = vadd.f32 %v7979, %v8001
    %8003 = vdwg.mxu0
    %8004 = vmatpush.xpose.msra.mxu0 0.0
    %8005 = vmatpush.xpose.msra.mxu0 0.0
    %8006 = vmatpush.xpose.msra.mxu0 0.0
    %8007 = vmatpush.xpose.msra.mxu0 0.0
    %8008 = vmatpush.xpose.msra.mxu0 0.0
    %8009 = vmatpush.xpose.msra.mxu0 0.0
    %8010 = vmatpush.xpose.msra.mxu0 0.0
    %8011 = vmatpush.xpose.msra.mxu0 0.0
    %8012 = vmatpush.xpose.msra.mxu0 0.0
    %8013 = vmatpush.xpose.msra.mxu0 0.0
    %8014 = vmatpush.xpose.msra.mxu0 0.0
    %8015 = vmatpush.xpose.msra.mxu0 0.0
    %8016 = vmatpush.xpose.msra.mxu0 0.0
    %8017 = vmatpush.xpose.msra.mxu0 0.0
    %8018 = vmatpush.xpose.msra.mxu0 %v7788
    %8019 = vmatpush.xpose.msra.mxu0 %v7786
    %8020 = vmatmul.f32.gmra.mxu0 %v931
    %v8021 = vpop.f32.mrf.mxu0
    %v8022 = vadd.f32 0.0, %v8021
    %8023 = vmatmul.f32.gmra.mxu0 %v933
    %v8024 = vpop.f32.mrf.mxu0
    %v8025 = vadd.f32 0.0, %v8024
    %8026 = vdwg.mxu0
    %8027 = vmatpush.xpose.msra.mxu0 0.0
    %8028 = vmatpush.xpose.msra.mxu0 0.0
    %8029 = vmatpush.xpose.msra.mxu0 0.0
    %8030 = vmatpush.xpose.msra.mxu0 0.0
    %8031 = vmatpush.xpose.msra.mxu0 0.0
    %8032 = vmatpush.xpose.msra.mxu0 0.0
    %8033 = vmatpush.xpose.msra.mxu0 0.0
    %8034 = vmatpush.xpose.msra.mxu0 0.0
    %8035 = vmatpush.xpose.msra.mxu0 0.0
    %8036 = vmatpush.xpose.msra.mxu0 0.0
    %8037 = vmatpush.xpose.msra.mxu0 0.0
    %8038 = vmatpush.xpose.msra.mxu0 0.0
    %8039 = vmatpush.xpose.msra.mxu0 0.0
    %8040 = vmatpush.xpose.msra.mxu0 0.0
    %8041 = vmatpush.xpose.msra.mxu0 %v7956
    %8042 = vmatpush.xpose.msra.mxu0 %v7953
    %8043 = vmatmul.f32.gmra.mxu0 %v7899
    %v8044 = vpop.f32.mrf.mxu0
    %v8045 = vadd.f32 %v8022, %v8044
    %8046 = vmatmul.f32.gmra.mxu0 %v7902
    %v8047 = vpop.f32.mrf.mxu0
    %v8048 = vadd.f32 %v8025, %v8047
    %8049 = vdwg.mxu0
    %v8051 = vsel %vm6673, %v5482, 0
    %v8054 = vsel %vm6673, %v5483, 0
    %v8057 = vsel %vm6673, %v7791, 0
    %v8060 = vsel %vm6673, %v7793, 0
    %v8063 = vsel %vm6673, %v7795, 0
    %v8066 = vsel %vm6673, %v7797, 0
    %v8069 = vsel %vm6673, %v7799, 0
    %v8072 = vsel %vm6673, %v7801, 0
    %v8075 = vsel %vm6673, %v7803, 0
    %v8078 = vsel %vm6673, %v7805, 0
    %v8081 = vsel %vm6673, %v7807, 0
    %v8084 = vsel %vm6673, %v7809, 0
    %v8087 = vsel %vm6673, %v7811, 0
    %v8090 = vsel %vm6673, %v7813, 0
    %v8093 = vsel %vm6673, %v7815, 0
    %v8096 = vsel %vm6673, %v7817, 0
    %v8099 = vsel %vm6673, %v7819, 0
    %v8102 = vsel %vm6673, %v7821, 0
    %v8105 = vsel %vm6673, %v7823, 0
    %v8108 = vsel %vm6673, %v7825, 0
    %8110 = vmatpush.xpose.msra.mxu0 %v7820
    %8111 = vmatpush.xpose.msra.mxu0 %v7818
    %8112 = vmatpush.xpose.msra.mxu0 %v7816
    %8113 = vmatpush.xpose.msra.mxu0 %v7814
    %8114 = vmatpush.xpose.msra.mxu0 %v7812
    %8115 = vmatpush.xpose.msra.mxu0 %v7810
    %8116 = vmatpush.xpose.msra.mxu0 %v7808
    %8117 = vmatpush.xpose.msra.mxu0 %v7806
    %8118 = vmatpush.xpose.msra.mxu0 %v7804
    %8119 = vmatpush.xpose.msra.mxu0 %v7802
    %8120 = vmatpush.xpose.msra.mxu0 %v7800
    %8121 = vmatpush.xpose.msra.mxu0 %v7798
    %8122 = vmatpush.xpose.msra.mxu0 %v7796
    %8123 = vmatpush.xpose.msra.mxu0 %v7794
    %8124 = vmatpush.xpose.msra.mxu0 %v7792
    %8125 = vmatpush.xpose.msra.mxu0 %v7790
    %8126 = vmatmul.f32.gmra.mxu0 %v935
    %v8127 = vpop.f32.mrf.mxu0
    %v8128 = vadd.f32 0.0, %v8127
    %8129 = vmatmul.f32.gmra.mxu0 %v937
    %v8130 = vpop.f32.mrf.mxu0
    %v8131 = vadd.f32 0.0, %v8130
    %8132 = vdwg.mxu0
    %8133 = vmatpush.xpose.msra.mxu0 %v8102
    %8134 = vmatpush.xpose.msra.mxu0 %v8099
    %8135 = vmatpush.xpose.msra.mxu0 %v8096
    %8136 = vmatpush.xpose.msra.mxu0 %v8093
    %8137 = vmatpush.xpose.msra.mxu0 %v8090
    %8138 = vmatpush.xpose.msra.mxu0 %v8087
    %8139 = vmatpush.xpose.msra.mxu0 %v8084
    %8140 = vmatpush.xpose.msra.mxu0 %v8081
    %8141 = vmatpush.xpose.msra.mxu0 %v8078
    %8142 = vmatpush.xpose.msra.mxu0 %v8075
    %8143 = vmatpush.xpose.msra.mxu0 %v8072
    %8144 = vmatpush.xpose.msra.mxu0 %v8069
    %8145 = vmatpush.xpose.msra.mxu0 %v8066
    %8146 = vmatpush.xpose.msra.mxu0 %v8063
    %8147 = vmatpush.xpose.msra.mxu0 %v8060
    %8148 = vmatpush.xpose.msra.mxu0 %v8057
    %8149 = vmatmul.f32.gmra.mxu0 %v8051
    %v8150 = vpop.f32.mrf.mxu0
    %v8151 = vadd.f32 %v8128, %v8150
    %8152 = vmatmul.f32.gmra.mxu0 %v8054
    %v8153 = vpop.f32.mrf.mxu0
    %v8154 = vadd.f32 %v8131, %v8153
    %8155 = vdwg.mxu0
    %8156 = vmatpush.xpose.msra.mxu0 0.0
    %8157 = vmatpush.xpose.msra.mxu0 0.0
    %8158 = vmatpush.xpose.msra.mxu0 0.0
    %8159 = vmatpush.xpose.msra.mxu0 0.0
    %8160 = vmatpush.xpose.msra.mxu0 0.0
    %8161 = vmatpush.xpose.msra.mxu0 0.0
    %8162 = vmatpush.xpose.msra.mxu0 0.0
    %8163 = vmatpush.xpose.msra.mxu0 0.0
    %8164 = vmatpush.xpose.msra.mxu0 0.0
    %8165 = vmatpush.xpose.msra.mxu0 0.0
    %8166 = vmatpush.xpose.msra.mxu0 0.0
    %8167 = vmatpush.xpose.msra.mxu0 0.0
    %8168 = vmatpush.xpose.msra.mxu0 0.0
    %8169 = vmatpush.xpose.msra.mxu0 0.0
    %8170 = vmatpush.xpose.msra.mxu0 %v7824
    %8171 = vmatpush.xpose.msra.mxu0 %v7822
    %8172 = vmatmul.f32.gmra.mxu0 %v935
    %v8173 = vpop.f32.mrf.mxu0
    %v8174 = vadd.f32 0.0, %v8173
    %8175 = vmatmul.f32.gmra.mxu0 %v937
    %v8176 = vpop.f32.mrf.mxu0
    %v8177 = vadd.f32 0.0, %v8176
    %8178 = vdwg.mxu0
    %8179 = vmatpush.xpose.msra.mxu0 0.0
    %8180 = vmatpush.xpose.msra.mxu0 0.0
    %8181 = vmatpush.xpose.msra.mxu0 0.0
    %8182 = vmatpush.xpose.msra.mxu0 0.0
    %8183 = vmatpush.xpose.msra.mxu0 0.0
    %8184 = vmatpush.xpose.msra.mxu0 0.0
    %8185 = vmatpush.xpose.msra.mxu0 0.0
    %8186 = vmatpush.xpose.msra.mxu0 0.0
    %8187 = vmatpush.xpose.msra.mxu0 0.0
    %8188 = vmatpush.xpose.msra.mxu0 0.0
    %8189 = vmatpush.xpose.msra.mxu0 0.0
    %8190 = vmatpush.xpose.msra.mxu0 0.0
    %8191 = vmatpush.xpose.msra.mxu0 0.0
    %8192 = vmatpush.xpose.msra.mxu0 0.0
    %8193 = vmatpush.xpose.msra.mxu0 %v8108
    %8194 = vmatpush.xpose.msra.mxu0 %v8105
    %8195 = vmatmul.f32.gmra.mxu0 %v8051
    %v8196 = vpop.f32.mrf.mxu0
    %v8197 = vadd.f32 %v8174, %v8196
    %8198 = vmatmul.f32.gmra.mxu0 %v8054
    %v8199 = vpop.f32.mrf.mxu0
    %v8200 = vadd.f32 %v8177, %v8199
    %8201 = vdwg.mxu0
    %v8203 = vsel %vm6673, %v5484, 0
    %v8206 = vsel %vm6673, %v5485, 0
    %v8209 = vsel %vm6673, %v7827, 0
    %v8212 = vsel %vm6673, %v7829, 0
    %v8215 = vsel %vm6673, %v7831, 0
    %v8218 = vsel %vm6673, %v7833, 0
    %v8221 = vsel %vm6673, %v7835, 0
    %v8224 = vsel %vm6673, %v7837, 0
    %v8227 = vsel %vm6673, %v7839, 0
    %v8230 = vsel %vm6673, %v7841, 0
    %v8233 = vsel %vm6673, %v7843, 0
    %v8236 = vsel %vm6673, %v7845, 0
    %v8239 = vsel %vm6673, %v7847, 0
    %v8242 = vsel %vm6673, %v7849, 0
    %v8245 = vsel %vm6673, %v7851, 0
    %v8248 = vsel %vm6673, %v7853, 0
    %v8251 = vsel %vm6673, %v7855, 0
    %v8254 = vsel %vm6673, %v7857, 0
    %v8257 = vsel %vm6673, %v7859, 0
    %v8260 = vsel %vm6673, %v7861, 0
    %8262 = vmatpush.xpose.msra.mxu0 %v7856
    %8263 = vmatpush.xpose.msra.mxu0 %v7854
    %8264 = vmatpush.xpose.msra.mxu0 %v7852
    %8265 = vmatpush.xpose.msra.mxu0 %v7850
    %8266 = vmatpush.xpose.msra.mxu0 %v7848
    %8267 = vmatpush.xpose.msra.mxu0 %v7846
    %8268 = vmatpush.xpose.msra.mxu0 %v7844
    %8269 = vmatpush.xpose.msra.mxu0 %v7842
    %8270 = vmatpush.xpose.msra.mxu0 %v7840
    %8271 = vmatpush.xpose.msra.mxu0 %v7838
    %8272 = vmatpush.xpose.msra.mxu0 %v7836
    %8273 = vmatpush.xpose.msra.mxu0 %v7834
    %8274 = vmatpush.xpose.msra.mxu0 %v7832
    %8275 = vmatpush.xpose.msra.mxu0 %v7830
    %8276 = vmatpush.xpose.msra.mxu0 %v7828
    %8277 = vmatpush.xpose.msra.mxu0 %v7826
    %8278 = vmatmul.f32.gmra.mxu0 %v947
    %v8279 = vpop.f32.mrf.mxu0
    %v8280 = vadd.f32 0.0, %v8279
    %8281 = vmatmul.f32.gmra.mxu0 %v949
    %v8282 = vpop.f32.mrf.mxu0
    %v8283 = vadd.f32 0.0, %v8282
    %8284 = vdwg.mxu0
    %8285 = vmatpush.xpose.msra.mxu0 %v8254
    %8286 = vmatpush.xpose.msra.mxu0 %v8251
    %8287 = vmatpush.xpose.msra.mxu0 %v8248
    %8288 = vmatpush.xpose.msra.mxu0 %v8245
    %8289 = vmatpush.xpose.msra.mxu0 %v8242
    %8290 = vmatpush.xpose.msra.mxu0 %v8239
    %8291 = vmatpush.xpose.msra.mxu0 %v8236
    %8292 = vmatpush.xpose.msra.mxu0 %v8233
    %8293 = vmatpush.xpose.msra.mxu0 %v8230
    %8294 = vmatpush.xpose.msra.mxu0 %v8227
    %8295 = vmatpush.xpose.msra.mxu0 %v8224
    %8296 = vmatpush.xpose.msra.mxu0 %v8221
    %8297 = vmatpush.xpose.msra.mxu0 %v8218
    %8298 = vmatpush.xpose.msra.mxu0 %v8215
    %8299 = vmatpush.xpose.msra.mxu0 %v8212
    %8300 = vmatpush.xpose.msra.mxu0 %v8209
    %8301 = vmatmul.f32.gmra.mxu0 %v8203
    %v8302 = vpop.f32.mrf.mxu0
    %v8303 = vadd.f32 %v8280, %v8302
    %8304 = vmatmul.f32.gmra.mxu0 %v8206
    %v8305 = vpop.f32.mrf.mxu0
    %v8306 = vadd.f32 %v8283, %v8305
    %8307 = vdwg.mxu0
    %8308 = vmatpush.xpose.msra.mxu0 0.0
    %8309 = vmatpush.xpose.msra.mxu0 0.0
    %8310 = vmatpush.xpose.msra.mxu0 0.0
    %8311 = vmatpush.xpose.msra.mxu0 0.0
    %8312 = vmatpush.xpose.msra.mxu0 0.0
    %8313 = vmatpush.xpose.msra.mxu0 0.0
    %8314 = vmatpush.xpose.msra.mxu0 0.0
    %8315 = vmatpush.xpose.msra.mxu0 0.0
    %8316 = vmatpush.xpose.msra.mxu0 0.0
    %8317 = vmatpush.xpose.msra.mxu0 0.0
    %8318 = vmatpush.xpose.msra.mxu0 0.0
    %8319 = vmatpush.xpose.msra.mxu0 0.0
    %8320 = vmatpush.xpose.msra.mxu0 0.0
    %8321 = vmatpush.xpose.msra.mxu0 0.0
    %8322 = vmatpush.xpose.msra.mxu0 %v7860
    %8323 = vmatpush.xpose.msra.mxu0 %v7858
    %8324 = vmatmul.f32.gmra.mxu0 %v947
    %v8325 = vpop.f32.mrf.mxu0
    %v8326 = vadd.f32 0.0, %v8325
    %8327 = vmatmul.f32.gmra.mxu0 %v949
    %v8328 = vpop.f32.mrf.mxu0
    %v8329 = vadd.f32 0.0, %v8328
    %8330 = vdwg.mxu0
    %8331 = vmatpush.xpose.msra.mxu0 0.0
    %8332 = vmatpush.xpose.msra.mxu0 0.0
    %8333 = vmatpush.xpose.msra.mxu0 0.0
    %8334 = vmatpush.xpose.msra.mxu0 0.0
    %8335 = vmatpush.xpose.msra.mxu0 0.0
    %8336 = vmatpush.xpose.msra.mxu0 0.0
    %8337 = vmatpush.xpose.msra.mxu0 0.0
    %8338 = vmatpush.xpose.msra.mxu0 0.0
    %8339 = vmatpush.xpose.msra.mxu0 0.0
    %8340 = vmatpush.xpose.msra.mxu0 0.0
    %8341 = vmatpush.xpose.msra.mxu0 0.0
    %8342 = vmatpush.xpose.msra.mxu0 0.0
    %8343 = vmatpush.xpose.msra.mxu0 0.0
    %8344 = vmatpush.xpose.msra.mxu0 0.0
    %8345 = vmatpush.xpose.msra.mxu0 %v8260
    %8346 = vmatpush.xpose.msra.mxu0 %v8257
    %8347 = vmatmul.f32.gmra.mxu0 %v8203
    %v8348 = vpop.f32.mrf.mxu0
    %v8349 = vadd.f32 %v8326, %v8348
    %8350 = vmatmul.f32.gmra.mxu0 %v8206
    %v8351 = vpop.f32.mrf.mxu0
    %v8352 = vadd.f32 %v8329, %v8351
    %8353 = vdwg.mxu0
    %v8355 = vsel %vm6673, %v5486, 0
    %v8358 = vsel %vm6673, %v5487, 0
    %v8361 = vsel %vm6673, %v7863, 0
    %v8364 = vsel %vm6673, %v7865, 0
    %v8367 = vsel %vm6673, %v7867, 0
    %v8370 = vsel %vm6673, %v7869, 0
    %v8373 = vsel %vm6673, %v7871, 0
    %v8376 = vsel %vm6673, %v7873, 0
    %v8379 = vsel %vm6673, %v7875, 0
    %v8382 = vsel %vm6673, %v7877, 0
    %v8385 = vsel %vm6673, %v7879, 0
    %v8388 = vsel %vm6673, %v7881, 0
    %v8391 = vsel %vm6673, %v7883, 0
    %v8394 = vsel %vm6673, %v7885, 0
    %v8397 = vsel %vm6673, %v7887, 0
    %v8400 = vsel %vm6673, %v7889, 0
    %v8403 = vsel %vm6673, %v7891, 0
    %v8406 = vsel %vm6673, %v7893, 0
    %v8409 = vsel %vm6673, %v7895, 0
    %v8412 = vsel %vm6673, %v7897, 0
    %8414 = vmatpush.xpose.msra.mxu0 %v7892
    %8415 = vmatpush.xpose.msra.mxu0 %v7890
    %8416 = vmatpush.xpose.msra.mxu0 %v7888
    %8417 = vmatpush.xpose.msra.mxu0 %v7886
    %8418 = vmatpush.xpose.msra.mxu0 %v7884
    %8419 = vmatpush.xpose.msra.mxu0 %v7882
    %8420 = vmatpush.xpose.msra.mxu0 %v7880
    %8421 = vmatpush.xpose.msra.mxu0 %v7878
    %8422 = vmatpush.xpose.msra.mxu0 %v7876
    %8423 = vmatpush.xpose.msra.mxu0 %v7874
    %8424 = vmatpush.xpose.msra.mxu0 %v7872
    %8425 = vmatpush.xpose.msra.mxu0 %v7870
    %8426 = vmatpush.xpose.msra.mxu0 %v7868
    %8427 = vmatpush.xpose.msra.mxu0 %v7866
    %8428 = vmatpush.xpose.msra.mxu0 %v7864
    %8429 = vmatpush.xpose.msra.mxu0 %v7862
    %8430 = vmatmul.f32.gmra.mxu0 %v951
    %v8431 = vpop.f32.mrf.mxu0
    %v8432 = vadd.f32 0.0, %v8431
    %8433 = vmatmul.f32.gmra.mxu0 %v953
    %v8434 = vpop.f32.mrf.mxu0
    %v8435 = vadd.f32 0.0, %v8434
    %8436 = vdwg.mxu0
    %8437 = vmatpush.xpose.msra.mxu0 %v8406
    %8438 = vmatpush.xpose.msra.mxu0 %v8403
    %8439 = vmatpush.xpose.msra.mxu0 %v8400
    %8440 = vmatpush.xpose.msra.mxu0 %v8397
    %8441 = vmatpush.xpose.msra.mxu0 %v8394
    %8442 = vmatpush.xpose.msra.mxu0 %v8391
    %8443 = vmatpush.xpose.msra.mxu0 %v8388
    %8444 = vmatpush.xpose.msra.mxu0 %v8385
    %8445 = vmatpush.xpose.msra.mxu0 %v8382
    %8446 = vmatpush.xpose.msra.mxu0 %v8379
    %8447 = vmatpush.xpose.msra.mxu0 %v8376
    %8448 = vmatpush.xpose.msra.mxu0 %v8373
    %8449 = vmatpush.xpose.msra.mxu0 %v8370
    %8450 = vmatpush.xpose.msra.mxu0 %v8367
    %8451 = vmatpush.xpose.msra.mxu0 %v8364
    %8452 = vmatpush.xpose.msra.mxu0 %v8361
    %8453 = vmatmul.f32.gmra.mxu0 %v8355
    %v8454 = vpop.f32.mrf.mxu0
    %v8455 = vadd.f32 %v8432, %v8454
    %8456 = vmatmul.f32.gmra.mxu0 %v8358
    %v8457 = vpop.f32.mrf.mxu0
    %v8458 = vadd.f32 %v8435, %v8457
    %8459 = vdwg.mxu0
    %8460 = vmatpush.xpose.msra.mxu0 0.0
    %8461 = vmatpush.xpose.msra.mxu0 0.0
    %8462 = vmatpush.xpose.msra.mxu0 0.0
    %8463 = vmatpush.xpose.msra.mxu0 0.0
    %8464 = vmatpush.xpose.msra.mxu0 0.0
    %8465 = vmatpush.xpose.msra.mxu0 0.0
    %8466 = vmatpush.xpose.msra.mxu0 0.0
    %8467 = vmatpush.xpose.msra.mxu0 0.0
    %8468 = vmatpush.xpose.msra.mxu0 0.0
    %8469 = vmatpush.xpose.msra.mxu0 0.0
    %8470 = vmatpush.xpose.msra.mxu0 0.0
    %8471 = vmatpush.xpose.msra.mxu0 0.0
    %8472 = vmatpush.xpose.msra.mxu0 0.0
    %8473 = vmatpush.xpose.msra.mxu0 0.0
    %8474 = vmatpush.xpose.msra.mxu0 %v7896
    %8475 = vmatpush.xpose.msra.mxu0 %v7894
    %8476 = vmatmul.f32.gmra.mxu0 %v951
    %v8477 = vpop.f32.mrf.mxu0
    %v8478 = vadd.f32 0.0, %v8477
    %8479 = vmatmul.f32.gmra.mxu0 %v953
    %v8480 = vpop.f32.mrf.mxu0
    %v8481 = vadd.f32 0.0, %v8480
    %8482 = vdwg.mxu0
    %8483 = vmatpush.xpose.msra.mxu0 0.0
    %8484 = vmatpush.xpose.msra.mxu0 0.0
    %8485 = vmatpush.xpose.msra.mxu0 0.0
    %8486 = vmatpush.xpose.msra.mxu0 0.0
    %8487 = vmatpush.xpose.msra.mxu0 0.0
    %8488 = vmatpush.xpose.msra.mxu0 0.0
    %8489 = vmatpush.xpose.msra.mxu0 0.0
    %8490 = vmatpush.xpose.msra.mxu0 0.0
    %8491 = vmatpush.xpose.msra.mxu0 0.0
    %8492 = vmatpush.xpose.msra.mxu0 0.0
    %8493 = vmatpush.xpose.msra.mxu0 0.0
    %8494 = vmatpush.xpose.msra.mxu0 0.0
    %8495 = vmatpush.xpose.msra.mxu0 0.0
    %8496 = vmatpush.xpose.msra.mxu0 0.0
    %8497 = vmatpush.xpose.msra.mxu0 %v8412
    %8498 = vmatpush.xpose.msra.mxu0 %v8409
    %8499 = vmatmul.f32.gmra.mxu0 %v8355
    %v8500 = vpop.f32.mrf.mxu0
    %v8501 = vadd.f32 %v8478, %v8500
    %8502 = vmatmul.f32.gmra.mxu0 %v8358
    %v8503 = vpop.f32.mrf.mxu0
    %v8504 = vadd.f32 %v8481, %v8503
    %8505 = vdwg.mxu0
    %v8506 = vadd.f32 %v7999, %v5351
    %v8507 = vadd.f32 %v8045, %v5352
    %v8508 = vadd.f32 %v8002, %v5353
    %v8509 = vadd.f32 %v8048, %v5354
    %v8510 = vadd.f32 %v8151, %v5355
    %v8511 = vadd.f32 %v8197, %v5356
    %v8512 = vadd.f32 %v8154, %v5357
    %v8513 = vadd.f32 %v8200, %v5358
    %v8514 = vadd.f32 %v8303, %v5359
    %v8515 = vadd.f32 %v8349, %v5360
    %v8516 = vadd.f32 %v8306, %v5361
    %v8517 = vadd.f32 %v8352, %v5362
    %v8518 = vadd.f32 %v8455, %v5363
    %v8519 = vadd.f32 %v8501, %v5364
    %v8520 = vadd.f32 %v8458, %v5365
    %v8521 = vadd.f32 %v8504, %v5366
    %v8522 = vld [vmem:[%s24] sm:$0xff]
    %v8523 = vld [vmem:[%s24 + $0x8] sm:$0xff]
    %v8524 = vld [vmem:[%s24 + $0x10] sm:$0xff]
    %v8525 = vld [vmem:[%s24 + $0x18] sm:$0xff]
    %v8526 = vld [vmem:[%s25] sm:$0xff]
    %v8527 = vld [vmem:[%s25 + $0x8] sm:$0xff]
    %v8528 = vld [vmem:[%s25 + $0x10] sm:$0xff]
    %v8529 = vld [vmem:[%s25 + $0x18] sm:$0xff]
    %v8530 = vsel %vm102, %v8507, 0.0
    %v8531 = vadd.f32 %v8506, %v8530
    %8532 = vadd.xlane.f32.xlu0 %v8531
    %v8533 = vpop.xlane.xlu0 %8532
    %v8534 = vsel %vm102, %v8509, 0.0
    %v8535 = vadd.f32 %v8508, %v8534
    %8536 = vadd.xlane.f32.xlu0 %v8535
    %v8537 = vpop.xlane.xlu0 %8536
    %v8538 = vsel %vm102, %v8511, 0.0
    %v8539 = vadd.f32 %v8510, %v8538
    %8540 = vadd.xlane.f32.xlu0 %v8539
    %v8541 = vpop.xlane.xlu0 %8540
    %v8542 = vsel %vm102, %v8513, 0.0
    %v8543 = vadd.f32 %v8512, %v8542
    %8544 = vadd.xlane.f32.xlu0 %v8543
    %v8545 = vpop.xlane.xlu0 %8544
    %v8546 = vsel %vm102, %v8515, 0.0
    %v8547 = vadd.f32 %v8514, %v8546
    %8548 = vadd.xlane.f32.xlu0 %v8547
    %v8549 = vpop.xlane.xlu0 %8548
    %v8550 = vsel %vm102, %v8517, 0.0
    %v8551 = vadd.f32 %v8516, %v8550
    %8552 = vadd.xlane.f32.xlu0 %v8551
    %v8553 = vpop.xlane.xlu0 %8552
    %v8554 = vsel %vm102, %v8519, 0.0
    %v8555 = vadd.f32 %v8518, %v8554
    %8556 = vadd.xlane.f32.xlu0 %v8555
    %v8557 = vpop.xlane.xlu0 %8556
    %v8558 = vsel %vm102, %v8521, 0.0
    %v8559 = vadd.f32 %v8520, %v8558
    %8560 = vadd.xlane.f32.xlu0 %v8559
    %v8561 = vpop.xlane.xlu0 %8560
    %v8562 = vadd.f32 %v8533, %v8549
    %v8563 = vadd.f32 %v8537, %v8553
    %v8564 = vadd.f32 %v8541, %v8557
    %v8565 = vadd.f32 %v8545, %v8561
    %v8566 = vmul.f32 %v8506, %v8506
    %v8567 = vmul.f32 %v8507, %v8507
    %v8568 = vmul.f32 %v8508, %v8508
    %v8569 = vmul.f32 %v8509, %v8509
    %v8570 = vmul.f32 %v8510, %v8510
    %v8571 = vmul.f32 %v8511, %v8511
    %v8572 = vmul.f32 %v8512, %v8512
    %v8573 = vmul.f32 %v8513, %v8513
    %v8574 = vmul.f32 %v8514, %v8514
    %v8575 = vmul.f32 %v8515, %v8515
    %v8576 = vmul.f32 %v8516, %v8516
    %v8577 = vmul.f32 %v8517, %v8517
    %v8578 = vmul.f32 %v8518, %v8518
    %v8579 = vmul.f32 %v8519, %v8519
    %v8580 = vmul.f32 %v8520, %v8520
    %v8581 = vmul.f32 %v8521, %v8521
    %v8582 = vsel %vm102, %v8567, 0.0
    %v8583 = vadd.f32 %v8566, %v8582
    %8584 = vadd.xlane.f32.xlu0 %v8583
    %v8585 = vpop.xlane.xlu0 %8584
    %v8586 = vsel %vm102, %v8569, 0.0
    %v8587 = vadd.f32 %v8568, %v8586
    %8588 = vadd.xlane.f32.xlu0 %v8587
    %v8589 = vpop.xlane.xlu0 %8588
    %v8590 = vsel %vm102, %v8571, 0.0
    %v8591 = vadd.f32 %v8570, %v8590
    %8592 = vadd.xlane.f32.xlu0 %v8591
    %v8593 = vpop.xlane.xlu0 %8592
    %v8594 = vsel %vm102, %v8573, 0.0
    %v8595 = vadd.f32 %v8572, %v8594
    %8596 = vadd.xlane.f32.xlu0 %v8595
    %v8597 = vpop.xlane.xlu0 %8596
    %v8598 = vsel %vm102, %v8575, 0.0
    %v8599 = vadd.f32 %v8574, %v8598
    %8600 = vadd.xlane.f32.xlu0 %v8599
    %v8601 = vpop.xlane.xlu0 %8600
    %v8602 = vsel %vm102, %v8577, 0.0
    %v8603 = vadd.f32 %v8576, %v8602
    %8604 = vadd.xlane.f32.xlu0 %v8603
    %v8605 = vpop.xlane.xlu0 %8604
    %v8606 = vsel %vm102, %v8579, 0.0
    %v8607 = vadd.f32 %v8578, %v8606
    %8608 = vadd.xlane.f32.xlu0 %v8607
    %v8609 = vpop.xlane.xlu0 %8608
    %v8610 = vsel %vm102, %v8581, 0.0
    %v8611 = vadd.f32 %v8580, %v8610
    %8612 = vadd.xlane.f32.xlu0 %v8611
    %v8613 = vpop.xlane.xlu0 %8612
    %v8614 = vadd.f32 %v8585, %v8601
    %v8615 = vadd.f32 %v8589, %v8605
    %v8616 = vadd.f32 %v8593, %v8609
    %v8617 = vadd.f32 %v8597, %v8613
    %v8618 = vmul.f32 %v8562, 0.0034722222
    %v8619 = vmul.f32 %v8563, 0.0034722222
    %v8620 = vmul.f32 %v8564, 0.0034722222
    %v8621 = vmul.f32 %v8565, 0.0034722222
    %v8622 = vmul.f32 %v8614, 0.0034722222
    %v8623 = vmul.f32 %v8615, 0.0034722222
    %v8624 = vmul.f32 %v8616, 0.0034722222
    %v8625 = vmul.f32 %v8617, 0.0034722222
    %v8626 = vmul.f32 %v8618, %v8618
    %v8627 = vmul.f32 %v8619, %v8619
    %v8628 = vmul.f32 %v8620, %v8620
    %v8629 = vmul.f32 %v8621, %v8621
    %v8630 = vsub.f32 %v8622, %v8626
    %v8631 = vsub.f32 %v8623, %v8627
    %v8632 = vsub.f32 %v8624, %v8628
    %v8633 = vsub.f32 %v8625, %v8629
    %v8634 = vmax.f32 %v8630, 0.0
    %v8635 = vmax.f32 %v8631, 0.0
    %v8636 = vmax.f32 %v8632, 0.0
    %v8637 = vmax.f32 %v8633, 0.0
    %v8638 = vsub.f32 %v8506, %v8618
    %v8639 = vsub.f32 %v8507, %v8618
    %v8640 = vsub.f32 %v8508, %v8619
    %v8641 = vsub.f32 %v8509, %v8619
    %v8642 = vsub.f32 %v8510, %v8620
    %v8643 = vsub.f32 %v8511, %v8620
    %v8644 = vsub.f32 %v8512, %v8621
    %v8645 = vsub.f32 %v8513, %v8621
    %v8646 = vsub.f32 %v8514, %v8618
    %v8647 = vsub.f32 %v8515, %v8618
    %v8648 = vsub.f32 %v8516, %v8619
    %v8649 = vsub.f32 %v8517, %v8619
    %v8650 = vsub.f32 %v8518, %v8620
    %v8651 = vsub.f32 %v8519, %v8620
    %v8652 = vsub.f32 %v8520, %v8621
    %v8653 = vsub.f32 %v8521, %v8621
    %v8654 = vadd.f32 %v8634, 1e-05
    %v8655 = vadd.f32 %v8635, 1e-05
    %v8656 = vadd.f32 %v8636, 1e-05
    %v8657 = vadd.f32 %v8637, 1e-05
    %v8658 = vrsqrt.pop %v8654
    %v8659 = vmul.f32 %v8658, %v8654
    %v8660 = vmul.f32 %v8659, %v8658
    %v8661 = vmul.f32 0.5, %v8660
    %v8662 = vsub.f32 1.5, %v8661
    %v8663 = vmul.f32 %v8658, %v8662
    %vm8664 = vweird.f32 %v8654
    %vm8665 = vweird.f32 %v8658
    %vm8666 = vmor %vm8664, %vm8665
    %v8667 = vsel %vm8666, %v8658, %v8663
    %v8668 = vrsqrt.pop %v8655
    %v8669 = vmul.f32 %v8668, %v8655
    %v8670 = vmul.f32 %v8669, %v8668
    %v8671 = vmul.f32 0.5, %v8670
    %v8672 = vsub.f32 1.5, %v8671
    %v8673 = vmul.f32 %v8668, %v8672
    %vm8674 = vweird.f32 %v8655
    %vm8675 = vweird.f32 %v8668
    %vm8676 = vmor %vm8674, %vm8675
    %v8677 = vsel %vm8676, %v8668, %v8673
    %v8678 = vrsqrt.pop %v8656
    %v8679 = vmul.f32 %v8678, %v8656
    %v8680 = vmul.f32 %v8679, %v8678
    %v8681 = vmul.f32 0.5, %v8680
    %v8682 = vsub.f32 1.5, %v8681
    %v8683 = vmul.f32 %v8678, %v8682
    %vm8684 = vweird.f32 %v8656
    %vm8685 = vweird.f32 %v8678
    %vm8686 = vmor %vm8684, %vm8685
    %v8687 = vsel %vm8686, %v8678, %v8683
    %v8688 = vrsqrt.pop %v8657
    %v8689 = vmul.f32 %v8688, %v8657
    %v8690 = vmul.f32 %v8689, %v8688
    %v8691 = vmul.f32 0.5, %v8690
    %v8692 = vsub.f32 1.5, %v8691
    %v8693 = vmul.f32 %v8688, %v8692
    %vm8694 = vweird.f32 %v8657
    %vm8695 = vweird.f32 %v8688
    %vm8696 = vmor %vm8694, %vm8695
    %v8697 = vsel %vm8696, %v8688, %v8693
    %v8698 = vmul.f32 %v8638, %v8667
    %v8699 = vmul.f32 %v8639, %v8667
    %v8700 = vmul.f32 %v8640, %v8677
    %v8701 = vmul.f32 %v8641, %v8677
    %v8702 = vmul.f32 %v8642, %v8687
    %v8703 = vmul.f32 %v8643, %v8687
    %v8704 = vmul.f32 %v8644, %v8697
    %v8705 = vmul.f32 %v8645, %v8697
    %v8706 = vmul.f32 %v8646, %v8667
    %v8707 = vmul.f32 %v8647, %v8667
    %v8708 = vmul.f32 %v8648, %v8677
    %v8709 = vmul.f32 %v8649, %v8677
    %v8710 = vmul.f32 %v8650, %v8687
    %v8711 = vmul.f32 %v8651, %v8687
    %v8712 = vmul.f32 %v8652, %v8697
    %v8713 = vmul.f32 %v8653, %v8697
    %8715 = vset.pattern.permute.xlu0 0
    %8716 = vperm.xlu0 %8715, %v8522
    %v8717 = vpop.permute.xlu0 %8716
    %8720 = vset.pattern.permute.xlu0 0
    %8721 = vperm.xlu0 %8720, %v8523
    %v8722 = vpop.permute.xlu0 %8721
    %8725 = vset.pattern.permute.xlu0 0
    %8726 = vperm.xlu0 %8725, %v8524
    %v8727 = vpop.permute.xlu0 %8726
    %8730 = vset.pattern.permute.xlu0 0
    %8731 = vperm.xlu0 %8730, %v8525
    %v8732 = vpop.permute.xlu0 %8731
    %v8734 = vmul.f32 %v8698, %v8717
    %v8735 = vmul.f32 %v8699, %v8717
    %v8736 = vmul.f32 %v8700, %v8722
    %v8737 = vmul.f32 %v8701, %v8722
    %v8738 = vmul.f32 %v8702, %v8727
    %v8739 = vmul.f32 %v8703, %v8727
    %v8740 = vmul.f32 %v8704, %v8732
    %v8741 = vmul.f32 %v8705, %v8732
    %v8742 = vmul.f32 %v8706, %v8717
    %v8743 = vmul.f32 %v8707, %v8717
    %v8744 = vmul.f32 %v8708, %v8722
    %v8745 = vmul.f32 %v8709, %v8722
    %v8746 = vmul.f32 %v8710, %v8727
    %v8747 = vmul.f32 %v8711, %v8727
    %v8748 = vmul.f32 %v8712, %v8732
    %v8749 = vmul.f32 %v8713, %v8732
    %8751 = vset.pattern.permute.xlu0 0
    %8752 = vperm.xlu0 %8751, %v8526
    %v8753 = vpop.permute.xlu0 %8752
    %8756 = vset.pattern.permute.xlu0 0
    %8757 = vperm.xlu0 %8756, %v8527
    %v8758 = vpop.permute.xlu0 %8757
    %8761 = vset.pattern.permute.xlu0 0
    %8762 = vperm.xlu0 %8761, %v8528
    %v8763 = vpop.permute.xlu0 %8762
    %8766 = vset.pattern.permute.xlu0 0
    %8767 = vperm.xlu0 %8766, %v8529
    %v8768 = vpop.permute.xlu0 %8767
    %v8770 = vadd.f32 %v8734, %v8753
    %v8771 = vadd.f32 %v8735, %v8753
    %v8772 = vadd.f32 %v8736, %v8758
    %v8773 = vadd.f32 %v8737, %v8758
    %v8774 = vadd.f32 %v8738, %v8763
    %v8775 = vadd.f32 %v8739, %v8763
    %v8776 = vadd.f32 %v8740, %v8768
    %v8777 = vadd.f32 %v8741, %v8768
    %v8778 = vadd.f32 %v8742, %v8753
    %v8779 = vadd.f32 %v8743, %v8753
    %v8780 = vadd.f32 %v8744, %v8758
    %v8781 = vadd.f32 %v8745, %v8758
    %v8782 = vadd.f32 %v8746, %v8763
    %v8783 = vadd.f32 %v8747, %v8763
    %v8784 = vadd.f32 %v8748, %v8768
    %v8785 = vadd.f32 %v8749, %v8768
    %v8786 = vadd.f32 %v8770, 3.0
    %v8787 = vadd.f32 %v8771, 3.0
    %v8788 = vadd.f32 %v8772, 3.0
    %v8789 = vadd.f32 %v8773, 3.0
    %v8790 = vadd.f32 %v8774, 3.0
    %v8791 = vadd.f32 %v8775, 3.0
    %v8792 = vadd.f32 %v8776, 3.0
    %v8793 = vadd.f32 %v8777, 3.0
    %v8794 = vadd.f32 %v8778, 3.0
    %v8795 = vadd.f32 %v8779, 3.0
    %v8796 = vadd.f32 %v8780, 3.0
    %v8797 = vadd.f32 %v8781, 3.0
    %v8798 = vadd.f32 %v8782, 3.0
    %v8799 = vadd.f32 %v8783, 3.0
    %v8800 = vadd.f32 %v8784, 3.0
    %v8801 = vadd.f32 %v8785, 3.0
    %v8802 = vmax.f32 %v8786, 0.0
    %v8803 = vmax.f32 %v8787, 0.0
    %v8804 = vmax.f32 %v8788, 0.0
    %v8805 = vmax.f32 %v8789, 0.0
    %v8806 = vmax.f32 %v8790, 0.0
    %v8807 = vmax.f32 %v8791, 0.0
    %v8808 = vmax.f32 %v8792, 0.0
    %v8809 = vmax.f32 %v8793, 0.0
    %v8810 = vmax.f32 %v8794, 0.0
    %v8811 = vmax.f32 %v8795, 0.0
    %v8812 = vmax.f32 %v8796, 0.0
    %v8813 = vmax.f32 %v8797, 0.0
    %v8814 = vmax.f32 %v8798, 0.0
    %v8815 = vmax.f32 %v8799, 0.0
    %v8816 = vmax.f32 %v8800, 0.0
    %v8817 = vmax.f32 %v8801, 0.0
    %v8818 = vmin.f32 %v8802, 6.0
    %v8819 = vmin.f32 %v8803, 6.0
    %v8820 = vmin.f32 %v8804, 6.0
    %v8821 = vmin.f32 %v8805, 6.0
    %v8822 = vmin.f32 %v8806, 6.0
    %v8823 = vmin.f32 %v8807, 6.0
    %v8824 = vmin.f32 %v8808, 6.0
    %v8825 = vmin.f32 %v8809, 6.0
    %v8826 = vmin.f32 %v8810, 6.0
    %v8827 = vmin.f32 %v8811, 6.0
    %v8828 = vmin.f32 %v8812, 6.0
    %v8829 = vmin.f32 %v8813, 6.0
    %v8830 = vmin.f32 %v8814, 6.0
    %v8831 = vmin.f32 %v8815, 6.0
    %v8832 = vmin.f32 %v8816, 6.0
    %v8833 = vmin.f32 %v8817, 6.0
    %v8834 = vmul.f32 %v8770, %v8818
    %v8835 = vmul.f32 %v8771, %v8819
    %v8836 = vmul.f32 %v8772, %v8820
    %v8837 = vmul.f32 %v8773, %v8821
    %v8838 = vmul.f32 %v8774, %v8822
    %v8839 = vmul.f32 %v8775, %v8823
    %v8840 = vmul.f32 %v8776, %v8824
    %v8841 = vmul.f32 %v8777, %v8825
    %v8842 = vmul.f32 %v8778, %v8826
    %v8843 = vmul.f32 %v8779, %v8827
    %v8844 = vmul.f32 %v8780, %v8828
    %v8845 = vmul.f32 %v8781, %v8829
    %v8846 = vmul.f32 %v8782, %v8830
    %v8847 = vmul.f32 %v8783, %v8831
    %v8848 = vmul.f32 %v8784, %v8832
    %v8849 = vmul.f32 %v8785, %v8833
    %v8850 = vmul.f32 %v8834, 0.16666667
    %v8851 = vmul.f32 %v8835, 0.16666667
    %v8852 = vmul.f32 %v8836, 0.16666667
    %v8853 = vmul.f32 %v8837, 0.16666667
    %v8854 = vmul.f32 %v8838, 0.16666667
    %v8855 = vmul.f32 %v8839, 0.16666667
    %v8856 = vmul.f32 %v8840, 0.16666667
    %v8857 = vmul.f32 %v8841, 0.16666667
    %v8858 = vmul.f32 %v8842, 0.16666667
    %v8859 = vmul.f32 %v8843, 0.16666667
    %v8860 = vmul.f32 %v8844, 0.16666667
    %v8861 = vmul.f32 %v8845, 0.16666667
    %v8862 = vmul.f32 %v8846, 0.16666667
    %v8863 = vmul.f32 %v8847, 0.16666667
    %v8864 = vmul.f32 %v8848, 0.16666667
    %v8865 = vmul.f32 %v8849, 0.16666667
    %v8866 = vld [vmem:[%s26] sm:$0xff]
    %v8867 = vld [vmem:[%s26 + $0x8] sm:$0xff]
    %v8868 = vld [vmem:[%s27] sm:$0xff]
    %v8869 = vld [vmem:[%s27 + $0x8] sm:$0xff]
    %8871 = vset.pattern.permute.xlu0 0
    %8872 = vperm.xlu0 %8871, %v8868
    %v8873 = vpop.permute.xlu0 %8872
    %8876 = vset.pattern.permute.xlu0 0
    %8877 = vperm.xlu0 %8876, %v8869
    %v8878 = vpop.permute.xlu0 %8877
    %vm8880 = vcmask 261120
    %v8882 = vsel %vm8880, %v8866, 0
    %v8885 = vsel %vm8880, %v8867, 0
    %8887 = vmatpush.msra.mxu0 0.0
    %8888 = vmatpush.msra.mxu0 0.0
    %8889 = vmatpush.msra.mxu0 0.0
    %8890 = vmatpush.msra.mxu0 0.0
    %8891 = vmatpush.msra.mxu0 0.0
    %8892 = vmatpush.msra.mxu0 0.0
    %8893 = vmatpush.msra.mxu0 0.0
    %8894 = vmatpush.msra.mxu0 0.0
    %8895 = vmatpush.msra.mxu0 0.0
    %8896 = vmatpush.msra.mxu0 0.0
    %8897 = vmatpush.msra.mxu0 0.0
    %8898 = vmatpush.msra.mxu0 0.0
    %8899 = vmatpush.msra.mxu0 %v8856
    %8900 = vmatpush.msra.mxu0 %v8854
    %8901 = vmatpush.msra.mxu0 %v8852
    %8902 = vmatpush.msra.mxu0 %v8850
    %8903 = vmatmul.f32.gmra.mxu0 %v8882
    %v8904 = vpop.f32.mrf.mxu0
    %v8905 = vadd.f32 %v8873, %v8904
    %8906 = vmatmul.f32.gmra.mxu0 %v8885
    %v8907 = vpop.f32.mrf.mxu0
    %v8908 = vadd.f32 %v8878, %v8907
    %8909 = vdwg.mxu0
    %8910 = vmatpush.msra.mxu0 0.0
    %8911 = vmatpush.msra.mxu0 0.0
    %8912 = vmatpush.msra.mxu0 0.0
    %8913 = vmatpush.msra.mxu0 0.0
    %8914 = vmatpush.msra.mxu0 0.0
    %8915 = vmatpush.msra.mxu0 0.0
    %8916 = vmatpush.msra.mxu0 0.0
    %8917 = vmatpush.msra.mxu0 0.0
    %8918 = vmatpush.msra.mxu0 0.0
    %8919 = vmatpush.msra.mxu0 0.0
    %8920 = vmatpush.msra.mxu0 0.0
    %8921 = vmatpush.msra.mxu0 0.0
    %8922 = vmatpush.msra.mxu0 %v8857
    %8923 = vmatpush.msra.mxu0 %v8855
    %8924 = vmatpush.msra.mxu0 %v8853
    %8925 = vmatpush.msra.mxu0 %v8851
    %8926 = vmatmul.f32.gmra.mxu0 %v8882
    %v8927 = vpop.f32.mrf.mxu0
    %v8928 = vadd.f32 %v8873, %v8927
    %8929 = vmatmul.f32.gmra.mxu0 %v8885
    %v8930 = vpop.f32.mrf.mxu0
    %v8931 = vadd.f32 %v8878, %v8930
    %8932 = vdwg.mxu0
    %8933 = vst [vmem:[#allocation2] sm:$0xff] %v8905
    %8934 = vst.msk [vmem:[#allocation2 + $0x8] sm:$0xff] %vm102, %v8928
    %8935 = vst [vmem:[#allocation2 + $0x10] sm:$0xff] %v8908
    %8936 = vst.msk [vmem:[#allocation2 + $0x18] sm:$0xff] %vm102, %v8931
    %8937 = vmatpush.msra.mxu0 0.0
    %8938 = vmatpush.msra.mxu0 0.0
    %8939 = vmatpush.msra.mxu0 0.0
    %8940 = vmatpush.msra.mxu0 0.0
    %8941 = vmatpush.msra.mxu0 0.0
    %8942 = vmatpush.msra.mxu0 0.0
    %8943 = vmatpush.msra.mxu0 0.0
    %8944 = vmatpush.msra.mxu0 0.0
    %8945 = vmatpush.msra.mxu0 0.0
    %8946 = vmatpush.msra.mxu0 0.0
    %8947 = vmatpush.msra.mxu0 0.0
    %8948 = vmatpush.msra.mxu0 0.0
    %8949 = vmatpush.msra.mxu0 %v8864
    %8950 = vmatpush.msra.mxu0 %v8862
    %8951 = vmatpush.msra.mxu0 %v8860
    %8952 = vmatpush.msra.mxu0 %v8858
    %8953 = vmatmul.f32.gmra.mxu0 %v8882
    %v8954 = vpop.f32.mrf.mxu0
    %v8955 = vadd.f32 %v8873, %v8954
    %8956 = vmatmul.f32.gmra.mxu0 %v8885
    %v8957 = vpop.f32.mrf.mxu0
    %v8958 = vadd.f32 %v8878, %v8957
    %8959 = vdwg.mxu0
    %8960 = vmatpush.msra.mxu0 0.0
    %8961 = vmatpush.msra.mxu0 0.0
    %8962 = vmatpush.msra.mxu0 0.0
    %8963 = vmatpush.msra.mxu0 0.0
    %8964 = vmatpush.msra.mxu0 0.0
    %8965 = vmatpush.msra.mxu0 0.0
    %8966 = vmatpush.msra.mxu0 0.0
    %8967 = vmatpush.msra.mxu0 0.0
    %8968 = vmatpush.msra.mxu0 0.0
    %8969 = vmatpush.msra.mxu0 0.0
    %8970 = vmatpush.msra.mxu0 0.0
    %8971 = vmatpush.msra.mxu0 0.0
    %8972 = vmatpush.msra.mxu0 %v8865
    %8973 = vmatpush.msra.mxu0 %v8863
    %8974 = vmatpush.msra.mxu0 %v8861
    %8975 = vmatpush.msra.mxu0 %v8859
    %8976 = vmatmul.f32.gmra.mxu0 %v8882
    %v8977 = vpop.f32.mrf.mxu0
    %v8978 = vadd.f32 %v8873, %v8977
    %8979 = vmatmul.f32.gmra.mxu0 %v8885
    %v8980 = vpop.f32.mrf.mxu0
    %v8981 = vadd.f32 %v8878, %v8980
    %8982 = vdwg.mxu0
    %s8983 = scalar_lea.vmem [#allocation2], 32
    %8984 = vst [vmem:[%s8983] sm:$0xff] %v8955
    %8985 = vst.msk [vmem:[%s8983 + $0x8] sm:$0xff] %vm102, %v8978
    %8986 = vst [vmem:[%s8983 + $0x10] sm:$0xff] %v8958
    %8987 = vst.msk [vmem:[%s8983 + $0x18] sm:$0xff] %vm102, %v8981
    // Predicated region
    $region114: #{tpu_custom_call.1} parent=1 // pred_check
      _
    $region115: #{tpu_custom_call.1} parent=1 // pred_check_branch
      %8989 = sbr.rel (0) target = $region117
    $region116: #{tpu_custom_call.1} parent=1 // pred_region
      %8991 = vsyncadd [#allocation3], 0
      %s8992 = sshll.u32 [#allocation2], 4
      %s8993 = int_to_ptr.vmem [resolvable:$true] %s8992
      %s8994 = sshll.u32 %s28, 4
      %s8995 = int_to_ptr.hbm [resolvable:$true] %s8994
      %9000 = dma.vmem_to_hbm [thread:$0]  %s8993, 1024, %s8995, [#allocation3], 256, 256, 16
    $region117: #{tpu_custom_call.1} parent=1 // pred_fallthru
      _
    // Predicated region
    $region118: #{tpu_custom_call.1} parent=1 // pred_check
      _
    $region119: #{tpu_custom_call.1} parent=1 // pred_check_branch
      %9002 = sbr.rel (0) target = $region121
    $region120: #{tpu_custom_call.1} parent=1 // pred_region
      %9004 = dma.done [#allocation3], 1024
    $region121: #{tpu_custom_call.1} parent=1 // pred_fallthru
      _
    %9005 = vsyncpa [#allocation3], 1

</llo_original>
